<compile_context>
chip_gen: v5e
topology: v5e:2x2
jax: 0.10.0
libtpu: 0.0.40
codegen_flags: <defaults>
</compile_context>

<pallas_src>
import functools

import jax
import jax.numpy as jnp
from jax import lax
from jax.experimental import pallas as pl
from jax.experimental.pallas import tpu as pltpu

HP = 128  # lane-aligned width of each gate / hidden slab (layers 0 and 1)


# ----------------------------------------------------------------------------
# Kernel
#   x_ref      : (S, 1)       raw input column (input size is 1)
#   wih0_ref   : (1, 4*HP)    layer-0 input weights as a gate-slab row
#   b0_ref     : (1, 4*HP)    layer-0 b_ih + b_hh (gate-slab row)
#   whh0_ref   : (HP, 4*HP)   layer-0 hidden->gates (transposed, gate-aligned)
#   wih1_ref   : (HP, 4*HP)   layer-1 input->gates
#   whh1_ref   : (HP, 4*HP)   layer-1 hidden->gates
#   b1_ref     : (1, 4*HP)    layer-1 bias row
#   wih2_ref   : (HP, 128)    layer-2 input->gates, compact (gates at lanes 0..3)
#   whh2_ref   : (1, 128)     layer-2 hidden->gates, compact
#   b2_ref     : (1, 128)     layer-2 bias, compact
#   hinit_ref  : (2, HP)      initial hidden states of layers 0,1 (zero-padded)
#   cinit_ref  : (2, HP)      initial cell states of layers 0,1
#   hc2_ref    : (1, 128)     lane0 = h2 init, lane1 = c2 init
#   y_ref      : (S, 1)       final output (lstm2 hidden state per step)
# ----------------------------------------------------------------------------
def _fused_net_kernel(x_ref, wih0_ref, b0_ref, whh0_ref,
                      wih1_ref, whh1_ref, b1_ref,
                      wih2_ref, whh2_ref, b2_ref,
                      hinit_ref, cinit_ref, hc2_ref,
                      y_ref, *, seq_len):
    S, Hp = seq_len, HP
    f32 = jnp.float32

    def gate_slabs(gates):
        i_g = jax.nn.sigmoid(gates[:, 0 * Hp:1 * Hp])
        f_g = jax.nn.sigmoid(gates[:, 1 * Hp:2 * Hp])
        g_g = jnp.tanh(gates[:, 2 * Hp:3 * Hp])
        o_g = jax.nn.sigmoid(gates[:, 3 * Hp:4 * Hp])
        return i_g, f_g, g_g, o_g

    # Layer-0 input projection for ALL timesteps: outer product on the VPU
    # (input feature dim is 1), hoisted out of the recurrence.
    gx0 = x_ref[...] * wih0_ref[...] + b0_ref[...]          # (S, 4*Hp)

    # Loop-carried states (padded lanes are exactly zero by construction).
    h0 = hinit_ref[0:1, :]
    c0 = cinit_ref[0:1, :]
    h1 = hinit_ref[1:2, :]
    c1 = cinit_ref[1:2, :]
    h2 = hc2_ref[:, 0:1]                                    # (1, 1) scalar
    c2 = hc2_ref[:, 1:2]

    b1 = b1_ref[...]
    whh2 = whh2_ref[...]
    b2 = b2_ref[...]

    # Fully unrolled; dataflow lets layer k's chain overlap layer k-1's chain
    # (layer k step t only needs layer k-1 step t and layer k step t-1).
    for t in range(S):
        # ---- layer 0 (1 -> 100): only the recurrent matmul per step -------
        g0 = gx0[t:t + 1, :] + jnp.dot(h0, whh0_ref[...],
                                       preferred_element_type=f32)
        i_g, f_g, g_g, o_g = gate_slabs(g0)
        c0 = f_g * c0 + i_g * g_g
        h0 = o_g * jnp.tanh(c0)

        # ---- layer 1 (100 -> 100) ------------------------------------------
        g1 = (jnp.dot(h0, wih1_ref[...], preferred_element_type=f32)
              + jnp.dot(h1, whh1_ref[...], preferred_element_type=f32)
              + b1)
        i_g, f_g, g_g, o_g = gate_slabs(g1)
        c1 = f_g * c1 + i_g * g_g
        h1 = o_g * jnp.tanh(c1)

        # ---- layer 2 (100 -> 1): recurrence is scalar -> off the MXU -------
        g2 = (jnp.dot(h1, wih2_ref[...], preferred_element_type=f32)
              + h2 * whh2 + b2)                             # (1, 128), lanes 0..3
        i2 = jax.nn.sigmoid(g2[:, 0:1])
        f2 = jax.nn.sigmoid(g2[:, 1:2])
        gg2 = jnp.tanh(g2[:, 2:3])
        o2 = jax.nn.sigmoid(g2[:, 3:4])
        c2 = f2 * c2 + i2 * gg2
        h2 = o2 * jnp.tanh(c2)

        y_ref[t:t + 1, :] = h2


# ----------------------------------------------------------------------------
# One-time parameter packing (called OUTSIDE the jitted forward path).
# Gate g of layers 0/1 occupies lanes [g*HP, g*HP + H). Padded lanes are zero
# so the padded lanes of h/c remain exactly zero inside the kernel.
# ----------------------------------------------------------------------------
def _pack_gate_weight_T(w):
    """PyTorch (4H, K) weight -> (HP, 4*HP): out[k, g*HP+j] = w[g*H+j, k]."""
    four_h, k_dim = w.shape
    h = four_h // 4
    assert h <= HP and k_dim <= HP, "hidden/input size must be <= HP=128"
    wt = jnp.asarray(w, jnp.float32).T                      # (K, 4H)
    out = jnp.zeros((HP, 4 * HP), jnp.float32)
    for g in range(4):
        out = out.at[:k_dim, g * HP:g * HP + h].set(wt[:, g * h:(g + 1) * h])
    return out


def _pack_gate_row(vec):
    """(4H,) -> (1, 4*HP) gate-slab row (padded lanes zero)."""
    v = jnp.asarray(vec, jnp.float32)
    h = v.shape[0] // 4
    assert h <= HP
    out = jnp.zeros((1, 4 * HP), jnp.float32)
    for g in range(4):
        out = out.at[0, g * HP:g * HP + h].set(v[g * h:(g + 1) * h])
    return out


def _pad_state_rows(s):
    """(L, H) -> (L, HP) zero-padded."""
    l, h = s.shape
    assert h <= HP
    return jnp.zeros((l, HP), jnp.float32).at[:, :h].set(s.astype(jnp.float32))


def pack_net_params(params, h1, c1, h2, c2):
    """Pack PyTorch-layout params/buffers once; result is reused every call."""
    (w_ih0, w_hh0, b_ih0, b_hh0,
     w_ih1, w_hh1, b_ih1, b_hh1,
     w_ih2, w_hh2, b_ih2, b_hh2) = params

    assert w_ih0.shape[1] == 1, "lstm1 input size must be 1"
    assert w_hh2.shape[1] == 1, "lstm2 hidden size must be 1"
    k2 = w_ih2.shape[1]
    assert k2 <= HP

    wih0_row = _pack_gate_row(jnp.asarray(w_ih0, jnp.float32)[:, 0])
    b0_row = _pack_gate_row(jnp.asarray(b_ih0) + jnp.asarray(b_hh0))
    whh0_p = _pack_gate_weight_T(w_hh0)

    wih1_p = _pack_gate_weight_T(w_ih1)
    whh1_p = _pack_gate_weight_T(w_hh1)
    b1_row = _pack_gate_row(jnp.asarray(b_ih1) + jnp.asarray(b_hh1))

    # Layer 2 (hidden size 1): compact layout, gates i,f,g,o at lanes 0..3.
    wih2_c = jnp.zeros((HP, 128), jnp.float32).at[:k2, 0:4].set(
        jnp.asarray(w_ih2, jnp.float32).T)
    whh2_c = jnp.zeros((1, 128), jnp.float32).at[0, 0:4].set(
        jnp.asarray(w_hh2, jnp.float32)[:, 0])
    b2_c = jnp.zeros((1, 128), jnp.float32).at[0, 0:4].set(
        jnp.asarray(b_ih2, jnp.float32) + jnp.asarray(b_hh2, jnp.float32))

    hinit01 = _pad_state_rows(jnp.asarray(h1, jnp.float32)[:, 0, :])  # (2, HP)
    cinit01 = _pad_state_rows(jnp.asarray(c1, jnp.float32)[:, 0, :])
    hc2 = jnp.zeros((1, 128), jnp.float32)
    hc2 = hc2.at[0, 0].set(jnp.asarray(h2, jnp.float32)[0, 0, 0])
    hc2 = hc2.at[0, 1].set(jnp.asarray(c2, jnp.float32)[0, 0, 0])

    return (wih0_row, b0_row, whh0_p,
            wih1_p, whh1_p, b1_row,
            wih2_c, whh2_c, b2_c,
            hinit01, cinit01, hc2)


# ----------------------------------------------------------------------------
# Jitted forward: only a reshape + the fused kernel launch per call.
# ----------------------------------------------------------------------------
@jax.jit
def net_forward_pallas(x, packed):
    """x: (S, 1, 1). Returns (S, 1, 1) — output of lstm2, PyTorch semantics."""
    (wih0_row, b0_row, whh0_p,
     wih1_p, whh1_p, b1_row,
     wih2_c, whh2_c, b2_c,
     hinit01, cinit01, hc2) = packed

    S, B, I0 = x.shape
    assert B == 1 and I0 == 1, "module fixes batch=1, input_size=1"
    x_col = x.reshape(S, 1).astype(jnp.float32)

    kernel = functools.partial(_fused_net_kernel, seq_len=S)
    vmem = pl.BlockSpec(memory_space=pltpu.MemorySpace.VMEM)

    y = pl.pallas_call(
        kernel,
        out_shape=jax.ShapeDtypeStruct((S, 1), jnp.float32),
        in_specs=[vmem] * 13,
        out_specs=vmem,
    )(x_col, wih0_row, b0_row, whh0_p,
      wih1_p, whh1_p, b1_row,
      wih2_c, whh2_c, b2_c,
      hinit01, cinit01, hc2)

    # TODO(synk): with multiple independent sequences, batch them into extra
    # LHS rows (or split across TensorCores on v7x) instead of looping calls.
    return y.reshape(S, B, 1)


# ----------------------------------------------------------------------------
# Pure-JAX reference (PyTorch nn.LSTM semantics), for verification only.
# ----------------------------------------------------------------------------
def lstm_layer_ref(x, w_ih, w_hh, b_ih, b_hh, h0, c0):
    def step(carry, x_t):
        h, c = carry
        gates = x_t @ w_ih.T + h @ w_hh.T + b_ih + b_hh
        i_g, f_g, g_g, o_g = jnp.split(gates, 4, axis=-1)
        i_g = jax.nn.sigmoid(i_g)
        f_g = jax.nn.sigmoid(f_g)
        g_g = jnp.tanh(g_g)
        o_g = jax.nn.sigmoid(o_g)
        c = f_g * c + i_g * g_g
        h = o_g * jnp.tanh(c)
        return (h, c), h

    (_, _), ys = lax.scan(step, (h0, c0), x)
    return ys


def net_forward_ref(x, params, h1, c1, h2, c2):
    (w_ih0, w_hh0, b_ih0, b_hh0,
     w_ih1, w_hh1, b_ih1, b_hh1,
     w_ih2, w_hh2, b_ih2, b_hh2) = params
    y = lstm_layer_ref(x, w_ih0, w_hh0, b_ih0, b_hh0, h1[0], c1[0])
    y = lstm_layer_ref(y, w_ih1, w_hh1, b_ih1, b_hh1, h1[1], c1[1])
    return lstm_layer_ref(y, w_ih2, w_hh2, b_ih2, b_hh2, h2[0], c2[0])


def uniform_param(key, shape, hidden):
    # PyTorch nn.LSTM default init: U(-1/sqrt(H), 1/sqrt(H))
    bound = 1.0 / jnp.sqrt(jnp.float32(hidden))
    return jax.random.uniform(key, shape, jnp.float32, -bound, bound)


if __name__ == "__main__":
    key = jax.random.PRNGKey(0)
    ks = jax.random.split(key, 20)

    S, B = 8, 1          # seq_len=8, batch=1 (fixed by the module's h1/c1)
    I0, H1, H2 = 1, 100, 1

    # lstm1, layer 0: input 1 -> hidden 100
    w_ih0 = uniform_param(ks[0], (4 * H1, I0), H1)
    w_hh0 = uniform_param(ks[1], (4 * H1, H1), H1)
    b_ih0 = uniform_param(ks[2], (4 * H1,), H1)
    b_hh0 = uniform_param(ks[3], (4 * H1,), H1)
    # lstm1, layer 1: input 100 -> hidden 100
    w_ih1 = uniform_param(ks[4], (4 * H1, H1), H1)
    w_hh1 = uniform_param(ks[5], (4 * H1, H1), H1)
    b_ih1 = uniform_param(ks[6], (4 * H1,), H1)
    b_hh1 = uniform_param(ks[7], (4 * H1,), H1)
    # lstm2: input 100 -> hidden 1
    w_ih2 = uniform_param(ks[8], (4 * H2, H1), H2)
    w_hh2 = uniform_param(ks[9], (4 * H2, H2), H2)
    b_ih2 = uniform_param(ks[10], (4 * H2,), H2)
    b_hh2 = uniform_param(ks[11], (4 * H2,), H2)

    # Module buffers (torch.randn in __init__)
    h1 = jax.random.normal(ks[12], (2, B, H1), jnp.float32)
    c1 = jax.random.normal(ks[13], (2, B, H1), jnp.float32)
    h2 = jax.random.normal(ks[14], (1, B, H2), jnp.float32)
    c2 = jax.random.normal(ks[15], (1, B, H2), jnp.float32)

    # Input: (seq, batch, input_size) = (8, 1, 1)
    x = jax.random.normal(ks[16], (S, B, I0), jnp.float32)

    params = (w_ih0, w_hh0, b_ih0, b_hh0,
              w_ih1, w_hh1, b_ih1, b_hh1,
              w_ih2, w_hh2, b_ih2, b_hh2)

    # Pack once (outside the per-call hot path); reuse for every forward call.
    packed = jax.block_until_ready(pack_net_params(params, h1, c1, h2, c2))

    out = net_forward_pallas(x, packed)
    out = jax.block_until_ready(out)
    assert out.shape == (S, B, H2), out.shape

    ref = net_forward_ref(x, params, h1, c1, h2, c2)
    ref = jax.block_until_ready(ref)
    assert jnp.allclose(out, ref, atol=1e-5, rtol=1e-5), (
        float(jnp.max(jnp.abs(out - ref))))

    print("KERNEL_OK")
</pallas_src>

<mosaic_0001>
module attributes {stable_mosaic.version = 11 : i64} {
  func.func @_fused_net_kernel(%arg0: memref<8x1xf32, #tpu.memory_space<vmem>>, %arg1: memref<1x512xf32, #tpu.memory_space<vmem>>, %arg2: memref<1x512xf32, #tpu.memory_space<vmem>>, %arg3: memref<128x512xf32, #tpu.memory_space<vmem>>, %arg4: memref<128x512xf32, #tpu.memory_space<vmem>>, %arg5: memref<128x512xf32, #tpu.memory_space<vmem>>, %arg6: memref<1x512xf32, #tpu.memory_space<vmem>>, %arg7: memref<128x128xf32, #tpu.memory_space<vmem>>, %arg8: memref<1x128xf32, #tpu.memory_space<vmem>>, %arg9: memref<1x128xf32, #tpu.memory_space<vmem>>, %arg10: memref<2x128xf32, #tpu.memory_space<vmem>>, %arg11: memref<2x128xf32, #tpu.memory_space<vmem>>, %arg12: memref<1x128xf32, #tpu.memory_space<vmem>>, %arg13: memref<8x1xf32, #tpu.memory_space<vmem>>) attributes {dimension_semantics = [], scalar_prefetch = 0 : i64, scratch_operands = 0 : i64, tpu.core_type = #tpu.core_type<tc>} {
    %c0 = arith.constant 0 : index
    %c0_0 = arith.constant 0 : index
    %0 = vector.load %arg0[%c0, %c0_0] : memref<8x1xf32, #tpu.memory_space<vmem>>, vector<8x1xf32>
    %c0_1 = arith.constant 0 : index
    %c0_2 = arith.constant 0 : index
    %1 = vector.load %arg1[%c0_1, %c0_2] : memref<1x512xf32, #tpu.memory_space<vmem>>, vector<1x512xf32>
    %2 = vector.broadcast %0 : vector<8x1xf32> to vector<8x512xf32>
    %3 = vector.broadcast %1 : vector<1x512xf32> to vector<8x512xf32>
    %4 = arith.mulf %2, %3 : vector<8x512xf32>
    %c0_3 = arith.constant 0 : index
    %c0_4 = arith.constant 0 : index
    %5 = vector.load %arg2[%c0_3, %c0_4] : memref<1x512xf32, #tpu.memory_space<vmem>>, vector<1x512xf32>
    %6 = vector.broadcast %5 : vector<1x512xf32> to vector<8x512xf32>
    %7 = arith.addf %4, %6 : vector<8x512xf32>
    %c0_5 = arith.constant 0 : index
    %c0_6 = arith.constant 0 : index
    %8 = vector.load %arg10[%c0_5, %c0_6] : memref<2x128xf32, #tpu.memory_space<vmem>>, vector<1x128xf32>
    %c0_7 = arith.constant 0 : index
    %c0_8 = arith.constant 0 : index
    %9 = vector.load %arg11[%c0_7, %c0_8] : memref<2x128xf32, #tpu.memory_space<vmem>>, vector<1x128xf32>
    %c1 = arith.constant 1 : index
    %c0_9 = arith.constant 0 : index
    %10 = vector.load %arg10[%c1, %c0_9] : memref<2x128xf32, #tpu.memory_space<vmem>>, vector<1x128xf32>
    %c1_10 = arith.constant 1 : index
    %c0_11 = arith.constant 0 : index
    %11 = vector.load %arg11[%c1_10, %c0_11] : memref<2x128xf32, #tpu.memory_space<vmem>>, vector<1x128xf32>
    %c0_12 = arith.constant 0 : index
    %c0_13 = arith.constant 0 : index
    %12 = vector.load %arg12[%c0_12, %c0_13] : memref<1x128xf32, #tpu.memory_space<vmem>>, vector<1x1xf32>
    %c0_14 = arith.constant 0 : index
    %c1_15 = arith.constant 1 : index
    %13 = vector.load %arg12[%c0_14, %c1_15] : memref<1x128xf32, #tpu.memory_space<vmem>>, vector<1x1xf32>
    %c0_16 = arith.constant 0 : index
    %c0_17 = arith.constant 0 : index
    %14 = vector.load %arg6[%c0_16, %c0_17] : memref<1x512xf32, #tpu.memory_space<vmem>>, vector<1x512xf32>
    %c0_18 = arith.constant 0 : index
    %c0_19 = arith.constant 0 : index
    %15 = vector.load %arg8[%c0_18, %c0_19] : memref<1x128xf32, #tpu.memory_space<vmem>>, vector<1x128xf32>
    %c0_20 = arith.constant 0 : index
    %c0_21 = arith.constant 0 : index
    %16 = vector.load %arg9[%c0_20, %c0_21] : memref<1x128xf32, #tpu.memory_space<vmem>>, vector<1x128xf32>
    %17 = vector.extract_strided_slice %7 {offsets = [0, 0], sizes = [1, 512], strides = [1, 1]} : vector<8x512xf32> to vector<1x512xf32>
    %c0_22 = arith.constant 0 : index
    %c0_23 = arith.constant 0 : index
    %18 = vector.load %arg3[%c0_22, %c0_23] : memref<128x512xf32, #tpu.memory_space<vmem>>, vector<128x512xf32>
    %cst = arith.constant dense<0.000000e+00> : vector<1x512xf32>
    %19 = tpu.matmul %8, %18, %cst {dimension_numbers = #tpu.dot_dimension_numbers<[1], [0], [0], [1], [0, 0, 1, 1], [], []>} : vector<1x128xf32>, vector<128x512xf32>, vector<1x512xf32> -> vector<1x512xf32>
    %20 = arith.addf %17, %19 : vector<1x512xf32>
    %21 = vector.extract_strided_slice %20 {offsets = [0, 0], sizes = [1, 128], strides = [1, 1]} : vector<1x512xf32> to vector<1x128xf32>
    %22 = arith.negf %21 : vector<1x128xf32>
    %23 = math.exp %22 : vector<1x128xf32>
    %cst_24 = arith.constant 1.000000e+00 : f32
    %24 = vector.broadcast %cst_24 : f32 to vector<1x128xf32>
    %25 = arith.addf %24, %23 : vector<1x128xf32>
    %26 = arith.divf %24, %25 : vector<1x128xf32>
    %27 = vector.extract_strided_slice %20 {offsets = [0, 128], sizes = [1, 128], strides = [1, 1]} : vector<1x512xf32> to vector<1x128xf32>
    %28 = arith.negf %27 : vector<1x128xf32>
    %29 = math.exp %28 : vector<1x128xf32>
    %cst_25 = arith.constant 1.000000e+00 : f32
    %30 = vector.broadcast %cst_25 : f32 to vector<1x128xf32>
    %31 = arith.addf %30, %29 : vector<1x128xf32>
    %32 = arith.divf %30, %31 : vector<1x128xf32>
    %33 = vector.extract_strided_slice %20 {offsets = [0, 256], sizes = [1, 128], strides = [1, 1]} : vector<1x512xf32> to vector<1x128xf32>
    %34 = math.tanh %33 : vector<1x128xf32>
    %35 = vector.extract_strided_slice %20 {offsets = [0, 384], sizes = [1, 128], strides = [1, 1]} : vector<1x512xf32> to vector<1x128xf32>
    %36 = arith.negf %35 : vector<1x128xf32>
    %37 = math.exp %36 : vector<1x128xf32>
    %cst_26 = arith.constant 1.000000e+00 : f32
    %38 = vector.broadcast %cst_26 : f32 to vector<1x128xf32>
    %39 = arith.addf %38, %37 : vector<1x128xf32>
    %40 = arith.divf %38, %39 : vector<1x128xf32>
    %41 = arith.mulf %32, %9 : vector<1x128xf32>
    %42 = arith.mulf %26, %34 : vector<1x128xf32>
    %43 = arith.addf %41, %42 : vector<1x128xf32>
    %44 = math.tanh %43 : vector<1x128xf32>
    %45 = arith.mulf %40, %44 : vector<1x128xf32>
    %c0_27 = arith.constant 0 : index
    %c0_28 = arith.constant 0 : index
    %46 = vector.load %arg4[%c0_27, %c0_28] : memref<128x512xf32, #tpu.memory_space<vmem>>, vector<128x512xf32>
    %cst_29 = arith.constant dense<0.000000e+00> : vector<1x512xf32>
    %47 = tpu.matmul %45, %46, %cst_29 {dimension_numbers = #tpu.dot_dimension_numbers<[1], [0], [0], [1], [0, 0, 1, 1], [], []>} : vector<1x128xf32>, vector<128x512xf32>, vector<1x512xf32> -> vector<1x512xf32>
    %c0_30 = arith.constant 0 : index
    %c0_31 = arith.constant 0 : index
    %48 = vector.load %arg5[%c0_30, %c0_31] : memref<128x512xf32, #tpu.memory_space<vmem>>, vector<128x512xf32>
    %cst_32 = arith.constant dense<0.000000e+00> : vector<1x512xf32>
    %49 = tpu.matmul %10, %48, %cst_32 {dimension_numbers = #tpu.dot_dimension_numbers<[1], [0], [0], [1], [0, 0, 1, 1], [], []>} : vector<1x128xf32>, vector<128x512xf32>, vector<1x512xf32> -> vector<1x512xf32>
    %50 = arith.addf %47, %49 : vector<1x512xf32>
    %51 = arith.addf %50, %14 : vector<1x512xf32>
    %52 = vector.extract_strided_slice %51 {offsets = [0, 0], sizes = [1, 128], strides = [1, 1]} : vector<1x512xf32> to vector<1x128xf32>
    %53 = arith.negf %52 : vector<1x128xf32>
    %54 = math.exp %53 : vector<1x128xf32>
    %cst_33 = arith.constant 1.000000e+00 : f32
    %55 = vector.broadcast %cst_33 : f32 to vector<1x128xf32>
    %56 = arith.addf %55, %54 : vector<1x128xf32>
    %57 = arith.divf %55, %56 : vector<1x128xf32>
    %58 = vector.extract_strided_slice %51 {offsets = [0, 128], sizes = [1, 128], strides = [1, 1]} : vector<1x512xf32> to vector<1x128xf32>
    %59 = arith.negf %58 : vector<1x128xf32>
    %60 = math.exp %59 : vector<1x128xf32>
    %cst_34 = arith.constant 1.000000e+00 : f32
    %61 = vector.broadcast %cst_34 : f32 to vector<1x128xf32>
    %62 = arith.addf %61, %60 : vector<1x128xf32>
    %63 = arith.divf %61, %62 : vector<1x128xf32>
    %64 = vector.extract_strided_slice %51 {offsets = [0, 256], sizes = [1, 128], strides = [1, 1]} : vector<1x512xf32> to vector<1x128xf32>
    %65 = math.tanh %64 : vector<1x128xf32>
    %66 = vector.extract_strided_slice %51 {offsets = [0, 384], sizes = [1, 128], strides = [1, 1]} : vector<1x512xf32> to vector<1x128xf32>
    %67 = arith.negf %66 : vector<1x128xf32>
    %68 = math.exp %67 : vector<1x128xf32>
    %cst_35 = arith.constant 1.000000e+00 : f32
    %69 = vector.broadcast %cst_35 : f32 to vector<1x128xf32>
    %70 = arith.addf %69, %68 : vector<1x128xf32>
    %71 = arith.divf %69, %70 : vector<1x128xf32>
    %72 = arith.mulf %63, %11 : vector<1x128xf32>
    %73 = arith.mulf %57, %65 : vector<1x128xf32>
    %74 = arith.addf %72, %73 : vector<1x128xf32>
    %75 = math.tanh %74 : vector<1x128xf32>
    %76 = arith.mulf %71, %75 : vector<1x128xf32>
    %c0_36 = arith.constant 0 : index
    %c0_37 = arith.constant 0 : index
    %77 = vector.load %arg7[%c0_36, %c0_37] : memref<128x128xf32, #tpu.memory_space<vmem>>, vector<128x128xf32>
    %cst_38 = arith.constant dense<0.000000e+00> : vector<1x128xf32>
    %78 = tpu.matmul %76, %77, %cst_38 {dimension_numbers = #tpu.dot_dimension_numbers<[1], [0], [0], [1], [0, 0, 1, 1], [], []>} : vector<1x128xf32>, vector<128x128xf32>, vector<1x128xf32> -> vector<1x128xf32>
    %79 = vector.broadcast %12 : vector<1x1xf32> to vector<1x128xf32>
    %80 = arith.mulf %79, %15 : vector<1x128xf32>
    %81 = arith.addf %78, %80 : vector<1x128xf32>
    %82 = arith.addf %81, %16 : vector<1x128xf32>
    %83 = vector.extract_strided_slice %82 {offsets = [0, 0], sizes = [1, 1], strides = [1, 1]} : vector<1x128xf32> to vector<1x1xf32>
    %84 = arith.negf %83 : vector<1x1xf32>
    %85 = math.exp %84 : vector<1x1xf32>
    %cst_39 = arith.constant 1.000000e+00 : f32
    %86 = vector.broadcast %cst_39 : f32 to vector<1x1xf32>
    %87 = arith.addf %86, %85 : vector<1x1xf32>
    %88 = arith.divf %86, %87 : vector<1x1xf32>
    %89 = vector.extract_strided_slice %82 {offsets = [0, 1], sizes = [1, 1], strides = [1, 1]} : vector<1x128xf32> to vector<1x1xf32>
    %90 = arith.negf %89 : vector<1x1xf32>
    %91 = math.exp %90 : vector<1x1xf32>
    %cst_40 = arith.constant 1.000000e+00 : f32
    %92 = vector.broadcast %cst_40 : f32 to vector<1x1xf32>
    %93 = arith.addf %92, %91 : vector<1x1xf32>
    %94 = arith.divf %92, %93 : vector<1x1xf32>
    %95 = vector.extract_strided_slice %82 {offsets = [0, 2], sizes = [1, 1], strides = [1, 1]} : vector<1x128xf32> to vector<1x1xf32>
    %96 = math.tanh %95 : vector<1x1xf32>
    %97 = vector.extract_strided_slice %82 {offsets = [0, 3], sizes = [1, 1], strides = [1, 1]} : vector<1x128xf32> to vector<1x1xf32>
    %98 = arith.negf %97 : vector<1x1xf32>
    %99 = math.exp %98 : vector<1x1xf32>
    %cst_41 = arith.constant 1.000000e+00 : f32
    %100 = vector.broadcast %cst_41 : f32 to vector<1x1xf32>
    %101 = arith.addf %100, %99 : vector<1x1xf32>
    %102 = arith.divf %100, %101 : vector<1x1xf32>
    %103 = arith.mulf %94, %13 : vector<1x1xf32>
    %104 = arith.mulf %88, %96 : vector<1x1xf32>
    %105 = arith.addf %103, %104 : vector<1x1xf32>
    %106 = math.tanh %105 : vector<1x1xf32>
    %107 = arith.mulf %102, %106 : vector<1x1xf32>
    %c0_42 = arith.constant 0 : index
    %c0_43 = arith.constant 0 : index
    %108 = vector.load %arg13[%c0_42, %c0_43] : memref<8x1xf32, #tpu.memory_space<vmem>>, vector<1x1xf32>
    tpu.vector_store %arg13[%c0_42, %c0_43], %107 {strides = array<i32>} : memref<8x1xf32, #tpu.memory_space<vmem>>, vector<1x1xf32>,
    %109 = vector.extract_strided_slice %7 {offsets = [1, 0], sizes = [1, 512], strides = [1, 1]} : vector<8x512xf32> to vector<1x512xf32>
    %c0_44 = arith.constant 0 : index
    %c0_45 = arith.constant 0 : index
    %110 = vector.load %arg3[%c0_44, %c0_45] : memref<128x512xf32, #tpu.memory_space<vmem>>, vector<128x512xf32>
    %cst_46 = arith.constant dense<0.000000e+00> : vector<1x512xf32>
    %111 = tpu.matmul %45, %110, %cst_46 {dimension_numbers = #tpu.dot_dimension_numbers<[1], [0], [0], [1], [0, 0, 1, 1], [], []>} : vector<1x128xf32>, vector<128x512xf32>, vector<1x512xf32> -> vector<1x512xf32>
    %112 = arith.addf %109, %111 : vector<1x512xf32>
    %113 = vector.extract_strided_slice %112 {offsets = [0, 0], sizes = [1, 128], strides = [1, 1]} : vector<1x512xf32> to vector<1x128xf32>
    %114 = arith.negf %113 : vector<1x128xf32>
    %115 = math.exp %114 : vector<1x128xf32>
    %cst_47 = arith.constant 1.000000e+00 : f32
    %116 = vector.broadcast %cst_47 : f32 to vector<1x128xf32>
    %117 = arith.addf %116, %115 : vector<1x128xf32>
    %118 = arith.divf %116, %117 : vector<1x128xf32>
    %119 = vector.extract_strided_slice %112 {offsets = [0, 128], sizes = [1, 128], strides = [1, 1]} : vector<1x512xf32> to vector<1x128xf32>
    %120 = arith.negf %119 : vector<1x128xf32>
    %121 = math.exp %120 : vector<1x128xf32>
    %cst_48 = arith.constant 1.000000e+00 : f32
    %122 = vector.broadcast %cst_48 : f32 to vector<1x128xf32>
    %123 = arith.addf %122, %121 : vector<1x128xf32>
    %124 = arith.divf %122, %123 : vector<1x128xf32>
    %125 = vector.extract_strided_slice %112 {offsets = [0, 256], sizes = [1, 128], strides = [1, 1]} : vector<1x512xf32> to vector<1x128xf32>
    %126 = math.tanh %125 : vector<1x128xf32>
    %127 = vector.extract_strided_slice %112 {offsets = [0, 384], sizes = [1, 128], strides = [1, 1]} : vector<1x512xf32> to vector<1x128xf32>
    %128 = arith.negf %127 : vector<1x128xf32>
    %129 = math.exp %128 : vector<1x128xf32>
    %cst_49 = arith.constant 1.000000e+00 : f32
    %130 = vector.broadcast %cst_49 : f32 to vector<1x128xf32>
    %131 = arith.addf %130, %129 : vector<1x128xf32>
    %132 = arith.divf %130, %131 : vector<1x128xf32>
    %133 = arith.mulf %124, %43 : vector<1x128xf32>
    %134 = arith.mulf %118, %126 : vector<1x128xf32>
    %135 = arith.addf %133, %134 : vector<1x128xf32>
    %136 = math.tanh %135 : vector<1x128xf32>
    %137 = arith.mulf %132, %136 : vector<1x128xf32>
    %c0_50 = arith.constant 0 : index
    %c0_51 = arith.constant 0 : index
    %138 = vector.load %arg4[%c0_50, %c0_51] : memref<128x512xf32, #tpu.memory_space<vmem>>, vector<128x512xf32>
    %cst_52 = arith.constant dense<0.000000e+00> : vector<1x512xf32>
    %139 = tpu.matmul %137, %138, %cst_52 {dimension_numbers = #tpu.dot_dimension_numbers<[1], [0], [0], [1], [0, 0, 1, 1], [], []>} : vector<1x128xf32>, vector<128x512xf32>, vector<1x512xf32> -> vector<1x512xf32>
    %c0_53 = arith.constant 0 : index
    %c0_54 = arith.constant 0 : index
    %140 = vector.load %arg5[%c0_53, %c0_54] : memref<128x512xf32, #tpu.memory_space<vmem>>, vector<128x512xf32>
    %cst_55 = arith.constant dense<0.000000e+00> : vector<1x512xf32>
    %141 = tpu.matmul %76, %140, %cst_55 {dimension_numbers = #tpu.dot_dimension_numbers<[1], [0], [0], [1], [0, 0, 1, 1], [], []>} : vector<1x128xf32>, vector<128x512xf32>, vector<1x512xf32> -> vector<1x512xf32>
    %142 = arith.addf %139, %141 : vector<1x512xf32>
    %143 = arith.addf %142, %14 : vector<1x512xf32>
    %144 = vector.extract_strided_slice %143 {offsets = [0, 0], sizes = [1, 128], strides = [1, 1]} : vector<1x512xf32> to vector<1x128xf32>
    %145 = arith.negf %144 : vector<1x128xf32>
    %146 = math.exp %145 : vector<1x128xf32>
    %cst_56 = arith.constant 1.000000e+00 : f32
    %147 = vector.broadcast %cst_56 : f32 to vector<1x128xf32>
    %148 = arith.addf %147, %146 : vector<1x128xf32>
    %149 = arith.divf %147, %148 : vector<1x128xf32>
    %150 = vector.extract_strided_slice %143 {offsets = [0, 128], sizes = [1, 128], strides = [1, 1]} : vector<1x512xf32> to vector<1x128xf32>
    %151 = arith.negf %150 : vector<1x128xf32>
    %152 = math.exp %151 : vector<1x128xf32>
    %cst_57 = arith.constant 1.000000e+00 : f32
    %153 = vector.broadcast %cst_57 : f32 to vector<1x128xf32>
    %154 = arith.addf %153, %152 : vector<1x128xf32>
    %155 = arith.divf %153, %154 : vector<1x128xf32>
    %156 = vector.extract_strided_slice %143 {offsets = [0, 256], sizes = [1, 128], strides = [1, 1]} : vector<1x512xf32> to vector<1x128xf32>
    %157 = math.tanh %156 : vector<1x128xf32>
    %158 = vector.extract_strided_slice %143 {offsets = [0, 384], sizes = [1, 128], strides = [1, 1]} : vector<1x512xf32> to vector<1x128xf32>
    %159 = arith.negf %158 : vector<1x128xf32>
    %160 = math.exp %159 : vector<1x128xf32>
    %cst_58 = arith.constant 1.000000e+00 : f32
    %161 = vector.broadcast %cst_58 : f32 to vector<1x128xf32>
    %162 = arith.addf %161, %160 : vector<1x128xf32>
    %163 = arith.divf %161, %162 : vector<1x128xf32>
    %164 = arith.mulf %155, %74 : vector<1x128xf32>
    %165 = arith.mulf %149, %157 : vector<1x128xf32>
    %166 = arith.addf %164, %165 : vector<1x128xf32>
    %167 = math.tanh %166 : vector<1x128xf32>
    %168 = arith.mulf %163, %167 : vector<1x128xf32>
    %c0_59 = arith.constant 0 : index
    %c0_60 = arith.constant 0 : index
    %169 = vector.load %arg7[%c0_59, %c0_60] : memref<128x128xf32, #tpu.memory_space<vmem>>, vector<128x128xf32>
    %cst_61 = arith.constant dense<0.000000e+00> : vector<1x128xf32>
    %170 = tpu.matmul %168, %169, %cst_61 {dimension_numbers = #tpu.dot_dimension_numbers<[1], [0], [0], [1], [0, 0, 1, 1], [], []>} : vector<1x128xf32>, vector<128x128xf32>, vector<1x128xf32> -> vector<1x128xf32>
    %171 = vector.broadcast %107 : vector<1x1xf32> to vector<1x128xf32>
    %172 = arith.mulf %171, %15 : vector<1x128xf32>
    %173 = arith.addf %170, %172 : vector<1x128xf32>
    %174 = arith.addf %173, %16 : vector<1x128xf32>
    %175 = vector.extract_strided_slice %174 {offsets = [0, 0], sizes = [1, 1], strides = [1, 1]} : vector<1x128xf32> to vector<1x1xf32>
    %176 = arith.negf %175 : vector<1x1xf32>
    %177 = math.exp %176 : vector<1x1xf32>
    %cst_62 = arith.constant 1.000000e+00 : f32
    %178 = vector.broadcast %cst_62 : f32 to vector<1x1xf32>
    %179 = arith.addf %178, %177 : vector<1x1xf32>
    %180 = arith.divf %178, %179 : vector<1x1xf32>
    %181 = vector.extract_strided_slice %174 {offsets = [0, 1], sizes = [1, 1], strides = [1, 1]} : vector<1x128xf32> to vector<1x1xf32>
    %182 = arith.negf %181 : vector<1x1xf32>
    %183 = math.exp %182 : vector<1x1xf32>
    %cst_63 = arith.constant 1.000000e+00 : f32
    %184 = vector.broadcast %cst_63 : f32 to vector<1x1xf32>
    %185 = arith.addf %184, %183 : vector<1x1xf32>
    %186 = arith.divf %184, %185 : vector<1x1xf32>
    %187 = vector.extract_strided_slice %174 {offsets = [0, 2], sizes = [1, 1], strides = [1, 1]} : vector<1x128xf32> to vector<1x1xf32>
    %188 = math.tanh %187 : vector<1x1xf32>
    %189 = vector.extract_strided_slice %174 {offsets = [0, 3], sizes = [1, 1], strides = [1, 1]} : vector<1x128xf32> to vector<1x1xf32>
    %190 = arith.negf %189 : vector<1x1xf32>
    %191 = math.exp %190 : vector<1x1xf32>
    %cst_64 = arith.constant 1.000000e+00 : f32
    %192 = vector.broadcast %cst_64 : f32 to vector<1x1xf32>
    %193 = arith.addf %192, %191 : vector<1x1xf32>
    %194 = arith.divf %192, %193 : vector<1x1xf32>
    %195 = arith.mulf %186, %105 : vector<1x1xf32>
    %196 = arith.mulf %180, %188 : vector<1x1xf32>
    %197 = arith.addf %195, %196 : vector<1x1xf32>
    %198 = math.tanh %197 : vector<1x1xf32>
    %199 = arith.mulf %194, %198 : vector<1x1xf32>
    %c1_65 = arith.constant 1 : index
    %c0_66 = arith.constant 0 : index
    %200 = vector.load %arg13[%c1_65, %c0_66] : memref<8x1xf32, #tpu.memory_space<vmem>>, vector<1x1xf32>
    tpu.vector_store %arg13[%c1_65, %c0_66], %199 {strides = array<i32>} : memref<8x1xf32, #tpu.memory_space<vmem>>, vector<1x1xf32>,
    %201 = vector.extract_strided_slice %7 {offsets = [2, 0], sizes = [1, 512], strides = [1, 1]} : vector<8x512xf32> to vector<1x512xf32>
    %c0_67 = arith.constant 0 : index
    %c0_68 = arith.constant 0 : index
    %202 = vector.load %arg3[%c0_67, %c0_68] : memref<128x512xf32, #tpu.memory_space<vmem>>, vector<128x512xf32>
    %cst_69 = arith.constant dense<0.000000e+00> : vector<1x512xf32>
    %203 = tpu.matmul %137, %202, %cst_69 {dimension_numbers = #tpu.dot_dimension_numbers<[1], [0], [0], [1], [0, 0, 1, 1], [], []>} : vector<1x128xf32>, vector<128x512xf32>, vector<1x512xf32> -> vector<1x512xf32>
    %204 = arith.addf %201, %203 : vector<1x512xf32>
    %205 = vector.extract_strided_slice %204 {offsets = [0, 0], sizes = [1, 128], strides = [1, 1]} : vector<1x512xf32> to vector<1x128xf32>
    %206 = arith.negf %205 : vector<1x128xf32>
    %207 = math.exp %206 : vector<1x128xf32>
    %cst_70 = arith.constant 1.000000e+00 : f32
    %208 = vector.broadcast %cst_70 : f32 to vector<1x128xf32>
    %209 = arith.addf %208, %207 : vector<1x128xf32>
    %210 = arith.divf %208, %209 : vector<1x128xf32>
    %211 = vector.extract_strided_slice %204 {offsets = [0, 128], sizes = [1, 128], strides = [1, 1]} : vector<1x512xf32> to vector<1x128xf32>
    %212 = arith.negf %211 : vector<1x128xf32>
    %213 = math.exp %212 : vector<1x128xf32>
    %cst_71 = arith.constant 1.000000e+00 : f32
    %214 = vector.broadcast %cst_71 : f32 to vector<1x128xf32>
    %215 = arith.addf %214, %213 : vector<1x128xf32>
    %216 = arith.divf %214, %215 : vector<1x128xf32>
    %217 = vector.extract_strided_slice %204 {offsets = [0, 256], sizes = [1, 128], strides = [1, 1]} : vector<1x512xf32> to vector<1x128xf32>
    %218 = math.tanh %217 : vector<1x128xf32>
    %219 = vector.extract_strided_slice %204 {offsets = [0, 384], sizes = [1, 128], strides = [1, 1]} : vector<1x512xf32> to vector<1x128xf32>
    %220 = arith.negf %219 : vector<1x128xf32>
    %221 = math.exp %220 : vector<1x128xf32>
    %cst_72 = arith.constant 1.000000e+00 : f32
    %222 = vector.broadcast %cst_72 : f32 to vector<1x128xf32>
    %223 = arith.addf %222, %221 : vector<1x128xf32>
    %224 = arith.divf %222, %223 : vector<1x128xf32>
    %225 = arith.mulf %216, %135 : vector<1x128xf32>
    %226 = arith.mulf %210, %218 : vector<1x128xf32>
    %227 = arith.addf %225, %226 : vector<1x128xf32>
    %228 = math.tanh %227 : vector<1x128xf32>
    %229 = arith.mulf %224, %228 : vector<1x128xf32>
    %c0_73 = arith.constant 0 : index
    %c0_74 = arith.constant 0 : index
    %230 = vector.load %arg4[%c0_73, %c0_74] : memref<128x512xf32, #tpu.memory_space<vmem>>, vector<128x512xf32>
    %cst_75 = arith.constant dense<0.000000e+00> : vector<1x512xf32>
    %231 = tpu.matmul %229, %230, %cst_75 {dimension_numbers = #tpu.dot_dimension_numbers<[1], [0], [0], [1], [0, 0, 1, 1], [], []>} : vector<1x128xf32>, vector<128x512xf32>, vector<1x512xf32> -> vector<1x512xf32>
    %c0_76 = arith.constant 0 : index
    %c0_77 = arith.constant 0 : index
    %232 = vector.load %arg5[%c0_76, %c0_77] : memref<128x512xf32, #tpu.memory_space<vmem>>, vector<128x512xf32>
    %cst_78 = arith.constant dense<0.000000e+00> : vector<1x512xf32>
    %233 = tpu.matmul %168, %232, %cst_78 {dimension_numbers = #tpu.dot_dimension_numbers<[1], [0], [0], [1], [0, 0, 1, 1], [], []>} : vector<1x128xf32>, vector<128x512xf32>, vector<1x512xf32> -> vector<1x512xf32>
    %234 = arith.addf %231, %233 : vector<1x512xf32>
    %235 = arith.addf %234, %14 : vector<1x512xf32>
    %236 = vector.extract_strided_slice %235 {offsets = [0, 0], sizes = [1, 128], strides = [1, 1]} : vector<1x512xf32> to vector<1x128xf32>
    %237 = arith.negf %236 : vector<1x128xf32>
    %238 = math.exp %237 : vector<1x128xf32>
    %cst_79 = arith.constant 1.000000e+00 : f32
    %239 = vector.broadcast %cst_79 : f32 to vector<1x128xf32>
    %240 = arith.addf %239, %238 : vector<1x128xf32>
    %241 = arith.divf %239, %240 : vector<1x128xf32>
    %242 = vector.extract_strided_slice %235 {offsets = [0, 128], sizes = [1, 128], strides = [1, 1]} : vector<1x512xf32> to vector<1x128xf32>
    %243 = arith.negf %242 : vector<1x128xf32>
    %244 = math.exp %243 : vector<1x128xf32>
    %cst_80 = arith.constant 1.000000e+00 : f32
    %245 = vector.broadcast %cst_80 : f32 to vector<1x128xf32>
    %246 = arith.addf %245, %244 : vector<1x128xf32>
    %247 = arith.divf %245, %246 : vector<1x128xf32>
    %248 = vector.extract_strided_slice %235 {offsets = [0, 256], sizes = [1, 128], strides = [1, 1]} : vector<1x512xf32> to vector<1x128xf32>
    %249 = math.tanh %248 : vector<1x128xf32>
    %250 = vector.extract_strided_slice %235 {offsets = [0, 384], sizes = [1, 128], strides = [1, 1]} : vector<1x512xf32> to vector<1x128xf32>
    %251 = arith.negf %250 : vector<1x128xf32>
    %252 = math.exp %251 : vector<1x128xf32>
    %cst_81 = arith.constant 1.000000e+00 : f32
    %253 = vector.broadcast %cst_81 : f32 to vector<1x128xf32>
    %254 = arith.addf %253, %252 : vector<1x128xf32>
    %255 = arith.divf %253, %254 : vector<1x128xf32>
    %256 = arith.mulf %247, %166 : vector<1x128xf32>
    %257 = arith.mulf %241, %249 : vector<1x128xf32>
    %258 = arith.addf %256, %257 : vector<1x128xf32>
    %259 = math.tanh %258 : vector<1x128xf32>
    %260 = arith.mulf %255, %259 : vector<1x128xf32>
    %c0_82 = arith.constant 0 : index
    %c0_83 = arith.constant 0 : index
    %261 = vector.load %arg7[%c0_82, %c0_83] : memref<128x128xf32, #tpu.memory_space<vmem>>, vector<128x128xf32>
    %cst_84 = arith.constant dense<0.000000e+00> : vector<1x128xf32>
    %262 = tpu.matmul %260, %261, %cst_84 {dimension_numbers = #tpu.dot_dimension_numbers<[1], [0], [0], [1], [0, 0, 1, 1], [], []>} : vector<1x128xf32>, vector<128x128xf32>, vector<1x128xf32> -> vector<1x128xf32>
    %263 = vector.broadcast %199 : vector<1x1xf32> to vector<1x128xf32>
    %264 = arith.mulf %263, %15 : vector<1x128xf32>
    %265 = arith.addf %262, %264 : vector<1x128xf32>
    %266 = arith.addf %265, %16 : vector<1x128xf32>
    %267 = vector.extract_strided_slice %266 {offsets = [0, 0], sizes = [1, 1], strides = [1, 1]} : vector<1x128xf32> to vector<1x1xf32>
    %268 = arith.negf %267 : vector<1x1xf32>
    %269 = math.exp %268 : vector<1x1xf32>
    %cst_85 = arith.constant 1.000000e+00 : f32
    %270 = vector.broadcast %cst_85 : f32 to vector<1x1xf32>
    %271 = arith.addf %270, %269 : vector<1x1xf32>
    %272 = arith.divf %270, %271 : vector<1x1xf32>
    %273 = vector.extract_strided_slice %266 {offsets = [0, 1], sizes = [1, 1], strides = [1, 1]} : vector<1x128xf32> to vector<1x1xf32>
    %274 = arith.negf %273 : vector<1x1xf32>
    %275 = math.exp %274 : vector<1x1xf32>
    %cst_86 = arith.constant 1.000000e+00 : f32
    %276 = vector.broadcast %cst_86 : f32 to vector<1x1xf32>
    %277 = arith.addf %276, %275 : vector<1x1xf32>
    %278 = arith.divf %276, %277 : vector<1x1xf32>
    %279 = vector.extract_strided_slice %266 {offsets = [0, 2], sizes = [1, 1], strides = [1, 1]} : vector<1x128xf32> to vector<1x1xf32>
    %280 = math.tanh %279 : vector<1x1xf32>
    %281 = vector.extract_strided_slice %266 {offsets = [0, 3], sizes = [1, 1], strides = [1, 1]} : vector<1x128xf32> to vector<1x1xf32>
    %282 = arith.negf %281 : vector<1x1xf32>
    %283 = math.exp %282 : vector<1x1xf32>
    %cst_87 = arith.constant 1.000000e+00 : f32
    %284 = vector.broadcast %cst_87 : f32 to vector<1x1xf32>
    %285 = arith.addf %284, %283 : vector<1x1xf32>
    %286 = arith.divf %284, %285 : vector<1x1xf32>
    %287 = arith.mulf %278, %197 : vector<1x1xf32>
    %288 = arith.mulf %272, %280 : vector<1x1xf32>
    %289 = arith.addf %287, %288 : vector<1x1xf32>
    %290 = math.tanh %289 : vector<1x1xf32>
    %291 = arith.mulf %286, %290 : vector<1x1xf32>
    %c2 = arith.constant 2 : index
    %c0_88 = arith.constant 0 : index
    %292 = vector.load %arg13[%c2, %c0_88] : memref<8x1xf32, #tpu.memory_space<vmem>>, vector<1x1xf32>
    tpu.vector_store %arg13[%c2, %c0_88], %291 {strides = array<i32>} : memref<8x1xf32, #tpu.memory_space<vmem>>, vector<1x1xf32>,
    %293 = vector.extract_strided_slice %7 {offsets = [3, 0], sizes = [1, 512], strides = [1, 1]} : vector<8x512xf32> to vector<1x512xf32>
    %c0_89 = arith.constant 0 : index
    %c0_90 = arith.constant 0 : index
    %294 = vector.load %arg3[%c0_89, %c0_90] : memref<128x512xf32, #tpu.memory_space<vmem>>, vector<128x512xf32>
    %cst_91 = arith.constant dense<0.000000e+00> : vector<1x512xf32>
    %295 = tpu.matmul %229, %294, %cst_91 {dimension_numbers = #tpu.dot_dimension_numbers<[1], [0], [0], [1], [0, 0, 1, 1], [], []>} : vector<1x128xf32>, vector<128x512xf32>, vector<1x512xf32> -> vector<1x512xf32>
    %296 = arith.addf %293, %295 : vector<1x512xf32>
    %297 = vector.extract_strided_slice %296 {offsets = [0, 0], sizes = [1, 128], strides = [1, 1]} : vector<1x512xf32> to vector<1x128xf32>
    %298 = arith.negf %297 : vector<1x128xf32>
    %299 = math.exp %298 : vector<1x128xf32>
    %cst_92 = arith.constant 1.000000e+00 : f32
    %300 = vector.broadcast %cst_92 : f32 to vector<1x128xf32>
    %301 = arith.addf %300, %299 : vector<1x128xf32>
    %302 = arith.divf %300, %301 : vector<1x128xf32>
    %303 = vector.extract_strided_slice %296 {offsets = [0, 128], sizes = [1, 128], strides = [1, 1]} : vector<1x512xf32> to vector<1x128xf32>
    %304 = arith.negf %303 : vector<1x128xf32>
    %305 = math.exp %304 : vector<1x128xf32>
    %cst_93 = arith.constant 1.000000e+00 : f32
    %306 = vector.broadcast %cst_93 : f32 to vector<1x128xf32>
    %307 = arith.addf %306, %305 : vector<1x128xf32>
    %308 = arith.divf %306, %307 : vector<1x128xf32>
    %309 = vector.extract_strided_slice %296 {offsets = [0, 256], sizes = [1, 128], strides = [1, 1]} : vector<1x512xf32> to vector<1x128xf32>
    %310 = math.tanh %309 : vector<1x128xf32>
    %311 = vector.extract_strided_slice %296 {offsets = [0, 384], sizes = [1, 128], strides = [1, 1]} : vector<1x512xf32> to vector<1x128xf32>
    %312 = arith.negf %311 : vector<1x128xf32>
    %313 = math.exp %312 : vector<1x128xf32>
    %cst_94 = arith.constant 1.000000e+00 : f32
    %314 = vector.broadcast %cst_94 : f32 to vector<1x128xf32>
    %315 = arith.addf %314, %313 : vector<1x128xf32>
    %316 = arith.divf %314, %315 : vector<1x128xf32>
    %317 = arith.mulf %308, %227 : vector<1x128xf32>
    %318 = arith.mulf %302, %310 : vector<1x128xf32>
    %319 = arith.addf %317, %318 : vector<1x128xf32>
    %320 = math.tanh %319 : vector<1x128xf32>
    %321 = arith.mulf %316, %320 : vector<1x128xf32>
    %c0_95 = arith.constant 0 : index
    %c0_96 = arith.constant 0 : index
    %322 = vector.load %arg4[%c0_95, %c0_96] : memref<128x512xf32, #tpu.memory_space<vmem>>, vector<128x512xf32>
    %cst_97 = arith.constant dense<0.000000e+00> : vector<1x512xf32>
    %323 = tpu.matmul %321, %322, %cst_97 {dimension_numbers = #tpu.dot_dimension_numbers<[1], [0], [0], [1], [0, 0, 1, 1], [], []>} : vector<1x128xf32>, vector<128x512xf32>, vector<1x512xf32> -> vector<1x512xf32>
    %c0_98 = arith.constant 0 : index
    %c0_99 = arith.constant 0 : index
    %324 = vector.load %arg5[%c0_98, %c0_99] : memref<128x512xf32, #tpu.memory_space<vmem>>, vector<128x512xf32>
    %cst_100 = arith.constant dense<0.000000e+00> : vector<1x512xf32>
    %325 = tpu.matmul %260, %324, %cst_100 {dimension_numbers = #tpu.dot_dimension_numbers<[1], [0], [0], [1], [0, 0, 1, 1], [], []>} : vector<1x128xf32>, vector<128x512xf32>, vector<1x512xf32> -> vector<1x512xf32>
    %326 = arith.addf %323, %325 : vector<1x512xf32>
    %327 = arith.addf %326, %14 : vector<1x512xf32>
    %328 = vector.extract_strided_slice %327 {offsets = [0, 0], sizes = [1, 128], strides = [1, 1]} : vector<1x512xf32> to vector<1x128xf32>
    %329 = arith.negf %328 : vector<1x128xf32>
    %330 = math.exp %329 : vector<1x128xf32>
    %cst_101 = arith.constant 1.000000e+00 : f32
    %331 = vector.broadcast %cst_101 : f32 to vector<1x128xf32>
    %332 = arith.addf %331, %330 : vector<1x128xf32>
    %333 = arith.divf %331, %332 : vector<1x128xf32>
    %334 = vector.extract_strided_slice %327 {offsets = [0, 128], sizes = [1, 128], strides = [1, 1]} : vector<1x512xf32> to vector<1x128xf32>
    %335 = arith.negf %334 : vector<1x128xf32>
    %336 = math.exp %335 : vector<1x128xf32>
    %cst_102 = arith.constant 1.000000e+00 : f32
    %337 = vector.broadcast %cst_102 : f32 to vector<1x128xf32>
    %338 = arith.addf %337, %336 : vector<1x128xf32>
    %339 = arith.divf %337, %338 : vector<1x128xf32>
    %340 = vector.extract_strided_slice %327 {offsets = [0, 256], sizes = [1, 128], strides = [1, 1]} : vector<1x512xf32> to vector<1x128xf32>
    %341 = math.tanh %340 : vector<1x128xf32>
    %342 = vector.extract_strided_slice %327 {offsets = [0, 384], sizes = [1, 128], strides = [1, 1]} : vector<1x512xf32> to vector<1x128xf32>
    %343 = arith.negf %342 : vector<1x128xf32>
    %344 = math.exp %343 : vector<1x128xf32>
    %cst_103 = arith.constant 1.000000e+00 : f32
    %345 = vector.broadcast %cst_103 : f32 to vector<1x128xf32>
    %346 = arith.addf %345, %344 : vector<1x128xf32>
    %347 = arith.divf %345, %346 : vector<1x128xf32>
    %348 = arith.mulf %339, %258 : vector<1x128xf32>
    %349 = arith.mulf %333, %341 : vector<1x128xf32>
    %350 = arith.addf %348, %349 : vector<1x128xf32>
    %351 = math.tanh %350 : vector<1x128xf32>
    %352 = arith.mulf %347, %351 : vector<1x128xf32>
    %c0_104 = arith.constant 0 : index
    %c0_105 = arith.constant 0 : index
    %353 = vector.load %arg7[%c0_104, %c0_105] : memref<128x128xf32, #tpu.memory_space<vmem>>, vector<128x128xf32>
    %cst_106 = arith.constant dense<0.000000e+00> : vector<1x128xf32>
    %354 = tpu.matmul %352, %353, %cst_106 {dimension_numbers = #tpu.dot_dimension_numbers<[1], [0], [0], [1], [0, 0, 1, 1], [], []>} : vector<1x128xf32>, vector<128x128xf32>, vector<1x128xf32> -> vector<1x128xf32>
    %355 = vector.broadcast %291 : vector<1x1xf32> to vector<1x128xf32>
    %356 = arith.mulf %355, %15 : vector<1x128xf32>
    %357 = arith.addf %354, %356 : vector<1x128xf32>
    %358 = arith.addf %357, %16 : vector<1x128xf32>
    %359 = vector.extract_strided_slice %358 {offsets = [0, 0], sizes = [1, 1], strides = [1, 1]} : vector<1x128xf32> to vector<1x1xf32>
    %360 = arith.negf %359 : vector<1x1xf32>
    %361 = math.exp %360 : vector<1x1xf32>
    %cst_107 = arith.constant 1.000000e+00 : f32
    %362 = vector.broadcast %cst_107 : f32 to vector<1x1xf32>
    %363 = arith.addf %362, %361 : vector<1x1xf32>
    %364 = arith.divf %362, %363 : vector<1x1xf32>
    %365 = vector.extract_strided_slice %358 {offsets = [0, 1], sizes = [1, 1], strides = [1, 1]} : vector<1x128xf32> to vector<1x1xf32>
    %366 = arith.negf %365 : vector<1x1xf32>
    %367 = math.exp %366 : vector<1x1xf32>
    %cst_108 = arith.constant 1.000000e+00 : f32
    %368 = vector.broadcast %cst_108 : f32 to vector<1x1xf32>
    %369 = arith.addf %368, %367 : vector<1x1xf32>
    %370 = arith.divf %368, %369 : vector<1x1xf32>
    %371 = vector.extract_strided_slice %358 {offsets = [0, 2], sizes = [1, 1], strides = [1, 1]} : vector<1x128xf32> to vector<1x1xf32>
    %372 = math.tanh %371 : vector<1x1xf32>
    %373 = vector.extract_strided_slice %358 {offsets = [0, 3], sizes = [1, 1], strides = [1, 1]} : vector<1x128xf32> to vector<1x1xf32>
    %374 = arith.negf %373 : vector<1x1xf32>
    %375 = math.exp %374 : vector<1x1xf32>
    %cst_109 = arith.constant 1.000000e+00 : f32
    %376 = vector.broadcast %cst_109 : f32 to vector<1x1xf32>
    %377 = arith.addf %376, %375 : vector<1x1xf32>
    %378 = arith.divf %376, %377 : vector<1x1xf32>
    %379 = arith.mulf %370, %289 : vector<1x1xf32>
    %380 = arith.mulf %364, %372 : vector<1x1xf32>
    %381 = arith.addf %379, %380 : vector<1x1xf32>
    %382 = math.tanh %381 : vector<1x1xf32>
    %383 = arith.mulf %378, %382 : vector<1x1xf32>
    %c3 = arith.constant 3 : index
    %c0_110 = arith.constant 0 : index
    %384 = vector.load %arg13[%c3, %c0_110] : memref<8x1xf32, #tpu.memory_space<vmem>>, vector<1x1xf32>
    tpu.vector_store %arg13[%c3, %c0_110], %383 {strides = array<i32>} : memref<8x1xf32, #tpu.memory_space<vmem>>, vector<1x1xf32>,
    %385 = vector.extract_strided_slice %7 {offsets = [4, 0], sizes = [1, 512], strides = [1, 1]} : vector<8x512xf32> to vector<1x512xf32>
    %c0_111 = arith.constant 0 : index
    %c0_112 = arith.constant 0 : index
    %386 = vector.load %arg3[%c0_111, %c0_112] : memref<128x512xf32, #tpu.memory_space<vmem>>, vector<128x512xf32>
    %cst_113 = arith.constant dense<0.000000e+00> : vector<1x512xf32>
    %387 = tpu.matmul %321, %386, %cst_113 {dimension_numbers = #tpu.dot_dimension_numbers<[1], [0], [0], [1], [0, 0, 1, 1], [], []>} : vector<1x128xf32>, vector<128x512xf32>, vector<1x512xf32> -> vector<1x512xf32>
    %388 = arith.addf %385, %387 : vector<1x512xf32>
    %389 = vector.extract_strided_slice %388 {offsets = [0, 0], sizes = [1, 128], strides = [1, 1]} : vector<1x512xf32> to vector<1x128xf32>
    %390 = arith.negf %389 : vector<1x128xf32>
    %391 = math.exp %390 : vector<1x128xf32>
    %cst_114 = arith.constant 1.000000e+00 : f32
    %392 = vector.broadcast %cst_114 : f32 to vector<1x128xf32>
    %393 = arith.addf %392, %391 : vector<1x128xf32>
    %394 = arith.divf %392, %393 : vector<1x128xf32>
    %395 = vector.extract_strided_slice %388 {offsets = [0, 128], sizes = [1, 128], strides = [1, 1]} : vector<1x512xf32> to vector<1x128xf32>
    %396 = arith.negf %395 : vector<1x128xf32>
    %397 = math.exp %396 : vector<1x128xf32>
    %cst_115 = arith.constant 1.000000e+00 : f32
    %398 = vector.broadcast %cst_115 : f32 to vector<1x128xf32>
    %399 = arith.addf %398, %397 : vector<1x128xf32>
    %400 = arith.divf %398, %399 : vector<1x128xf32>
    %401 = vector.extract_strided_slice %388 {offsets = [0, 256], sizes = [1, 128], strides = [1, 1]} : vector<1x512xf32> to vector<1x128xf32>
    %402 = math.tanh %401 : vector<1x128xf32>
    %403 = vector.extract_strided_slice %388 {offsets = [0, 384], sizes = [1, 128], strides = [1, 1]} : vector<1x512xf32> to vector<1x128xf32>
    %404 = arith.negf %403 : vector<1x128xf32>
    %405 = math.exp %404 : vector<1x128xf32>
    %cst_116 = arith.constant 1.000000e+00 : f32
    %406 = vector.broadcast %cst_116 : f32 to vector<1x128xf32>
    %407 = arith.addf %406, %405 : vector<1x128xf32>
    %408 = arith.divf %406, %407 : vector<1x128xf32>
    %409 = arith.mulf %400, %319 : vector<1x128xf32>
    %410 = arith.mulf %394, %402 : vector<1x128xf32>
    %411 = arith.addf %409, %410 : vector<1x128xf32>
    %412 = math.tanh %411 : vector<1x128xf32>
    %413 = arith.mulf %408, %412 : vector<1x128xf32>
    %c0_117 = arith.constant 0 : index
    %c0_118 = arith.constant 0 : index
    %414 = vector.load %arg4[%c0_117, %c0_118] : memref<128x512xf32, #tpu.memory_space<vmem>>, vector<128x512xf32>
    %cst_119 = arith.constant dense<0.000000e+00> : vector<1x512xf32>
    %415 = tpu.matmul %413, %414, %cst_119 {dimension_numbers = #tpu.dot_dimension_numbers<[1], [0], [0], [1], [0, 0, 1, 1], [], []>} : vector<1x128xf32>, vector<128x512xf32>, vector<1x512xf32> -> vector<1x512xf32>
    %c0_120 = arith.constant 0 : index
    %c0_121 = arith.constant 0 : index
    %416 = vector.load %arg5[%c0_120, %c0_121] : memref<128x512xf32, #tpu.memory_space<vmem>>, vector<128x512xf32>
    %cst_122 = arith.constant dense<0.000000e+00> : vector<1x512xf32>
    %417 = tpu.matmul %352, %416, %cst_122 {dimension_numbers = #tpu.dot_dimension_numbers<[1], [0], [0], [1], [0, 0, 1, 1], [], []>} : vector<1x128xf32>, vector<128x512xf32>, vector<1x512xf32> -> vector<1x512xf32>
    %418 = arith.addf %415, %417 : vector<1x512xf32>
    %419 = arith.addf %418, %14 : vector<1x512xf32>
    %420 = vector.extract_strided_slice %419 {offsets = [0, 0], sizes = [1, 128], strides = [1, 1]} : vector<1x512xf32> to vector<1x128xf32>
    %421 = arith.negf %420 : vector<1x128xf32>
    %422 = math.exp %421 : vector<1x128xf32>
    %cst_123 = arith.constant 1.000000e+00 : f32
    %423 = vector.broadcast %cst_123 : f32 to vector<1x128xf32>
    %424 = arith.addf %423, %422 : vector<1x128xf32>
    %425 = arith.divf %423, %424 : vector<1x128xf32>
    %426 = vector.extract_strided_slice %419 {offsets = [0, 128], sizes = [1, 128], strides = [1, 1]} : vector<1x512xf32> to vector<1x128xf32>
    %427 = arith.negf %426 : vector<1x128xf32>
    %428 = math.exp %427 : vector<1x128xf32>
    %cst_124 = arith.constant 1.000000e+00 : f32
    %429 = vector.broadcast %cst_124 : f32 to vector<1x128xf32>
    %430 = arith.addf %429, %428 : vector<1x128xf32>
    %431 = arith.divf %429, %430 : vector<1x128xf32>
    %432 = vector.extract_strided_slice %419 {offsets = [0, 256], sizes = [1, 128], strides = [1, 1]} : vector<1x512xf32> to vector<1x128xf32>
    %433 = math.tanh %432 : vector<1x128xf32>
    %434 = vector.extract_strided_slice %419 {offsets = [0, 384], sizes = [1, 128], strides = [1, 1]} : vector<1x512xf32> to vector<1x128xf32>
    %435 = arith.negf %434 : vector<1x128xf32>
    %436 = math.exp %435 : vector<1x128xf32>
    %cst_125 = arith.constant 1.000000e+00 : f32
    %437 = vector.broadcast %cst_125 : f32 to vector<1x128xf32>
    %438 = arith.addf %437, %436 : vector<1x128xf32>
    %439 = arith.divf %437, %438 : vector<1x128xf32>
    %440 = arith.mulf %431, %350 : vector<1x128xf32>
    %441 = arith.mulf %425, %433 : vector<1x128xf32>
    %442 = arith.addf %440, %441 : vector<1x128xf32>
    %443 = math.tanh %442 : vector<1x128xf32>
    %444 = arith.mulf %439, %443 : vector<1x128xf32>
    %c0_126 = arith.constant 0 : index
    %c0_127 = arith.constant 0 : index
    %445 = vector.load %arg7[%c0_126, %c0_127] : memref<128x128xf32, #tpu.memory_space<vmem>>, vector<128x128xf32>
    %cst_128 = arith.constant dense<0.000000e+00> : vector<1x128xf32>
    %446 = tpu.matmul %444, %445, %cst_128 {dimension_numbers = #tpu.dot_dimension_numbers<[1], [0], [0], [1], [0, 0, 1, 1], [], []>} : vector<1x128xf32>, vector<128x128xf32>, vector<1x128xf32> -> vector<1x128xf32>
    %447 = vector.broadcast %383 : vector<1x1xf32> to vector<1x128xf32>
    %448 = arith.mulf %447, %15 : vector<1x128xf32>
    %449 = arith.addf %446, %448 : vector<1x128xf32>
    %450 = arith.addf %449, %16 : vector<1x128xf32>
    %451 = vector.extract_strided_slice %450 {offsets = [0, 0], sizes = [1, 1], strides = [1, 1]} : vector<1x128xf32> to vector<1x1xf32>
    %452 = arith.negf %451 : vector<1x1xf32>
    %453 = math.exp %452 : vector<1x1xf32>
    %cst_129 = arith.constant 1.000000e+00 : f32
    %454 = vector.broadcast %cst_129 : f32 to vector<1x1xf32>
    %455 = arith.addf %454, %453 : vector<1x1xf32>
    %456 = arith.divf %454, %455 : vector<1x1xf32>
    %457 = vector.extract_strided_slice %450 {offsets = [0, 1], sizes = [1, 1], strides = [1, 1]} : vector<1x128xf32> to vector<1x1xf32>
    %458 = arith.negf %457 : vector<1x1xf32>
    %459 = math.exp %458 : vector<1x1xf32>
    %cst_130 = arith.constant 1.000000e+00 : f32
    %460 = vector.broadcast %cst_130 : f32 to vector<1x1xf32>
    %461 = arith.addf %460, %459 : vector<1x1xf32>
    %462 = arith.divf %460, %461 : vector<1x1xf32>
    %463 = vector.extract_strided_slice %450 {offsets = [0, 2], sizes = [1, 1], strides = [1, 1]} : vector<1x128xf32> to vector<1x1xf32>
    %464 = math.tanh %463 : vector<1x1xf32>
    %465 = vector.extract_strided_slice %450 {offsets = [0, 3], sizes = [1, 1], strides = [1, 1]} : vector<1x128xf32> to vector<1x1xf32>
    %466 = arith.negf %465 : vector<1x1xf32>
    %467 = math.exp %466 : vector<1x1xf32>
    %cst_131 = arith.constant 1.000000e+00 : f32
    %468 = vector.broadcast %cst_131 : f32 to vector<1x1xf32>
    %469 = arith.addf %468, %467 : vector<1x1xf32>
    %470 = arith.divf %468, %469 : vector<1x1xf32>
    %471 = arith.mulf %462, %381 : vector<1x1xf32>
    %472 = arith.mulf %456, %464 : vector<1x1xf32>
    %473 = arith.addf %471, %472 : vector<1x1xf32>
    %474 = math.tanh %473 : vector<1x1xf32>
    %475 = arith.mulf %470, %474 : vector<1x1xf32>
    %c4 = arith.constant 4 : index
    %c0_132 = arith.constant 0 : index
    %476 = vector.load %arg13[%c4, %c0_132] : memref<8x1xf32, #tpu.memory_space<vmem>>, vector<1x1xf32>
    tpu.vector_store %arg13[%c4, %c0_132], %475 {strides = array<i32>} : memref<8x1xf32, #tpu.memory_space<vmem>>, vector<1x1xf32>,
    %477 = vector.extract_strided_slice %7 {offsets = [5, 0], sizes = [1, 512], strides = [1, 1]} : vector<8x512xf32> to vector<1x512xf32>
    %c0_133 = arith.constant 0 : index
    %c0_134 = arith.constant 0 : index
    %478 = vector.load %arg3[%c0_133, %c0_134] : memref<128x512xf32, #tpu.memory_space<vmem>>, vector<128x512xf32>
    %cst_135 = arith.constant dense<0.000000e+00> : vector<1x512xf32>
    %479 = tpu.matmul %413, %478, %cst_135 {dimension_numbers = #tpu.dot_dimension_numbers<[1], [0], [0], [1], [0, 0, 1, 1], [], []>} : vector<1x128xf32>, vector<128x512xf32>, vector<1x512xf32> -> vector<1x512xf32>
    %480 = arith.addf %477, %479 : vector<1x512xf32>
    %481 = vector.extract_strided_slice %480 {offsets = [0, 0], sizes = [1, 128], strides = [1, 1]} : vector<1x512xf32> to vector<1x128xf32>
    %482 = arith.negf %481 : vector<1x128xf32>
    %483 = math.exp %482 : vector<1x128xf32>
    %cst_136 = arith.constant 1.000000e+00 : f32
    %484 = vector.broadcast %cst_136 : f32 to vector<1x128xf32>
    %485 = arith.addf %484, %483 : vector<1x128xf32>
    %486 = arith.divf %484, %485 : vector<1x128xf32>
    %487 = vector.extract_strided_slice %480 {offsets = [0, 128], sizes = [1, 128], strides = [1, 1]} : vector<1x512xf32> to vector<1x128xf32>
    %488 = arith.negf %487 : vector<1x128xf32>
    %489 = math.exp %488 : vector<1x128xf32>
    %cst_137 = arith.constant 1.000000e+00 : f32
    %490 = vector.broadcast %cst_137 : f32 to vector<1x128xf32>
    %491 = arith.addf %490, %489 : vector<1x128xf32>
    %492 = arith.divf %490, %491 : vector<1x128xf32>
    %493 = vector.extract_strided_slice %480 {offsets = [0, 256], sizes = [1, 128], strides = [1, 1]} : vector<1x512xf32> to vector<1x128xf32>
    %494 = math.tanh %493 : vector<1x128xf32>
    %495 = vector.extract_strided_slice %480 {offsets = [0, 384], sizes = [1, 128], strides = [1, 1]} : vector<1x512xf32> to vector<1x128xf32>
    %496 = arith.negf %495 : vector<1x128xf32>
    %497 = math.exp %496 : vector<1x128xf32>
    %cst_138 = arith.constant 1.000000e+00 : f32
    %498 = vector.broadcast %cst_138 : f32 to vector<1x128xf32>
    %499 = arith.addf %498, %497 : vector<1x128xf32>
    %500 = arith.divf %498, %499 : vector<1x128xf32>
    %501 = arith.mulf %492, %411 : vector<1x128xf32>
    %502 = arith.mulf %486, %494 : vector<1x128xf32>
    %503 = arith.addf %501, %502 : vector<1x128xf32>
    %504 = math.tanh %503 : vector<1x128xf32>
    %505 = arith.mulf %500, %504 : vector<1x128xf32>
    %c0_139 = arith.constant 0 : index
    %c0_140 = arith.constant 0 : index
    %506 = vector.load %arg4[%c0_139, %c0_140] : memref<128x512xf32, #tpu.memory_space<vmem>>, vector<128x512xf32>
    %cst_141 = arith.constant dense<0.000000e+00> : vector<1x512xf32>
    %507 = tpu.matmul %505, %506, %cst_141 {dimension_numbers = #tpu.dot_dimension_numbers<[1], [0], [0], [1], [0, 0, 1, 1], [], []>} : vector<1x128xf32>, vector<128x512xf32>, vector<1x512xf32> -> vector<1x512xf32>
    %c0_142 = arith.constant 0 : index
    %c0_143 = arith.constant 0 : index
    %508 = vector.load %arg5[%c0_142, %c0_143] : memref<128x512xf32, #tpu.memory_space<vmem>>, vector<128x512xf32>
    %cst_144 = arith.constant dense<0.000000e+00> : vector<1x512xf32>
    %509 = tpu.matmul %444, %508, %cst_144 {dimension_numbers = #tpu.dot_dimension_numbers<[1], [0], [0], [1], [0, 0, 1, 1], [], []>} : vector<1x128xf32>, vector<128x512xf32>, vector<1x512xf32> -> vector<1x512xf32>
    %510 = arith.addf %507, %509 : vector<1x512xf32>
    %511 = arith.addf %510, %14 : vector<1x512xf32>
    %512 = vector.extract_strided_slice %511 {offsets = [0, 0], sizes = [1, 128], strides = [1, 1]} : vector<1x512xf32> to vector<1x128xf32>
    %513 = arith.negf %512 : vector<1x128xf32>
    %514 = math.exp %513 : vector<1x128xf32>
    %cst_145 = arith.constant 1.000000e+00 : f32
    %515 = vector.broadcast %cst_145 : f32 to vector<1x128xf32>
    %516 = arith.addf %515, %514 : vector<1x128xf32>
    %517 = arith.divf %515, %516 : vector<1x128xf32>
    %518 = vector.extract_strided_slice %511 {offsets = [0, 128], sizes = [1, 128], strides = [1, 1]} : vector<1x512xf32> to vector<1x128xf32>
    %519 = arith.negf %518 : vector<1x128xf32>
    %520 = math.exp %519 : vector<1x128xf32>
    %cst_146 = arith.constant 1.000000e+00 : f32
    %521 = vector.broadcast %cst_146 : f32 to vector<1x128xf32>
    %522 = arith.addf %521, %520 : vector<1x128xf32>
    %523 = arith.divf %521, %522 : vector<1x128xf32>
    %524 = vector.extract_strided_slice %511 {offsets = [0, 256], sizes = [1, 128], strides = [1, 1]} : vector<1x512xf32> to vector<1x128xf32>
    %525 = math.tanh %524 : vector<1x128xf32>
    %526 = vector.extract_strided_slice %511 {offsets = [0, 384], sizes = [1, 128], strides = [1, 1]} : vector<1x512xf32> to vector<1x128xf32>
    %527 = arith.negf %526 : vector<1x128xf32>
    %528 = math.exp %527 : vector<1x128xf32>
    %cst_147 = arith.constant 1.000000e+00 : f32
    %529 = vector.broadcast %cst_147 : f32 to vector<1x128xf32>
    %530 = arith.addf %529, %528 : vector<1x128xf32>
    %531 = arith.divf %529, %530 : vector<1x128xf32>
    %532 = arith.mulf %523, %442 : vector<1x128xf32>
    %533 = arith.mulf %517, %525 : vector<1x128xf32>
    %534 = arith.addf %532, %533 : vector<1x128xf32>
    %535 = math.tanh %534 : vector<1x128xf32>
    %536 = arith.mulf %531, %535 : vector<1x128xf32>
    %c0_148 = arith.constant 0 : index
    %c0_149 = arith.constant 0 : index
    %537 = vector.load %arg7[%c0_148, %c0_149] : memref<128x128xf32, #tpu.memory_space<vmem>>, vector<128x128xf32>
    %cst_150 = arith.constant dense<0.000000e+00> : vector<1x128xf32>
    %538 = tpu.matmul %536, %537, %cst_150 {dimension_numbers = #tpu.dot_dimension_numbers<[1], [0], [0], [1], [0, 0, 1, 1], [], []>} : vector<1x128xf32>, vector<128x128xf32>, vector<1x128xf32> -> vector<1x128xf32>
    %539 = vector.broadcast %475 : vector<1x1xf32> to vector<1x128xf32>
    %540 = arith.mulf %539, %15 : vector<1x128xf32>
    %541 = arith.addf %538, %540 : vector<1x128xf32>
    %542 = arith.addf %541, %16 : vector<1x128xf32>
    %543 = vector.extract_strided_slice %542 {offsets = [0, 0], sizes = [1, 1], strides = [1, 1]} : vector<1x128xf32> to vector<1x1xf32>
    %544 = arith.negf %543 : vector<1x1xf32>
    %545 = math.exp %544 : vector<1x1xf32>
    %cst_151 = arith.constant 1.000000e+00 : f32
    %546 = vector.broadcast %cst_151 : f32 to vector<1x1xf32>
    %547 = arith.addf %546, %545 : vector<1x1xf32>
    %548 = arith.divf %546, %547 : vector<1x1xf32>
    %549 = vector.extract_strided_slice %542 {offsets = [0, 1], sizes = [1, 1], strides = [1, 1]} : vector<1x128xf32> to vector<1x1xf32>
    %550 = arith.negf %549 : vector<1x1xf32>
    %551 = math.exp %550 : vector<1x1xf32>
    %cst_152 = arith.constant 1.000000e+00 : f32
    %552 = vector.broadcast %cst_152 : f32 to vector<1x1xf32>
    %553 = arith.addf %552, %551 : vector<1x1xf32>
    %554 = arith.divf %552, %553 : vector<1x1xf32>
    %555 = vector.extract_strided_slice %542 {offsets = [0, 2], sizes = [1, 1], strides = [1, 1]} : vector<1x128xf32> to vector<1x1xf32>
    %556 = math.tanh %555 : vector<1x1xf32>
    %557 = vector.extract_strided_slice %542 {offsets = [0, 3], sizes = [1, 1], strides = [1, 1]} : vector<1x128xf32> to vector<1x1xf32>
    %558 = arith.negf %557 : vector<1x1xf32>
    %559 = math.exp %558 : vector<1x1xf32>
    %cst_153 = arith.constant 1.000000e+00 : f32
    %560 = vector.broadcast %cst_153 : f32 to vector<1x1xf32>
    %561 = arith.addf %560, %559 : vector<1x1xf32>
    %562 = arith.divf %560, %561 : vector<1x1xf32>
    %563 = arith.mulf %554, %473 : vector<1x1xf32>
    %564 = arith.mulf %548, %556 : vector<1x1xf32>
    %565 = arith.addf %563, %564 : vector<1x1xf32>
    %566 = math.tanh %565 : vector<1x1xf32>
    %567 = arith.mulf %562, %566 : vector<1x1xf32>
    %c5 = arith.constant 5 : index
    %c0_154 = arith.constant 0 : index
    %568 = vector.load %arg13[%c5, %c0_154] : memref<8x1xf32, #tpu.memory_space<vmem>>, vector<1x1xf32>
    tpu.vector_store %arg13[%c5, %c0_154], %567 {strides = array<i32>} : memref<8x1xf32, #tpu.memory_space<vmem>>, vector<1x1xf32>,
    %569 = vector.extract_strided_slice %7 {offsets = [6, 0], sizes = [1, 512], strides = [1, 1]} : vector<8x512xf32> to vector<1x512xf32>
    %c0_155 = arith.constant 0 : index
    %c0_156 = arith.constant 0 : index
    %570 = vector.load %arg3[%c0_155, %c0_156] : memref<128x512xf32, #tpu.memory_space<vmem>>, vector<128x512xf32>
    %cst_157 = arith.constant dense<0.000000e+00> : vector<1x512xf32>
    %571 = tpu.matmul %505, %570, %cst_157 {dimension_numbers = #tpu.dot_dimension_numbers<[1], [0], [0], [1], [0, 0, 1, 1], [], []>} : vector<1x128xf32>, vector<128x512xf32>, vector<1x512xf32> -> vector<1x512xf32>
    %572 = arith.addf %569, %571 : vector<1x512xf32>
    %573 = vector.extract_strided_slice %572 {offsets = [0, 0], sizes = [1, 128], strides = [1, 1]} : vector<1x512xf32> to vector<1x128xf32>
    %574 = arith.negf %573 : vector<1x128xf32>
    %575 = math.exp %574 : vector<1x128xf32>
    %cst_158 = arith.constant 1.000000e+00 : f32
    %576 = vector.broadcast %cst_158 : f32 to vector<1x128xf32>
    %577 = arith.addf %576, %575 : vector<1x128xf32>
    %578 = arith.divf %576, %577 : vector<1x128xf32>
    %579 = vector.extract_strided_slice %572 {offsets = [0, 128], sizes = [1, 128], strides = [1, 1]} : vector<1x512xf32> to vector<1x128xf32>
    %580 = arith.negf %579 : vector<1x128xf32>
    %581 = math.exp %580 : vector<1x128xf32>
    %cst_159 = arith.constant 1.000000e+00 : f32
    %582 = vector.broadcast %cst_159 : f32 to vector<1x128xf32>
    %583 = arith.addf %582, %581 : vector<1x128xf32>
    %584 = arith.divf %582, %583 : vector<1x128xf32>
    %585 = vector.extract_strided_slice %572 {offsets = [0, 256], sizes = [1, 128], strides = [1, 1]} : vector<1x512xf32> to vector<1x128xf32>
    %586 = math.tanh %585 : vector<1x128xf32>
    %587 = vector.extract_strided_slice %572 {offsets = [0, 384], sizes = [1, 128], strides = [1, 1]} : vector<1x512xf32> to vector<1x128xf32>
    %588 = arith.negf %587 : vector<1x128xf32>
    %589 = math.exp %588 : vector<1x128xf32>
    %cst_160 = arith.constant 1.000000e+00 : f32
    %590 = vector.broadcast %cst_160 : f32 to vector<1x128xf32>
    %591 = arith.addf %590, %589 : vector<1x128xf32>
    %592 = arith.divf %590, %591 : vector<1x128xf32>
    %593 = arith.mulf %584, %503 : vector<1x128xf32>
    %594 = arith.mulf %578, %586 : vector<1x128xf32>
    %595 = arith.addf %593, %594 : vector<1x128xf32>
    %596 = math.tanh %595 : vector<1x128xf32>
    %597 = arith.mulf %592, %596 : vector<1x128xf32>
    %c0_161 = arith.constant 0 : index
    %c0_162 = arith.constant 0 : index
    %598 = vector.load %arg4[%c0_161, %c0_162] : memref<128x512xf32, #tpu.memory_space<vmem>>, vector<128x512xf32>
    %cst_163 = arith.constant dense<0.000000e+00> : vector<1x512xf32>
    %599 = tpu.matmul %597, %598, %cst_163 {dimension_numbers = #tpu.dot_dimension_numbers<[1], [0], [0], [1], [0, 0, 1, 1], [], []>} : vector<1x128xf32>, vector<128x512xf32>, vector<1x512xf32> -> vector<1x512xf32>
    %c0_164 = arith.constant 0 : index
    %c0_165 = arith.constant 0 : index
    %600 = vector.load %arg5[%c0_164, %c0_165] : memref<128x512xf32, #tpu.memory_space<vmem>>, vector<128x512xf32>
    %cst_166 = arith.constant dense<0.000000e+00> : vector<1x512xf32>
    %601 = tpu.matmul %536, %600, %cst_166 {dimension_numbers = #tpu.dot_dimension_numbers<[1], [0], [0], [1], [0, 0, 1, 1], [], []>} : vector<1x128xf32>, vector<128x512xf32>, vector<1x512xf32> -> vector<1x512xf32>
    %602 = arith.addf %599, %601 : vector<1x512xf32>
    %603 = arith.addf %602, %14 : vector<1x512xf32>
    %604 = vector.extract_strided_slice %603 {offsets = [0, 0], sizes = [1, 128], strides = [1, 1]} : vector<1x512xf32> to vector<1x128xf32>
    %605 = arith.negf %604 : vector<1x128xf32>
    %606 = math.exp %605 : vector<1x128xf32>
    %cst_167 = arith.constant 1.000000e+00 : f32
    %607 = vector.broadcast %cst_167 : f32 to vector<1x128xf32>
    %608 = arith.addf %607, %606 : vector<1x128xf32>
    %609 = arith.divf %607, %608 : vector<1x128xf32>
    %610 = vector.extract_strided_slice %603 {offsets = [0, 128], sizes = [1, 128], strides = [1, 1]} : vector<1x512xf32> to vector<1x128xf32>
    %611 = arith.negf %610 : vector<1x128xf32>
    %612 = math.exp %611 : vector<1x128xf32>
    %cst_168 = arith.constant 1.000000e+00 : f32
    %613 = vector.broadcast %cst_168 : f32 to vector<1x128xf32>
    %614 = arith.addf %613, %612 : vector<1x128xf32>
    %615 = arith.divf %613, %614 : vector<1x128xf32>
    %616 = vector.extract_strided_slice %603 {offsets = [0, 256], sizes = [1, 128], strides = [1, 1]} : vector<1x512xf32> to vector<1x128xf32>
    %617 = math.tanh %616 : vector<1x128xf32>
    %618 = vector.extract_strided_slice %603 {offsets = [0, 384], sizes = [1, 128], strides = [1, 1]} : vector<1x512xf32> to vector<1x128xf32>
    %619 = arith.negf %618 : vector<1x128xf32>
    %620 = math.exp %619 : vector<1x128xf32>
    %cst_169 = arith.constant 1.000000e+00 : f32
    %621 = vector.broadcast %cst_169 : f32 to vector<1x128xf32>
    %622 = arith.addf %621, %620 : vector<1x128xf32>
    %623 = arith.divf %621, %622 : vector<1x128xf32>
    %624 = arith.mulf %615, %534 : vector<1x128xf32>
    %625 = arith.mulf %609, %617 : vector<1x128xf32>
    %626 = arith.addf %624, %625 : vector<1x128xf32>
    %627 = math.tanh %626 : vector<1x128xf32>
    %628 = arith.mulf %623, %627 : vector<1x128xf32>
    %c0_170 = arith.constant 0 : index
    %c0_171 = arith.constant 0 : index
    %629 = vector.load %arg7[%c0_170, %c0_171] : memref<128x128xf32, #tpu.memory_space<vmem>>, vector<128x128xf32>
    %cst_172 = arith.constant dense<0.000000e+00> : vector<1x128xf32>
    %630 = tpu.matmul %628, %629, %cst_172 {dimension_numbers = #tpu.dot_dimension_numbers<[1], [0], [0], [1], [0, 0, 1, 1], [], []>} : vector<1x128xf32>, vector<128x128xf32>, vector<1x128xf32> -> vector<1x128xf32>
    %631 = vector.broadcast %567 : vector<1x1xf32> to vector<1x128xf32>
    %632 = arith.mulf %631, %15 : vector<1x128xf32>
    %633 = arith.addf %630, %632 : vector<1x128xf32>
    %634 = arith.addf %633, %16 : vector<1x128xf32>
    %635 = vector.extract_strided_slice %634 {offsets = [0, 0], sizes = [1, 1], strides = [1, 1]} : vector<1x128xf32> to vector<1x1xf32>
    %636 = arith.negf %635 : vector<1x1xf32>
    %637 = math.exp %636 : vector<1x1xf32>
    %cst_173 = arith.constant 1.000000e+00 : f32
    %638 = vector.broadcast %cst_173 : f32 to vector<1x1xf32>
    %639 = arith.addf %638, %637 : vector<1x1xf32>
    %640 = arith.divf %638, %639 : vector<1x1xf32>
    %641 = vector.extract_strided_slice %634 {offsets = [0, 1], sizes = [1, 1], strides = [1, 1]} : vector<1x128xf32> to vector<1x1xf32>
    %642 = arith.negf %641 : vector<1x1xf32>
    %643 = math.exp %642 : vector<1x1xf32>
    %cst_174 = arith.constant 1.000000e+00 : f32
    %644 = vector.broadcast %cst_174 : f32 to vector<1x1xf32>
    %645 = arith.addf %644, %643 : vector<1x1xf32>
    %646 = arith.divf %644, %645 : vector<1x1xf32>
    %647 = vector.extract_strided_slice %634 {offsets = [0, 2], sizes = [1, 1], strides = [1, 1]} : vector<1x128xf32> to vector<1x1xf32>
    %648 = math.tanh %647 : vector<1x1xf32>
    %649 = vector.extract_strided_slice %634 {offsets = [0, 3], sizes = [1, 1], strides = [1, 1]} : vector<1x128xf32> to vector<1x1xf32>
    %650 = arith.negf %649 : vector<1x1xf32>
    %651 = math.exp %650 : vector<1x1xf32>
    %cst_175 = arith.constant 1.000000e+00 : f32
    %652 = vector.broadcast %cst_175 : f32 to vector<1x1xf32>
    %653 = arith.addf %652, %651 : vector<1x1xf32>
    %654 = arith.divf %652, %653 : vector<1x1xf32>
    %655 = arith.mulf %646, %565 : vector<1x1xf32>
    %656 = arith.mulf %640, %648 : vector<1x1xf32>
    %657 = arith.addf %655, %656 : vector<1x1xf32>
    %658 = math.tanh %657 : vector<1x1xf32>
    %659 = arith.mulf %654, %658 : vector<1x1xf32>
    %c6 = arith.constant 6 : index
    %c0_176 = arith.constant 0 : index
    %660 = vector.load %arg13[%c6, %c0_176] : memref<8x1xf32, #tpu.memory_space<vmem>>, vector<1x1xf32>
    tpu.vector_store %arg13[%c6, %c0_176], %659 {strides = array<i32>} : memref<8x1xf32, #tpu.memory_space<vmem>>, vector<1x1xf32>,
    %661 = vector.extract_strided_slice %7 {offsets = [7, 0], sizes = [1, 512], strides = [1, 1]} : vector<8x512xf32> to vector<1x512xf32>
    %c0_177 = arith.constant 0 : index
    %c0_178 = arith.constant 0 : index
    %662 = vector.load %arg3[%c0_177, %c0_178] : memref<128x512xf32, #tpu.memory_space<vmem>>, vector<128x512xf32>
    %cst_179 = arith.constant dense<0.000000e+00> : vector<1x512xf32>
    %663 = tpu.matmul %597, %662, %cst_179 {dimension_numbers = #tpu.dot_dimension_numbers<[1], [0], [0], [1], [0, 0, 1, 1], [], []>} : vector<1x128xf32>, vector<128x512xf32>, vector<1x512xf32> -> vector<1x512xf32>
    %664 = arith.addf %661, %663 : vector<1x512xf32>
    %665 = vector.extract_strided_slice %664 {offsets = [0, 0], sizes = [1, 128], strides = [1, 1]} : vector<1x512xf32> to vector<1x128xf32>
    %666 = arith.negf %665 : vector<1x128xf32>
    %667 = math.exp %666 : vector<1x128xf32>
    %cst_180 = arith.constant 1.000000e+00 : f32
    %668 = vector.broadcast %cst_180 : f32 to vector<1x128xf32>
    %669 = arith.addf %668, %667 : vector<1x128xf32>
    %670 = arith.divf %668, %669 : vector<1x128xf32>
    %671 = vector.extract_strided_slice %664 {offsets = [0, 128], sizes = [1, 128], strides = [1, 1]} : vector<1x512xf32> to vector<1x128xf32>
    %672 = arith.negf %671 : vector<1x128xf32>
    %673 = math.exp %672 : vector<1x128xf32>
    %cst_181 = arith.constant 1.000000e+00 : f32
    %674 = vector.broadcast %cst_181 : f32 to vector<1x128xf32>
    %675 = arith.addf %674, %673 : vector<1x128xf32>
    %676 = arith.divf %674, %675 : vector<1x128xf32>
    %677 = vector.extract_strided_slice %664 {offsets = [0, 256], sizes = [1, 128], strides = [1, 1]} : vector<1x512xf32> to vector<1x128xf32>
    %678 = math.tanh %677 : vector<1x128xf32>
    %679 = vector.extract_strided_slice %664 {offsets = [0, 384], sizes = [1, 128], strides = [1, 1]} : vector<1x512xf32> to vector<1x128xf32>
    %680 = arith.negf %679 : vector<1x128xf32>
    %681 = math.exp %680 : vector<1x128xf32>
    %cst_182 = arith.constant 1.000000e+00 : f32
    %682 = vector.broadcast %cst_182 : f32 to vector<1x128xf32>
    %683 = arith.addf %682, %681 : vector<1x128xf32>
    %684 = arith.divf %682, %683 : vector<1x128xf32>
    %685 = arith.mulf %676, %595 : vector<1x128xf32>
    %686 = arith.mulf %670, %678 : vector<1x128xf32>
    %687 = arith.addf %685, %686 : vector<1x128xf32>
    %688 = math.tanh %687 : vector<1x128xf32>
    %689 = arith.mulf %684, %688 : vector<1x128xf32>
    %c0_183 = arith.constant 0 : index
    %c0_184 = arith.constant 0 : index
    %690 = vector.load %arg4[%c0_183, %c0_184] : memref<128x512xf32, #tpu.memory_space<vmem>>, vector<128x512xf32>
    %cst_185 = arith.constant dense<0.000000e+00> : vector<1x512xf32>
    %691 = tpu.matmul %689, %690, %cst_185 {dimension_numbers = #tpu.dot_dimension_numbers<[1], [0], [0], [1], [0, 0, 1, 1], [], []>} : vector<1x128xf32>, vector<128x512xf32>, vector<1x512xf32> -> vector<1x512xf32>
    %c0_186 = arith.constant 0 : index
    %c0_187 = arith.constant 0 : index
    %692 = vector.load %arg5[%c0_186, %c0_187] : memref<128x512xf32, #tpu.memory_space<vmem>>, vector<128x512xf32>
    %cst_188 = arith.constant dense<0.000000e+00> : vector<1x512xf32>
    %693 = tpu.matmul %628, %692, %cst_188 {dimension_numbers = #tpu.dot_dimension_numbers<[1], [0], [0], [1], [0, 0, 1, 1], [], []>} : vector<1x128xf32>, vector<128x512xf32>, vector<1x512xf32> -> vector<1x512xf32>
    %694 = arith.addf %691, %693 : vector<1x512xf32>
    %695 = arith.addf %694, %14 : vector<1x512xf32>
    %696 = vector.extract_strided_slice %695 {offsets = [0, 0], sizes = [1, 128], strides = [1, 1]} : vector<1x512xf32> to vector<1x128xf32>
    %697 = arith.negf %696 : vector<1x128xf32>
    %698 = math.exp %697 : vector<1x128xf32>
    %cst_189 = arith.constant 1.000000e+00 : f32
    %699 = vector.broadcast %cst_189 : f32 to vector<1x128xf32>
    %700 = arith.addf %699, %698 : vector<1x128xf32>
    %701 = arith.divf %699, %700 : vector<1x128xf32>
    %702 = vector.extract_strided_slice %695 {offsets = [0, 128], sizes = [1, 128], strides = [1, 1]} : vector<1x512xf32> to vector<1x128xf32>
    %703 = arith.negf %702 : vector<1x128xf32>
    %704 = math.exp %703 : vector<1x128xf32>
    %cst_190 = arith.constant 1.000000e+00 : f32
    %705 = vector.broadcast %cst_190 : f32 to vector<1x128xf32>
    %706 = arith.addf %705, %704 : vector<1x128xf32>
    %707 = arith.divf %705, %706 : vector<1x128xf32>
    %708 = vector.extract_strided_slice %695 {offsets = [0, 256], sizes = [1, 128], strides = [1, 1]} : vector<1x512xf32> to vector<1x128xf32>
    %709 = math.tanh %708 : vector<1x128xf32>
    %710 = vector.extract_strided_slice %695 {offsets = [0, 384], sizes = [1, 128], strides = [1, 1]} : vector<1x512xf32> to vector<1x128xf32>
    %711 = arith.negf %710 : vector<1x128xf32>
    %712 = math.exp %711 : vector<1x128xf32>
    %cst_191 = arith.constant 1.000000e+00 : f32
    %713 = vector.broadcast %cst_191 : f32 to vector<1x128xf32>
    %714 = arith.addf %713, %712 : vector<1x128xf32>
    %715 = arith.divf %713, %714 : vector<1x128xf32>
    %716 = arith.mulf %707, %626 : vector<1x128xf32>
    %717 = arith.mulf %701, %709 : vector<1x128xf32>
    %718 = arith.addf %716, %717 : vector<1x128xf32>
    %719 = math.tanh %718 : vector<1x128xf32>
    %720 = arith.mulf %715, %719 : vector<1x128xf32>
    %c0_192 = arith.constant 0 : index
    %c0_193 = arith.constant 0 : index
    %721 = vector.load %arg7[%c0_192, %c0_193] : memref<128x128xf32, #tpu.memory_space<vmem>>, vector<128x128xf32>
    %cst_194 = arith.constant dense<0.000000e+00> : vector<1x128xf32>
    %722 = tpu.matmul %720, %721, %cst_194 {dimension_numbers = #tpu.dot_dimension_numbers<[1], [0], [0], [1], [0, 0, 1, 1], [], []>} : vector<1x128xf32>, vector<128x128xf32>, vector<1x128xf32> -> vector<1x128xf32>
    %723 = vector.broadcast %659 : vector<1x1xf32> to vector<1x128xf32>
    %724 = arith.mulf %723, %15 : vector<1x128xf32>
    %725 = arith.addf %722, %724 : vector<1x128xf32>
    %726 = arith.addf %725, %16 : vector<1x128xf32>
    %727 = vector.extract_strided_slice %726 {offsets = [0, 0], sizes = [1, 1], strides = [1, 1]} : vector<1x128xf32> to vector<1x1xf32>
    %728 = arith.negf %727 : vector<1x1xf32>
    %729 = math.exp %728 : vector<1x1xf32>
    %cst_195 = arith.constant 1.000000e+00 : f32
    %730 = vector.broadcast %cst_195 : f32 to vector<1x1xf32>
    %731 = arith.addf %730, %729 : vector<1x1xf32>
    %732 = arith.divf %730, %731 : vector<1x1xf32>
    %733 = vector.extract_strided_slice %726 {offsets = [0, 1], sizes = [1, 1], strides = [1, 1]} : vector<1x128xf32> to vector<1x1xf32>
    %734 = arith.negf %733 : vector<1x1xf32>
    %735 = math.exp %734 : vector<1x1xf32>
    %cst_196 = arith.constant 1.000000e+00 : f32
    %736 = vector.broadcast %cst_196 : f32 to vector<1x1xf32>
    %737 = arith.addf %736, %735 : vector<1x1xf32>
    %738 = arith.divf %736, %737 : vector<1x1xf32>
    %739 = vector.extract_strided_slice %726 {offsets = [0, 2], sizes = [1, 1], strides = [1, 1]} : vector<1x128xf32> to vector<1x1xf32>
    %740 = math.tanh %739 : vector<1x1xf32>
    %741 = vector.extract_strided_slice %726 {offsets = [0, 3], sizes = [1, 1], strides = [1, 1]} : vector<1x128xf32> to vector<1x1xf32>
    %742 = arith.negf %741 : vector<1x1xf32>
    %743 = math.exp %742 : vector<1x1xf32>
    %cst_197 = arith.constant 1.000000e+00 : f32
    %744 = vector.broadcast %cst_197 : f32 to vector<1x1xf32>
    %745 = arith.addf %744, %743 : vector<1x1xf32>
    %746 = arith.divf %744, %745 : vector<1x1xf32>
    %747 = arith.mulf %738, %657 : vector<1x1xf32>
    %748 = arith.mulf %732, %740 : vector<1x1xf32>
    %749 = arith.addf %747, %748 : vector<1x1xf32>
    %750 = math.tanh %749 : vector<1x1xf32>
    %751 = arith.mulf %746, %750 : vector<1x1xf32>
    %c7 = arith.constant 7 : index
    %c0_198 = arith.constant 0 : index
    %752 = vector.load %arg13[%c7, %c0_198] : memref<8x1xf32, #tpu.memory_space<vmem>>, vector<1x1xf32>
    tpu.vector_store %arg13[%c7, %c0_198], %751 {strides = array<i32>} : memref<8x1xf32, #tpu.memory_space<vmem>>, vector<1x1xf32>,
    return
  }
}

</mosaic_0001>

<llo_original>
// kernel: net_forward_pallas.1
$region0: #{net_forward_pallas.1}
  #allocation0 [shape = 'u32[]', space=smem, size = 0x4, offset = 0x4, fixed_abs, tag = 'smem constant byte address 0x4 - core index']
  #allocation1 [shape = 'u32[72,128]{1,0:T(1,128)}', space=vmem, size = 0x9000, scoped, tag = 'internal scratch']
  %s0 = inlined_call_operand.vmem [shape: f32[8,1], index: 0, kind: input, shape index: {}]
  %s1 = inlined_call_operand.vmem [shape: f32[1,512], index: 1, kind: input, shape index: {}]
  %s2 = inlined_call_operand.vmem [shape: f32[1,512], index: 2, kind: input, shape index: {}]
  %s3 = inlined_call_operand.hbm [shape: f32[128,512], index: 3, kind: input, shape index: {}]
  %s4 = inlined_call_operand.hbm [shape: f32[128,512], index: 4, kind: input, shape index: {}]
  %s5 = inlined_call_operand.hbm [shape: f32[128,512], index: 5, kind: input, shape index: {}]
  %s6 = inlined_call_operand.vmem [shape: f32[1,512], index: 6, kind: input, shape index: {}]
  %s7 = inlined_call_operand.hbm [shape: f32[128,128], index: 7, kind: input, shape index: {}]
  %s8 = inlined_call_operand.vmem [shape: f32[1,128], index: 8, kind: input, shape index: {}]
  %s9 = inlined_call_operand.vmem [shape: f32[1,128], index: 9, kind: input, shape index: {}]
  %s10 = inlined_call_operand.vmem [shape: f32[2,128], index: 10, kind: input, shape index: {}]
  %s11 = inlined_call_operand.vmem [shape: f32[2,128], index: 11, kind: input, shape index: {}]
  %s12 = inlined_call_operand.vmem [shape: f32[1,128], index: 12, kind: input, shape index: {}]
  %s13 = inlined_call_operand.vmem [shape: f32[8,1], index: 13, kind: output, shape index: {}]
  %s14 = sld [smem:[#allocation0]]
  $region78: #{net_forward_pallas.1} parent=0
    _
  %s16 = ssub.s32 1, %s14
  %s17 = scalar_select 0, %s16, %s14
  $region1: #{net_forward_pallas.1} parent=0
    #allocation2 [shape = 'u8[262144]{0}', space=vmem, size = 0x40000, scoped, tag = 'input window, operand 3, single buffered']
    #allocation3 [shape = 's32[1]{0}', space=sflag, size = 0x4, scoped, tag = 'scoped memory for net_forward_pallas.1']
    #allocation4 [shape = 'u8[262144]{0}', space=vmem, size = 0x40000, scoped, tag = 'input window, operand 4, single buffered']
    #allocation5 [shape = 's32[1]{0}', space=sflag, size = 0x4, scoped, tag = 'scoped memory for net_forward_pallas.1']
    #allocation6 [shape = 'u8[262144]{0}', space=vmem, size = 0x40000, scoped, tag = 'input window, operand 5, single buffered']
    #allocation7 [shape = 'u8[65536]{0}', space=vmem, size = 0x10000, scoped, tag = 'input window, operand 7, single buffered']
    #allocation8 [shape = 's32[1]{0}', space=sflag, size = 0x4, scoped, tag = 'scoped memory for net_forward_pallas.1']
    %18 = vsyncpa [#allocation3], 0
    %19 = vsyncpa [#allocation5], 0
    %20 = vsyncpa [#allocation8], 0
    // Predicated region
    $region2: #{net_forward_pallas.1} parent=1 // pred_check
      _
    $region3: #{net_forward_pallas.1} parent=1 // pred_check_branch
      %22 = sbr.rel (0) target = $region5
    $region4: #{net_forward_pallas.1} parent=1 // pred_region
      _
    $region5: #{net_forward_pallas.1} parent=1 // pred_fallthru
      _
    // Predicated region
    $region6: #{net_forward_pallas.1} parent=1 // pred_check
      _
    $region7: #{net_forward_pallas.1} parent=1 // pred_check_branch
      %24 = sbr.rel (0) target = $region9
    $region8: #{net_forward_pallas.1} parent=1 // pred_region
      _
    $region9: #{net_forward_pallas.1} parent=1 // pred_fallthru
      _
    // Predicated region
    $region10: #{net_forward_pallas.1} parent=1 // pred_check
      _
    $region11: #{net_forward_pallas.1} parent=1 // pred_check_branch
      %26 = sbr.rel (0) target = $region13
    $region12: #{net_forward_pallas.1} parent=1 // pred_region
      _
    $region13: #{net_forward_pallas.1} parent=1 // pred_fallthru
      _
    // Predicated region
    $region14: #{net_forward_pallas.1} parent=1 // pred_check
      _
    $region15: #{net_forward_pallas.1} parent=1 // pred_check_branch
      %28 = sbr.rel (0) target = $region17
    $region16: #{net_forward_pallas.1} parent=1 // pred_region
      %30 = vsyncadd [#allocation3], 0
      %s31 = sshll.u32 %s3, 4
      %s32 = int_to_ptr.hbm [resolvable:$true] %s31
      %s33 = sshll.u32 [#allocation2], 4
      %s34 = int_to_ptr.vmem [resolvable:$true] %s33
      %39 = dma.hbm_to_vmem [thread:$0]  %s32, 8192, %s34, [#allocation3], 512, 512, 32
    $region17: #{net_forward_pallas.1} parent=1 // pred_fallthru
      _
    // Predicated region
    $region18: #{net_forward_pallas.1} parent=1 // pred_check
      _
    $region19: #{net_forward_pallas.1} parent=1 // pred_check_branch
      %41 = sbr.rel (0) target = $region21
    $region20: #{net_forward_pallas.1} parent=1 // pred_region
      %43 = vsyncadd [#allocation5], 0
      %s44 = sshll.u32 %s4, 4
      %s45 = int_to_ptr.hbm [resolvable:$true] %s44
      %s46 = sshll.u32 [#allocation4], 4
      %s47 = int_to_ptr.vmem [resolvable:$true] %s46
      %52 = dma.hbm_to_vmem [thread:$0]  %s45, 8192, %s47, [#allocation5], 512, 512, 32
    $region21: #{net_forward_pallas.1} parent=1 // pred_fallthru
      _
    // Predicated region
    $region22: #{net_forward_pallas.1} parent=1 // pred_check
      _
    $region23: #{net_forward_pallas.1} parent=1 // pred_check_branch
      %54 = sbr.rel (0) target = $region25
    $region24: #{net_forward_pallas.1} parent=1 // pred_region
      %56 = vsyncadd [#allocation5], 0
      %s57 = sshll.u32 %s5, 4
      %s58 = int_to_ptr.hbm [resolvable:$true] %s57
      %s59 = sshll.u32 [#allocation6], 4
      %s60 = int_to_ptr.vmem [resolvable:$true] %s59
      %65 = dma.hbm_to_vmem [thread:$0]  %s58, 8192, %s60, [#allocation5], 512, 512, 32
    $region25: #{net_forward_pallas.1} parent=1 // pred_fallthru
      _
    // Predicated region
    $region26: #{net_forward_pallas.1} parent=1 // pred_check
      _
    $region27: #{net_forward_pallas.1} parent=1 // pred_check_branch
      %67 = sbr.rel (0) target = $region29
    $region28: #{net_forward_pallas.1} parent=1 // pred_region
      _
    $region29: #{net_forward_pallas.1} parent=1 // pred_fallthru
      _
    // Predicated region
    $region30: #{net_forward_pallas.1} parent=1 // pred_check
      _
    $region31: #{net_forward_pallas.1} parent=1 // pred_check_branch
      %69 = sbr.rel (0) target = $region33
    $region32: #{net_forward_pallas.1} parent=1 // pred_region
      %71 = vsyncadd [#allocation8], 0
      %s72 = sshll.u32 %s7, 4
      %s73 = int_to_ptr.hbm [resolvable:$true] %s72
      %s74 = sshll.u32 [#allocation7], 4
      %s75 = int_to_ptr.vmem [resolvable:$true] %s74
      %80 = dma.hbm_to_vmem [thread:$0]  %s73, 2048, %s75, [#allocation8], 128, 128, 8
    $region33: #{net_forward_pallas.1} parent=1 // pred_fallthru
      _
    // Predicated region
    $region34: #{net_forward_pallas.1} parent=1 // pred_check
      _
    $region35: #{net_forward_pallas.1} parent=1 // pred_check_branch
      %82 = sbr.rel (0) target = $region37
    $region36: #{net_forward_pallas.1} parent=1 // pred_region
      _
    $region37: #{net_forward_pallas.1} parent=1 // pred_fallthru
      _
    // Predicated region
    $region38: #{net_forward_pallas.1} parent=1 // pred_check
      _
    $region39: #{net_forward_pallas.1} parent=1 // pred_check_branch
      %84 = sbr.rel (0) target = $region41
    $region40: #{net_forward_pallas.1} parent=1 // pred_region
      _
    $region41: #{net_forward_pallas.1} parent=1 // pred_fallthru
      _
    // Predicated region
    $region42: #{net_forward_pallas.1} parent=1 // pred_check
      _
    $region43: #{net_forward_pallas.1} parent=1 // pred_check_branch
      %86 = sbr.rel (0) target = $region45
    $region44: #{net_forward_pallas.1} parent=1 // pred_region
      _
    $region45: #{net_forward_pallas.1} parent=1 // pred_fallthru
      _
    // Predicated region
    $region46: #{net_forward_pallas.1} parent=1 // pred_check
      _
    $region47: #{net_forward_pallas.1} parent=1 // pred_check_branch
      %88 = sbr.rel (0) target = $region49
    $region48: #{net_forward_pallas.1} parent=1 // pred_region
      _
    $region49: #{net_forward_pallas.1} parent=1 // pred_fallthru
      _
    // Predicated region
    $region50: #{net_forward_pallas.1} parent=1 // pred_check
      _
    $region51: #{net_forward_pallas.1} parent=1 // pred_check_branch
      %90 = sbr.rel (0) target = $region53
    $region52: #{net_forward_pallas.1} parent=1 // pred_region
      _
    $region53: #{net_forward_pallas.1} parent=1 // pred_fallthru
      _
    // Predicated region
    $region54: #{net_forward_pallas.1} parent=1 // pred_check
      _
    $region55: #{net_forward_pallas.1} parent=1 // pred_check_branch
      %92 = sbr.rel (0) target = $region57
    $region56: #{net_forward_pallas.1} parent=1 // pred_region
      %94 = dma.done [#allocation3], 8192
    $region57: #{net_forward_pallas.1} parent=1 // pred_fallthru
      _
    // Predicated region
    $region58: #{net_forward_pallas.1} parent=1 // pred_check
      _
    $region59: #{net_forward_pallas.1} parent=1 // pred_check_branch
      %96 = sbr.rel (0) target = $region61
    $region60: #{net_forward_pallas.1} parent=1 // pred_region
      %98 = dma.done [#allocation5], 8192
    $region61: #{net_forward_pallas.1} parent=1 // pred_fallthru
      _
    // Predicated region
    $region62: #{net_forward_pallas.1} parent=1 // pred_check
      _
    $region63: #{net_forward_pallas.1} parent=1 // pred_check_branch
      %100 = sbr.rel (0) target = $region65
    $region64: #{net_forward_pallas.1} parent=1 // pred_region
      %102 = dma.done [#allocation5], 8192
    $region65: #{net_forward_pallas.1} parent=1 // pred_fallthru
      _
    // Predicated region
    $region66: #{net_forward_pallas.1} parent=1 // pred_check
      _
    $region67: #{net_forward_pallas.1} parent=1 // pred_check_branch
      %104 = sbr.rel (0) target = $region69
    $region68: #{net_forward_pallas.1} parent=1 // pred_region
      %106 = dma.done [#allocation8], 2048
    $region69: #{net_forward_pallas.1} parent=1 // pred_fallthru
      _
    %v107 = vld [vmem:[%s0] sm:$0xff]
    %v108 = vld [vmem:[%s1] sm:$0xf]
    %110 = vset.pattern.permute.xlu0 0
    %111 = vperm.xlu0 %110, %v107
    %v112 = vpop.permute.xlu0 %111
    %v115 = vperm.slane %v108, 0
    %v116 = vperm.slane %v108, 1
    %v117 = vperm.slane %v108, 2
    %v118 = vperm.slane %v108, 3
    %v123 = vmul.f32 %v112, %v115
    %v124 = vmul.f32 %v112, %v116
    %v125 = vmul.f32 %v112, %v117
    %v126 = vmul.f32 %v112, %v118
    %v127 = vld [vmem:[%s2] sm:$0xf]
    %v129 = vperm.slane %v127, 0
    %v130 = vperm.slane %v127, 1
    %v131 = vperm.slane %v127, 2
    %v132 = vperm.slane %v127, 3
    %v137 = vadd.f32 %v123, %v129
    %v138 = vadd.f32 %v124, %v130
    %v139 = vadd.f32 %v125, %v131
    %v140 = vadd.f32 %v126, %v132
    %v141 = vld [vmem:[%s10] sm:$0x1]
    %v142 = vld [vmem:[%s11] sm:$0x1]
    %v143 = vld [vmem:[%s10 + $0x1] sm:$0x1]
    %v144 = vld [vmem:[%s11 + $0x1] sm:$0x1]
    %v145 = vld [vmem:[%s12] sm:$0x1]
    %v146 = vld [vmem:[%s6] sm:$0xf]
    %v147 = vld [vmem:[%s8] sm:$0x1]
    %v148 = vld [vmem:[%s9] sm:$0x1]
    %v149 = vld [vmem:[#allocation2] sm:$0xff]
    %v150 = vld [vmem:[#allocation2 + $0x8] sm:$0xff]
    %v151 = vld [vmem:[#allocation2 + $0x10] sm:$0xff]
    %v152 = vld [vmem:[#allocation2 + $0x18] sm:$0xff]
    %v153 = vld [vmem:[#allocation2 + $0x20] sm:$0xff]
    %v154 = vld [vmem:[#allocation2 + $0x28] sm:$0xff]
    %v155 = vld [vmem:[#allocation2 + $0x30] sm:$0xff]
    %v156 = vld [vmem:[#allocation2 + $0x38] sm:$0xff]
    %v157 = vld [vmem:[#allocation2 + $0x40] sm:$0xff]
    %v158 = vld [vmem:[#allocation2 + $0x48] sm:$0xff]
    %v159 = vld [vmem:[#allocation2 + $0x50] sm:$0xff]
    %v160 = vld [vmem:[#allocation2 + $0x58] sm:$0xff]
    %v161 = vld [vmem:[#allocation2 + $0x60] sm:$0xff]
    %v162 = vld [vmem:[#allocation2 + $0x68] sm:$0xff]
    %v163 = vld [vmem:[#allocation2 + $0x70] sm:$0xff]
    %v164 = vld [vmem:[#allocation2 + $0x78] sm:$0xff]
    %v165 = vld [vmem:[#allocation2 + $0x80] sm:$0xff]
    %v166 = vld [vmem:[#allocation2 + $0x88] sm:$0xff]
    %v167 = vld [vmem:[#allocation2 + $0x90] sm:$0xff]
    %v168 = vld [vmem:[#allocation2 + $0x98] sm:$0xff]
    %v169 = vld [vmem:[#allocation2 + $0xa0] sm:$0xff]
    %v170 = vld [vmem:[#allocation2 + $0xa8] sm:$0xff]
    %v171 = vld [vmem:[#allocation2 + $0xb0] sm:$0xff]
    %v172 = vld [vmem:[#allocation2 + $0xb8] sm:$0xff]
    %v173 = vld [vmem:[#allocation2 + $0xc0] sm:$0xff]
    %v174 = vld [vmem:[#allocation2 + $0xc8] sm:$0xff]
    %v175 = vld [vmem:[#allocation2 + $0xd0] sm:$0xff]
    %v176 = vld [vmem:[#allocation2 + $0xd8] sm:$0xff]
    %v177 = vld [vmem:[#allocation2 + $0xe0] sm:$0xff]
    %v178 = vld [vmem:[#allocation2 + $0xe8] sm:$0xff]
    %v179 = vld [vmem:[#allocation2 + $0xf0] sm:$0xff]
    %v180 = vld [vmem:[#allocation2 + $0xf8] sm:$0xff]
    %v181 = vld [vmem:[#allocation2 + $0x100] sm:$0xff]
    %v182 = vld [vmem:[#allocation2 + $0x108] sm:$0xff]
    %v183 = vld [vmem:[#allocation2 + $0x110] sm:$0xff]
    %v184 = vld [vmem:[#allocation2 + $0x118] sm:$0xff]
    %v185 = vld [vmem:[#allocation2 + $0x120] sm:$0xff]
    %v186 = vld [vmem:[#allocation2 + $0x128] sm:$0xff]
    %v187 = vld [vmem:[#allocation2 + $0x130] sm:$0xff]
    %v188 = vld [vmem:[#allocation2 + $0x138] sm:$0xff]
    %v189 = vld [vmem:[#allocation2 + $0x140] sm:$0xff]
    %v190 = vld [vmem:[#allocation2 + $0x148] sm:$0xff]
    %v191 = vld [vmem:[#allocation2 + $0x150] sm:$0xff]
    %v192 = vld [vmem:[#allocation2 + $0x158] sm:$0xff]
    %v193 = vld [vmem:[#allocation2 + $0x160] sm:$0xff]
    %v194 = vld [vmem:[#allocation2 + $0x168] sm:$0xff]
    %v195 = vld [vmem:[#allocation2 + $0x170] sm:$0xff]
    %v196 = vld [vmem:[#allocation2 + $0x178] sm:$0xff]
    %v197 = vld [vmem:[#allocation2 + $0x180] sm:$0xff]
    %v198 = vld [vmem:[#allocation2 + $0x188] sm:$0xff]
    %v199 = vld [vmem:[#allocation2 + $0x190] sm:$0xff]
    %v200 = vld [vmem:[#allocation2 + $0x198] sm:$0xff]
    %v201 = vld [vmem:[#allocation2 + $0x1a0] sm:$0xff]
    %v202 = vld [vmem:[#allocation2 + $0x1a8] sm:$0xff]
    %v203 = vld [vmem:[#allocation2 + $0x1b0] sm:$0xff]
    %v204 = vld [vmem:[#allocation2 + $0x1b8] sm:$0xff]
    %v205 = vld [vmem:[#allocation2 + $0x1c0] sm:$0xff]
    %v206 = vld [vmem:[#allocation2 + $0x1c8] sm:$0xff]
    %v207 = vld [vmem:[#allocation2 + $0x1d0] sm:$0xff]
    %v208 = vld [vmem:[#allocation2 + $0x1d8] sm:$0xff]
    %v209 = vld [vmem:[#allocation2 + $0x1e0] sm:$0xff]
    %v210 = vld [vmem:[#allocation2 + $0x1e8] sm:$0xff]
    %v211 = vld [vmem:[#allocation2 + $0x1f0] sm:$0xff]
    %v212 = vld [vmem:[#allocation2 + $0x1f8] sm:$0xff]
    %213 = vmatpush.msra.mxu0 %v209
    %214 = vmatpush.msra.mxu0 %v205
    %215 = vmatpush.msra.mxu0 %v201
    %216 = vmatpush.msra.mxu0 %v197
    %217 = vmatpush.msra.mxu0 %v193
    %218 = vmatpush.msra.mxu0 %v189
    %219 = vmatpush.msra.mxu0 %v185
    %220 = vmatpush.msra.mxu0 %v181
    %221 = vmatpush.msra.mxu0 %v177
    %222 = vmatpush.msra.mxu0 %v173
    %223 = vmatpush.msra.mxu0 %v169
    %224 = vmatpush.msra.mxu0 %v165
    %225 = vmatpush.msra.mxu0 %v161
    %226 = vmatpush.msra.mxu0 %v157
    %227 = vmatpush.msra.mxu0 %v153
    %228 = vmatpush.msra.mxu0 %v149
    %229 = vmatmul.f32.gmra.mxu0 %v141
    %v230 = vpop.f32.mrf.mxu0
    %v231 = vadd.f32 0.0, %v230
    %232 = vdwg.mxu0
    %233 = vmatpush.msra.mxu0 %v210
    %234 = vmatpush.msra.mxu0 %v206
    %235 = vmatpush.msra.mxu0 %v202
    %236 = vmatpush.msra.mxu0 %v198
    %237 = vmatpush.msra.mxu0 %v194
    %238 = vmatpush.msra.mxu0 %v190
    %239 = vmatpush.msra.mxu0 %v186
    %240 = vmatpush.msra.mxu0 %v182
    %241 = vmatpush.msra.mxu0 %v178
    %242 = vmatpush.msra.mxu0 %v174
    %243 = vmatpush.msra.mxu0 %v170
    %244 = vmatpush.msra.mxu0 %v166
    %245 = vmatpush.msra.mxu0 %v162
    %246 = vmatpush.msra.mxu0 %v158
    %247 = vmatpush.msra.mxu0 %v154
    %248 = vmatpush.msra.mxu0 %v150
    %249 = vmatmul.f32.gmra.mxu0 %v141
    %v250 = vpop.f32.mrf.mxu0
    %v251 = vadd.f32 0.0, %v250
    %252 = vdwg.mxu0
    %253 = vmatpush.msra.mxu0 %v211
    %254 = vmatpush.msra.mxu0 %v207
    %255 = vmatpush.msra.mxu0 %v203
    %256 = vmatpush.msra.mxu0 %v199
    %257 = vmatpush.msra.mxu0 %v195
    %258 = vmatpush.msra.mxu0 %v191
    %259 = vmatpush.msra.mxu0 %v187
    %260 = vmatpush.msra.mxu0 %v183
    %261 = vmatpush.msra.mxu0 %v179
    %262 = vmatpush.msra.mxu0 %v175
    %263 = vmatpush.msra.mxu0 %v171
    %264 = vmatpush.msra.mxu0 %v167
    %265 = vmatpush.msra.mxu0 %v163
    %266 = vmatpush.msra.mxu0 %v159
    %267 = vmatpush.msra.mxu0 %v155
    %268 = vmatpush.msra.mxu0 %v151
    %269 = vmatmul.f32.gmra.mxu0 %v141
    %v270 = vpop.f32.mrf.mxu0
    %v271 = vadd.f32 0.0, %v270
    %272 = vdwg.mxu0
    %273 = vmatpush.msra.mxu0 %v212
    %274 = vmatpush.msra.mxu0 %v208
    %275 = vmatpush.msra.mxu0 %v204
    %276 = vmatpush.msra.mxu0 %v200
    %277 = vmatpush.msra.mxu0 %v196
    %278 = vmatpush.msra.mxu0 %v192
    %279 = vmatpush.msra.mxu0 %v188
    %280 = vmatpush.msra.mxu0 %v184
    %281 = vmatpush.msra.mxu0 %v180
    %282 = vmatpush.msra.mxu0 %v176
    %283 = vmatpush.msra.mxu0 %v172
    %284 = vmatpush.msra.mxu0 %v168
    %285 = vmatpush.msra.mxu0 %v164
    %286 = vmatpush.msra.mxu0 %v160
    %287 = vmatpush.msra.mxu0 %v156
    %288 = vmatpush.msra.mxu0 %v152
    %289 = vmatmul.f32.gmra.mxu0 %v141
    %v290 = vpop.f32.mrf.mxu0
    %v291 = vadd.f32 0.0, %v290
    %292 = vdwg.mxu0
    %v293 = vadd.f32 %v137, %v231
    %v294 = vadd.f32 %v138, %v251
    %v295 = vadd.f32 %v139, %v271
    %v296 = vadd.f32 %v140, %v291
    %v297 = vxor.u32 %v293, 2147483648
    %v298 = vmul.f32 %v297, 1.442695
    %v299 = vpow.pop %v298
    %v300 = vadd.f32 %v299, 1.0
    %v301 = vrcp.pop %v300
    %v302 = vmul.f32 %v300, %v301
    %v303 = vsub.f32 1.0, %v302
    %v304 = vmul.f32 %v301, %v303
    %v305 = vadd.f32 %v301, %v304
    %vm306 = vweird.f32 %v300
    %vm307 = vweird.f32 %v301
    %vm308 = vmor %vm306, %vm307
    %v309 = vsel %vm308, %v301, %v305
    %v310 = vand.u32 2147483647, %v300
    %vm311 = vcmp.eq.f32.partialorder %v310, 8.507059e+37
    %v312 = vand.u32 %v300, 2147483648
    %v313 = vor.u32 1.1754944e-38, %v312
    %v314 = vsel %vm311, %v313, %v309
    %v315 = vmul.f32 1.0, %v314
    %v316 = vxor.u32 %v294, 2147483648
    %v317 = vmul.f32 %v316, 1.442695
    %v318 = vpow.pop %v317
    %v319 = vadd.f32 %v318, 1.0
    %v320 = vrcp.pop %v319
    %v321 = vmul.f32 %v319, %v320
    %v322 = vsub.f32 1.0, %v321
    %v323 = vmul.f32 %v320, %v322
    %v324 = vadd.f32 %v320, %v323
    %vm325 = vweird.f32 %v319
    %vm326 = vweird.f32 %v320
    %vm327 = vmor %vm325, %vm326
    %v328 = vsel %vm327, %v320, %v324
    %v329 = vand.u32 2147483647, %v319
    %vm330 = vcmp.eq.f32.partialorder %v329, 8.507059e+37
    %v331 = vand.u32 %v319, 2147483648
    %v332 = vor.u32 1.1754944e-38, %v331
    %v333 = vsel %vm330, %v332, %v328
    %v334 = vmul.f32 1.0, %v333
    %v335 = vtanh.pop %v295
    %v336 = vxor.u32 %v296, 2147483648
    %v337 = vmul.f32 %v336, 1.442695
    %v338 = vpow.pop %v337
    %v339 = vadd.f32 %v338, 1.0
    %v340 = vrcp.pop %v339
    %v341 = vmul.f32 %v339, %v340
    %v342 = vsub.f32 1.0, %v341
    %v343 = vmul.f32 %v340, %v342
    %v344 = vadd.f32 %v340, %v343
    %vm345 = vweird.f32 %v339
    %vm346 = vweird.f32 %v340
    %vm347 = vmor %vm345, %vm346
    %v348 = vsel %vm347, %v340, %v344
    %v349 = vand.u32 2147483647, %v339
    %vm350 = vcmp.eq.f32.partialorder %v349, 8.507059e+37
    %v351 = vand.u32 %v339, 2147483648
    %v352 = vor.u32 1.1754944e-38, %v351
    %v353 = vsel %vm350, %v352, %v348
    %v354 = vmul.f32 1.0, %v353
    %v355 = vmul.f32 %v334, %v142
    %v356 = vmul.f32 %v315, %v335
    %v357 = vadd.f32 %v355, %v356
    %v358 = vtanh.pop %v357
    %v359 = vmul.f32 %v354, %v358
    %v360 = vld [vmem:[#allocation4] sm:$0xff]
    %v361 = vld [vmem:[#allocation4 + $0x8] sm:$0xff]
    %v362 = vld [vmem:[#allocation4 + $0x10] sm:$0xff]
    %v363 = vld [vmem:[#allocation4 + $0x18] sm:$0xff]
    %v364 = vld [vmem:[#allocation4 + $0x20] sm:$0xff]
    %v365 = vld [vmem:[#allocation4 + $0x28] sm:$0xff]
    %v366 = vld [vmem:[#allocation4 + $0x30] sm:$0xff]
    %v367 = vld [vmem:[#allocation4 + $0x38] sm:$0xff]
    %v368 = vld [vmem:[#allocation4 + $0x40] sm:$0xff]
    %v369 = vld [vmem:[#allocation4 + $0x48] sm:$0xff]
    %v370 = vld [vmem:[#allocation4 + $0x50] sm:$0xff]
    %v371 = vld [vmem:[#allocation4 + $0x58] sm:$0xff]
    %v372 = vld [vmem:[#allocation4 + $0x60] sm:$0xff]
    %v373 = vld [vmem:[#allocation4 + $0x68] sm:$0xff]
    %v374 = vld [vmem:[#allocation4 + $0x70] sm:$0xff]
    %v375 = vld [vmem:[#allocation4 + $0x78] sm:$0xff]
    %v376 = vld [vmem:[#allocation4 + $0x80] sm:$0xff]
    %v377 = vld [vmem:[#allocation4 + $0x88] sm:$0xff]
    %v378 = vld [vmem:[#allocation4 + $0x90] sm:$0xff]
    %v379 = vld [vmem:[#allocation4 + $0x98] sm:$0xff]
    %v380 = vld [vmem:[#allocation4 + $0xa0] sm:$0xff]
    %v381 = vld [vmem:[#allocation4 + $0xa8] sm:$0xff]
    %v382 = vld [vmem:[#allocation4 + $0xb0] sm:$0xff]
    %v383 = vld [vmem:[#allocation4 + $0xb8] sm:$0xff]
    %v384 = vld [vmem:[#allocation4 + $0xc0] sm:$0xff]
    %v385 = vld [vmem:[#allocation4 + $0xc8] sm:$0xff]
    %v386 = vld [vmem:[#allocation4 + $0xd0] sm:$0xff]
    %v387 = vld [vmem:[#allocation4 + $0xd8] sm:$0xff]
    %v388 = vld [vmem:[#allocation4 + $0xe0] sm:$0xff]
    %v389 = vld [vmem:[#allocation4 + $0xe8] sm:$0xff]
    %v390 = vld [vmem:[#allocation4 + $0xf0] sm:$0xff]
    %v391 = vld [vmem:[#allocation4 + $0xf8] sm:$0xff]
    %v392 = vld [vmem:[#allocation4 + $0x100] sm:$0xff]
    %v393 = vld [vmem:[#allocation4 + $0x108] sm:$0xff]
    %v394 = vld [vmem:[#allocation4 + $0x110] sm:$0xff]
    %v395 = vld [vmem:[#allocation4 + $0x118] sm:$0xff]
    %v396 = vld [vmem:[#allocation4 + $0x120] sm:$0xff]
    %v397 = vld [vmem:[#allocation4 + $0x128] sm:$0xff]
    %v398 = vld [vmem:[#allocation4 + $0x130] sm:$0xff]
    %v399 = vld [vmem:[#allocation4 + $0x138] sm:$0xff]
    %v400 = vld [vmem:[#allocation4 + $0x140] sm:$0xff]
    %v401 = vld [vmem:[#allocation4 + $0x148] sm:$0xff]
    %v402 = vld [vmem:[#allocation4 + $0x150] sm:$0xff]
    %v403 = vld [vmem:[#allocation4 + $0x158] sm:$0xff]
    %v404 = vld [vmem:[#allocation4 + $0x160] sm:$0xff]
    %v405 = vld [vmem:[#allocation4 + $0x168] sm:$0xff]
    %v406 = vld [vmem:[#allocation4 + $0x170] sm:$0xff]
    %v407 = vld [vmem:[#allocation4 + $0x178] sm:$0xff]
    %v408 = vld [vmem:[#allocation4 + $0x180] sm:$0xff]
    %v409 = vld [vmem:[#allocation4 + $0x188] sm:$0xff]
    %v410 = vld [vmem:[#allocation4 + $0x190] sm:$0xff]
    %v411 = vld [vmem:[#allocation4 + $0x198] sm:$0xff]
    %v412 = vld [vmem:[#allocation4 + $0x1a0] sm:$0xff]
    %v413 = vld [vmem:[#allocation4 + $0x1a8] sm:$0xff]
    %v414 = vld [vmem:[#allocation4 + $0x1b0] sm:$0xff]
    %v415 = vld [vmem:[#allocation4 + $0x1b8] sm:$0xff]
    %v416 = vld [vmem:[#allocation4 + $0x1c0] sm:$0xff]
    %v417 = vld [vmem:[#allocation4 + $0x1c8] sm:$0xff]
    %v418 = vld [vmem:[#allocation4 + $0x1d0] sm:$0xff]
    %v419 = vld [vmem:[#allocation4 + $0x1d8] sm:$0xff]
    %v420 = vld [vmem:[#allocation4 + $0x1e0] sm:$0xff]
    %v421 = vld [vmem:[#allocation4 + $0x1e8] sm:$0xff]
    %v422 = vld [vmem:[#allocation4 + $0x1f0] sm:$0xff]
    %v423 = vld [vmem:[#allocation4 + $0x1f8] sm:$0xff]
    %v424 = vld [vmem:[#allocation6] sm:$0xff]
    %v425 = vld [vmem:[#allocation6 + $0x8] sm:$0xff]
    %v426 = vld [vmem:[#allocation6 + $0x10] sm:$0xff]
    %v427 = vld [vmem:[#allocation6 + $0x18] sm:$0xff]
    %v428 = vld [vmem:[#allocation6 + $0x20] sm:$0xff]
    %v429 = vld [vmem:[#allocation6 + $0x28] sm:$0xff]
    %v430 = vld [vmem:[#allocation6 + $0x30] sm:$0xff]
    %v431 = vld [vmem:[#allocation6 + $0x38] sm:$0xff]
    %v432 = vld [vmem:[#allocation6 + $0x40] sm:$0xff]
    %v433 = vld [vmem:[#allocation6 + $0x48] sm:$0xff]
    %v434 = vld [vmem:[#allocation6 + $0x50] sm:$0xff]
    %v435 = vld [vmem:[#allocation6 + $0x58] sm:$0xff]
    %v436 = vld [vmem:[#allocation6 + $0x60] sm:$0xff]
    %v437 = vld [vmem:[#allocation6 + $0x68] sm:$0xff]
    %v438 = vld [vmem:[#allocation6 + $0x70] sm:$0xff]
    %v439 = vld [vmem:[#allocation6 + $0x78] sm:$0xff]
    %v440 = vld [vmem:[#allocation6 + $0x80] sm:$0xff]
    %v441 = vld [vmem:[#allocation6 + $0x88] sm:$0xff]
    %v442 = vld [vmem:[#allocation6 + $0x90] sm:$0xff]
    %v443 = vld [vmem:[#allocation6 + $0x98] sm:$0xff]
    %v444 = vld [vmem:[#allocation6 + $0xa0] sm:$0xff]
    %v445 = vld [vmem:[#allocation6 + $0xa8] sm:$0xff]
    %v446 = vld [vmem:[#allocation6 + $0xb0] sm:$0xff]
    %v447 = vld [vmem:[#allocation6 + $0xb8] sm:$0xff]
    %v448 = vld [vmem:[#allocation6 + $0xc0] sm:$0xff]
    %v449 = vld [vmem:[#allocation6 + $0xc8] sm:$0xff]
    %v450 = vld [vmem:[#allocation6 + $0xd0] sm:$0xff]
    %v451 = vld [vmem:[#allocation6 + $0xd8] sm:$0xff]
    %v452 = vld [vmem:[#allocation6 + $0xe0] sm:$0xff]
    %v453 = vld [vmem:[#allocation6 + $0xe8] sm:$0xff]
    %v454 = vld [vmem:[#allocation6 + $0xf0] sm:$0xff]
    %v455 = vld [vmem:[#allocation6 + $0xf8] sm:$0xff]
    %v456 = vld [vmem:[#allocation6 + $0x100] sm:$0xff]
    %v457 = vld [vmem:[#allocation6 + $0x108] sm:$0xff]
    %v458 = vld [vmem:[#allocation6 + $0x110] sm:$0xff]
    %v459 = vld [vmem:[#allocation6 + $0x118] sm:$0xff]
    %v460 = vld [vmem:[#allocation6 + $0x120] sm:$0xff]
    %v461 = vld [vmem:[#allocation6 + $0x128] sm:$0xff]
    %v462 = vld [vmem:[#allocation6 + $0x130] sm:$0xff]
    %v463 = vld [vmem:[#allocation6 + $0x138] sm:$0xff]
    %v464 = vld [vmem:[#allocation6 + $0x140] sm:$0xff]
    %v465 = vld [vmem:[#allocation6 + $0x148] sm:$0xff]
    %v466 = vld [vmem:[#allocation6 + $0x150] sm:$0xff]
    %v467 = vld [vmem:[#allocation6 + $0x158] sm:$0xff]
    %v468 = vld [vmem:[#allocation6 + $0x160] sm:$0xff]
    %v469 = vld [vmem:[#allocation6 + $0x168] sm:$0xff]
    %v470 = vld [vmem:[#allocation6 + $0x170] sm:$0xff]
    %v471 = vld [vmem:[#allocation6 + $0x178] sm:$0xff]
    %v472 = vld [vmem:[#allocation6 + $0x180] sm:$0xff]
    %v473 = vld [vmem:[#allocation6 + $0x188] sm:$0xff]
    %v474 = vld [vmem:[#allocation6 + $0x190] sm:$0xff]
    %v475 = vld [vmem:[#allocation6 + $0x198] sm:$0xff]
    %v476 = vld [vmem:[#allocation6 + $0x1a0] sm:$0xff]
    %v477 = vld [vmem:[#allocation6 + $0x1a8] sm:$0xff]
    %v478 = vld [vmem:[#allocation6 + $0x1b0] sm:$0xff]
    %v479 = vld [vmem:[#allocation6 + $0x1b8] sm:$0xff]
    %v480 = vld [vmem:[#allocation6 + $0x1c0] sm:$0xff]
    %v481 = vld [vmem:[#allocation6 + $0x1c8] sm:$0xff]
    %v482 = vld [vmem:[#allocation6 + $0x1d0] sm:$0xff]
    %v483 = vld [vmem:[#allocation6 + $0x1d8] sm:$0xff]
    %v484 = vld [vmem:[#allocation6 + $0x1e0] sm:$0xff]
    %v485 = vld [vmem:[#allocation6 + $0x1e8] sm:$0xff]
    %v486 = vld [vmem:[#allocation6 + $0x1f0] sm:$0xff]
    %v487 = vld [vmem:[#allocation6 + $0x1f8] sm:$0xff]
    %488 = vmatpush.msra.mxu0 %v484
    %489 = vmatpush.msra.mxu0 %v480
    %490 = vmatpush.msra.mxu0 %v476
    %491 = vmatpush.msra.mxu0 %v472
    %492 = vmatpush.msra.mxu0 %v468
    %493 = vmatpush.msra.mxu0 %v464
    %494 = vmatpush.msra.mxu0 %v460
    %495 = vmatpush.msra.mxu0 %v456
    %496 = vmatpush.msra.mxu0 %v452
    %497 = vmatpush.msra.mxu0 %v448
    %498 = vmatpush.msra.mxu0 %v444
    %499 = vmatpush.msra.mxu0 %v440
    %500 = vmatpush.msra.mxu0 %v436
    %501 = vmatpush.msra.mxu0 %v432
    %502 = vmatpush.msra.mxu0 %v428
    %503 = vmatpush.msra.mxu0 %v424
    %504 = vmatmul.f32.gmra.mxu0 %v143
    %v505 = vpop.f32.mrf.mxu0
    %v506 = vadd.f32 0.0, %v505
    %507 = vdwg.mxu0
    %508 = vmatpush.msra.mxu0 %v485
    %509 = vmatpush.msra.mxu0 %v481
    %510 = vmatpush.msra.mxu0 %v477
    %511 = vmatpush.msra.mxu0 %v473
    %512 = vmatpush.msra.mxu0 %v469
    %513 = vmatpush.msra.mxu0 %v465
    %514 = vmatpush.msra.mxu0 %v461
    %515 = vmatpush.msra.mxu0 %v457
    %516 = vmatpush.msra.mxu0 %v453
    %517 = vmatpush.msra.mxu0 %v449
    %518 = vmatpush.msra.mxu0 %v445
    %519 = vmatpush.msra.mxu0 %v441
    %520 = vmatpush.msra.mxu0 %v437
    %521 = vmatpush.msra.mxu0 %v433
    %522 = vmatpush.msra.mxu0 %v429
    %523 = vmatpush.msra.mxu0 %v425
    %524 = vmatmul.f32.gmra.mxu0 %v143
    %v525 = vpop.f32.mrf.mxu0
    %v526 = vadd.f32 0.0, %v525
    %527 = vdwg.mxu0
    %528 = vmatpush.msra.mxu0 %v486
    %529 = vmatpush.msra.mxu0 %v482
    %530 = vmatpush.msra.mxu0 %v478
    %531 = vmatpush.msra.mxu0 %v474
    %532 = vmatpush.msra.mxu0 %v470
    %533 = vmatpush.msra.mxu0 %v466
    %534 = vmatpush.msra.mxu0 %v462
    %535 = vmatpush.msra.mxu0 %v458
    %536 = vmatpush.msra.mxu0 %v454
    %537 = vmatpush.msra.mxu0 %v450
    %538 = vmatpush.msra.mxu0 %v446
    %539 = vmatpush.msra.mxu0 %v442
    %540 = vmatpush.msra.mxu0 %v438
    %541 = vmatpush.msra.mxu0 %v434
    %542 = vmatpush.msra.mxu0 %v430
    %543 = vmatpush.msra.mxu0 %v426
    %544 = vmatmul.f32.gmra.mxu0 %v143
    %v545 = vpop.f32.mrf.mxu0
    %v546 = vadd.f32 0.0, %v545
    %547 = vdwg.mxu0
    %548 = vmatpush.msra.mxu0 %v487
    %549 = vmatpush.msra.mxu0 %v483
    %550 = vmatpush.msra.mxu0 %v479
    %551 = vmatpush.msra.mxu0 %v475
    %552 = vmatpush.msra.mxu0 %v471
    %553 = vmatpush.msra.mxu0 %v467
    %554 = vmatpush.msra.mxu0 %v463
    %555 = vmatpush.msra.mxu0 %v459
    %556 = vmatpush.msra.mxu0 %v455
    %557 = vmatpush.msra.mxu0 %v451
    %558 = vmatpush.msra.mxu0 %v447
    %559 = vmatpush.msra.mxu0 %v443
    %560 = vmatpush.msra.mxu0 %v439
    %561 = vmatpush.msra.mxu0 %v435
    %562 = vmatpush.msra.mxu0 %v431
    %563 = vmatpush.msra.mxu0 %v427
    %564 = vmatmul.f32.gmra.mxu0 %v143
    %v565 = vpop.f32.mrf.mxu0
    %v566 = vadd.f32 0.0, %v565
    %567 = vdwg.mxu0
    %568 = vmatpush.msra.mxu0 %v420
    %569 = vmatpush.msra.mxu0 %v416
    %570 = vmatpush.msra.mxu0 %v412
    %571 = vmatpush.msra.mxu0 %v408
    %572 = vmatpush.msra.mxu0 %v404
    %573 = vmatpush.msra.mxu0 %v400
    %574 = vmatpush.msra.mxu0 %v396
    %575 = vmatpush.msra.mxu0 %v392
    %576 = vmatpush.msra.mxu0 %v388
    %577 = vmatpush.msra.mxu0 %v384
    %578 = vmatpush.msra.mxu0 %v380
    %579 = vmatpush.msra.mxu0 %v376
    %580 = vmatpush.msra.mxu0 %v372
    %581 = vmatpush.msra.mxu0 %v368
    %582 = vmatpush.msra.mxu0 %v364
    %583 = vmatpush.msra.mxu0 %v360
    %584 = vmatmul.f32.gmra.mxu0 %v359
    %v585 = vpop.f32.mrf.mxu0
    %v586 = vadd.f32 %v506, %v585
    %587 = vdwg.mxu0
    %588 = vmatpush.msra.mxu0 %v421
    %589 = vmatpush.msra.mxu0 %v417
    %590 = vmatpush.msra.mxu0 %v413
    %591 = vmatpush.msra.mxu0 %v409
    %592 = vmatpush.msra.mxu0 %v405
    %593 = vmatpush.msra.mxu0 %v401
    %594 = vmatpush.msra.mxu0 %v397
    %595 = vmatpush.msra.mxu0 %v393
    %596 = vmatpush.msra.mxu0 %v389
    %597 = vmatpush.msra.mxu0 %v385
    %598 = vmatpush.msra.mxu0 %v381
    %599 = vmatpush.msra.mxu0 %v377
    %600 = vmatpush.msra.mxu0 %v373
    %601 = vmatpush.msra.mxu0 %v369
    %602 = vmatpush.msra.mxu0 %v365
    %603 = vmatpush.msra.mxu0 %v361
    %604 = vmatmul.f32.gmra.mxu0 %v359
    %v605 = vpop.f32.mrf.mxu0
    %v606 = vadd.f32 %v526, %v605
    %607 = vdwg.mxu0
    %608 = vmatpush.msra.mxu0 %v422
    %609 = vmatpush.msra.mxu0 %v418
    %610 = vmatpush.msra.mxu0 %v414
    %611 = vmatpush.msra.mxu0 %v410
    %612 = vmatpush.msra.mxu0 %v406
    %613 = vmatpush.msra.mxu0 %v402
    %614 = vmatpush.msra.mxu0 %v398
    %615 = vmatpush.msra.mxu0 %v394
    %616 = vmatpush.msra.mxu0 %v390
    %617 = vmatpush.msra.mxu0 %v386
    %618 = vmatpush.msra.mxu0 %v382
    %619 = vmatpush.msra.mxu0 %v378
    %620 = vmatpush.msra.mxu0 %v374
    %621 = vmatpush.msra.mxu0 %v370
    %622 = vmatpush.msra.mxu0 %v366
    %623 = vmatpush.msra.mxu0 %v362
    %624 = vmatmul.f32.gmra.mxu0 %v359
    %v625 = vpop.f32.mrf.mxu0
    %v626 = vadd.f32 %v546, %v625
    %627 = vdwg.mxu0
    %628 = vmatpush.msra.mxu0 %v423
    %629 = vmatpush.msra.mxu0 %v419
    %630 = vmatpush.msra.mxu0 %v415
    %631 = vmatpush.msra.mxu0 %v411
    %632 = vmatpush.msra.mxu0 %v407
    %633 = vmatpush.msra.mxu0 %v403
    %634 = vmatpush.msra.mxu0 %v399
    %635 = vmatpush.msra.mxu0 %v395
    %636 = vmatpush.msra.mxu0 %v391
    %637 = vmatpush.msra.mxu0 %v387
    %638 = vmatpush.msra.mxu0 %v383
    %639 = vmatpush.msra.mxu0 %v379
    %640 = vmatpush.msra.mxu0 %v375
    %641 = vmatpush.msra.mxu0 %v371
    %642 = vmatpush.msra.mxu0 %v367
    %643 = vmatpush.msra.mxu0 %v363
    %644 = vmatmul.f32.gmra.mxu0 %v359
    %v645 = vpop.f32.mrf.mxu0
    %v646 = vadd.f32 %v566, %v645
    %647 = vdwg.mxu0
    %v649 = vperm.slane %v146, 0
    %v650 = vperm.slane %v146, 1
    %v651 = vperm.slane %v146, 2
    %v652 = vperm.slane %v146, 3
    %v657 = vadd.f32 %v586, %v649
    %v658 = vadd.f32 %v606, %v650
    %v659 = vadd.f32 %v626, %v651
    %v660 = vadd.f32 %v646, %v652
    %v661 = vxor.u32 %v657, 2147483648
    %v662 = vmul.f32 %v661, 1.442695
    %v663 = vpow.pop %v662
    %v664 = vadd.f32 %v663, 1.0
    %v665 = vrcp.pop %v664
    %v666 = vmul.f32 %v664, %v665
    %v667 = vsub.f32 1.0, %v666
    %v668 = vmul.f32 %v665, %v667
    %v669 = vadd.f32 %v665, %v668
    %vm670 = vweird.f32 %v664
    %vm671 = vweird.f32 %v665
    %vm672 = vmor %vm670, %vm671
    %v673 = vsel %vm672, %v665, %v669
    %v674 = vand.u32 2147483647, %v664
    %vm675 = vcmp.eq.f32.partialorder %v674, 8.507059e+37
    %v676 = vand.u32 %v664, 2147483648
    %v677 = vor.u32 1.1754944e-38, %v676
    %v678 = vsel %vm675, %v677, %v673
    %v679 = vmul.f32 1.0, %v678
    %v680 = vxor.u32 %v658, 2147483648
    %v681 = vmul.f32 %v680, 1.442695
    %v682 = vpow.pop %v681
    %v683 = vadd.f32 %v682, 1.0
    %v684 = vrcp.pop %v683
    %v685 = vmul.f32 %v683, %v684
    %v686 = vsub.f32 1.0, %v685
    %v687 = vmul.f32 %v684, %v686
    %v688 = vadd.f32 %v684, %v687
    %vm689 = vweird.f32 %v683
    %vm690 = vweird.f32 %v684
    %vm691 = vmor %vm689, %vm690
    %v692 = vsel %vm691, %v684, %v688
    %v693 = vand.u32 2147483647, %v683
    %vm694 = vcmp.eq.f32.partialorder %v693, 8.507059e+37
    %v695 = vand.u32 %v683, 2147483648
    %v696 = vor.u32 1.1754944e-38, %v695
    %v697 = vsel %vm694, %v696, %v692
    %v698 = vmul.f32 1.0, %v697
    %v699 = vtanh.pop %v659
    %v700 = vxor.u32 %v660, 2147483648
    %v701 = vmul.f32 %v700, 1.442695
    %v702 = vpow.pop %v701
    %v703 = vadd.f32 %v702, 1.0
    %v704 = vrcp.pop %v703
    %v705 = vmul.f32 %v703, %v704
    %v706 = vsub.f32 1.0, %v705
    %v707 = vmul.f32 %v704, %v706
    %v708 = vadd.f32 %v704, %v707
    %vm709 = vweird.f32 %v703
    %vm710 = vweird.f32 %v704
    %vm711 = vmor %vm709, %vm710
    %v712 = vsel %vm711, %v704, %v708
    %v713 = vand.u32 2147483647, %v703
    %vm714 = vcmp.eq.f32.partialorder %v713, 8.507059e+37
    %v715 = vand.u32 %v703, 2147483648
    %v716 = vor.u32 1.1754944e-38, %v715
    %v717 = vsel %vm714, %v716, %v712
    %v718 = vmul.f32 1.0, %v717
    %v719 = vmul.f32 %v698, %v144
    %v720 = vmul.f32 %v679, %v699
    %v721 = vadd.f32 %v719, %v720
    %v722 = vtanh.pop %v721
    %v723 = vmul.f32 %v718, %v722
    %v724 = vld [vmem:[#allocation7] sm:$0xff]
    %v725 = vld [vmem:[#allocation7 + $0x8] sm:$0xff]
    %v726 = vld [vmem:[#allocation7 + $0x10] sm:$0xff]
    %v727 = vld [vmem:[#allocation7 + $0x18] sm:$0xff]
    %v728 = vld [vmem:[#allocation7 + $0x20] sm:$0xff]
    %v729 = vld [vmem:[#allocation7 + $0x28] sm:$0xff]
    %v730 = vld [vmem:[#allocation7 + $0x30] sm:$0xff]
    %v731 = vld [vmem:[#allocation7 + $0x38] sm:$0xff]
    %v732 = vld [vmem:[#allocation7 + $0x40] sm:$0xff]
    %v733 = vld [vmem:[#allocation7 + $0x48] sm:$0xff]
    %v734 = vld [vmem:[#allocation7 + $0x50] sm:$0xff]
    %v735 = vld [vmem:[#allocation7 + $0x58] sm:$0xff]
    %v736 = vld [vmem:[#allocation7 + $0x60] sm:$0xff]
    %v737 = vld [vmem:[#allocation7 + $0x68] sm:$0xff]
    %v738 = vld [vmem:[#allocation7 + $0x70] sm:$0xff]
    %v739 = vld [vmem:[#allocation7 + $0x78] sm:$0xff]
    %741 = vset.pattern.permute.xlu0 0
    %742 = vperm.xlu0 %741, %v145
    %v743 = vpop.permute.xlu0 %742
    %v745 = vperm.slane %v743, 0
    %v746 = vmul.f32 %v745, %v147
    %747 = vmatpush.msra.mxu0 %v739
    %748 = vmatpush.msra.mxu0 %v738
    %749 = vmatpush.msra.mxu0 %v737
    %750 = vmatpush.msra.mxu0 %v736
    %751 = vmatpush.msra.mxu0 %v735
    %752 = vmatpush.msra.mxu0 %v734
    %753 = vmatpush.msra.mxu0 %v733
    %754 = vmatpush.msra.mxu0 %v732
    %755 = vmatpush.msra.mxu0 %v731
    %756 = vmatpush.msra.mxu0 %v730
    %757 = vmatpush.msra.mxu0 %v729
    %758 = vmatpush.msra.mxu0 %v728
    %759 = vmatpush.msra.mxu0 %v727
    %760 = vmatpush.msra.mxu0 %v726
    %761 = vmatpush.msra.mxu0 %v725
    %762 = vmatpush.msra.mxu0 %v724
    %763 = vmatmul.f32.gmra.mxu0 %v723
    %v764 = vpop.f32.mrf.mxu0
    %v765 = vadd.f32 %v746, %v764
    %766 = vdwg.mxu0
    %v767 = vadd.f32 %v765, %v148
    %v768 = vxor.u32 %v767, 2147483648
    %v769 = vmul.f32 %v768, 1.442695
    %v770 = vpow.pop %v769
    %v771 = vadd.f32 %v770, 1.0
    %v772 = vrcp.pop %v771
    %v773 = vmul.f32 %v771, %v772
    %v774 = vsub.f32 1.0, %v773
    %v775 = vmul.f32 %v772, %v774
    %v776 = vadd.f32 %v772, %v775
    %vm777 = vweird.f32 %v771
    %vm778 = vweird.f32 %v772
    %vm779 = vmor %vm777, %vm778
    %v780 = vsel %vm779, %v772, %v776
    %v781 = vand.u32 2147483647, %v771
    %vm782 = vcmp.eq.f32.partialorder %v781, 8.507059e+37
    %v783 = vand.u32 %v771, 2147483648
    %v784 = vor.u32 1.1754944e-38, %v783
    %v785 = vsel %vm782, %v784, %v780
    %v786 = vmul.f32 1.0, %v785
    %v787 = vtanh.pop %v767
    %v788 = vmul.f32 %v786, %v145
    %790 = vrot.lane.b32.xlu0 %v787, 126
    %v791 = vpop.permute.xlu0 %790
    %v793 = vmul.f32 %v786, %v791
    %795 = vrot.lane.b32.xlu0 %v793, 1
    %v796 = vpop.permute.xlu0 %795
    %v798 = vadd.f32 %v788, %v796
    %v799 = vtanh.pop %v798
    %801 = vrot.lane.b32.xlu0 %v799, 2
    %v802 = vpop.permute.xlu0 %801
    %v804 = vmul.f32 %v786, %v802
    %806 = vrot.lane.b32.xlu0 %v804, 125
    %v807 = vpop.permute.xlu0 %806
    %vm809 = vcmask 0
    %810 = vst.msk [vmem:[%s13] sm:$0x1] %vm809, %v807
    %v811 = vld [vmem:[#allocation2] sm:$0xff]
    %v812 = vld [vmem:[#allocation2 + $0x8] sm:$0xff]
    %v813 = vld [vmem:[#allocation2 + $0x10] sm:$0xff]
    %v814 = vld [vmem:[#allocation2 + $0x18] sm:$0xff]
    %v815 = vld [vmem:[#allocation2 + $0x20] sm:$0xff]
    %v816 = vld [vmem:[#allocation2 + $0x28] sm:$0xff]
    %v817 = vld [vmem:[#allocation2 + $0x30] sm:$0xff]
    %v818 = vld [vmem:[#allocation2 + $0x38] sm:$0xff]
    %v819 = vld [vmem:[#allocation2 + $0x40] sm:$0xff]
    %v820 = vld [vmem:[#allocation2 + $0x48] sm:$0xff]
    %v821 = vld [vmem:[#allocation2 + $0x50] sm:$0xff]
    %v822 = vld [vmem:[#allocation2 + $0x58] sm:$0xff]
    %v823 = vld [vmem:[#allocation2 + $0x60] sm:$0xff]
    %v824 = vld [vmem:[#allocation2 + $0x68] sm:$0xff]
    %v825 = vld [vmem:[#allocation2 + $0x70] sm:$0xff]
    %v826 = vld [vmem:[#allocation2 + $0x78] sm:$0xff]
    %v827 = vld [vmem:[#allocation2 + $0x80] sm:$0xff]
    %v828 = vld [vmem:[#allocation2 + $0x88] sm:$0xff]
    %v829 = vld [vmem:[#allocation2 + $0x90] sm:$0xff]
    %v830 = vld [vmem:[#allocation2 + $0x98] sm:$0xff]
    %v831 = vld [vmem:[#allocation2 + $0xa0] sm:$0xff]
    %v832 = vld [vmem:[#allocation2 + $0xa8] sm:$0xff]
    %v833 = vld [vmem:[#allocation2 + $0xb0] sm:$0xff]
    %v834 = vld [vmem:[#allocation2 + $0xb8] sm:$0xff]
    %v835 = vld [vmem:[#allocation2 + $0xc0] sm:$0xff]
    %v836 = vld [vmem:[#allocation2 + $0xc8] sm:$0xff]
    %v837 = vld [vmem:[#allocation2 + $0xd0] sm:$0xff]
    %v838 = vld [vmem:[#allocation2 + $0xd8] sm:$0xff]
    %v839 = vld [vmem:[#allocation2 + $0xe0] sm:$0xff]
    %v840 = vld [vmem:[#allocation2 + $0xe8] sm:$0xff]
    %v841 = vld [vmem:[#allocation2 + $0xf0] sm:$0xff]
    %v842 = vld [vmem:[#allocation2 + $0xf8] sm:$0xff]
    %v843 = vld [vmem:[#allocation2 + $0x100] sm:$0xff]
    %v844 = vld [vmem:[#allocation2 + $0x108] sm:$0xff]
    %v845 = vld [vmem:[#allocation2 + $0x110] sm:$0xff]
    %v846 = vld [vmem:[#allocation2 + $0x118] sm:$0xff]
    %v847 = vld [vmem:[#allocation2 + $0x120] sm:$0xff]
    %v848 = vld [vmem:[#allocation2 + $0x128] sm:$0xff]
    %v849 = vld [vmem:[#allocation2 + $0x130] sm:$0xff]
    %v850 = vld [vmem:[#allocation2 + $0x138] sm:$0xff]
    %v851 = vld [vmem:[#allocation2 + $0x140] sm:$0xff]
    %v852 = vld [vmem:[#allocation2 + $0x148] sm:$0xff]
    %v853 = vld [vmem:[#allocation2 + $0x150] sm:$0xff]
    %v854 = vld [vmem:[#allocation2 + $0x158] sm:$0xff]
    %v855 = vld [vmem:[#allocation2 + $0x160] sm:$0xff]
    %v856 = vld [vmem:[#allocation2 + $0x168] sm:$0xff]
    %v857 = vld [vmem:[#allocation2 + $0x170] sm:$0xff]
    %v858 = vld [vmem:[#allocation2 + $0x178] sm:$0xff]
    %v859 = vld [vmem:[#allocation2 + $0x180] sm:$0xff]
    %v860 = vld [vmem:[#allocation2 + $0x188] sm:$0xff]
    %v861 = vld [vmem:[#allocation2 + $0x190] sm:$0xff]
    %v862 = vld [vmem:[#allocation2 + $0x198] sm:$0xff]
    %v863 = vld [vmem:[#allocation2 + $0x1a0] sm:$0xff]
    %v864 = vld [vmem:[#allocation2 + $0x1a8] sm:$0xff]
    %v865 = vld [vmem:[#allocation2 + $0x1b0] sm:$0xff]
    %v866 = vld [vmem:[#allocation2 + $0x1b8] sm:$0xff]
    %v867 = vld [vmem:[#allocation2 + $0x1c0] sm:$0xff]
    %v868 = vld [vmem:[#allocation2 + $0x1c8] sm:$0xff]
    %v869 = vld [vmem:[#allocation2 + $0x1d0] sm:$0xff]
    %v870 = vld [vmem:[#allocation2 + $0x1d8] sm:$0xff]
    %v871 = vld [vmem:[#allocation2 + $0x1e0] sm:$0xff]
    %v872 = vld [vmem:[#allocation2 + $0x1e8] sm:$0xff]
    %v873 = vld [vmem:[#allocation2 + $0x1f0] sm:$0xff]
    %v874 = vld [vmem:[#allocation2 + $0x1f8] sm:$0xff]
    %875 = vmatpush.msra.mxu0 %v871
    %876 = vmatpush.msra.mxu0 %v867
    %877 = vmatpush.msra.mxu0 %v863
    %878 = vmatpush.msra.mxu0 %v859
    %879 = vmatpush.msra.mxu0 %v855
    %880 = vmatpush.msra.mxu0 %v851
    %881 = vmatpush.msra.mxu0 %v847
    %882 = vmatpush.msra.mxu0 %v843
    %883 = vmatpush.msra.mxu0 %v839
    %884 = vmatpush.msra.mxu0 %v835
    %885 = vmatpush.msra.mxu0 %v831
    %886 = vmatpush.msra.mxu0 %v827
    %887 = vmatpush.msra.mxu0 %v823
    %888 = vmatpush.msra.mxu0 %v819
    %889 = vmatpush.msra.mxu0 %v815
    %890 = vmatpush.msra.mxu0 %v811
    %891 = vmatmul.f32.gmra.mxu0 %v359
    %v892 = vpop.f32.mrf.mxu0
    %v893 = vadd.f32 0.0, %v892
    %894 = vdwg.mxu0
    %895 = vmatpush.msra.mxu0 %v872
    %896 = vmatpush.msra.mxu0 %v868
    %897 = vmatpush.msra.mxu0 %v864
    %898 = vmatpush.msra.mxu0 %v860
    %899 = vmatpush.msra.mxu0 %v856
    %900 = vmatpush.msra.mxu0 %v852
    %901 = vmatpush.msra.mxu0 %v848
    %902 = vmatpush.msra.mxu0 %v844
    %903 = vmatpush.msra.mxu0 %v840
    %904 = vmatpush.msra.mxu0 %v836
    %905 = vmatpush.msra.mxu0 %v832
    %906 = vmatpush.msra.mxu0 %v828
    %907 = vmatpush.msra.mxu0 %v824
    %908 = vmatpush.msra.mxu0 %v820
    %909 = vmatpush.msra.mxu0 %v816
    %910 = vmatpush.msra.mxu0 %v812
    %911 = vmatmul.f32.gmra.mxu0 %v359
    %v912 = vpop.f32.mrf.mxu0
    %v913 = vadd.f32 0.0, %v912
    %914 = vdwg.mxu0
    %915 = vmatpush.msra.mxu0 %v873
    %916 = vmatpush.msra.mxu0 %v869
    %917 = vmatpush.msra.mxu0 %v865
    %918 = vmatpush.msra.mxu0 %v861
    %919 = vmatpush.msra.mxu0 %v857
    %920 = vmatpush.msra.mxu0 %v853
    %921 = vmatpush.msra.mxu0 %v849
    %922 = vmatpush.msra.mxu0 %v845
    %923 = vmatpush.msra.mxu0 %v841
    %924 = vmatpush.msra.mxu0 %v837
    %925 = vmatpush.msra.mxu0 %v833
    %926 = vmatpush.msra.mxu0 %v829
    %927 = vmatpush.msra.mxu0 %v825
    %928 = vmatpush.msra.mxu0 %v821
    %929 = vmatpush.msra.mxu0 %v817
    %930 = vmatpush.msra.mxu0 %v813
    %931 = vmatmul.f32.gmra.mxu0 %v359
    %v932 = vpop.f32.mrf.mxu0
    %v933 = vadd.f32 0.0, %v932
    %934 = vdwg.mxu0
    %935 = vmatpush.msra.mxu0 %v874
    %936 = vmatpush.msra.mxu0 %v870
    %937 = vmatpush.msra.mxu0 %v866
    %938 = vmatpush.msra.mxu0 %v862
    %939 = vmatpush.msra.mxu0 %v858
    %940 = vmatpush.msra.mxu0 %v854
    %941 = vmatpush.msra.mxu0 %v850
    %942 = vmatpush.msra.mxu0 %v846
    %943 = vmatpush.msra.mxu0 %v842
    %944 = vmatpush.msra.mxu0 %v838
    %945 = vmatpush.msra.mxu0 %v834
    %946 = vmatpush.msra.mxu0 %v830
    %947 = vmatpush.msra.mxu0 %v826
    %948 = vmatpush.msra.mxu0 %v822
    %949 = vmatpush.msra.mxu0 %v818
    %950 = vmatpush.msra.mxu0 %v814
    %951 = vmatmul.f32.gmra.mxu0 %v359
    %v952 = vpop.f32.mrf.mxu0
    %v953 = vadd.f32 0.0, %v952
    %954 = vdwg.mxu0
    %v959 = vrot.slane %v893, 7
    %v960 = vrot.slane %v913, 7
    %v961 = vrot.slane %v933, 7
    %v962 = vrot.slane %v953, 7
    %v967 = vadd.f32 %v137, %v959
    %v968 = vadd.f32 %v138, %v960
    %v969 = vadd.f32 %v139, %v961
    %v970 = vadd.f32 %v140, %v962
    %v971 = vxor.u32 %v967, 2147483648
    %v972 = vmul.f32 %v971, 1.442695
    %v973 = vpow.pop %v972
    %v974 = vadd.f32 %v973, 1.0
    %v975 = vrcp.pop %v974
    %v976 = vmul.f32 %v974, %v975
    %v977 = vsub.f32 1.0, %v976
    %v978 = vmul.f32 %v975, %v977
    %v979 = vadd.f32 %v975, %v978
    %vm980 = vweird.f32 %v974
    %vm981 = vweird.f32 %v975
    %vm982 = vmor %vm980, %vm981
    %v983 = vsel %vm982, %v975, %v979
    %v984 = vand.u32 2147483647, %v974
    %vm985 = vcmp.eq.f32.partialorder %v984, 8.507059e+37
    %v986 = vand.u32 %v974, 2147483648
    %v987 = vor.u32 1.1754944e-38, %v986
    %v988 = vsel %vm985, %v987, %v983
    %v989 = vmul.f32 1.0, %v988
    %v990 = vxor.u32 %v968, 2147483648
    %v991 = vmul.f32 %v990, 1.442695
    %v992 = vpow.pop %v991
    %v993 = vadd.f32 %v992, 1.0
    %v994 = vrcp.pop %v993
    %v995 = vmul.f32 %v993, %v994
    %v996 = vsub.f32 1.0, %v995
    %v997 = vmul.f32 %v994, %v996
    %v998 = vadd.f32 %v994, %v997
    %vm999 = vweird.f32 %v993
    %vm1000 = vweird.f32 %v994
    %vm1001 = vmor %vm999, %vm1000
    %v1002 = vsel %vm1001, %v994, %v998
    %v1003 = vand.u32 2147483647, %v993
    %vm1004 = vcmp.eq.f32.partialorder %v1003, 8.507059e+37
    %v1005 = vand.u32 %v993, 2147483648
    %v1006 = vor.u32 1.1754944e-38, %v1005
    %v1007 = vsel %vm1004, %v1006, %v1002
    %v1008 = vmul.f32 1.0, %v1007
    %v1009 = vtanh.pop %v969
    %v1010 = vxor.u32 %v970, 2147483648
    %v1011 = vmul.f32 %v1010, 1.442695
    %v1012 = vpow.pop %v1011
    %v1013 = vadd.f32 %v1012, 1.0
    %v1014 = vrcp.pop %v1013
    %v1015 = vmul.f32 %v1013, %v1014
    %v1016 = vsub.f32 1.0, %v1015
    %v1017 = vmul.f32 %v1014, %v1016
    %v1018 = vadd.f32 %v1014, %v1017
    %vm1019 = vweird.f32 %v1013
    %vm1020 = vweird.f32 %v1014
    %vm1021 = vmor %vm1019, %vm1020
    %v1022 = vsel %vm1021, %v1014, %v1018
    %v1023 = vand.u32 2147483647, %v1013
    %vm1024 = vcmp.eq.f32.partialorder %v1023, 8.507059e+37
    %v1025 = vand.u32 %v1013, 2147483648
    %v1026 = vor.u32 1.1754944e-38, %v1025
    %v1027 = vsel %vm1024, %v1026, %v1022
    %v1028 = vmul.f32 1.0, %v1027
    %v1030 = vrot.slane %v357, 7
    %v1032 = vmul.f32 %v1008, %v1030
    %v1033 = vmul.f32 %v989, %v1009
    %v1034 = vadd.f32 %v1032, %v1033
    %v1035 = vtanh.pop %v1034
    %v1036 = vmul.f32 %v1028, %v1035
    %v1037 = vld [vmem:[#allocation4] sm:$0xff]
    %v1038 = vld [vmem:[#allocation4 + $0x8] sm:$0xff]
    %v1039 = vld [vmem:[#allocation4 + $0x10] sm:$0xff]
    %v1040 = vld [vmem:[#allocation4 + $0x18] sm:$0xff]
    %v1041 = vld [vmem:[#allocation4 + $0x20] sm:$0xff]
    %v1042 = vld [vmem:[#allocation4 + $0x28] sm:$0xff]
    %v1043 = vld [vmem:[#allocation4 + $0x30] sm:$0xff]
    %v1044 = vld [vmem:[#allocation4 + $0x38] sm:$0xff]
    %v1045 = vld [vmem:[#allocation4 + $0x40] sm:$0xff]
    %v1046 = vld [vmem:[#allocation4 + $0x48] sm:$0xff]
    %v1047 = vld [vmem:[#allocation4 + $0x50] sm:$0xff]
    %v1048 = vld [vmem:[#allocation4 + $0x58] sm:$0xff]
    %v1049 = vld [vmem:[#allocation4 + $0x60] sm:$0xff]
    %v1050 = vld [vmem:[#allocation4 + $0x68] sm:$0xff]
    %v1051 = vld [vmem:[#allocation4 + $0x70] sm:$0xff]
    %v1052 = vld [vmem:[#allocation4 + $0x78] sm:$0xff]
    %v1053 = vld [vmem:[#allocation4 + $0x80] sm:$0xff]
    %v1054 = vld [vmem:[#allocation4 + $0x88] sm:$0xff]
    %v1055 = vld [vmem:[#allocation4 + $0x90] sm:$0xff]
    %v1056 = vld [vmem:[#allocation4 + $0x98] sm:$0xff]
    %v1057 = vld [vmem:[#allocation4 + $0xa0] sm:$0xff]
    %v1058 = vld [vmem:[#allocation4 + $0xa8] sm:$0xff]
    %v1059 = vld [vmem:[#allocation4 + $0xb0] sm:$0xff]
    %v1060 = vld [vmem:[#allocation4 + $0xb8] sm:$0xff]
    %v1061 = vld [vmem:[#allocation4 + $0xc0] sm:$0xff]
    %v1062 = vld [vmem:[#allocation4 + $0xc8] sm:$0xff]
    %v1063 = vld [vmem:[#allocation4 + $0xd0] sm:$0xff]
    %v1064 = vld [vmem:[#allocation4 + $0xd8] sm:$0xff]
    %v1065 = vld [vmem:[#allocation4 + $0xe0] sm:$0xff]
    %v1066 = vld [vmem:[#allocation4 + $0xe8] sm:$0xff]
    %v1067 = vld [vmem:[#allocation4 + $0xf0] sm:$0xff]
    %v1068 = vld [vmem:[#allocation4 + $0xf8] sm:$0xff]
    %v1069 = vld [vmem:[#allocation4 + $0x100] sm:$0xff]
    %v1070 = vld [vmem:[#allocation4 + $0x108] sm:$0xff]
    %v1071 = vld [vmem:[#allocation4 + $0x110] sm:$0xff]
    %v1072 = vld [vmem:[#allocation4 + $0x118] sm:$0xff]
    %v1073 = vld [vmem:[#allocation4 + $0x120] sm:$0xff]
    %v1074 = vld [vmem:[#allocation4 + $0x128] sm:$0xff]
    %v1075 = vld [vmem:[#allocation4 + $0x130] sm:$0xff]
    %v1076 = vld [vmem:[#allocation4 + $0x138] sm:$0xff]
    %v1077 = vld [vmem:[#allocation4 + $0x140] sm:$0xff]
    %v1078 = vld [vmem:[#allocation4 + $0x148] sm:$0xff]
    %v1079 = vld [vmem:[#allocation4 + $0x150] sm:$0xff]
    %v1080 = vld [vmem:[#allocation4 + $0x158] sm:$0xff]
    %v1081 = vld [vmem:[#allocation4 + $0x160] sm:$0xff]
    %v1082 = vld [vmem:[#allocation4 + $0x168] sm:$0xff]
    %v1083 = vld [vmem:[#allocation4 + $0x170] sm:$0xff]
    %v1084 = vld [vmem:[#allocation4 + $0x178] sm:$0xff]
    %v1085 = vld [vmem:[#allocation4 + $0x180] sm:$0xff]
    %v1086 = vld [vmem:[#allocation4 + $0x188] sm:$0xff]
    %v1087 = vld [vmem:[#allocation4 + $0x190] sm:$0xff]
    %v1088 = vld [vmem:[#allocation4 + $0x198] sm:$0xff]
    %v1089 = vld [vmem:[#allocation4 + $0x1a0] sm:$0xff]
    %v1090 = vld [vmem:[#allocation4 + $0x1a8] sm:$0xff]
    %v1091 = vld [vmem:[#allocation4 + $0x1b0] sm:$0xff]
    %v1092 = vld [vmem:[#allocation4 + $0x1b8] sm:$0xff]
    %v1093 = vld [vmem:[#allocation4 + $0x1c0] sm:$0xff]
    %v1094 = vld [vmem:[#allocation4 + $0x1c8] sm:$0xff]
    %v1095 = vld [vmem:[#allocation4 + $0x1d0] sm:$0xff]
    %v1096 = vld [vmem:[#allocation4 + $0x1d8] sm:$0xff]
    %v1097 = vld [vmem:[#allocation4 + $0x1e0] sm:$0xff]
    %v1098 = vld [vmem:[#allocation4 + $0x1e8] sm:$0xff]
    %v1099 = vld [vmem:[#allocation4 + $0x1f0] sm:$0xff]
    %v1100 = vld [vmem:[#allocation4 + $0x1f8] sm:$0xff]
    %v1101 = vld [vmem:[#allocation6] sm:$0xff]
    %v1102 = vld [vmem:[#allocation6 + $0x8] sm:$0xff]
    %v1103 = vld [vmem:[#allocation6 + $0x10] sm:$0xff]
    %v1104 = vld [vmem:[#allocation6 + $0x18] sm:$0xff]
    %v1105 = vld [vmem:[#allocation6 + $0x20] sm:$0xff]
    %v1106 = vld [vmem:[#allocation6 + $0x28] sm:$0xff]
    %v1107 = vld [vmem:[#allocation6 + $0x30] sm:$0xff]
    %v1108 = vld [vmem:[#allocation6 + $0x38] sm:$0xff]
    %v1109 = vld [vmem:[#allocation6 + $0x40] sm:$0xff]
    %v1110 = vld [vmem:[#allocation6 + $0x48] sm:$0xff]
    %v1111 = vld [vmem:[#allocation6 + $0x50] sm:$0xff]
    %v1112 = vld [vmem:[#allocation6 + $0x58] sm:$0xff]
    %v1113 = vld [vmem:[#allocation6 + $0x60] sm:$0xff]
    %v1114 = vld [vmem:[#allocation6 + $0x68] sm:$0xff]
    %v1115 = vld [vmem:[#allocation6 + $0x70] sm:$0xff]
    %v1116 = vld [vmem:[#allocation6 + $0x78] sm:$0xff]
    %v1117 = vld [vmem:[#allocation6 + $0x80] sm:$0xff]
    %v1118 = vld [vmem:[#allocation6 + $0x88] sm:$0xff]
    %v1119 = vld [vmem:[#allocation6 + $0x90] sm:$0xff]
    %v1120 = vld [vmem:[#allocation6 + $0x98] sm:$0xff]
    %v1121 = vld [vmem:[#allocation6 + $0xa0] sm:$0xff]
    %v1122 = vld [vmem:[#allocation6 + $0xa8] sm:$0xff]
    %v1123 = vld [vmem:[#allocation6 + $0xb0] sm:$0xff]
    %v1124 = vld [vmem:[#allocation6 + $0xb8] sm:$0xff]
    %v1125 = vld [vmem:[#allocation6 + $0xc0] sm:$0xff]
    %v1126 = vld [vmem:[#allocation6 + $0xc8] sm:$0xff]
    %v1127 = vld [vmem:[#allocation6 + $0xd0] sm:$0xff]
    %v1128 = vld [vmem:[#allocation6 + $0xd8] sm:$0xff]
    %v1129 = vld [vmem:[#allocation6 + $0xe0] sm:$0xff]
    %v1130 = vld [vmem:[#allocation6 + $0xe8] sm:$0xff]
    %v1131 = vld [vmem:[#allocation6 + $0xf0] sm:$0xff]
    %v1132 = vld [vmem:[#allocation6 + $0xf8] sm:$0xff]
    %v1133 = vld [vmem:[#allocation6 + $0x100] sm:$0xff]
    %v1134 = vld [vmem:[#allocation6 + $0x108] sm:$0xff]
    %v1135 = vld [vmem:[#allocation6 + $0x110] sm:$0xff]
    %v1136 = vld [vmem:[#allocation6 + $0x118] sm:$0xff]
    %v1137 = vld [vmem:[#allocation6 + $0x120] sm:$0xff]
    %v1138 = vld [vmem:[#allocation6 + $0x128] sm:$0xff]
    %v1139 = vld [vmem:[#allocation6 + $0x130] sm:$0xff]
    %v1140 = vld [vmem:[#allocation6 + $0x138] sm:$0xff]
    %v1141 = vld [vmem:[#allocation6 + $0x140] sm:$0xff]
    %v1142 = vld [vmem:[#allocation6 + $0x148] sm:$0xff]
    %v1143 = vld [vmem:[#allocation6 + $0x150] sm:$0xff]
    %v1144 = vld [vmem:[#allocation6 + $0x158] sm:$0xff]
    %v1145 = vld [vmem:[#allocation6 + $0x160] sm:$0xff]
    %v1146 = vld [vmem:[#allocation6 + $0x168] sm:$0xff]
    %v1147 = vld [vmem:[#allocation6 + $0x170] sm:$0xff]
    %v1148 = vld [vmem:[#allocation6 + $0x178] sm:$0xff]
    %v1149 = vld [vmem:[#allocation6 + $0x180] sm:$0xff]
    %v1150 = vld [vmem:[#allocation6 + $0x188] sm:$0xff]
    %v1151 = vld [vmem:[#allocation6 + $0x190] sm:$0xff]
    %v1152 = vld [vmem:[#allocation6 + $0x198] sm:$0xff]
    %v1153 = vld [vmem:[#allocation6 + $0x1a0] sm:$0xff]
    %v1154 = vld [vmem:[#allocation6 + $0x1a8] sm:$0xff]
    %v1155 = vld [vmem:[#allocation6 + $0x1b0] sm:$0xff]
    %v1156 = vld [vmem:[#allocation6 + $0x1b8] sm:$0xff]
    %v1157 = vld [vmem:[#allocation6 + $0x1c0] sm:$0xff]
    %v1158 = vld [vmem:[#allocation6 + $0x1c8] sm:$0xff]
    %v1159 = vld [vmem:[#allocation6 + $0x1d0] sm:$0xff]
    %v1160 = vld [vmem:[#allocation6 + $0x1d8] sm:$0xff]
    %v1161 = vld [vmem:[#allocation6 + $0x1e0] sm:$0xff]
    %v1162 = vld [vmem:[#allocation6 + $0x1e8] sm:$0xff]
    %v1163 = vld [vmem:[#allocation6 + $0x1f0] sm:$0xff]
    %v1164 = vld [vmem:[#allocation6 + $0x1f8] sm:$0xff]
    %1165 = vmatpush.msra.mxu0 %v1161
    %1166 = vmatpush.msra.mxu0 %v1157
    %1167 = vmatpush.msra.mxu0 %v1153
    %1168 = vmatpush.msra.mxu0 %v1149
    %1169 = vmatpush.msra.mxu0 %v1145
    %1170 = vmatpush.msra.mxu0 %v1141
    %1171 = vmatpush.msra.mxu0 %v1137
    %1172 = vmatpush.msra.mxu0 %v1133
    %1173 = vmatpush.msra.mxu0 %v1129
    %1174 = vmatpush.msra.mxu0 %v1125
    %1175 = vmatpush.msra.mxu0 %v1121
    %1176 = vmatpush.msra.mxu0 %v1117
    %1177 = vmatpush.msra.mxu0 %v1113
    %1178 = vmatpush.msra.mxu0 %v1109
    %1179 = vmatpush.msra.mxu0 %v1105
    %1180 = vmatpush.msra.mxu0 %v1101
    %1181 = vmatmul.f32.gmra.mxu0 %v723
    %v1182 = vpop.f32.mrf.mxu0
    %v1183 = vadd.f32 0.0, %v1182
    %1184 = vdwg.mxu0
    %1185 = vmatpush.msra.mxu0 %v1162
    %1186 = vmatpush.msra.mxu0 %v1158
    %1187 = vmatpush.msra.mxu0 %v1154
    %1188 = vmatpush.msra.mxu0 %v1150
    %1189 = vmatpush.msra.mxu0 %v1146
    %1190 = vmatpush.msra.mxu0 %v1142
    %1191 = vmatpush.msra.mxu0 %v1138
    %1192 = vmatpush.msra.mxu0 %v1134
    %1193 = vmatpush.msra.mxu0 %v1130
    %1194 = vmatpush.msra.mxu0 %v1126
    %1195 = vmatpush.msra.mxu0 %v1122
    %1196 = vmatpush.msra.mxu0 %v1118
    %1197 = vmatpush.msra.mxu0 %v1114
    %1198 = vmatpush.msra.mxu0 %v1110
    %1199 = vmatpush.msra.mxu0 %v1106
    %1200 = vmatpush.msra.mxu0 %v1102
    %1201 = vmatmul.f32.gmra.mxu0 %v723
    %v1202 = vpop.f32.mrf.mxu0
    %v1203 = vadd.f32 0.0, %v1202
    %1204 = vdwg.mxu0
    %1205 = vmatpush.msra.mxu0 %v1163
    %1206 = vmatpush.msra.mxu0 %v1159
    %1207 = vmatpush.msra.mxu0 %v1155
    %1208 = vmatpush.msra.mxu0 %v1151
    %1209 = vmatpush.msra.mxu0 %v1147
    %1210 = vmatpush.msra.mxu0 %v1143
    %1211 = vmatpush.msra.mxu0 %v1139
    %1212 = vmatpush.msra.mxu0 %v1135
    %1213 = vmatpush.msra.mxu0 %v1131
    %1214 = vmatpush.msra.mxu0 %v1127
    %1215 = vmatpush.msra.mxu0 %v1123
    %1216 = vmatpush.msra.mxu0 %v1119
    %1217 = vmatpush.msra.mxu0 %v1115
    %1218 = vmatpush.msra.mxu0 %v1111
    %1219 = vmatpush.msra.mxu0 %v1107
    %1220 = vmatpush.msra.mxu0 %v1103
    %1221 = vmatmul.f32.gmra.mxu0 %v723
    %v1222 = vpop.f32.mrf.mxu0
    %v1223 = vadd.f32 0.0, %v1222
    %1224 = vdwg.mxu0
    %1225 = vmatpush.msra.mxu0 %v1164
    %1226 = vmatpush.msra.mxu0 %v1160
    %1227 = vmatpush.msra.mxu0 %v1156
    %1228 = vmatpush.msra.mxu0 %v1152
    %1229 = vmatpush.msra.mxu0 %v1148
    %1230 = vmatpush.msra.mxu0 %v1144
    %1231 = vmatpush.msra.mxu0 %v1140
    %1232 = vmatpush.msra.mxu0 %v1136
    %1233 = vmatpush.msra.mxu0 %v1132
    %1234 = vmatpush.msra.mxu0 %v1128
    %1235 = vmatpush.msra.mxu0 %v1124
    %1236 = vmatpush.msra.mxu0 %v1120
    %1237 = vmatpush.msra.mxu0 %v1116
    %1238 = vmatpush.msra.mxu0 %v1112
    %1239 = vmatpush.msra.mxu0 %v1108
    %1240 = vmatpush.msra.mxu0 %v1104
    %1241 = vmatmul.f32.gmra.mxu0 %v723
    %v1242 = vpop.f32.mrf.mxu0
    %v1243 = vadd.f32 0.0, %v1242
    %1244 = vdwg.mxu0
    %v1246 = vrot.slane %v1036, 1
    %1248 = vmatpush.msra.mxu0 %v1097
    %1249 = vmatpush.msra.mxu0 %v1093
    %1250 = vmatpush.msra.mxu0 %v1089
    %1251 = vmatpush.msra.mxu0 %v1085
    %1252 = vmatpush.msra.mxu0 %v1081
    %1253 = vmatpush.msra.mxu0 %v1077
    %1254 = vmatpush.msra.mxu0 %v1073
    %1255 = vmatpush.msra.mxu0 %v1069
    %1256 = vmatpush.msra.mxu0 %v1065
    %1257 = vmatpush.msra.mxu0 %v1061
    %1258 = vmatpush.msra.mxu0 %v1057
    %1259 = vmatpush.msra.mxu0 %v1053
    %1260 = vmatpush.msra.mxu0 %v1049
    %1261 = vmatpush.msra.mxu0 %v1045
    %1262 = vmatpush.msra.mxu0 %v1041
    %1263 = vmatpush.msra.mxu0 %v1037
    %1264 = vmatmul.f32.gmra.mxu0 %v1246
    %v1265 = vpop.f32.mrf.mxu0
    %v1266 = vadd.f32 %v1183, %v1265
    %1267 = vdwg.mxu0
    %1268 = vmatpush.msra.mxu0 %v1098
    %1269 = vmatpush.msra.mxu0 %v1094
    %1270 = vmatpush.msra.mxu0 %v1090
    %1271 = vmatpush.msra.mxu0 %v1086
    %1272 = vmatpush.msra.mxu0 %v1082
    %1273 = vmatpush.msra.mxu0 %v1078
    %1274 = vmatpush.msra.mxu0 %v1074
    %1275 = vmatpush.msra.mxu0 %v1070
    %1276 = vmatpush.msra.mxu0 %v1066
    %1277 = vmatpush.msra.mxu0 %v1062
    %1278 = vmatpush.msra.mxu0 %v1058
    %1279 = vmatpush.msra.mxu0 %v1054
    %1280 = vmatpush.msra.mxu0 %v1050
    %1281 = vmatpush.msra.mxu0 %v1046
    %1282 = vmatpush.msra.mxu0 %v1042
    %1283 = vmatpush.msra.mxu0 %v1038
    %1284 = vmatmul.f32.gmra.mxu0 %v1246
    %v1285 = vpop.f32.mrf.mxu0
    %v1286 = vadd.f32 %v1203, %v1285
    %1287 = vdwg.mxu0
    %1288 = vmatpush.msra.mxu0 %v1099
    %1289 = vmatpush.msra.mxu0 %v1095
    %1290 = vmatpush.msra.mxu0 %v1091
    %1291 = vmatpush.msra.mxu0 %v1087
    %1292 = vmatpush.msra.mxu0 %v1083
    %1293 = vmatpush.msra.mxu0 %v1079
    %1294 = vmatpush.msra.mxu0 %v1075
    %1295 = vmatpush.msra.mxu0 %v1071
    %1296 = vmatpush.msra.mxu0 %v1067
    %1297 = vmatpush.msra.mxu0 %v1063
    %1298 = vmatpush.msra.mxu0 %v1059
    %1299 = vmatpush.msra.mxu0 %v1055
    %1300 = vmatpush.msra.mxu0 %v1051
    %1301 = vmatpush.msra.mxu0 %v1047
    %1302 = vmatpush.msra.mxu0 %v1043
    %1303 = vmatpush.msra.mxu0 %v1039
    %1304 = vmatmul.f32.gmra.mxu0 %v1246
    %v1305 = vpop.f32.mrf.mxu0
    %v1306 = vadd.f32 %v1223, %v1305
    %1307 = vdwg.mxu0
    %1308 = vmatpush.msra.mxu0 %v1100
    %1309 = vmatpush.msra.mxu0 %v1096
    %1310 = vmatpush.msra.mxu0 %v1092
    %1311 = vmatpush.msra.mxu0 %v1088
    %1312 = vmatpush.msra.mxu0 %v1084
    %1313 = vmatpush.msra.mxu0 %v1080
    %1314 = vmatpush.msra.mxu0 %v1076
    %1315 = vmatpush.msra.mxu0 %v1072
    %1316 = vmatpush.msra.mxu0 %v1068
    %1317 = vmatpush.msra.mxu0 %v1064
    %1318 = vmatpush.msra.mxu0 %v1060
    %1319 = vmatpush.msra.mxu0 %v1056
    %1320 = vmatpush.msra.mxu0 %v1052
    %1321 = vmatpush.msra.mxu0 %v1048
    %1322 = vmatpush.msra.mxu0 %v1044
    %1323 = vmatpush.msra.mxu0 %v1040
    %1324 = vmatmul.f32.gmra.mxu0 %v1246
    %v1325 = vpop.f32.mrf.mxu0
    %v1326 = vadd.f32 %v1243, %v1325
    %1327 = vdwg.mxu0
    %v1328 = vadd.f32 %v1266, %v649
    %v1329 = vadd.f32 %v1286, %v650
    %v1330 = vadd.f32 %v1306, %v651
    %v1331 = vadd.f32 %v1326, %v652
    %v1332 = vxor.u32 %v1328, 2147483648
    %v1333 = vmul.f32 %v1332, 1.442695
    %v1334 = vpow.pop %v1333
    %v1335 = vadd.f32 %v1334, 1.0
    %v1336 = vrcp.pop %v1335
    %v1337 = vmul.f32 %v1335, %v1336
    %v1338 = vsub.f32 1.0, %v1337
    %v1339 = vmul.f32 %v1336, %v1338
    %v1340 = vadd.f32 %v1336, %v1339
    %vm1341 = vweird.f32 %v1335
    %vm1342 = vweird.f32 %v1336
    %vm1343 = vmor %vm1341, %vm1342
    %v1344 = vsel %vm1343, %v1336, %v1340
    %v1345 = vand.u32 2147483647, %v1335
    %vm1346 = vcmp.eq.f32.partialorder %v1345, 8.507059e+37
    %v1347 = vand.u32 %v1335, 2147483648
    %v1348 = vor.u32 1.1754944e-38, %v1347
    %v1349 = vsel %vm1346, %v1348, %v1344
    %v1350 = vmul.f32 1.0, %v1349
    %v1351 = vxor.u32 %v1329, 2147483648
    %v1352 = vmul.f32 %v1351, 1.442695
    %v1353 = vpow.pop %v1352
    %v1354 = vadd.f32 %v1353, 1.0
    %v1355 = vrcp.pop %v1354
    %v1356 = vmul.f32 %v1354, %v1355
    %v1357 = vsub.f32 1.0, %v1356
    %v1358 = vmul.f32 %v1355, %v1357
    %v1359 = vadd.f32 %v1355, %v1358
    %vm1360 = vweird.f32 %v1354
    %vm1361 = vweird.f32 %v1355
    %vm1362 = vmor %vm1360, %vm1361
    %v1363 = vsel %vm1362, %v1355, %v1359
    %v1364 = vand.u32 2147483647, %v1354
    %vm1365 = vcmp.eq.f32.partialorder %v1364, 8.507059e+37
    %v1366 = vand.u32 %v1354, 2147483648
    %v1367 = vor.u32 1.1754944e-38, %v1366
    %v1368 = vsel %vm1365, %v1367, %v1363
    %v1369 = vmul.f32 1.0, %v1368
    %v1370 = vtanh.pop %v1330
    %v1371 = vxor.u32 %v1331, 2147483648
    %v1372 = vmul.f32 %v1371, 1.442695
    %v1373 = vpow.pop %v1372
    %v1374 = vadd.f32 %v1373, 1.0
    %v1375 = vrcp.pop %v1374
    %v1376 = vmul.f32 %v1374, %v1375
    %v1377 = vsub.f32 1.0, %v1376
    %v1378 = vmul.f32 %v1375, %v1377
    %v1379 = vadd.f32 %v1375, %v1378
    %vm1380 = vweird.f32 %v1374
    %vm1381 = vweird.f32 %v1375
    %vm1382 = vmor %vm1380, %vm1381
    %v1383 = vsel %vm1382, %v1375, %v1379
    %v1384 = vand.u32 2147483647, %v1374
    %vm1385 = vcmp.eq.f32.partialorder %v1384, 8.507059e+37
    %v1386 = vand.u32 %v1374, 2147483648
    %v1387 = vor.u32 1.1754944e-38, %v1386
    %v1388 = vsel %vm1385, %v1387, %v1383
    %v1389 = vmul.f32 1.0, %v1388
    %v1390 = vmul.f32 %v1369, %v721
    %v1391 = vmul.f32 %v1350, %v1370
    %v1392 = vadd.f32 %v1390, %v1391
    %v1393 = vtanh.pop %v1392
    %v1394 = vmul.f32 %v1389, %v1393
    %v1395 = vld [vmem:[#allocation7] sm:$0xff]
    %v1396 = vld [vmem:[#allocation7 + $0x8] sm:$0xff]
    %v1397 = vld [vmem:[#allocation7 + $0x10] sm:$0xff]
    %v1398 = vld [vmem:[#allocation7 + $0x18] sm:$0xff]
    %v1399 = vld [vmem:[#allocation7 + $0x20] sm:$0xff]
    %v1400 = vld [vmem:[#allocation7 + $0x28] sm:$0xff]
    %v1401 = vld [vmem:[#allocation7 + $0x30] sm:$0xff]
    %v1402 = vld [vmem:[#allocation7 + $0x38] sm:$0xff]
    %v1403 = vld [vmem:[#allocation7 + $0x40] sm:$0xff]
    %v1404 = vld [vmem:[#allocation7 + $0x48] sm:$0xff]
    %v1405 = vld [vmem:[#allocation7 + $0x50] sm:$0xff]
    %v1406 = vld [vmem:[#allocation7 + $0x58] sm:$0xff]
    %v1407 = vld [vmem:[#allocation7 + $0x60] sm:$0xff]
    %v1408 = vld [vmem:[#allocation7 + $0x68] sm:$0xff]
    %v1409 = vld [vmem:[#allocation7 + $0x70] sm:$0xff]
    %v1410 = vld [vmem:[#allocation7 + $0x78] sm:$0xff]
    %1411 = vset.pattern.permute.xlu0 3
    %1412 = vperm.xlu0 %1411, %v804
    %v1413 = vpop.permute.xlu0 %1412
    %v1415 = vmul.f32 %v1413, %v147
    %1416 = vmatpush.msra.mxu0 %v1410
    %1417 = vmatpush.msra.mxu0 %v1409
    %1418 = vmatpush.msra.mxu0 %v1408
    %1419 = vmatpush.msra.mxu0 %v1407
    %1420 = vmatpush.msra.mxu0 %v1406
    %1421 = vmatpush.msra.mxu0 %v1405
    %1422 = vmatpush.msra.mxu0 %v1404
    %1423 = vmatpush.msra.mxu0 %v1403
    %1424 = vmatpush.msra.mxu0 %v1402
    %1425 = vmatpush.msra.mxu0 %v1401
    %1426 = vmatpush.msra.mxu0 %v1400
    %1427 = vmatpush.msra.mxu0 %v1399
    %1428 = vmatpush.msra.mxu0 %v1398
    %1429 = vmatpush.msra.mxu0 %v1397
    %1430 = vmatpush.msra.mxu0 %v1396
    %1431 = vmatpush.msra.mxu0 %v1395
    %1432 = vmatmul.f32.gmra.mxu0 %v1394
    %v1433 = vpop.f32.mrf.mxu0
    %v1434 = vadd.f32 %v1415, %v1433
    %1435 = vdwg.mxu0
    %v1436 = vadd.f32 %v1434, %v148
    %v1437 = vxor.u32 %v1436, 2147483648
    %v1438 = vmul.f32 %v1437, 1.442695
    %v1439 = vpow.pop %v1438
    %v1440 = vadd.f32 %v1439, 1.0
    %v1441 = vrcp.pop %v1440
    %v1442 = vmul.f32 %v1440, %v1441
    %v1443 = vsub.f32 1.0, %v1442
    %v1444 = vmul.f32 %v1441, %v1443
    %v1445 = vadd.f32 %v1441, %v1444
    %vm1446 = vweird.f32 %v1440
    %vm1447 = vweird.f32 %v1441
    %vm1448 = vmor %vm1446, %vm1447
    %v1449 = vsel %vm1448, %v1441, %v1445
    %v1450 = vand.u32 2147483647, %v1440
    %vm1451 = vcmp.eq.f32.partialorder %v1450, 8.507059e+37
    %v1452 = vand.u32 %v1440, 2147483648
    %v1453 = vor.u32 1.1754944e-38, %v1452
    %v1454 = vsel %vm1451, %v1453, %v1449
    %v1455 = vmul.f32 1.0, %v1454
    %v1456 = vtanh.pop %v1436
    %v1457 = vmul.f32 %v1455, %v798
    %1459 = vrot.lane.b32.xlu0 %v1456, 126
    %v1460 = vpop.permute.xlu0 %1459
    %v1462 = vmul.f32 %v1455, %v1460
    %1464 = vrot.lane.b32.xlu0 %v1462, 1
    %v1465 = vpop.permute.xlu0 %1464
    %v1467 = vadd.f32 %v1457, %v1465
    %v1468 = vtanh.pop %v1467
    %1470 = vrot.lane.b32.xlu0 %v1468, 2
    %v1471 = vpop.permute.xlu0 %1470
    %v1473 = vmul.f32 %v1455, %v1471
    %1475 = vrot.lane.b32.xlu0 %v1473, 125
    %v1476 = vpop.permute.xlu0 %1475
    %1478 = vst.msk [vmem:[%s13 + $0x1] sm:$0x1] %vm809, %v1476
    %v1479 = vld [vmem:[#allocation2] sm:$0xff]
    %v1480 = vld [vmem:[#allocation2 + $0x8] sm:$0xff]
    %v1481 = vld [vmem:[#allocation2 + $0x10] sm:$0xff]
    %v1482 = vld [vmem:[#allocation2 + $0x18] sm:$0xff]
    %v1483 = vld [vmem:[#allocation2 + $0x20] sm:$0xff]
    %v1484 = vld [vmem:[#allocation2 + $0x28] sm:$0xff]
    %v1485 = vld [vmem:[#allocation2 + $0x30] sm:$0xff]
    %v1486 = vld [vmem:[#allocation2 + $0x38] sm:$0xff]
    %v1487 = vld [vmem:[#allocation2 + $0x40] sm:$0xff]
    %v1488 = vld [vmem:[#allocation2 + $0x48] sm:$0xff]
    %v1489 = vld [vmem:[#allocation2 + $0x50] sm:$0xff]
    %v1490 = vld [vmem:[#allocation2 + $0x58] sm:$0xff]
    %v1491 = vld [vmem:[#allocation2 + $0x60] sm:$0xff]
    %v1492 = vld [vmem:[#allocation2 + $0x68] sm:$0xff]
    %v1493 = vld [vmem:[#allocation2 + $0x70] sm:$0xff]
    %v1494 = vld [vmem:[#allocation2 + $0x78] sm:$0xff]
    %v1495 = vld [vmem:[#allocation2 + $0x80] sm:$0xff]
    %v1496 = vld [vmem:[#allocation2 + $0x88] sm:$0xff]
    %v1497 = vld [vmem:[#allocation2 + $0x90] sm:$0xff]
    %v1498 = vld [vmem:[#allocation2 + $0x98] sm:$0xff]
    %v1499 = vld [vmem:[#allocation2 + $0xa0] sm:$0xff]
    %v1500 = vld [vmem:[#allocation2 + $0xa8] sm:$0xff]
    %v1501 = vld [vmem:[#allocation2 + $0xb0] sm:$0xff]
    %v1502 = vld [vmem:[#allocation2 + $0xb8] sm:$0xff]
    %v1503 = vld [vmem:[#allocation2 + $0xc0] sm:$0xff]
    %v1504 = vld [vmem:[#allocation2 + $0xc8] sm:$0xff]
    %v1505 = vld [vmem:[#allocation2 + $0xd0] sm:$0xff]
    %v1506 = vld [vmem:[#allocation2 + $0xd8] sm:$0xff]
    %v1507 = vld [vmem:[#allocation2 + $0xe0] sm:$0xff]
    %v1508 = vld [vmem:[#allocation2 + $0xe8] sm:$0xff]
    %v1509 = vld [vmem:[#allocation2 + $0xf0] sm:$0xff]
    %v1510 = vld [vmem:[#allocation2 + $0xf8] sm:$0xff]
    %v1511 = vld [vmem:[#allocation2 + $0x100] sm:$0xff]
    %v1512 = vld [vmem:[#allocation2 + $0x108] sm:$0xff]
    %v1513 = vld [vmem:[#allocation2 + $0x110] sm:$0xff]
    %v1514 = vld [vmem:[#allocation2 + $0x118] sm:$0xff]
    %v1515 = vld [vmem:[#allocation2 + $0x120] sm:$0xff]
    %v1516 = vld [vmem:[#allocation2 + $0x128] sm:$0xff]
    %v1517 = vld [vmem:[#allocation2 + $0x130] sm:$0xff]
    %v1518 = vld [vmem:[#allocation2 + $0x138] sm:$0xff]
    %v1519 = vld [vmem:[#allocation2 + $0x140] sm:$0xff]
    %v1520 = vld [vmem:[#allocation2 + $0x148] sm:$0xff]
    %v1521 = vld [vmem:[#allocation2 + $0x150] sm:$0xff]
    %v1522 = vld [vmem:[#allocation2 + $0x158] sm:$0xff]
    %v1523 = vld [vmem:[#allocation2 + $0x160] sm:$0xff]
    %v1524 = vld [vmem:[#allocation2 + $0x168] sm:$0xff]
    %v1525 = vld [vmem:[#allocation2 + $0x170] sm:$0xff]
    %v1526 = vld [vmem:[#allocation2 + $0x178] sm:$0xff]
    %v1527 = vld [vmem:[#allocation2 + $0x180] sm:$0xff]
    %v1528 = vld [vmem:[#allocation2 + $0x188] sm:$0xff]
    %v1529 = vld [vmem:[#allocation2 + $0x190] sm:$0xff]
    %v1530 = vld [vmem:[#allocation2 + $0x198] sm:$0xff]
    %v1531 = vld [vmem:[#allocation2 + $0x1a0] sm:$0xff]
    %v1532 = vld [vmem:[#allocation2 + $0x1a8] sm:$0xff]
    %v1533 = vld [vmem:[#allocation2 + $0x1b0] sm:$0xff]
    %v1534 = vld [vmem:[#allocation2 + $0x1b8] sm:$0xff]
    %v1535 = vld [vmem:[#allocation2 + $0x1c0] sm:$0xff]
    %v1536 = vld [vmem:[#allocation2 + $0x1c8] sm:$0xff]
    %v1537 = vld [vmem:[#allocation2 + $0x1d0] sm:$0xff]
    %v1538 = vld [vmem:[#allocation2 + $0x1d8] sm:$0xff]
    %v1539 = vld [vmem:[#allocation2 + $0x1e0] sm:$0xff]
    %v1540 = vld [vmem:[#allocation2 + $0x1e8] sm:$0xff]
    %v1541 = vld [vmem:[#allocation2 + $0x1f0] sm:$0xff]
    %v1542 = vld [vmem:[#allocation2 + $0x1f8] sm:$0xff]
    %1543 = vmatpush.msra.mxu0 %v1539
    %1544 = vmatpush.msra.mxu0 %v1535
    %1545 = vmatpush.msra.mxu0 %v1531
    %1546 = vmatpush.msra.mxu0 %v1527
    %1547 = vmatpush.msra.mxu0 %v1523
    %1548 = vmatpush.msra.mxu0 %v1519
    %1549 = vmatpush.msra.mxu0 %v1515
    %1550 = vmatpush.msra.mxu0 %v1511
    %1551 = vmatpush.msra.mxu0 %v1507
    %1552 = vmatpush.msra.mxu0 %v1503
    %1553 = vmatpush.msra.mxu0 %v1499
    %1554 = vmatpush.msra.mxu0 %v1495
    %1555 = vmatpush.msra.mxu0 %v1491
    %1556 = vmatpush.msra.mxu0 %v1487
    %1557 = vmatpush.msra.mxu0 %v1483
    %1558 = vmatpush.msra.mxu0 %v1479
    %1559 = vmatmul.f32.gmra.mxu0 %v1246
    %v1560 = vpop.f32.mrf.mxu0
    %v1561 = vadd.f32 0.0, %v1560
    %1562 = vdwg.mxu0
    %1563 = vmatpush.msra.mxu0 %v1540
    %1564 = vmatpush.msra.mxu0 %v1536
    %1565 = vmatpush.msra.mxu0 %v1532
    %1566 = vmatpush.msra.mxu0 %v1528
    %1567 = vmatpush.msra.mxu0 %v1524
    %1568 = vmatpush.msra.mxu0 %v1520
    %1569 = vmatpush.msra.mxu0 %v1516
    %1570 = vmatpush.msra.mxu0 %v1512
    %1571 = vmatpush.msra.mxu0 %v1508
    %1572 = vmatpush.msra.mxu0 %v1504
    %1573 = vmatpush.msra.mxu0 %v1500
    %1574 = vmatpush.msra.mxu0 %v1496
    %1575 = vmatpush.msra.mxu0 %v1492
    %1576 = vmatpush.msra.mxu0 %v1488
    %1577 = vmatpush.msra.mxu0 %v1484
    %1578 = vmatpush.msra.mxu0 %v1480
    %1579 = vmatmul.f32.gmra.mxu0 %v1246
    %v1580 = vpop.f32.mrf.mxu0
    %v1581 = vadd.f32 0.0, %v1580
    %1582 = vdwg.mxu0
    %1583 = vmatpush.msra.mxu0 %v1541
    %1584 = vmatpush.msra.mxu0 %v1537
    %1585 = vmatpush.msra.mxu0 %v1533
    %1586 = vmatpush.msra.mxu0 %v1529
    %1587 = vmatpush.msra.mxu0 %v1525
    %1588 = vmatpush.msra.mxu0 %v1521
    %1589 = vmatpush.msra.mxu0 %v1517
    %1590 = vmatpush.msra.mxu0 %v1513
    %1591 = vmatpush.msra.mxu0 %v1509
    %1592 = vmatpush.msra.mxu0 %v1505
    %1593 = vmatpush.msra.mxu0 %v1501
    %1594 = vmatpush.msra.mxu0 %v1497
    %1595 = vmatpush.msra.mxu0 %v1493
    %1596 = vmatpush.msra.mxu0 %v1489
    %1597 = vmatpush.msra.mxu0 %v1485
    %1598 = vmatpush.msra.mxu0 %v1481
    %1599 = vmatmul.f32.gmra.mxu0 %v1246
    %v1600 = vpop.f32.mrf.mxu0
    %v1601 = vadd.f32 0.0, %v1600
    %1602 = vdwg.mxu0
    %1603 = vmatpush.msra.mxu0 %v1542
    %1604 = vmatpush.msra.mxu0 %v1538
    %1605 = vmatpush.msra.mxu0 %v1534
    %1606 = vmatpush.msra.mxu0 %v1530
    %1607 = vmatpush.msra.mxu0 %v1526
    %1608 = vmatpush.msra.mxu0 %v1522
    %1609 = vmatpush.msra.mxu0 %v1518
    %1610 = vmatpush.msra.mxu0 %v1514
    %1611 = vmatpush.msra.mxu0 %v1510
    %1612 = vmatpush.msra.mxu0 %v1506
    %1613 = vmatpush.msra.mxu0 %v1502
    %1614 = vmatpush.msra.mxu0 %v1498
    %1615 = vmatpush.msra.mxu0 %v1494
    %1616 = vmatpush.msra.mxu0 %v1490
    %1617 = vmatpush.msra.mxu0 %v1486
    %1618 = vmatpush.msra.mxu0 %v1482
    %1619 = vmatmul.f32.gmra.mxu0 %v1246
    %v1620 = vpop.f32.mrf.mxu0
    %v1621 = vadd.f32 0.0, %v1620
    %1622 = vdwg.mxu0
    %v1627 = vrot.slane %v1561, 6
    %v1628 = vrot.slane %v1581, 6
    %v1629 = vrot.slane %v1601, 6
    %v1630 = vrot.slane %v1621, 6
    %v1635 = vadd.f32 %v137, %v1627
    %v1636 = vadd.f32 %v138, %v1628
    %v1637 = vadd.f32 %v139, %v1629
    %v1638 = vadd.f32 %v140, %v1630
    %v1639 = vxor.u32 %v1635, 2147483648
    %v1640 = vmul.f32 %v1639, 1.442695
    %v1641 = vpow.pop %v1640
    %v1642 = vadd.f32 %v1641, 1.0
    %v1643 = vrcp.pop %v1642
    %v1644 = vmul.f32 %v1642, %v1643
    %v1645 = vsub.f32 1.0, %v1644
    %v1646 = vmul.f32 %v1643, %v1645
    %v1647 = vadd.f32 %v1643, %v1646
    %vm1648 = vweird.f32 %v1642
    %vm1649 = vweird.f32 %v1643
    %vm1650 = vmor %vm1648, %vm1649
    %v1651 = vsel %vm1650, %v1643, %v1647
    %v1652 = vand.u32 2147483647, %v1642
    %vm1653 = vcmp.eq.f32.partialorder %v1652, 8.507059e+37
    %v1654 = vand.u32 %v1642, 2147483648
    %v1655 = vor.u32 1.1754944e-38, %v1654
    %v1656 = vsel %vm1653, %v1655, %v1651
    %v1657 = vmul.f32 1.0, %v1656
    %v1658 = vxor.u32 %v1636, 2147483648
    %v1659 = vmul.f32 %v1658, 1.442695
    %v1660 = vpow.pop %v1659
    %v1661 = vadd.f32 %v1660, 1.0
    %v1662 = vrcp.pop %v1661
    %v1663 = vmul.f32 %v1661, %v1662
    %v1664 = vsub.f32 1.0, %v1663
    %v1665 = vmul.f32 %v1662, %v1664
    %v1666 = vadd.f32 %v1662, %v1665
    %vm1667 = vweird.f32 %v1661
    %vm1668 = vweird.f32 %v1662
    %vm1669 = vmor %vm1667, %vm1668
    %v1670 = vsel %vm1669, %v1662, %v1666
    %v1671 = vand.u32 2147483647, %v1661
    %vm1672 = vcmp.eq.f32.partialorder %v1671, 8.507059e+37
    %v1673 = vand.u32 %v1661, 2147483648
    %v1674 = vor.u32 1.1754944e-38, %v1673
    %v1675 = vsel %vm1672, %v1674, %v1670
    %v1676 = vmul.f32 1.0, %v1675
    %v1677 = vtanh.pop %v1637
    %v1678 = vxor.u32 %v1638, 2147483648
    %v1679 = vmul.f32 %v1678, 1.442695
    %v1680 = vpow.pop %v1679
    %v1681 = vadd.f32 %v1680, 1.0
    %v1682 = vrcp.pop %v1681
    %v1683 = vmul.f32 %v1681, %v1682
    %v1684 = vsub.f32 1.0, %v1683
    %v1685 = vmul.f32 %v1682, %v1684
    %v1686 = vadd.f32 %v1682, %v1685
    %vm1687 = vweird.f32 %v1681
    %vm1688 = vweird.f32 %v1682
    %vm1689 = vmor %vm1687, %vm1688
    %v1690 = vsel %vm1689, %v1682, %v1686
    %v1691 = vand.u32 2147483647, %v1681
    %vm1692 = vcmp.eq.f32.partialorder %v1691, 8.507059e+37
    %v1693 = vand.u32 %v1681, 2147483648
    %v1694 = vor.u32 1.1754944e-38, %v1693
    %v1695 = vsel %vm1692, %v1694, %v1690
    %v1696 = vmul.f32 1.0, %v1695
    %v1698 = vrot.slane %v1034, 7
    %v1700 = vmul.f32 %v1676, %v1698
    %v1701 = vmul.f32 %v1657, %v1677
    %v1702 = vadd.f32 %v1700, %v1701
    %v1703 = vtanh.pop %v1702
    %v1704 = vmul.f32 %v1696, %v1703
    %v1705 = vld [vmem:[#allocation4] sm:$0xff]
    %v1706 = vld [vmem:[#allocation4 + $0x8] sm:$0xff]
    %v1707 = vld [vmem:[#allocation4 + $0x10] sm:$0xff]
    %v1708 = vld [vmem:[#allocation4 + $0x18] sm:$0xff]
    %v1709 = vld [vmem:[#allocation4 + $0x20] sm:$0xff]
    %v1710 = vld [vmem:[#allocation4 + $0x28] sm:$0xff]
    %v1711 = vld [vmem:[#allocation4 + $0x30] sm:$0xff]
    %v1712 = vld [vmem:[#allocation4 + $0x38] sm:$0xff]
    %v1713 = vld [vmem:[#allocation4 + $0x40] sm:$0xff]
    %v1714 = vld [vmem:[#allocation4 + $0x48] sm:$0xff]
    %v1715 = vld [vmem:[#allocation4 + $0x50] sm:$0xff]
    %v1716 = vld [vmem:[#allocation4 + $0x58] sm:$0xff]
    %v1717 = vld [vmem:[#allocation4 + $0x60] sm:$0xff]
    %v1718 = vld [vmem:[#allocation4 + $0x68] sm:$0xff]
    %v1719 = vld [vmem:[#allocation4 + $0x70] sm:$0xff]
    %v1720 = vld [vmem:[#allocation4 + $0x78] sm:$0xff]
    %v1721 = vld [vmem:[#allocation4 + $0x80] sm:$0xff]
    %v1722 = vld [vmem:[#allocation4 + $0x88] sm:$0xff]
    %v1723 = vld [vmem:[#allocation4 + $0x90] sm:$0xff]
    %v1724 = vld [vmem:[#allocation4 + $0x98] sm:$0xff]
    %v1725 = vld [vmem:[#allocation4 + $0xa0] sm:$0xff]
    %v1726 = vld [vmem:[#allocation4 + $0xa8] sm:$0xff]
    %v1727 = vld [vmem:[#allocation4 + $0xb0] sm:$0xff]
    %v1728 = vld [vmem:[#allocation4 + $0xb8] sm:$0xff]
    %v1729 = vld [vmem:[#allocation4 + $0xc0] sm:$0xff]
    %v1730 = vld [vmem:[#allocation4 + $0xc8] sm:$0xff]
    %v1731 = vld [vmem:[#allocation4 + $0xd0] sm:$0xff]
    %v1732 = vld [vmem:[#allocation4 + $0xd8] sm:$0xff]
    %v1733 = vld [vmem:[#allocation4 + $0xe0] sm:$0xff]
    %v1734 = vld [vmem:[#allocation4 + $0xe8] sm:$0xff]
    %v1735 = vld [vmem:[#allocation4 + $0xf0] sm:$0xff]
    %v1736 = vld [vmem:[#allocation4 + $0xf8] sm:$0xff]
    %v1737 = vld [vmem:[#allocation4 + $0x100] sm:$0xff]
    %v1738 = vld [vmem:[#allocation4 + $0x108] sm:$0xff]
    %v1739 = vld [vmem:[#allocation4 + $0x110] sm:$0xff]
    %v1740 = vld [vmem:[#allocation4 + $0x118] sm:$0xff]
    %v1741 = vld [vmem:[#allocation4 + $0x120] sm:$0xff]
    %v1742 = vld [vmem:[#allocation4 + $0x128] sm:$0xff]
    %v1743 = vld [vmem:[#allocation4 + $0x130] sm:$0xff]
    %v1744 = vld [vmem:[#allocation4 + $0x138] sm:$0xff]
    %v1745 = vld [vmem:[#allocation4 + $0x140] sm:$0xff]
    %v1746 = vld [vmem:[#allocation4 + $0x148] sm:$0xff]
    %v1747 = vld [vmem:[#allocation4 + $0x150] sm:$0xff]
    %v1748 = vld [vmem:[#allocation4 + $0x158] sm:$0xff]
    %v1749 = vld [vmem:[#allocation4 + $0x160] sm:$0xff]
    %v1750 = vld [vmem:[#allocation4 + $0x168] sm:$0xff]
    %v1751 = vld [vmem:[#allocation4 + $0x170] sm:$0xff]
    %v1752 = vld [vmem:[#allocation4 + $0x178] sm:$0xff]
    %v1753 = vld [vmem:[#allocation4 + $0x180] sm:$0xff]
    %v1754 = vld [vmem:[#allocation4 + $0x188] sm:$0xff]
    %v1755 = vld [vmem:[#allocation4 + $0x190] sm:$0xff]
    %v1756 = vld [vmem:[#allocation4 + $0x198] sm:$0xff]
    %v1757 = vld [vmem:[#allocation4 + $0x1a0] sm:$0xff]
    %v1758 = vld [vmem:[#allocation4 + $0x1a8] sm:$0xff]
    %v1759 = vld [vmem:[#allocation4 + $0x1b0] sm:$0xff]
    %v1760 = vld [vmem:[#allocation4 + $0x1b8] sm:$0xff]
    %v1761 = vld [vmem:[#allocation4 + $0x1c0] sm:$0xff]
    %v1762 = vld [vmem:[#allocation4 + $0x1c8] sm:$0xff]
    %v1763 = vld [vmem:[#allocation4 + $0x1d0] sm:$0xff]
    %v1764 = vld [vmem:[#allocation4 + $0x1d8] sm:$0xff]
    %v1765 = vld [vmem:[#allocation4 + $0x1e0] sm:$0xff]
    %v1766 = vld [vmem:[#allocation4 + $0x1e8] sm:$0xff]
    %v1767 = vld [vmem:[#allocation4 + $0x1f0] sm:$0xff]
    %v1768 = vld [vmem:[#allocation4 + $0x1f8] sm:$0xff]
    %v1769 = vld [vmem:[#allocation6] sm:$0xff]
    %v1770 = vld [vmem:[#allocation6 + $0x8] sm:$0xff]
    %v1771 = vld [vmem:[#allocation6 + $0x10] sm:$0xff]
    %v1772 = vld [vmem:[#allocation6 + $0x18] sm:$0xff]
    %v1773 = vld [vmem:[#allocation6 + $0x20] sm:$0xff]
    %v1774 = vld [vmem:[#allocation6 + $0x28] sm:$0xff]
    %v1775 = vld [vmem:[#allocation6 + $0x30] sm:$0xff]
    %v1776 = vld [vmem:[#allocation6 + $0x38] sm:$0xff]
    %v1777 = vld [vmem:[#allocation6 + $0x40] sm:$0xff]
    %v1778 = vld [vmem:[#allocation6 + $0x48] sm:$0xff]
    %v1779 = vld [vmem:[#allocation6 + $0x50] sm:$0xff]
    %v1780 = vld [vmem:[#allocation6 + $0x58] sm:$0xff]
    %v1781 = vld [vmem:[#allocation6 + $0x60] sm:$0xff]
    %v1782 = vld [vmem:[#allocation6 + $0x68] sm:$0xff]
    %v1783 = vld [vmem:[#allocation6 + $0x70] sm:$0xff]
    %v1784 = vld [vmem:[#allocation6 + $0x78] sm:$0xff]
    %v1785 = vld [vmem:[#allocation6 + $0x80] sm:$0xff]
    %v1786 = vld [vmem:[#allocation6 + $0x88] sm:$0xff]
    %v1787 = vld [vmem:[#allocation6 + $0x90] sm:$0xff]
    %v1788 = vld [vmem:[#allocation6 + $0x98] sm:$0xff]
    %v1789 = vld [vmem:[#allocation6 + $0xa0] sm:$0xff]
    %v1790 = vld [vmem:[#allocation6 + $0xa8] sm:$0xff]
    %v1791 = vld [vmem:[#allocation6 + $0xb0] sm:$0xff]
    %v1792 = vld [vmem:[#allocation6 + $0xb8] sm:$0xff]
    %v1793 = vld [vmem:[#allocation6 + $0xc0] sm:$0xff]
    %v1794 = vld [vmem:[#allocation6 + $0xc8] sm:$0xff]
    %v1795 = vld [vmem:[#allocation6 + $0xd0] sm:$0xff]
    %v1796 = vld [vmem:[#allocation6 + $0xd8] sm:$0xff]
    %v1797 = vld [vmem:[#allocation6 + $0xe0] sm:$0xff]
    %v1798 = vld [vmem:[#allocation6 + $0xe8] sm:$0xff]
    %v1799 = vld [vmem:[#allocation6 + $0xf0] sm:$0xff]
    %v1800 = vld [vmem:[#allocation6 + $0xf8] sm:$0xff]
    %v1801 = vld [vmem:[#allocation6 + $0x100] sm:$0xff]
    %v1802 = vld [vmem:[#allocation6 + $0x108] sm:$0xff]
    %v1803 = vld [vmem:[#allocation6 + $0x110] sm:$0xff]
    %v1804 = vld [vmem:[#allocation6 + $0x118] sm:$0xff]
    %v1805 = vld [vmem:[#allocation6 + $0x120] sm:$0xff]
    %v1806 = vld [vmem:[#allocation6 + $0x128] sm:$0xff]
    %v1807 = vld [vmem:[#allocation6 + $0x130] sm:$0xff]
    %v1808 = vld [vmem:[#allocation6 + $0x138] sm:$0xff]
    %v1809 = vld [vmem:[#allocation6 + $0x140] sm:$0xff]
    %v1810 = vld [vmem:[#allocation6 + $0x148] sm:$0xff]
    %v1811 = vld [vmem:[#allocation6 + $0x150] sm:$0xff]
    %v1812 = vld [vmem:[#allocation6 + $0x158] sm:$0xff]
    %v1813 = vld [vmem:[#allocation6 + $0x160] sm:$0xff]
    %v1814 = vld [vmem:[#allocation6 + $0x168] sm:$0xff]
    %v1815 = vld [vmem:[#allocation6 + $0x170] sm:$0xff]
    %v1816 = vld [vmem:[#allocation6 + $0x178] sm:$0xff]
    %v1817 = vld [vmem:[#allocation6 + $0x180] sm:$0xff]
    %v1818 = vld [vmem:[#allocation6 + $0x188] sm:$0xff]
    %v1819 = vld [vmem:[#allocation6 + $0x190] sm:$0xff]
    %v1820 = vld [vmem:[#allocation6 + $0x198] sm:$0xff]
    %v1821 = vld [vmem:[#allocation6 + $0x1a0] sm:$0xff]
    %v1822 = vld [vmem:[#allocation6 + $0x1a8] sm:$0xff]
    %v1823 = vld [vmem:[#allocation6 + $0x1b0] sm:$0xff]
    %v1824 = vld [vmem:[#allocation6 + $0x1b8] sm:$0xff]
    %v1825 = vld [vmem:[#allocation6 + $0x1c0] sm:$0xff]
    %v1826 = vld [vmem:[#allocation6 + $0x1c8] sm:$0xff]
    %v1827 = vld [vmem:[#allocation6 + $0x1d0] sm:$0xff]
    %v1828 = vld [vmem:[#allocation6 + $0x1d8] sm:$0xff]
    %v1829 = vld [vmem:[#allocation6 + $0x1e0] sm:$0xff]
    %v1830 = vld [vmem:[#allocation6 + $0x1e8] sm:$0xff]
    %v1831 = vld [vmem:[#allocation6 + $0x1f0] sm:$0xff]
    %v1832 = vld [vmem:[#allocation6 + $0x1f8] sm:$0xff]
    %1833 = vmatpush.msra.mxu0 %v1829
    %1834 = vmatpush.msra.mxu0 %v1825
    %1835 = vmatpush.msra.mxu0 %v1821
    %1836 = vmatpush.msra.mxu0 %v1817
    %1837 = vmatpush.msra.mxu0 %v1813
    %1838 = vmatpush.msra.mxu0 %v1809
    %1839 = vmatpush.msra.mxu0 %v1805
    %1840 = vmatpush.msra.mxu0 %v1801
    %1841 = vmatpush.msra.mxu0 %v1797
    %1842 = vmatpush.msra.mxu0 %v1793
    %1843 = vmatpush.msra.mxu0 %v1789
    %1844 = vmatpush.msra.mxu0 %v1785
    %1845 = vmatpush.msra.mxu0 %v1781
    %1846 = vmatpush.msra.mxu0 %v1777
    %1847 = vmatpush.msra.mxu0 %v1773
    %1848 = vmatpush.msra.mxu0 %v1769
    %1849 = vmatmul.f32.gmra.mxu0 %v1394
    %v1850 = vpop.f32.mrf.mxu0
    %v1851 = vadd.f32 0.0, %v1850
    %1852 = vdwg.mxu0
    %1853 = vmatpush.msra.mxu0 %v1830
    %1854 = vmatpush.msra.mxu0 %v1826
    %1855 = vmatpush.msra.mxu0 %v1822
    %1856 = vmatpush.msra.mxu0 %v1818
    %1857 = vmatpush.msra.mxu0 %v1814
    %1858 = vmatpush.msra.mxu0 %v1810
    %1859 = vmatpush.msra.mxu0 %v1806
    %1860 = vmatpush.msra.mxu0 %v1802
    %1861 = vmatpush.msra.mxu0 %v1798
    %1862 = vmatpush.msra.mxu0 %v1794
    %1863 = vmatpush.msra.mxu0 %v1790
    %1864 = vmatpush.msra.mxu0 %v1786
    %1865 = vmatpush.msra.mxu0 %v1782
    %1866 = vmatpush.msra.mxu0 %v1778
    %1867 = vmatpush.msra.mxu0 %v1774
    %1868 = vmatpush.msra.mxu0 %v1770
    %1869 = vmatmul.f32.gmra.mxu0 %v1394
    %v1870 = vpop.f32.mrf.mxu0
    %v1871 = vadd.f32 0.0, %v1870
    %1872 = vdwg.mxu0
    %1873 = vmatpush.msra.mxu0 %v1831
    %1874 = vmatpush.msra.mxu0 %v1827
    %1875 = vmatpush.msra.mxu0 %v1823
    %1876 = vmatpush.msra.mxu0 %v1819
    %1877 = vmatpush.msra.mxu0 %v1815
    %1878 = vmatpush.msra.mxu0 %v1811
    %1879 = vmatpush.msra.mxu0 %v1807
    %1880 = vmatpush.msra.mxu0 %v1803
    %1881 = vmatpush.msra.mxu0 %v1799
    %1882 = vmatpush.msra.mxu0 %v1795
    %1883 = vmatpush.msra.mxu0 %v1791
    %1884 = vmatpush.msra.mxu0 %v1787
    %1885 = vmatpush.msra.mxu0 %v1783
    %1886 = vmatpush.msra.mxu0 %v1779
    %1887 = vmatpush.msra.mxu0 %v1775
    %1888 = vmatpush.msra.mxu0 %v1771
    %1889 = vmatmul.f32.gmra.mxu0 %v1394
    %v1890 = vpop.f32.mrf.mxu0
    %v1891 = vadd.f32 0.0, %v1890
    %1892 = vdwg.mxu0
    %1893 = vmatpush.msra.mxu0 %v1832
    %1894 = vmatpush.msra.mxu0 %v1828
    %1895 = vmatpush.msra.mxu0 %v1824
    %1896 = vmatpush.msra.mxu0 %v1820
    %1897 = vmatpush.msra.mxu0 %v1816
    %1898 = vmatpush.msra.mxu0 %v1812
    %1899 = vmatpush.msra.mxu0 %v1808
    %1900 = vmatpush.msra.mxu0 %v1804
    %1901 = vmatpush.msra.mxu0 %v1800
    %1902 = vmatpush.msra.mxu0 %v1796
    %1903 = vmatpush.msra.mxu0 %v1792
    %1904 = vmatpush.msra.mxu0 %v1788
    %1905 = vmatpush.msra.mxu0 %v1784
    %1906 = vmatpush.msra.mxu0 %v1780
    %1907 = vmatpush.msra.mxu0 %v1776
    %1908 = vmatpush.msra.mxu0 %v1772
    %1909 = vmatmul.f32.gmra.mxu0 %v1394
    %v1910 = vpop.f32.mrf.mxu0
    %v1911 = vadd.f32 0.0, %v1910
    %1912 = vdwg.mxu0
    %v1914 = vrot.slane %v1704, 2
    %1916 = vmatpush.msra.mxu0 %v1765
    %1917 = vmatpush.msra.mxu0 %v1761
    %1918 = vmatpush.msra.mxu0 %v1757
    %1919 = vmatpush.msra.mxu0 %v1753
    %1920 = vmatpush.msra.mxu0 %v1749
    %1921 = vmatpush.msra.mxu0 %v1745
    %1922 = vmatpush.msra.mxu0 %v1741
    %1923 = vmatpush.msra.mxu0 %v1737
    %1924 = vmatpush.msra.mxu0 %v1733
    %1925 = vmatpush.msra.mxu0 %v1729
    %1926 = vmatpush.msra.mxu0 %v1725
    %1927 = vmatpush.msra.mxu0 %v1721
    %1928 = vmatpush.msra.mxu0 %v1717
    %1929 = vmatpush.msra.mxu0 %v1713
    %1930 = vmatpush.msra.mxu0 %v1709
    %1931 = vmatpush.msra.mxu0 %v1705
    %1932 = vmatmul.f32.gmra.mxu0 %v1914
    %v1933 = vpop.f32.mrf.mxu0
    %v1934 = vadd.f32 %v1851, %v1933
    %1935 = vdwg.mxu0
    %1936 = vmatpush.msra.mxu0 %v1766
    %1937 = vmatpush.msra.mxu0 %v1762
    %1938 = vmatpush.msra.mxu0 %v1758
    %1939 = vmatpush.msra.mxu0 %v1754
    %1940 = vmatpush.msra.mxu0 %v1750
    %1941 = vmatpush.msra.mxu0 %v1746
    %1942 = vmatpush.msra.mxu0 %v1742
    %1943 = vmatpush.msra.mxu0 %v1738
    %1944 = vmatpush.msra.mxu0 %v1734
    %1945 = vmatpush.msra.mxu0 %v1730
    %1946 = vmatpush.msra.mxu0 %v1726
    %1947 = vmatpush.msra.mxu0 %v1722
    %1948 = vmatpush.msra.mxu0 %v1718
    %1949 = vmatpush.msra.mxu0 %v1714
    %1950 = vmatpush.msra.mxu0 %v1710
    %1951 = vmatpush.msra.mxu0 %v1706
    %1952 = vmatmul.f32.gmra.mxu0 %v1914
    %v1953 = vpop.f32.mrf.mxu0
    %v1954 = vadd.f32 %v1871, %v1953
    %1955 = vdwg.mxu0
    %1956 = vmatpush.msra.mxu0 %v1767
    %1957 = vmatpush.msra.mxu0 %v1763
    %1958 = vmatpush.msra.mxu0 %v1759
    %1959 = vmatpush.msra.mxu0 %v1755
    %1960 = vmatpush.msra.mxu0 %v1751
    %1961 = vmatpush.msra.mxu0 %v1747
    %1962 = vmatpush.msra.mxu0 %v1743
    %1963 = vmatpush.msra.mxu0 %v1739
    %1964 = vmatpush.msra.mxu0 %v1735
    %1965 = vmatpush.msra.mxu0 %v1731
    %1966 = vmatpush.msra.mxu0 %v1727
    %1967 = vmatpush.msra.mxu0 %v1723
    %1968 = vmatpush.msra.mxu0 %v1719
    %1969 = vmatpush.msra.mxu0 %v1715
    %1970 = vmatpush.msra.mxu0 %v1711
    %1971 = vmatpush.msra.mxu0 %v1707
    %1972 = vmatmul.f32.gmra.mxu0 %v1914
    %v1973 = vpop.f32.mrf.mxu0
    %v1974 = vadd.f32 %v1891, %v1973
    %1975 = vdwg.mxu0
    %1976 = vmatpush.msra.mxu0 %v1768
    %1977 = vmatpush.msra.mxu0 %v1764
    %1978 = vmatpush.msra.mxu0 %v1760
    %1979 = vmatpush.msra.mxu0 %v1756
    %1980 = vmatpush.msra.mxu0 %v1752
    %1981 = vmatpush.msra.mxu0 %v1748
    %1982 = vmatpush.msra.mxu0 %v1744
    %1983 = vmatpush.msra.mxu0 %v1740
    %1984 = vmatpush.msra.mxu0 %v1736
    %1985 = vmatpush.msra.mxu0 %v1732
    %1986 = vmatpush.msra.mxu0 %v1728
    %1987 = vmatpush.msra.mxu0 %v1724
    %1988 = vmatpush.msra.mxu0 %v1720
    %1989 = vmatpush.msra.mxu0 %v1716
    %1990 = vmatpush.msra.mxu0 %v1712
    %1991 = vmatpush.msra.mxu0 %v1708
    %1992 = vmatmul.f32.gmra.mxu0 %v1914
    %v1993 = vpop.f32.mrf.mxu0
    %v1994 = vadd.f32 %v1911, %v1993
    %1995 = vdwg.mxu0
    %v1996 = vadd.f32 %v1934, %v649
    %v1997 = vadd.f32 %v1954, %v650
    %v1998 = vadd.f32 %v1974, %v651
    %v1999 = vadd.f32 %v1994, %v652
    %v2000 = vxor.u32 %v1996, 2147483648
    %v2001 = vmul.f32 %v2000, 1.442695
    %v2002 = vpow.pop %v2001
    %v2003 = vadd.f32 %v2002, 1.0
    %v2004 = vrcp.pop %v2003
    %v2005 = vmul.f32 %v2003, %v2004
    %v2006 = vsub.f32 1.0, %v2005
    %v2007 = vmul.f32 %v2004, %v2006
    %v2008 = vadd.f32 %v2004, %v2007
    %vm2009 = vweird.f32 %v2003
    %vm2010 = vweird.f32 %v2004
    %vm2011 = vmor %vm2009, %vm2010
    %v2012 = vsel %vm2011, %v2004, %v2008
    %v2013 = vand.u32 2147483647, %v2003
    %vm2014 = vcmp.eq.f32.partialorder %v2013, 8.507059e+37
    %v2015 = vand.u32 %v2003, 2147483648
    %v2016 = vor.u32 1.1754944e-38, %v2015
    %v2017 = vsel %vm2014, %v2016, %v2012
    %v2018 = vmul.f32 1.0, %v2017
    %v2019 = vxor.u32 %v1997, 2147483648
    %v2020 = vmul.f32 %v2019, 1.442695
    %v2021 = vpow.pop %v2020
    %v2022 = vadd.f32 %v2021, 1.0
    %v2023 = vrcp.pop %v2022
    %v2024 = vmul.f32 %v2022, %v2023
    %v2025 = vsub.f32 1.0, %v2024
    %v2026 = vmul.f32 %v2023, %v2025
    %v2027 = vadd.f32 %v2023, %v2026
    %vm2028 = vweird.f32 %v2022
    %vm2029 = vweird.f32 %v2023
    %vm2030 = vmor %vm2028, %vm2029
    %v2031 = vsel %vm2030, %v2023, %v2027
    %v2032 = vand.u32 2147483647, %v2022
    %vm2033 = vcmp.eq.f32.partialorder %v2032, 8.507059e+37
    %v2034 = vand.u32 %v2022, 2147483648
    %v2035 = vor.u32 1.1754944e-38, %v2034
    %v2036 = vsel %vm2033, %v2035, %v2031
    %v2037 = vmul.f32 1.0, %v2036
    %v2038 = vtanh.pop %v1998
    %v2039 = vxor.u32 %v1999, 2147483648
    %v2040 = vmul.f32 %v2039, 1.442695
    %v2041 = vpow.pop %v2040
    %v2042 = vadd.f32 %v2041, 1.0
    %v2043 = vrcp.pop %v2042
    %v2044 = vmul.f32 %v2042, %v2043
    %v2045 = vsub.f32 1.0, %v2044
    %v2046 = vmul.f32 %v2043, %v2045
    %v2047 = vadd.f32 %v2043, %v2046
    %vm2048 = vweird.f32 %v2042
    %vm2049 = vweird.f32 %v2043
    %vm2050 = vmor %vm2048, %vm2049
    %v2051 = vsel %vm2050, %v2043, %v2047
    %v2052 = vand.u32 2147483647, %v2042
    %vm2053 = vcmp.eq.f32.partialorder %v2052, 8.507059e+37
    %v2054 = vand.u32 %v2042, 2147483648
    %v2055 = vor.u32 1.1754944e-38, %v2054
    %v2056 = vsel %vm2053, %v2055, %v2051
    %v2057 = vmul.f32 1.0, %v2056
    %v2058 = vmul.f32 %v2037, %v1392
    %v2059 = vmul.f32 %v2018, %v2038
    %v2060 = vadd.f32 %v2058, %v2059
    %v2061 = vtanh.pop %v2060
    %v2062 = vmul.f32 %v2057, %v2061
    %v2063 = vld [vmem:[#allocation7] sm:$0xff]
    %v2064 = vld [vmem:[#allocation7 + $0x8] sm:$0xff]
    %v2065 = vld [vmem:[#allocation7 + $0x10] sm:$0xff]
    %v2066 = vld [vmem:[#allocation7 + $0x18] sm:$0xff]
    %v2067 = vld [vmem:[#allocation7 + $0x20] sm:$0xff]
    %v2068 = vld [vmem:[#allocation7 + $0x28] sm:$0xff]
    %v2069 = vld [vmem:[#allocation7 + $0x30] sm:$0xff]
    %v2070 = vld [vmem:[#allocation7 + $0x38] sm:$0xff]
    %v2071 = vld [vmem:[#allocation7 + $0x40] sm:$0xff]
    %v2072 = vld [vmem:[#allocation7 + $0x48] sm:$0xff]
    %v2073 = vld [vmem:[#allocation7 + $0x50] sm:$0xff]
    %v2074 = vld [vmem:[#allocation7 + $0x58] sm:$0xff]
    %v2075 = vld [vmem:[#allocation7 + $0x60] sm:$0xff]
    %v2076 = vld [vmem:[#allocation7 + $0x68] sm:$0xff]
    %v2077 = vld [vmem:[#allocation7 + $0x70] sm:$0xff]
    %v2078 = vld [vmem:[#allocation7 + $0x78] sm:$0xff]
    %2079 = vset.pattern.permute.xlu0 3
    %2080 = vperm.xlu0 %2079, %v1473
    %v2081 = vpop.permute.xlu0 %2080
    %v2083 = vmul.f32 %v2081, %v147
    %2084 = vmatpush.msra.mxu0 %v2078
    %2085 = vmatpush.msra.mxu0 %v2077
    %2086 = vmatpush.msra.mxu0 %v2076
    %2087 = vmatpush.msra.mxu0 %v2075
    %2088 = vmatpush.msra.mxu0 %v2074
    %2089 = vmatpush.msra.mxu0 %v2073
    %2090 = vmatpush.msra.mxu0 %v2072
    %2091 = vmatpush.msra.mxu0 %v2071
    %2092 = vmatpush.msra.mxu0 %v2070
    %2093 = vmatpush.msra.mxu0 %v2069
    %2094 = vmatpush.msra.mxu0 %v2068
    %2095 = vmatpush.msra.mxu0 %v2067
    %2096 = vmatpush.msra.mxu0 %v2066
    %2097 = vmatpush.msra.mxu0 %v2065
    %2098 = vmatpush.msra.mxu0 %v2064
    %2099 = vmatpush.msra.mxu0 %v2063
    %2100 = vmatmul.f32.gmra.mxu0 %v2062
    %v2101 = vpop.f32.mrf.mxu0
    %v2102 = vadd.f32 %v2083, %v2101
    %2103 = vdwg.mxu0
    %v2104 = vadd.f32 %v2102, %v148
    %v2105 = vxor.u32 %v2104, 2147483648
    %v2106 = vmul.f32 %v2105, 1.442695
    %v2107 = vpow.pop %v2106
    %v2108 = vadd.f32 %v2107, 1.0
    %v2109 = vrcp.pop %v2108
    %v2110 = vmul.f32 %v2108, %v2109
    %v2111 = vsub.f32 1.0, %v2110
    %v2112 = vmul.f32 %v2109, %v2111
    %v2113 = vadd.f32 %v2109, %v2112
    %vm2114 = vweird.f32 %v2108
    %vm2115 = vweird.f32 %v2109
    %vm2116 = vmor %vm2114, %vm2115
    %v2117 = vsel %vm2116, %v2109, %v2113
    %v2118 = vand.u32 2147483647, %v2108
    %vm2119 = vcmp.eq.f32.partialorder %v2118, 8.507059e+37
    %v2120 = vand.u32 %v2108, 2147483648
    %v2121 = vor.u32 1.1754944e-38, %v2120
    %v2122 = vsel %vm2119, %v2121, %v2117
    %v2123 = vmul.f32 1.0, %v2122
    %v2124 = vtanh.pop %v2104
    %v2125 = vmul.f32 %v2123, %v1467
    %2127 = vrot.lane.b32.xlu0 %v2124, 126
    %v2128 = vpop.permute.xlu0 %2127
    %v2130 = vmul.f32 %v2123, %v2128
    %2132 = vrot.lane.b32.xlu0 %v2130, 1
    %v2133 = vpop.permute.xlu0 %2132
    %v2135 = vadd.f32 %v2125, %v2133
    %v2136 = vtanh.pop %v2135
    %2138 = vrot.lane.b32.xlu0 %v2136, 2
    %v2139 = vpop.permute.xlu0 %2138
    %v2141 = vmul.f32 %v2123, %v2139
    %2143 = vrot.lane.b32.xlu0 %v2141, 125
    %v2144 = vpop.permute.xlu0 %2143
    %2146 = vst.msk [vmem:[%s13 + $0x2] sm:$0x1] %vm809, %v2144
    %v2147 = vld [vmem:[#allocation2] sm:$0xff]
    %v2148 = vld [vmem:[#allocation2 + $0x8] sm:$0xff]
    %v2149 = vld [vmem:[#allocation2 + $0x10] sm:$0xff]
    %v2150 = vld [vmem:[#allocation2 + $0x18] sm:$0xff]
    %v2151 = vld [vmem:[#allocation2 + $0x20] sm:$0xff]
    %v2152 = vld [vmem:[#allocation2 + $0x28] sm:$0xff]
    %v2153 = vld [vmem:[#allocation2 + $0x30] sm:$0xff]
    %v2154 = vld [vmem:[#allocation2 + $0x38] sm:$0xff]
    %v2155 = vld [vmem:[#allocation2 + $0x40] sm:$0xff]
    %v2156 = vld [vmem:[#allocation2 + $0x48] sm:$0xff]
    %v2157 = vld [vmem:[#allocation2 + $0x50] sm:$0xff]
    %v2158 = vld [vmem:[#allocation2 + $0x58] sm:$0xff]
    %v2159 = vld [vmem:[#allocation2 + $0x60] sm:$0xff]
    %v2160 = vld [vmem:[#allocation2 + $0x68] sm:$0xff]
    %v2161 = vld [vmem:[#allocation2 + $0x70] sm:$0xff]
    %v2162 = vld [vmem:[#allocation2 + $0x78] sm:$0xff]
    %v2163 = vld [vmem:[#allocation2 + $0x80] sm:$0xff]
    %v2164 = vld [vmem:[#allocation2 + $0x88] sm:$0xff]
    %v2165 = vld [vmem:[#allocation2 + $0x90] sm:$0xff]
    %v2166 = vld [vmem:[#allocation2 + $0x98] sm:$0xff]
    %v2167 = vld [vmem:[#allocation2 + $0xa0] sm:$0xff]
    %v2168 = vld [vmem:[#allocation2 + $0xa8] sm:$0xff]
    %v2169 = vld [vmem:[#allocation2 + $0xb0] sm:$0xff]
    %v2170 = vld [vmem:[#allocation2 + $0xb8] sm:$0xff]
    %v2171 = vld [vmem:[#allocation2 + $0xc0] sm:$0xff]
    %v2172 = vld [vmem:[#allocation2 + $0xc8] sm:$0xff]
    %v2173 = vld [vmem:[#allocation2 + $0xd0] sm:$0xff]
    %v2174 = vld [vmem:[#allocation2 + $0xd8] sm:$0xff]
    %v2175 = vld [vmem:[#allocation2 + $0xe0] sm:$0xff]
    %v2176 = vld [vmem:[#allocation2 + $0xe8] sm:$0xff]
    %v2177 = vld [vmem:[#allocation2 + $0xf0] sm:$0xff]
    %v2178 = vld [vmem:[#allocation2 + $0xf8] sm:$0xff]
    %v2179 = vld [vmem:[#allocation2 + $0x100] sm:$0xff]
    %v2180 = vld [vmem:[#allocation2 + $0x108] sm:$0xff]
    %v2181 = vld [vmem:[#allocation2 + $0x110] sm:$0xff]
    %v2182 = vld [vmem:[#allocation2 + $0x118] sm:$0xff]
    %v2183 = vld [vmem:[#allocation2 + $0x120] sm:$0xff]
    %v2184 = vld [vmem:[#allocation2 + $0x128] sm:$0xff]
    %v2185 = vld [vmem:[#allocation2 + $0x130] sm:$0xff]
    %v2186 = vld [vmem:[#allocation2 + $0x138] sm:$0xff]
    %v2187 = vld [vmem:[#allocation2 + $0x140] sm:$0xff]
    %v2188 = vld [vmem:[#allocation2 + $0x148] sm:$0xff]
    %v2189 = vld [vmem:[#allocation2 + $0x150] sm:$0xff]
    %v2190 = vld [vmem:[#allocation2 + $0x158] sm:$0xff]
    %v2191 = vld [vmem:[#allocation2 + $0x160] sm:$0xff]
    %v2192 = vld [vmem:[#allocation2 + $0x168] sm:$0xff]
    %v2193 = vld [vmem:[#allocation2 + $0x170] sm:$0xff]
    %v2194 = vld [vmem:[#allocation2 + $0x178] sm:$0xff]
    %v2195 = vld [vmem:[#allocation2 + $0x180] sm:$0xff]
    %v2196 = vld [vmem:[#allocation2 + $0x188] sm:$0xff]
    %v2197 = vld [vmem:[#allocation2 + $0x190] sm:$0xff]
    %v2198 = vld [vmem:[#allocation2 + $0x198] sm:$0xff]
    %v2199 = vld [vmem:[#allocation2 + $0x1a0] sm:$0xff]
    %v2200 = vld [vmem:[#allocation2 + $0x1a8] sm:$0xff]
    %v2201 = vld [vmem:[#allocation2 + $0x1b0] sm:$0xff]
    %v2202 = vld [vmem:[#allocation2 + $0x1b8] sm:$0xff]
    %v2203 = vld [vmem:[#allocation2 + $0x1c0] sm:$0xff]
    %v2204 = vld [vmem:[#allocation2 + $0x1c8] sm:$0xff]
    %v2205 = vld [vmem:[#allocation2 + $0x1d0] sm:$0xff]
    %v2206 = vld [vmem:[#allocation2 + $0x1d8] sm:$0xff]
    %v2207 = vld [vmem:[#allocation2 + $0x1e0] sm:$0xff]
    %v2208 = vld [vmem:[#allocation2 + $0x1e8] sm:$0xff]
    %v2209 = vld [vmem:[#allocation2 + $0x1f0] sm:$0xff]
    %v2210 = vld [vmem:[#allocation2 + $0x1f8] sm:$0xff]
    %2211 = vmatpush.msra.mxu0 %v2207
    %2212 = vmatpush.msra.mxu0 %v2203
    %2213 = vmatpush.msra.mxu0 %v2199
    %2214 = vmatpush.msra.mxu0 %v2195
    %2215 = vmatpush.msra.mxu0 %v2191
    %2216 = vmatpush.msra.mxu0 %v2187
    %2217 = vmatpush.msra.mxu0 %v2183
    %2218 = vmatpush.msra.mxu0 %v2179
    %2219 = vmatpush.msra.mxu0 %v2175
    %2220 = vmatpush.msra.mxu0 %v2171
    %2221 = vmatpush.msra.mxu0 %v2167
    %2222 = vmatpush.msra.mxu0 %v2163
    %2223 = vmatpush.msra.mxu0 %v2159
    %2224 = vmatpush.msra.mxu0 %v2155
    %2225 = vmatpush.msra.mxu0 %v2151
    %2226 = vmatpush.msra.mxu0 %v2147
    %2227 = vmatmul.f32.gmra.mxu0 %v1914
    %v2228 = vpop.f32.mrf.mxu0
    %v2229 = vadd.f32 0.0, %v2228
    %2230 = vdwg.mxu0
    %2231 = vmatpush.msra.mxu0 %v2208
    %2232 = vmatpush.msra.mxu0 %v2204
    %2233 = vmatpush.msra.mxu0 %v2200
    %2234 = vmatpush.msra.mxu0 %v2196
    %2235 = vmatpush.msra.mxu0 %v2192
    %2236 = vmatpush.msra.mxu0 %v2188
    %2237 = vmatpush.msra.mxu0 %v2184
    %2238 = vmatpush.msra.mxu0 %v2180
    %2239 = vmatpush.msra.mxu0 %v2176
    %2240 = vmatpush.msra.mxu0 %v2172
    %2241 = vmatpush.msra.mxu0 %v2168
    %2242 = vmatpush.msra.mxu0 %v2164
    %2243 = vmatpush.msra.mxu0 %v2160
    %2244 = vmatpush.msra.mxu0 %v2156
    %2245 = vmatpush.msra.mxu0 %v2152
    %2246 = vmatpush.msra.mxu0 %v2148
    %2247 = vmatmul.f32.gmra.mxu0 %v1914
    %v2248 = vpop.f32.mrf.mxu0
    %v2249 = vadd.f32 0.0, %v2248
    %2250 = vdwg.mxu0
    %2251 = vmatpush.msra.mxu0 %v2209
    %2252 = vmatpush.msra.mxu0 %v2205
    %2253 = vmatpush.msra.mxu0 %v2201
    %2254 = vmatpush.msra.mxu0 %v2197
    %2255 = vmatpush.msra.mxu0 %v2193
    %2256 = vmatpush.msra.mxu0 %v2189
    %2257 = vmatpush.msra.mxu0 %v2185
    %2258 = vmatpush.msra.mxu0 %v2181
    %2259 = vmatpush.msra.mxu0 %v2177
    %2260 = vmatpush.msra.mxu0 %v2173
    %2261 = vmatpush.msra.mxu0 %v2169
    %2262 = vmatpush.msra.mxu0 %v2165
    %2263 = vmatpush.msra.mxu0 %v2161
    %2264 = vmatpush.msra.mxu0 %v2157
    %2265 = vmatpush.msra.mxu0 %v2153
    %2266 = vmatpush.msra.mxu0 %v2149
    %2267 = vmatmul.f32.gmra.mxu0 %v1914
    %v2268 = vpop.f32.mrf.mxu0
    %v2269 = vadd.f32 0.0, %v2268
    %2270 = vdwg.mxu0
    %2271 = vmatpush.msra.mxu0 %v2210
    %2272 = vmatpush.msra.mxu0 %v2206
    %2273 = vmatpush.msra.mxu0 %v2202
    %2274 = vmatpush.msra.mxu0 %v2198
    %2275 = vmatpush.msra.mxu0 %v2194
    %2276 = vmatpush.msra.mxu0 %v2190
    %2277 = vmatpush.msra.mxu0 %v2186
    %2278 = vmatpush.msra.mxu0 %v2182
    %2279 = vmatpush.msra.mxu0 %v2178
    %2280 = vmatpush.msra.mxu0 %v2174
    %2281 = vmatpush.msra.mxu0 %v2170
    %2282 = vmatpush.msra.mxu0 %v2166
    %2283 = vmatpush.msra.mxu0 %v2162
    %2284 = vmatpush.msra.mxu0 %v2158
    %2285 = vmatpush.msra.mxu0 %v2154
    %2286 = vmatpush.msra.mxu0 %v2150
    %2287 = vmatmul.f32.gmra.mxu0 %v1914
    %v2288 = vpop.f32.mrf.mxu0
    %v2289 = vadd.f32 0.0, %v2288
    %2290 = vdwg.mxu0
    %v2295 = vrot.slane %v2229, 5
    %v2296 = vrot.slane %v2249, 5
    %v2297 = vrot.slane %v2269, 5
    %v2298 = vrot.slane %v2289, 5
    %v2303 = vadd.f32 %v137, %v2295
    %v2304 = vadd.f32 %v138, %v2296
    %v2305 = vadd.f32 %v139, %v2297
    %v2306 = vadd.f32 %v140, %v2298
    %v2307 = vxor.u32 %v2303, 2147483648
    %v2308 = vmul.f32 %v2307, 1.442695
    %v2309 = vpow.pop %v2308
    %v2310 = vadd.f32 %v2309, 1.0
    %v2311 = vrcp.pop %v2310
    %v2312 = vmul.f32 %v2310, %v2311
    %v2313 = vsub.f32 1.0, %v2312
    %v2314 = vmul.f32 %v2311, %v2313
    %v2315 = vadd.f32 %v2311, %v2314
    %vm2316 = vweird.f32 %v2310
    %vm2317 = vweird.f32 %v2311
    %vm2318 = vmor %vm2316, %vm2317
    %v2319 = vsel %vm2318, %v2311, %v2315
    %v2320 = vand.u32 2147483647, %v2310
    %vm2321 = vcmp.eq.f32.partialorder %v2320, 8.507059e+37
    %v2322 = vand.u32 %v2310, 2147483648
    %v2323 = vor.u32 1.1754944e-38, %v2322
    %v2324 = vsel %vm2321, %v2323, %v2319
    %v2325 = vmul.f32 1.0, %v2324
    %v2326 = vxor.u32 %v2304, 2147483648
    %v2327 = vmul.f32 %v2326, 1.442695
    %v2328 = vpow.pop %v2327
    %v2329 = vadd.f32 %v2328, 1.0
    %v2330 = vrcp.pop %v2329
    %v2331 = vmul.f32 %v2329, %v2330
    %v2332 = vsub.f32 1.0, %v2331
    %v2333 = vmul.f32 %v2330, %v2332
    %v2334 = vadd.f32 %v2330, %v2333
    %vm2335 = vweird.f32 %v2329
    %vm2336 = vweird.f32 %v2330
    %vm2337 = vmor %vm2335, %vm2336
    %v2338 = vsel %vm2337, %v2330, %v2334
    %v2339 = vand.u32 2147483647, %v2329
    %vm2340 = vcmp.eq.f32.partialorder %v2339, 8.507059e+37
    %v2341 = vand.u32 %v2329, 2147483648
    %v2342 = vor.u32 1.1754944e-38, %v2341
    %v2343 = vsel %vm2340, %v2342, %v2338
    %v2344 = vmul.f32 1.0, %v2343
    %v2345 = vtanh.pop %v2305
    %v2346 = vxor.u32 %v2306, 2147483648
    %v2347 = vmul.f32 %v2346, 1.442695
    %v2348 = vpow.pop %v2347
    %v2349 = vadd.f32 %v2348, 1.0
    %v2350 = vrcp.pop %v2349
    %v2351 = vmul.f32 %v2349, %v2350
    %v2352 = vsub.f32 1.0, %v2351
    %v2353 = vmul.f32 %v2350, %v2352
    %v2354 = vadd.f32 %v2350, %v2353
    %vm2355 = vweird.f32 %v2349
    %vm2356 = vweird.f32 %v2350
    %vm2357 = vmor %vm2355, %vm2356
    %v2358 = vsel %vm2357, %v2350, %v2354
    %v2359 = vand.u32 2147483647, %v2349
    %vm2360 = vcmp.eq.f32.partialorder %v2359, 8.507059e+37
    %v2361 = vand.u32 %v2349, 2147483648
    %v2362 = vor.u32 1.1754944e-38, %v2361
    %v2363 = vsel %vm2360, %v2362, %v2358
    %v2364 = vmul.f32 1.0, %v2363
    %v2366 = vrot.slane %v1702, 7
    %v2368 = vmul.f32 %v2344, %v2366
    %v2369 = vmul.f32 %v2325, %v2345
    %v2370 = vadd.f32 %v2368, %v2369
    %v2371 = vtanh.pop %v2370
    %v2372 = vmul.f32 %v2364, %v2371
    %v2373 = vld [vmem:[#allocation4] sm:$0xff]
    %v2374 = vld [vmem:[#allocation4 + $0x8] sm:$0xff]
    %v2375 = vld [vmem:[#allocation4 + $0x10] sm:$0xff]
    %v2376 = vld [vmem:[#allocation4 + $0x18] sm:$0xff]
    %v2377 = vld [vmem:[#allocation4 + $0x20] sm:$0xff]
    %v2378 = vld [vmem:[#allocation4 + $0x28] sm:$0xff]
    %v2379 = vld [vmem:[#allocation4 + $0x30] sm:$0xff]
    %v2380 = vld [vmem:[#allocation4 + $0x38] sm:$0xff]
    %v2381 = vld [vmem:[#allocation4 + $0x40] sm:$0xff]
    %v2382 = vld [vmem:[#allocation4 + $0x48] sm:$0xff]
    %v2383 = vld [vmem:[#allocation4 + $0x50] sm:$0xff]
    %v2384 = vld [vmem:[#allocation4 + $0x58] sm:$0xff]
    %v2385 = vld [vmem:[#allocation4 + $0x60] sm:$0xff]
    %v2386 = vld [vmem:[#allocation4 + $0x68] sm:$0xff]
    %v2387 = vld [vmem:[#allocation4 + $0x70] sm:$0xff]
    %v2388 = vld [vmem:[#allocation4 + $0x78] sm:$0xff]
    %v2389 = vld [vmem:[#allocation4 + $0x80] sm:$0xff]
    %v2390 = vld [vmem:[#allocation4 + $0x88] sm:$0xff]
    %v2391 = vld [vmem:[#allocation4 + $0x90] sm:$0xff]
    %v2392 = vld [vmem:[#allocation4 + $0x98] sm:$0xff]
    %v2393 = vld [vmem:[#allocation4 + $0xa0] sm:$0xff]
    %v2394 = vld [vmem:[#allocation4 + $0xa8] sm:$0xff]
    %v2395 = vld [vmem:[#allocation4 + $0xb0] sm:$0xff]
    %v2396 = vld [vmem:[#allocation4 + $0xb8] sm:$0xff]
    %v2397 = vld [vmem:[#allocation4 + $0xc0] sm:$0xff]
    %v2398 = vld [vmem:[#allocation4 + $0xc8] sm:$0xff]
    %v2399 = vld [vmem:[#allocation4 + $0xd0] sm:$0xff]
    %v2400 = vld [vmem:[#allocation4 + $0xd8] sm:$0xff]
    %v2401 = vld [vmem:[#allocation4 + $0xe0] sm:$0xff]
    %v2402 = vld [vmem:[#allocation4 + $0xe8] sm:$0xff]
    %v2403 = vld [vmem:[#allocation4 + $0xf0] sm:$0xff]
    %v2404 = vld [vmem:[#allocation4 + $0xf8] sm:$0xff]
    %v2405 = vld [vmem:[#allocation4 + $0x100] sm:$0xff]
    %v2406 = vld [vmem:[#allocation4 + $0x108] sm:$0xff]
    %v2407 = vld [vmem:[#allocation4 + $0x110] sm:$0xff]
    %v2408 = vld [vmem:[#allocation4 + $0x118] sm:$0xff]
    %v2409 = vld [vmem:[#allocation4 + $0x120] sm:$0xff]
    %v2410 = vld [vmem:[#allocation4 + $0x128] sm:$0xff]
    %v2411 = vld [vmem:[#allocation4 + $0x130] sm:$0xff]
    %v2412 = vld [vmem:[#allocation4 + $0x138] sm:$0xff]
    %v2413 = vld [vmem:[#allocation4 + $0x140] sm:$0xff]
    %v2414 = vld [vmem:[#allocation4 + $0x148] sm:$0xff]
    %v2415 = vld [vmem:[#allocation4 + $0x150] sm:$0xff]
    %v2416 = vld [vmem:[#allocation4 + $0x158] sm:$0xff]
    %v2417 = vld [vmem:[#allocation4 + $0x160] sm:$0xff]
    %v2418 = vld [vmem:[#allocation4 + $0x168] sm:$0xff]
    %v2419 = vld [vmem:[#allocation4 + $0x170] sm:$0xff]
    %v2420 = vld [vmem:[#allocation4 + $0x178] sm:$0xff]
    %v2421 = vld [vmem:[#allocation4 + $0x180] sm:$0xff]
    %v2422 = vld [vmem:[#allocation4 + $0x188] sm:$0xff]
    %v2423 = vld [vmem:[#allocation4 + $0x190] sm:$0xff]
    %v2424 = vld [vmem:[#allocation4 + $0x198] sm:$0xff]
    %v2425 = vld [vmem:[#allocation4 + $0x1a0] sm:$0xff]
    %v2426 = vld [vmem:[#allocation4 + $0x1a8] sm:$0xff]
    %v2427 = vld [vmem:[#allocation4 + $0x1b0] sm:$0xff]
    %v2428 = vld [vmem:[#allocation4 + $0x1b8] sm:$0xff]
    %v2429 = vld [vmem:[#allocation4 + $0x1c0] sm:$0xff]
    %v2430 = vld [vmem:[#allocation4 + $0x1c8] sm:$0xff]
    %v2431 = vld [vmem:[#allocation4 + $0x1d0] sm:$0xff]
    %v2432 = vld [vmem:[#allocation4 + $0x1d8] sm:$0xff]
    %v2433 = vld [vmem:[#allocation4 + $0x1e0] sm:$0xff]
    %v2434 = vld [vmem:[#allocation4 + $0x1e8] sm:$0xff]
    %v2435 = vld [vmem:[#allocation4 + $0x1f0] sm:$0xff]
    %v2436 = vld [vmem:[#allocation4 + $0x1f8] sm:$0xff]
    %v2437 = vld [vmem:[#allocation6] sm:$0xff]
    %v2438 = vld [vmem:[#allocation6 + $0x8] sm:$0xff]
    %v2439 = vld [vmem:[#allocation6 + $0x10] sm:$0xff]
    %v2440 = vld [vmem:[#allocation6 + $0x18] sm:$0xff]
    %v2441 = vld [vmem:[#allocation6 + $0x20] sm:$0xff]
    %v2442 = vld [vmem:[#allocation6 + $0x28] sm:$0xff]
    %v2443 = vld [vmem:[#allocation6 + $0x30] sm:$0xff]
    %v2444 = vld [vmem:[#allocation6 + $0x38] sm:$0xff]
    %v2445 = vld [vmem:[#allocation6 + $0x40] sm:$0xff]
    %v2446 = vld [vmem:[#allocation6 + $0x48] sm:$0xff]
    %v2447 = vld [vmem:[#allocation6 + $0x50] sm:$0xff]
    %v2448 = vld [vmem:[#allocation6 + $0x58] sm:$0xff]
    %v2449 = vld [vmem:[#allocation6 + $0x60] sm:$0xff]
    %v2450 = vld [vmem:[#allocation6 + $0x68] sm:$0xff]
    %v2451 = vld [vmem:[#allocation6 + $0x70] sm:$0xff]
    %v2452 = vld [vmem:[#allocation6 + $0x78] sm:$0xff]
    %v2453 = vld [vmem:[#allocation6 + $0x80] sm:$0xff]
    %v2454 = vld [vmem:[#allocation6 + $0x88] sm:$0xff]
    %v2455 = vld [vmem:[#allocation6 + $0x90] sm:$0xff]
    %v2456 = vld [vmem:[#allocation6 + $0x98] sm:$0xff]
    %v2457 = vld [vmem:[#allocation6 + $0xa0] sm:$0xff]
    %v2458 = vld [vmem:[#allocation6 + $0xa8] sm:$0xff]
    %v2459 = vld [vmem:[#allocation6 + $0xb0] sm:$0xff]
    %v2460 = vld [vmem:[#allocation6 + $0xb8] sm:$0xff]
    %v2461 = vld [vmem:[#allocation6 + $0xc0] sm:$0xff]
    %v2462 = vld [vmem:[#allocation6 + $0xc8] sm:$0xff]
    %v2463 = vld [vmem:[#allocation6 + $0xd0] sm:$0xff]
    %v2464 = vld [vmem:[#allocation6 + $0xd8] sm:$0xff]
    %v2465 = vld [vmem:[#allocation6 + $0xe0] sm:$0xff]
    %v2466 = vld [vmem:[#allocation6 + $0xe8] sm:$0xff]
    %v2467 = vld [vmem:[#allocation6 + $0xf0] sm:$0xff]
    %v2468 = vld [vmem:[#allocation6 + $0xf8] sm:$0xff]
    %v2469 = vld [vmem:[#allocation6 + $0x100] sm:$0xff]
    %v2470 = vld [vmem:[#allocation6 + $0x108] sm:$0xff]
    %v2471 = vld [vmem:[#allocation6 + $0x110] sm:$0xff]
    %v2472 = vld [vmem:[#allocation6 + $0x118] sm:$0xff]
    %v2473 = vld [vmem:[#allocation6 + $0x120] sm:$0xff]
    %v2474 = vld [vmem:[#allocation6 + $0x128] sm:$0xff]
    %v2475 = vld [vmem:[#allocation6 + $0x130] sm:$0xff]
    %v2476 = vld [vmem:[#allocation6 + $0x138] sm:$0xff]
    %v2477 = vld [vmem:[#allocation6 + $0x140] sm:$0xff]
    %v2478 = vld [vmem:[#allocation6 + $0x148] sm:$0xff]
    %v2479 = vld [vmem:[#allocation6 + $0x150] sm:$0xff]
    %v2480 = vld [vmem:[#allocation6 + $0x158] sm:$0xff]
    %v2481 = vld [vmem:[#allocation6 + $0x160] sm:$0xff]
    %v2482 = vld [vmem:[#allocation6 + $0x168] sm:$0xff]
    %v2483 = vld [vmem:[#allocation6 + $0x170] sm:$0xff]
    %v2484 = vld [vmem:[#allocation6 + $0x178] sm:$0xff]
    %v2485 = vld [vmem:[#allocation6 + $0x180] sm:$0xff]
    %v2486 = vld [vmem:[#allocation6 + $0x188] sm:$0xff]
    %v2487 = vld [vmem:[#allocation6 + $0x190] sm:$0xff]
    %v2488 = vld [vmem:[#allocation6 + $0x198] sm:$0xff]
    %v2489 = vld [vmem:[#allocation6 + $0x1a0] sm:$0xff]
    %v2490 = vld [vmem:[#allocation6 + $0x1a8] sm:$0xff]
    %v2491 = vld [vmem:[#allocation6 + $0x1b0] sm:$0xff]
    %v2492 = vld [vmem:[#allocation6 + $0x1b8] sm:$0xff]
    %v2493 = vld [vmem:[#allocation6 + $0x1c0] sm:$0xff]
    %v2494 = vld [vmem:[#allocation6 + $0x1c8] sm:$0xff]
    %v2495 = vld [vmem:[#allocation6 + $0x1d0] sm:$0xff]
    %v2496 = vld [vmem:[#allocation6 + $0x1d8] sm:$0xff]
    %v2497 = vld [vmem:[#allocation6 + $0x1e0] sm:$0xff]
    %v2498 = vld [vmem:[#allocation6 + $0x1e8] sm:$0xff]
    %v2499 = vld [vmem:[#allocation6 + $0x1f0] sm:$0xff]
    %v2500 = vld [vmem:[#allocation6 + $0x1f8] sm:$0xff]
    %2501 = vmatpush.msra.mxu0 %v2497
    %2502 = vmatpush.msra.mxu0 %v2493
    %2503 = vmatpush.msra.mxu0 %v2489
    %2504 = vmatpush.msra.mxu0 %v2485
    %2505 = vmatpush.msra.mxu0 %v2481
    %2506 = vmatpush.msra.mxu0 %v2477
    %2507 = vmatpush.msra.mxu0 %v2473
    %2508 = vmatpush.msra.mxu0 %v2469
    %2509 = vmatpush.msra.mxu0 %v2465
    %2510 = vmatpush.msra.mxu0 %v2461
    %2511 = vmatpush.msra.mxu0 %v2457
    %2512 = vmatpush.msra.mxu0 %v2453
    %2513 = vmatpush.msra.mxu0 %v2449
    %2514 = vmatpush.msra.mxu0 %v2445
    %2515 = vmatpush.msra.mxu0 %v2441
    %2516 = vmatpush.msra.mxu0 %v2437
    %2517 = vmatmul.f32.gmra.mxu0 %v2062
    %v2518 = vpop.f32.mrf.mxu0
    %v2519 = vadd.f32 0.0, %v2518
    %2520 = vdwg.mxu0
    %2521 = vmatpush.msra.mxu0 %v2498
    %2522 = vmatpush.msra.mxu0 %v2494
    %2523 = vmatpush.msra.mxu0 %v2490
    %2524 = vmatpush.msra.mxu0 %v2486
    %2525 = vmatpush.msra.mxu0 %v2482
    %2526 = vmatpush.msra.mxu0 %v2478
    %2527 = vmatpush.msra.mxu0 %v2474
    %2528 = vmatpush.msra.mxu0 %v2470
    %2529 = vmatpush.msra.mxu0 %v2466
    %2530 = vmatpush.msra.mxu0 %v2462
    %2531 = vmatpush.msra.mxu0 %v2458
    %2532 = vmatpush.msra.mxu0 %v2454
    %2533 = vmatpush.msra.mxu0 %v2450
    %2534 = vmatpush.msra.mxu0 %v2446
    %2535 = vmatpush.msra.mxu0 %v2442
    %2536 = vmatpush.msra.mxu0 %v2438
    %2537 = vmatmul.f32.gmra.mxu0 %v2062
    %v2538 = vpop.f32.mrf.mxu0
    %v2539 = vadd.f32 0.0, %v2538
    %2540 = vdwg.mxu0
    %2541 = vmatpush.msra.mxu0 %v2499
    %2542 = vmatpush.msra.mxu0 %v2495
    %2543 = vmatpush.msra.mxu0 %v2491
    %2544 = vmatpush.msra.mxu0 %v2487
    %2545 = vmatpush.msra.mxu0 %v2483
    %2546 = vmatpush.msra.mxu0 %v2479
    %2547 = vmatpush.msra.mxu0 %v2475
    %2548 = vmatpush.msra.mxu0 %v2471
    %2549 = vmatpush.msra.mxu0 %v2467
    %2550 = vmatpush.msra.mxu0 %v2463
    %2551 = vmatpush.msra.mxu0 %v2459
    %2552 = vmatpush.msra.mxu0 %v2455
    %2553 = vmatpush.msra.mxu0 %v2451
    %2554 = vmatpush.msra.mxu0 %v2447
    %2555 = vmatpush.msra.mxu0 %v2443
    %2556 = vmatpush.msra.mxu0 %v2439
    %2557 = vmatmul.f32.gmra.mxu0 %v2062
    %v2558 = vpop.f32.mrf.mxu0
    %v2559 = vadd.f32 0.0, %v2558
    %2560 = vdwg.mxu0
    %2561 = vmatpush.msra.mxu0 %v2500
    %2562 = vmatpush.msra.mxu0 %v2496
    %2563 = vmatpush.msra.mxu0 %v2492
    %2564 = vmatpush.msra.mxu0 %v2488
    %2565 = vmatpush.msra.mxu0 %v2484
    %2566 = vmatpush.msra.mxu0 %v2480
    %2567 = vmatpush.msra.mxu0 %v2476
    %2568 = vmatpush.msra.mxu0 %v2472
    %2569 = vmatpush.msra.mxu0 %v2468
    %2570 = vmatpush.msra.mxu0 %v2464
    %2571 = vmatpush.msra.mxu0 %v2460
    %2572 = vmatpush.msra.mxu0 %v2456
    %2573 = vmatpush.msra.mxu0 %v2452
    %2574 = vmatpush.msra.mxu0 %v2448
    %2575 = vmatpush.msra.mxu0 %v2444
    %2576 = vmatpush.msra.mxu0 %v2440
    %2577 = vmatmul.f32.gmra.mxu0 %v2062
    %v2578 = vpop.f32.mrf.mxu0
    %v2579 = vadd.f32 0.0, %v2578
    %2580 = vdwg.mxu0
    %v2582 = vrot.slane %v2372, 3
    %2584 = vmatpush.msra.mxu0 %v2433
    %2585 = vmatpush.msra.mxu0 %v2429
    %2586 = vmatpush.msra.mxu0 %v2425
    %2587 = vmatpush.msra.mxu0 %v2421
    %2588 = vmatpush.msra.mxu0 %v2417
    %2589 = vmatpush.msra.mxu0 %v2413
    %2590 = vmatpush.msra.mxu0 %v2409
    %2591 = vmatpush.msra.mxu0 %v2405
    %2592 = vmatpush.msra.mxu0 %v2401
    %2593 = vmatpush.msra.mxu0 %v2397
    %2594 = vmatpush.msra.mxu0 %v2393
    %2595 = vmatpush.msra.mxu0 %v2389
    %2596 = vmatpush.msra.mxu0 %v2385
    %2597 = vmatpush.msra.mxu0 %v2381
    %2598 = vmatpush.msra.mxu0 %v2377
    %2599 = vmatpush.msra.mxu0 %v2373
    %2600 = vmatmul.f32.gmra.mxu0 %v2582
    %v2601 = vpop.f32.mrf.mxu0
    %v2602 = vadd.f32 %v2519, %v2601
    %2603 = vdwg.mxu0
    %2604 = vmatpush.msra.mxu0 %v2434
    %2605 = vmatpush.msra.mxu0 %v2430
    %2606 = vmatpush.msra.mxu0 %v2426
    %2607 = vmatpush.msra.mxu0 %v2422
    %2608 = vmatpush.msra.mxu0 %v2418
    %2609 = vmatpush.msra.mxu0 %v2414
    %2610 = vmatpush.msra.mxu0 %v2410
    %2611 = vmatpush.msra.mxu0 %v2406
    %2612 = vmatpush.msra.mxu0 %v2402
    %2613 = vmatpush.msra.mxu0 %v2398
    %2614 = vmatpush.msra.mxu0 %v2394
    %2615 = vmatpush.msra.mxu0 %v2390
    %2616 = vmatpush.msra.mxu0 %v2386
    %2617 = vmatpush.msra.mxu0 %v2382
    %2618 = vmatpush.msra.mxu0 %v2378
    %2619 = vmatpush.msra.mxu0 %v2374
    %2620 = vmatmul.f32.gmra.mxu0 %v2582
    %v2621 = vpop.f32.mrf.mxu0
    %v2622 = vadd.f32 %v2539, %v2621
    %2623 = vdwg.mxu0
    %2624 = vmatpush.msra.mxu0 %v2435
    %2625 = vmatpush.msra.mxu0 %v2431
    %2626 = vmatpush.msra.mxu0 %v2427
    %2627 = vmatpush.msra.mxu0 %v2423
    %2628 = vmatpush.msra.mxu0 %v2419
    %2629 = vmatpush.msra.mxu0 %v2415
    %2630 = vmatpush.msra.mxu0 %v2411
    %2631 = vmatpush.msra.mxu0 %v2407
    %2632 = vmatpush.msra.mxu0 %v2403
    %2633 = vmatpush.msra.mxu0 %v2399
    %2634 = vmatpush.msra.mxu0 %v2395
    %2635 = vmatpush.msra.mxu0 %v2391
    %2636 = vmatpush.msra.mxu0 %v2387
    %2637 = vmatpush.msra.mxu0 %v2383
    %2638 = vmatpush.msra.mxu0 %v2379
    %2639 = vmatpush.msra.mxu0 %v2375
    %2640 = vmatmul.f32.gmra.mxu0 %v2582
    %v2641 = vpop.f32.mrf.mxu0
    %v2642 = vadd.f32 %v2559, %v2641
    %2643 = vdwg.mxu0
    %2644 = vmatpush.msra.mxu0 %v2436
    %2645 = vmatpush.msra.mxu0 %v2432
    %2646 = vmatpush.msra.mxu0 %v2428
    %2647 = vmatpush.msra.mxu0 %v2424
    %2648 = vmatpush.msra.mxu0 %v2420
    %2649 = vmatpush.msra.mxu0 %v2416
    %2650 = vmatpush.msra.mxu0 %v2412
    %2651 = vmatpush.msra.mxu0 %v2408
    %2652 = vmatpush.msra.mxu0 %v2404
    %2653 = vmatpush.msra.mxu0 %v2400
    %2654 = vmatpush.msra.mxu0 %v2396
    %2655 = vmatpush.msra.mxu0 %v2392
    %2656 = vmatpush.msra.mxu0 %v2388
    %2657 = vmatpush.msra.mxu0 %v2384
    %2658 = vmatpush.msra.mxu0 %v2380
    %2659 = vmatpush.msra.mxu0 %v2376
    %2660 = vmatmul.f32.gmra.mxu0 %v2582
    %v2661 = vpop.f32.mrf.mxu0
    %v2662 = vadd.f32 %v2579, %v2661
    %2663 = vdwg.mxu0
    %v2664 = vadd.f32 %v2602, %v649
    %v2665 = vadd.f32 %v2622, %v650
    %v2666 = vadd.f32 %v2642, %v651
    %v2667 = vadd.f32 %v2662, %v652
    %v2668 = vxor.u32 %v2664, 2147483648
    %v2669 = vmul.f32 %v2668, 1.442695
    %v2670 = vpow.pop %v2669
    %v2671 = vadd.f32 %v2670, 1.0
    %v2672 = vrcp.pop %v2671
    %v2673 = vmul.f32 %v2671, %v2672
    %v2674 = vsub.f32 1.0, %v2673
    %v2675 = vmul.f32 %v2672, %v2674
    %v2676 = vadd.f32 %v2672, %v2675
    %vm2677 = vweird.f32 %v2671
    %vm2678 = vweird.f32 %v2672
    %vm2679 = vmor %vm2677, %vm2678
    %v2680 = vsel %vm2679, %v2672, %v2676
    %v2681 = vand.u32 2147483647, %v2671
    %vm2682 = vcmp.eq.f32.partialorder %v2681, 8.507059e+37
    %v2683 = vand.u32 %v2671, 2147483648
    %v2684 = vor.u32 1.1754944e-38, %v2683
    %v2685 = vsel %vm2682, %v2684, %v2680
    %v2686 = vmul.f32 1.0, %v2685
    %v2687 = vxor.u32 %v2665, 2147483648
    %v2688 = vmul.f32 %v2687, 1.442695
    %v2689 = vpow.pop %v2688
    %v2690 = vadd.f32 %v2689, 1.0
    %v2691 = vrcp.pop %v2690
    %v2692 = vmul.f32 %v2690, %v2691
    %v2693 = vsub.f32 1.0, %v2692
    %v2694 = vmul.f32 %v2691, %v2693
    %v2695 = vadd.f32 %v2691, %v2694
    %vm2696 = vweird.f32 %v2690
    %vm2697 = vweird.f32 %v2691
    %vm2698 = vmor %vm2696, %vm2697
    %v2699 = vsel %vm2698, %v2691, %v2695
    %v2700 = vand.u32 2147483647, %v2690
    %vm2701 = vcmp.eq.f32.partialorder %v2700, 8.507059e+37
    %v2702 = vand.u32 %v2690, 2147483648
    %v2703 = vor.u32 1.1754944e-38, %v2702
    %v2704 = vsel %vm2701, %v2703, %v2699
    %v2705 = vmul.f32 1.0, %v2704
    %v2706 = vtanh.pop %v2666
    %v2707 = vxor.u32 %v2667, 2147483648
    %v2708 = vmul.f32 %v2707, 1.442695
    %v2709 = vpow.pop %v2708
    %v2710 = vadd.f32 %v2709, 1.0
    %v2711 = vrcp.pop %v2710
    %v2712 = vmul.f32 %v2710, %v2711
    %v2713 = vsub.f32 1.0, %v2712
    %v2714 = vmul.f32 %v2711, %v2713
    %v2715 = vadd.f32 %v2711, %v2714
    %vm2716 = vweird.f32 %v2710
    %vm2717 = vweird.f32 %v2711
    %vm2718 = vmor %vm2716, %vm2717
    %v2719 = vsel %vm2718, %v2711, %v2715
    %v2720 = vand.u32 2147483647, %v2710
    %vm2721 = vcmp.eq.f32.partialorder %v2720, 8.507059e+37
    %v2722 = vand.u32 %v2710, 2147483648
    %v2723 = vor.u32 1.1754944e-38, %v2722
    %v2724 = vsel %vm2721, %v2723, %v2719
    %v2725 = vmul.f32 1.0, %v2724
    %v2726 = vmul.f32 %v2705, %v2060
    %v2727 = vmul.f32 %v2686, %v2706
    %v2728 = vadd.f32 %v2726, %v2727
    %v2729 = vtanh.pop %v2728
    %v2730 = vmul.f32 %v2725, %v2729
    %v2731 = vld [vmem:[#allocation7] sm:$0xff]
    %v2732 = vld [vmem:[#allocation7 + $0x8] sm:$0xff]
    %v2733 = vld [vmem:[#allocation7 + $0x10] sm:$0xff]
    %v2734 = vld [vmem:[#allocation7 + $0x18] sm:$0xff]
    %v2735 = vld [vmem:[#allocation7 + $0x20] sm:$0xff]
    %v2736 = vld [vmem:[#allocation7 + $0x28] sm:$0xff]
    %v2737 = vld [vmem:[#allocation7 + $0x30] sm:$0xff]
    %v2738 = vld [vmem:[#allocation7 + $0x38] sm:$0xff]
    %v2739 = vld [vmem:[#allocation7 + $0x40] sm:$0xff]
    %v2740 = vld [vmem:[#allocation7 + $0x48] sm:$0xff]
    %v2741 = vld [vmem:[#allocation7 + $0x50] sm:$0xff]
    %v2742 = vld [vmem:[#allocation7 + $0x58] sm:$0xff]
    %v2743 = vld [vmem:[#allocation7 + $0x60] sm:$0xff]
    %v2744 = vld [vmem:[#allocation7 + $0x68] sm:$0xff]
    %v2745 = vld [vmem:[#allocation7 + $0x70] sm:$0xff]
    %v2746 = vld [vmem:[#allocation7 + $0x78] sm:$0xff]
    %2747 = vset.pattern.permute.xlu0 3
    %2748 = vperm.xlu0 %2747, %v2141
    %v2749 = vpop.permute.xlu0 %2748
    %v2751 = vmul.f32 %v2749, %v147
    %2752 = vmatpush.msra.mxu0 %v2746
    %2753 = vmatpush.msra.mxu0 %v2745
    %2754 = vmatpush.msra.mxu0 %v2744
    %2755 = vmatpush.msra.mxu0 %v2743
    %2756 = vmatpush.msra.mxu0 %v2742
    %2757 = vmatpush.msra.mxu0 %v2741
    %2758 = vmatpush.msra.mxu0 %v2740
    %2759 = vmatpush.msra.mxu0 %v2739
    %2760 = vmatpush.msra.mxu0 %v2738
    %2761 = vmatpush.msra.mxu0 %v2737
    %2762 = vmatpush.msra.mxu0 %v2736
    %2763 = vmatpush.msra.mxu0 %v2735
    %2764 = vmatpush.msra.mxu0 %v2734
    %2765 = vmatpush.msra.mxu0 %v2733
    %2766 = vmatpush.msra.mxu0 %v2732
    %2767 = vmatpush.msra.mxu0 %v2731
    %2768 = vmatmul.f32.gmra.mxu0 %v2730
    %v2769 = vpop.f32.mrf.mxu0
    %v2770 = vadd.f32 %v2751, %v2769
    %2771 = vdwg.mxu0
    %v2772 = vadd.f32 %v2770, %v148
    %v2773 = vxor.u32 %v2772, 2147483648
    %v2774 = vmul.f32 %v2773, 1.442695
    %v2775 = vpow.pop %v2774
    %v2776 = vadd.f32 %v2775, 1.0
    %v2777 = vrcp.pop %v2776
    %v2778 = vmul.f32 %v2776, %v2777
    %v2779 = vsub.f32 1.0, %v2778
    %v2780 = vmul.f32 %v2777, %v2779
    %v2781 = vadd.f32 %v2777, %v2780
    %vm2782 = vweird.f32 %v2776
    %vm2783 = vweird.f32 %v2777
    %vm2784 = vmor %vm2782, %vm2783
    %v2785 = vsel %vm2784, %v2777, %v2781
    %v2786 = vand.u32 2147483647, %v2776
    %vm2787 = vcmp.eq.f32.partialorder %v2786, 8.507059e+37
    %v2788 = vand.u32 %v2776, 2147483648
    %v2789 = vor.u32 1.1754944e-38, %v2788
    %v2790 = vsel %vm2787, %v2789, %v2785
    %v2791 = vmul.f32 1.0, %v2790
    %v2792 = vtanh.pop %v2772
    %v2793 = vmul.f32 %v2791, %v2135
    %2795 = vrot.lane.b32.xlu0 %v2792, 126
    %v2796 = vpop.permute.xlu0 %2795
    %v2798 = vmul.f32 %v2791, %v2796
    %2800 = vrot.lane.b32.xlu0 %v2798, 1
    %v2801 = vpop.permute.xlu0 %2800
    %v2803 = vadd.f32 %v2793, %v2801
    %v2804 = vtanh.pop %v2803
    %2806 = vrot.lane.b32.xlu0 %v2804, 2
    %v2807 = vpop.permute.xlu0 %2806
    %v2809 = vmul.f32 %v2791, %v2807
    %2811 = vrot.lane.b32.xlu0 %v2809, 125
    %v2812 = vpop.permute.xlu0 %2811
    %2814 = vst.msk [vmem:[%s13 + $0x3] sm:$0x1] %vm809, %v2812
    %v2815 = vld [vmem:[#allocation2] sm:$0xff]
    %v2816 = vld [vmem:[#allocation2 + $0x8] sm:$0xff]
    %v2817 = vld [vmem:[#allocation2 + $0x10] sm:$0xff]
    %v2818 = vld [vmem:[#allocation2 + $0x18] sm:$0xff]
    %v2819 = vld [vmem:[#allocation2 + $0x20] sm:$0xff]
    %v2820 = vld [vmem:[#allocation2 + $0x28] sm:$0xff]
    %v2821 = vld [vmem:[#allocation2 + $0x30] sm:$0xff]
    %v2822 = vld [vmem:[#allocation2 + $0x38] sm:$0xff]
    %v2823 = vld [vmem:[#allocation2 + $0x40] sm:$0xff]
    %v2824 = vld [vmem:[#allocation2 + $0x48] sm:$0xff]
    %v2825 = vld [vmem:[#allocation2 + $0x50] sm:$0xff]
    %v2826 = vld [vmem:[#allocation2 + $0x58] sm:$0xff]
    %v2827 = vld [vmem:[#allocation2 + $0x60] sm:$0xff]
    %v2828 = vld [vmem:[#allocation2 + $0x68] sm:$0xff]
    %v2829 = vld [vmem:[#allocation2 + $0x70] sm:$0xff]
    %v2830 = vld [vmem:[#allocation2 + $0x78] sm:$0xff]
    %v2831 = vld [vmem:[#allocation2 + $0x80] sm:$0xff]
    %v2832 = vld [vmem:[#allocation2 + $0x88] sm:$0xff]
    %v2833 = vld [vmem:[#allocation2 + $0x90] sm:$0xff]
    %v2834 = vld [vmem:[#allocation2 + $0x98] sm:$0xff]
    %v2835 = vld [vmem:[#allocation2 + $0xa0] sm:$0xff]
    %v2836 = vld [vmem:[#allocation2 + $0xa8] sm:$0xff]
    %v2837 = vld [vmem:[#allocation2 + $0xb0] sm:$0xff]
    %v2838 = vld [vmem:[#allocation2 + $0xb8] sm:$0xff]
    %v2839 = vld [vmem:[#allocation2 + $0xc0] sm:$0xff]
    %v2840 = vld [vmem:[#allocation2 + $0xc8] sm:$0xff]
    %v2841 = vld [vmem:[#allocation2 + $0xd0] sm:$0xff]
    %v2842 = vld [vmem:[#allocation2 + $0xd8] sm:$0xff]
    %v2843 = vld [vmem:[#allocation2 + $0xe0] sm:$0xff]
    %v2844 = vld [vmem:[#allocation2 + $0xe8] sm:$0xff]
    %v2845 = vld [vmem:[#allocation2 + $0xf0] sm:$0xff]
    %v2846 = vld [vmem:[#allocation2 + $0xf8] sm:$0xff]
    %v2847 = vld [vmem:[#allocation2 + $0x100] sm:$0xff]
    %v2848 = vld [vmem:[#allocation2 + $0x108] sm:$0xff]
    %v2849 = vld [vmem:[#allocation2 + $0x110] sm:$0xff]
    %v2850 = vld [vmem:[#allocation2 + $0x118] sm:$0xff]
    %v2851 = vld [vmem:[#allocation2 + $0x120] sm:$0xff]
    %v2852 = vld [vmem:[#allocation2 + $0x128] sm:$0xff]
    %v2853 = vld [vmem:[#allocation2 + $0x130] sm:$0xff]
    %v2854 = vld [vmem:[#allocation2 + $0x138] sm:$0xff]
    %v2855 = vld [vmem:[#allocation2 + $0x140] sm:$0xff]
    %v2856 = vld [vmem:[#allocation2 + $0x148] sm:$0xff]
    %v2857 = vld [vmem:[#allocation2 + $0x150] sm:$0xff]
    %v2858 = vld [vmem:[#allocation2 + $0x158] sm:$0xff]
    %v2859 = vld [vmem:[#allocation2 + $0x160] sm:$0xff]
    %v2860 = vld [vmem:[#allocation2 + $0x168] sm:$0xff]
    %v2861 = vld [vmem:[#allocation2 + $0x170] sm:$0xff]
    %v2862 = vld [vmem:[#allocation2 + $0x178] sm:$0xff]
    %v2863 = vld [vmem:[#allocation2 + $0x180] sm:$0xff]
    %v2864 = vld [vmem:[#allocation2 + $0x188] sm:$0xff]
    %v2865 = vld [vmem:[#allocation2 + $0x190] sm:$0xff]
    %v2866 = vld [vmem:[#allocation2 + $0x198] sm:$0xff]
    %v2867 = vld [vmem:[#allocation2 + $0x1a0] sm:$0xff]
    %v2868 = vld [vmem:[#allocation2 + $0x1a8] sm:$0xff]
    %v2869 = vld [vmem:[#allocation2 + $0x1b0] sm:$0xff]
    %v2870 = vld [vmem:[#allocation2 + $0x1b8] sm:$0xff]
    %v2871 = vld [vmem:[#allocation2 + $0x1c0] sm:$0xff]
    %v2872 = vld [vmem:[#allocation2 + $0x1c8] sm:$0xff]
    %v2873 = vld [vmem:[#allocation2 + $0x1d0] sm:$0xff]
    %v2874 = vld [vmem:[#allocation2 + $0x1d8] sm:$0xff]
    %v2875 = vld [vmem:[#allocation2 + $0x1e0] sm:$0xff]
    %v2876 = vld [vmem:[#allocation2 + $0x1e8] sm:$0xff]
    %v2877 = vld [vmem:[#allocation2 + $0x1f0] sm:$0xff]
    %v2878 = vld [vmem:[#allocation2 + $0x1f8] sm:$0xff]
    %2879 = vmatpush.msra.mxu0 %v2875
    %2880 = vmatpush.msra.mxu0 %v2871
    %2881 = vmatpush.msra.mxu0 %v2867
    %2882 = vmatpush.msra.mxu0 %v2863
    %2883 = vmatpush.msra.mxu0 %v2859
    %2884 = vmatpush.msra.mxu0 %v2855
    %2885 = vmatpush.msra.mxu0 %v2851
    %2886 = vmatpush.msra.mxu0 %v2847
    %2887 = vmatpush.msra.mxu0 %v2843
    %2888 = vmatpush.msra.mxu0 %v2839
    %2889 = vmatpush.msra.mxu0 %v2835
    %2890 = vmatpush.msra.mxu0 %v2831
    %2891 = vmatpush.msra.mxu0 %v2827
    %2892 = vmatpush.msra.mxu0 %v2823
    %2893 = vmatpush.msra.mxu0 %v2819
    %2894 = vmatpush.msra.mxu0 %v2815
    %2895 = vmatmul.f32.gmra.mxu0 %v2582
    %v2896 = vpop.f32.mrf.mxu0
    %v2897 = vadd.f32 0.0, %v2896
    %2898 = vdwg.mxu0
    %2899 = vmatpush.msra.mxu0 %v2876
    %2900 = vmatpush.msra.mxu0 %v2872
    %2901 = vmatpush.msra.mxu0 %v2868
    %2902 = vmatpush.msra.mxu0 %v2864
    %2903 = vmatpush.msra.mxu0 %v2860
    %2904 = vmatpush.msra.mxu0 %v2856
    %2905 = vmatpush.msra.mxu0 %v2852
    %2906 = vmatpush.msra.mxu0 %v2848
    %2907 = vmatpush.msra.mxu0 %v2844
    %2908 = vmatpush.msra.mxu0 %v2840
    %2909 = vmatpush.msra.mxu0 %v2836
    %2910 = vmatpush.msra.mxu0 %v2832
    %2911 = vmatpush.msra.mxu0 %v2828
    %2912 = vmatpush.msra.mxu0 %v2824
    %2913 = vmatpush.msra.mxu0 %v2820
    %2914 = vmatpush.msra.mxu0 %v2816
    %2915 = vmatmul.f32.gmra.mxu0 %v2582
    %v2916 = vpop.f32.mrf.mxu0
    %v2917 = vadd.f32 0.0, %v2916
    %2918 = vdwg.mxu0
    %2919 = vmatpush.msra.mxu0 %v2877
    %2920 = vmatpush.msra.mxu0 %v2873
    %2921 = vmatpush.msra.mxu0 %v2869
    %2922 = vmatpush.msra.mxu0 %v2865
    %2923 = vmatpush.msra.mxu0 %v2861
    %2924 = vmatpush.msra.mxu0 %v2857
    %2925 = vmatpush.msra.mxu0 %v2853
    %2926 = vmatpush.msra.mxu0 %v2849
    %2927 = vmatpush.msra.mxu0 %v2845
    %2928 = vmatpush.msra.mxu0 %v2841
    %2929 = vmatpush.msra.mxu0 %v2837
    %2930 = vmatpush.msra.mxu0 %v2833
    %2931 = vmatpush.msra.mxu0 %v2829
    %2932 = vmatpush.msra.mxu0 %v2825
    %2933 = vmatpush.msra.mxu0 %v2821
    %2934 = vmatpush.msra.mxu0 %v2817
    %2935 = vmatmul.f32.gmra.mxu0 %v2582
    %v2936 = vpop.f32.mrf.mxu0
    %v2937 = vadd.f32 0.0, %v2936
    %2938 = vdwg.mxu0
    %2939 = vmatpush.msra.mxu0 %v2878
    %2940 = vmatpush.msra.mxu0 %v2874
    %2941 = vmatpush.msra.mxu0 %v2870
    %2942 = vmatpush.msra.mxu0 %v2866
    %2943 = vmatpush.msra.mxu0 %v2862
    %2944 = vmatpush.msra.mxu0 %v2858
    %2945 = vmatpush.msra.mxu0 %v2854
    %2946 = vmatpush.msra.mxu0 %v2850
    %2947 = vmatpush.msra.mxu0 %v2846
    %2948 = vmatpush.msra.mxu0 %v2842
    %2949 = vmatpush.msra.mxu0 %v2838
    %2950 = vmatpush.msra.mxu0 %v2834
    %2951 = vmatpush.msra.mxu0 %v2830
    %2952 = vmatpush.msra.mxu0 %v2826
    %2953 = vmatpush.msra.mxu0 %v2822
    %2954 = vmatpush.msra.mxu0 %v2818
    %2955 = vmatmul.f32.gmra.mxu0 %v2582
    %v2956 = vpop.f32.mrf.mxu0
    %v2957 = vadd.f32 0.0, %v2956
    %2958 = vdwg.mxu0
    %v2963 = vrot.slane %v2897, 4
    %v2964 = vrot.slane %v2917, 4
    %v2965 = vrot.slane %v2937, 4
    %v2966 = vrot.slane %v2957, 4
    %v2971 = vadd.f32 %v137, %v2963
    %v2972 = vadd.f32 %v138, %v2964
    %v2973 = vadd.f32 %v139, %v2965
    %v2974 = vadd.f32 %v140, %v2966
    %v2975 = vxor.u32 %v2971, 2147483648
    %v2976 = vmul.f32 %v2975, 1.442695
    %v2977 = vpow.pop %v2976
    %v2978 = vadd.f32 %v2977, 1.0
    %v2979 = vrcp.pop %v2978
    %v2980 = vmul.f32 %v2978, %v2979
    %v2981 = vsub.f32 1.0, %v2980
    %v2982 = vmul.f32 %v2979, %v2981
    %v2983 = vadd.f32 %v2979, %v2982
    %vm2984 = vweird.f32 %v2978
    %vm2985 = vweird.f32 %v2979
    %vm2986 = vmor %vm2984, %vm2985
    %v2987 = vsel %vm2986, %v2979, %v2983
    %v2988 = vand.u32 2147483647, %v2978
    %vm2989 = vcmp.eq.f32.partialorder %v2988, 8.507059e+37
    %v2990 = vand.u32 %v2978, 2147483648
    %v2991 = vor.u32 1.1754944e-38, %v2990
    %v2992 = vsel %vm2989, %v2991, %v2987
    %v2993 = vmul.f32 1.0, %v2992
    %v2994 = vxor.u32 %v2972, 2147483648
    %v2995 = vmul.f32 %v2994, 1.442695
    %v2996 = vpow.pop %v2995
    %v2997 = vadd.f32 %v2996, 1.0
    %v2998 = vrcp.pop %v2997
    %v2999 = vmul.f32 %v2997, %v2998
    %v3000 = vsub.f32 1.0, %v2999
    %v3001 = vmul.f32 %v2998, %v3000
    %v3002 = vadd.f32 %v2998, %v3001
    %vm3003 = vweird.f32 %v2997
    %vm3004 = vweird.f32 %v2998
    %vm3005 = vmor %vm3003, %vm3004
    %v3006 = vsel %vm3005, %v2998, %v3002
    %v3007 = vand.u32 2147483647, %v2997
    %vm3008 = vcmp.eq.f32.partialorder %v3007, 8.507059e+37
    %v3009 = vand.u32 %v2997, 2147483648
    %v3010 = vor.u32 1.1754944e-38, %v3009
    %v3011 = vsel %vm3008, %v3010, %v3006
    %v3012 = vmul.f32 1.0, %v3011
    %v3013 = vtanh.pop %v2973
    %v3014 = vxor.u32 %v2974, 2147483648
    %v3015 = vmul.f32 %v3014, 1.442695
    %v3016 = vpow.pop %v3015
    %v3017 = vadd.f32 %v3016, 1.0
    %v3018 = vrcp.pop %v3017
    %v3019 = vmul.f32 %v3017, %v3018
    %v3020 = vsub.f32 1.0, %v3019
    %v3021 = vmul.f32 %v3018, %v3020
    %v3022 = vadd.f32 %v3018, %v3021
    %vm3023 = vweird.f32 %v3017
    %vm3024 = vweird.f32 %v3018
    %vm3025 = vmor %vm3023, %vm3024
    %v3026 = vsel %vm3025, %v3018, %v3022
    %v3027 = vand.u32 2147483647, %v3017
    %vm3028 = vcmp.eq.f32.partialorder %v3027, 8.507059e+37
    %v3029 = vand.u32 %v3017, 2147483648
    %v3030 = vor.u32 1.1754944e-38, %v3029
    %v3031 = vsel %vm3028, %v3030, %v3026
    %v3032 = vmul.f32 1.0, %v3031
    %v3034 = vrot.slane %v2370, 7
    %v3036 = vmul.f32 %v3012, %v3034
    %v3037 = vmul.f32 %v2993, %v3013
    %v3038 = vadd.f32 %v3036, %v3037
    %v3039 = vtanh.pop %v3038
    %v3040 = vmul.f32 %v3032, %v3039
    %v3041 = vld [vmem:[#allocation4] sm:$0xff]
    %v3042 = vld [vmem:[#allocation4 + $0x8] sm:$0xff]
    %v3043 = vld [vmem:[#allocation4 + $0x10] sm:$0xff]
    %v3044 = vld [vmem:[#allocation4 + $0x18] sm:$0xff]
    %v3045 = vld [vmem:[#allocation4 + $0x20] sm:$0xff]
    %v3046 = vld [vmem:[#allocation4 + $0x28] sm:$0xff]
    %v3047 = vld [vmem:[#allocation4 + $0x30] sm:$0xff]
    %v3048 = vld [vmem:[#allocation4 + $0x38] sm:$0xff]
    %v3049 = vld [vmem:[#allocation4 + $0x40] sm:$0xff]
    %v3050 = vld [vmem:[#allocation4 + $0x48] sm:$0xff]
    %v3051 = vld [vmem:[#allocation4 + $0x50] sm:$0xff]
    %v3052 = vld [vmem:[#allocation4 + $0x58] sm:$0xff]
    %v3053 = vld [vmem:[#allocation4 + $0x60] sm:$0xff]
    %v3054 = vld [vmem:[#allocation4 + $0x68] sm:$0xff]
    %v3055 = vld [vmem:[#allocation4 + $0x70] sm:$0xff]
    %v3056 = vld [vmem:[#allocation4 + $0x78] sm:$0xff]
    %v3057 = vld [vmem:[#allocation4 + $0x80] sm:$0xff]
    %v3058 = vld [vmem:[#allocation4 + $0x88] sm:$0xff]
    %v3059 = vld [vmem:[#allocation4 + $0x90] sm:$0xff]
    %v3060 = vld [vmem:[#allocation4 + $0x98] sm:$0xff]
    %v3061 = vld [vmem:[#allocation4 + $0xa0] sm:$0xff]
    %v3062 = vld [vmem:[#allocation4 + $0xa8] sm:$0xff]
    %v3063 = vld [vmem:[#allocation4 + $0xb0] sm:$0xff]
    %v3064 = vld [vmem:[#allocation4 + $0xb8] sm:$0xff]
    %v3065 = vld [vmem:[#allocation4 + $0xc0] sm:$0xff]
    %v3066 = vld [vmem:[#allocation4 + $0xc8] sm:$0xff]
    %v3067 = vld [vmem:[#allocation4 + $0xd0] sm:$0xff]
    %v3068 = vld [vmem:[#allocation4 + $0xd8] sm:$0xff]
    %v3069 = vld [vmem:[#allocation4 + $0xe0] sm:$0xff]
    %v3070 = vld [vmem:[#allocation4 + $0xe8] sm:$0xff]
    %v3071 = vld [vmem:[#allocation4 + $0xf0] sm:$0xff]
    %v3072 = vld [vmem:[#allocation4 + $0xf8] sm:$0xff]
    %v3073 = vld [vmem:[#allocation4 + $0x100] sm:$0xff]
    %v3074 = vld [vmem:[#allocation4 + $0x108] sm:$0xff]
    %v3075 = vld [vmem:[#allocation4 + $0x110] sm:$0xff]
    %v3076 = vld [vmem:[#allocation4 + $0x118] sm:$0xff]
    %v3077 = vld [vmem:[#allocation4 + $0x120] sm:$0xff]
    %v3078 = vld [vmem:[#allocation4 + $0x128] sm:$0xff]
    %v3079 = vld [vmem:[#allocation4 + $0x130] sm:$0xff]
    %v3080 = vld [vmem:[#allocation4 + $0x138] sm:$0xff]
    %v3081 = vld [vmem:[#allocation4 + $0x140] sm:$0xff]
    %v3082 = vld [vmem:[#allocation4 + $0x148] sm:$0xff]
    %v3083 = vld [vmem:[#allocation4 + $0x150] sm:$0xff]
    %v3084 = vld [vmem:[#allocation4 + $0x158] sm:$0xff]
    %v3085 = vld [vmem:[#allocation4 + $0x160] sm:$0xff]
    %v3086 = vld [vmem:[#allocation4 + $0x168] sm:$0xff]
    %v3087 = vld [vmem:[#allocation4 + $0x170] sm:$0xff]
    %v3088 = vld [vmem:[#allocation4 + $0x178] sm:$0xff]
    %v3089 = vld [vmem:[#allocation4 + $0x180] sm:$0xff]
    %v3090 = vld [vmem:[#allocation4 + $0x188] sm:$0xff]
    %v3091 = vld [vmem:[#allocation4 + $0x190] sm:$0xff]
    %v3092 = vld [vmem:[#allocation4 + $0x198] sm:$0xff]
    %v3093 = vld [vmem:[#allocation4 + $0x1a0] sm:$0xff]
    %v3094 = vld [vmem:[#allocation4 + $0x1a8] sm:$0xff]
    %v3095 = vld [vmem:[#allocation4 + $0x1b0] sm:$0xff]
    %v3096 = vld [vmem:[#allocation4 + $0x1b8] sm:$0xff]
    %v3097 = vld [vmem:[#allocation4 + $0x1c0] sm:$0xff]
    %v3098 = vld [vmem:[#allocation4 + $0x1c8] sm:$0xff]
    %v3099 = vld [vmem:[#allocation4 + $0x1d0] sm:$0xff]
    %v3100 = vld [vmem:[#allocation4 + $0x1d8] sm:$0xff]
    %v3101 = vld [vmem:[#allocation4 + $0x1e0] sm:$0xff]
    %v3102 = vld [vmem:[#allocation4 + $0x1e8] sm:$0xff]
    %v3103 = vld [vmem:[#allocation4 + $0x1f0] sm:$0xff]
    %v3104 = vld [vmem:[#allocation4 + $0x1f8] sm:$0xff]
    %v3105 = vld [vmem:[#allocation6] sm:$0xff]
    %v3106 = vld [vmem:[#allocation6 + $0x8] sm:$0xff]
    %v3107 = vld [vmem:[#allocation6 + $0x10] sm:$0xff]
    %v3108 = vld [vmem:[#allocation6 + $0x18] sm:$0xff]
    %v3109 = vld [vmem:[#allocation6 + $0x20] sm:$0xff]
    %v3110 = vld [vmem:[#allocation6 + $0x28] sm:$0xff]
    %v3111 = vld [vmem:[#allocation6 + $0x30] sm:$0xff]
    %v3112 = vld [vmem:[#allocation6 + $0x38] sm:$0xff]
    %v3113 = vld [vmem:[#allocation6 + $0x40] sm:$0xff]
    %v3114 = vld [vmem:[#allocation6 + $0x48] sm:$0xff]
    %v3115 = vld [vmem:[#allocation6 + $0x50] sm:$0xff]
    %v3116 = vld [vmem:[#allocation6 + $0x58] sm:$0xff]
    %v3117 = vld [vmem:[#allocation6 + $0x60] sm:$0xff]
    %v3118 = vld [vmem:[#allocation6 + $0x68] sm:$0xff]
    %v3119 = vld [vmem:[#allocation6 + $0x70] sm:$0xff]
    %v3120 = vld [vmem:[#allocation6 + $0x78] sm:$0xff]
    %v3121 = vld [vmem:[#allocation6 + $0x80] sm:$0xff]
    %v3122 = vld [vmem:[#allocation6 + $0x88] sm:$0xff]
    %v3123 = vld [vmem:[#allocation6 + $0x90] sm:$0xff]
    %v3124 = vld [vmem:[#allocation6 + $0x98] sm:$0xff]
    %v3125 = vld [vmem:[#allocation6 + $0xa0] sm:$0xff]
    %v3126 = vld [vmem:[#allocation6 + $0xa8] sm:$0xff]
    %v3127 = vld [vmem:[#allocation6 + $0xb0] sm:$0xff]
    %v3128 = vld [vmem:[#allocation6 + $0xb8] sm:$0xff]
    %v3129 = vld [vmem:[#allocation6 + $0xc0] sm:$0xff]
    %v3130 = vld [vmem:[#allocation6 + $0xc8] sm:$0xff]
    %v3131 = vld [vmem:[#allocation6 + $0xd0] sm:$0xff]
    %v3132 = vld [vmem:[#allocation6 + $0xd8] sm:$0xff]
    %v3133 = vld [vmem:[#allocation6 + $0xe0] sm:$0xff]
    %v3134 = vld [vmem:[#allocation6 + $0xe8] sm:$0xff]
    %v3135 = vld [vmem:[#allocation6 + $0xf0] sm:$0xff]
    %v3136 = vld [vmem:[#allocation6 + $0xf8] sm:$0xff]
    %v3137 = vld [vmem:[#allocation6 + $0x100] sm:$0xff]
    %v3138 = vld [vmem:[#allocation6 + $0x108] sm:$0xff]
    %v3139 = vld [vmem:[#allocation6 + $0x110] sm:$0xff]
    %v3140 = vld [vmem:[#allocation6 + $0x118] sm:$0xff]
    %v3141 = vld [vmem:[#allocation6 + $0x120] sm:$0xff]
    %v3142 = vld [vmem:[#allocation6 + $0x128] sm:$0xff]
    %v3143 = vld [vmem:[#allocation6 + $0x130] sm:$0xff]
    %v3144 = vld [vmem:[#allocation6 + $0x138] sm:$0xff]
    %v3145 = vld [vmem:[#allocation6 + $0x140] sm:$0xff]
    %v3146 = vld [vmem:[#allocation6 + $0x148] sm:$0xff]
    %v3147 = vld [vmem:[#allocation6 + $0x150] sm:$0xff]
    %v3148 = vld [vmem:[#allocation6 + $0x158] sm:$0xff]
    %v3149 = vld [vmem:[#allocation6 + $0x160] sm:$0xff]
    %v3150 = vld [vmem:[#allocation6 + $0x168] sm:$0xff]
    %v3151 = vld [vmem:[#allocation6 + $0x170] sm:$0xff]
    %v3152 = vld [vmem:[#allocation6 + $0x178] sm:$0xff]
    %v3153 = vld [vmem:[#allocation6 + $0x180] sm:$0xff]
    %v3154 = vld [vmem:[#allocation6 + $0x188] sm:$0xff]
    %v3155 = vld [vmem:[#allocation6 + $0x190] sm:$0xff]
    %v3156 = vld [vmem:[#allocation6 + $0x198] sm:$0xff]
    %v3157 = vld [vmem:[#allocation6 + $0x1a0] sm:$0xff]
    %v3158 = vld [vmem:[#allocation6 + $0x1a8] sm:$0xff]
    %v3159 = vld [vmem:[#allocation6 + $0x1b0] sm:$0xff]
    %v3160 = vld [vmem:[#allocation6 + $0x1b8] sm:$0xff]
    %v3161 = vld [vmem:[#allocation6 + $0x1c0] sm:$0xff]
    %v3162 = vld [vmem:[#allocation6 + $0x1c8] sm:$0xff]
    %v3163 = vld [vmem:[#allocation6 + $0x1d0] sm:$0xff]
    %v3164 = vld [vmem:[#allocation6 + $0x1d8] sm:$0xff]
    %v3165 = vld [vmem:[#allocation6 + $0x1e0] sm:$0xff]
    %v3166 = vld [vmem:[#allocation6 + $0x1e8] sm:$0xff]
    %v3167 = vld [vmem:[#allocation6 + $0x1f0] sm:$0xff]
    %v3168 = vld [vmem:[#allocation6 + $0x1f8] sm:$0xff]
    %3169 = vmatpush.msra.mxu0 %v3165
    %3170 = vmatpush.msra.mxu0 %v3161
    %3171 = vmatpush.msra.mxu0 %v3157
    %3172 = vmatpush.msra.mxu0 %v3153
    %3173 = vmatpush.msra.mxu0 %v3149
    %3174 = vmatpush.msra.mxu0 %v3145
    %3175 = vmatpush.msra.mxu0 %v3141
    %3176 = vmatpush.msra.mxu0 %v3137
    %3177 = vmatpush.msra.mxu0 %v3133
    %3178 = vmatpush.msra.mxu0 %v3129
    %3179 = vmatpush.msra.mxu0 %v3125
    %3180 = vmatpush.msra.mxu0 %v3121
    %3181 = vmatpush.msra.mxu0 %v3117
    %3182 = vmatpush.msra.mxu0 %v3113
    %3183 = vmatpush.msra.mxu0 %v3109
    %3184 = vmatpush.msra.mxu0 %v3105
    %3185 = vmatmul.f32.gmra.mxu0 %v2730
    %v3186 = vpop.f32.mrf.mxu0
    %v3187 = vadd.f32 0.0, %v3186
    %3188 = vdwg.mxu0
    %3189 = vmatpush.msra.mxu0 %v3166
    %3190 = vmatpush.msra.mxu0 %v3162
    %3191 = vmatpush.msra.mxu0 %v3158
    %3192 = vmatpush.msra.mxu0 %v3154
    %3193 = vmatpush.msra.mxu0 %v3150
    %3194 = vmatpush.msra.mxu0 %v3146
    %3195 = vmatpush.msra.mxu0 %v3142
    %3196 = vmatpush.msra.mxu0 %v3138
    %3197 = vmatpush.msra.mxu0 %v3134
    %3198 = vmatpush.msra.mxu0 %v3130
    %3199 = vmatpush.msra.mxu0 %v3126
    %3200 = vmatpush.msra.mxu0 %v3122
    %3201 = vmatpush.msra.mxu0 %v3118
    %3202 = vmatpush.msra.mxu0 %v3114
    %3203 = vmatpush.msra.mxu0 %v3110
    %3204 = vmatpush.msra.mxu0 %v3106
    %3205 = vmatmul.f32.gmra.mxu0 %v2730
    %v3206 = vpop.f32.mrf.mxu0
    %v3207 = vadd.f32 0.0, %v3206
    %3208 = vdwg.mxu0
    %3209 = vmatpush.msra.mxu0 %v3167
    %3210 = vmatpush.msra.mxu0 %v3163
    %3211 = vmatpush.msra.mxu0 %v3159
    %3212 = vmatpush.msra.mxu0 %v3155
    %3213 = vmatpush.msra.mxu0 %v3151
    %3214 = vmatpush.msra.mxu0 %v3147
    %3215 = vmatpush.msra.mxu0 %v3143
    %3216 = vmatpush.msra.mxu0 %v3139
    %3217 = vmatpush.msra.mxu0 %v3135
    %3218 = vmatpush.msra.mxu0 %v3131
    %3219 = vmatpush.msra.mxu0 %v3127
    %3220 = vmatpush.msra.mxu0 %v3123
    %3221 = vmatpush.msra.mxu0 %v3119
    %3222 = vmatpush.msra.mxu0 %v3115
    %3223 = vmatpush.msra.mxu0 %v3111
    %3224 = vmatpush.msra.mxu0 %v3107
    %3225 = vmatmul.f32.gmra.mxu0 %v2730
    %v3226 = vpop.f32.mrf.mxu0
    %v3227 = vadd.f32 0.0, %v3226
    %3228 = vdwg.mxu0
    %3229 = vmatpush.msra.mxu0 %v3168
    %3230 = vmatpush.msra.mxu0 %v3164
    %3231 = vmatpush.msra.mxu0 %v3160
    %3232 = vmatpush.msra.mxu0 %v3156
    %3233 = vmatpush.msra.mxu0 %v3152
    %3234 = vmatpush.msra.mxu0 %v3148
    %3235 = vmatpush.msra.mxu0 %v3144
    %3236 = vmatpush.msra.mxu0 %v3140
    %3237 = vmatpush.msra.mxu0 %v3136
    %3238 = vmatpush.msra.mxu0 %v3132
    %3239 = vmatpush.msra.mxu0 %v3128
    %3240 = vmatpush.msra.mxu0 %v3124
    %3241 = vmatpush.msra.mxu0 %v3120
    %3242 = vmatpush.msra.mxu0 %v3116
    %3243 = vmatpush.msra.mxu0 %v3112
    %3244 = vmatpush.msra.mxu0 %v3108
    %3245 = vmatmul.f32.gmra.mxu0 %v2730
    %v3246 = vpop.f32.mrf.mxu0
    %v3247 = vadd.f32 0.0, %v3246
    %3248 = vdwg.mxu0
    %v3250 = vrot.slane %v3040, 4
    %3252 = vmatpush.msra.mxu0 %v3101
    %3253 = vmatpush.msra.mxu0 %v3097
    %3254 = vmatpush.msra.mxu0 %v3093
    %3255 = vmatpush.msra.mxu0 %v3089
    %3256 = vmatpush.msra.mxu0 %v3085
    %3257 = vmatpush.msra.mxu0 %v3081
    %3258 = vmatpush.msra.mxu0 %v3077
    %3259 = vmatpush.msra.mxu0 %v3073
    %3260 = vmatpush.msra.mxu0 %v3069
    %3261 = vmatpush.msra.mxu0 %v3065
    %3262 = vmatpush.msra.mxu0 %v3061
    %3263 = vmatpush.msra.mxu0 %v3057
    %3264 = vmatpush.msra.mxu0 %v3053
    %3265 = vmatpush.msra.mxu0 %v3049
    %3266 = vmatpush.msra.mxu0 %v3045
    %3267 = vmatpush.msra.mxu0 %v3041
    %3268 = vmatmul.f32.gmra.mxu0 %v3250
    %v3269 = vpop.f32.mrf.mxu0
    %v3270 = vadd.f32 %v3187, %v3269
    %3271 = vdwg.mxu0
    %3272 = vmatpush.msra.mxu0 %v3102
    %3273 = vmatpush.msra.mxu0 %v3098
    %3274 = vmatpush.msra.mxu0 %v3094
    %3275 = vmatpush.msra.mxu0 %v3090
    %3276 = vmatpush.msra.mxu0 %v3086
    %3277 = vmatpush.msra.mxu0 %v3082
    %3278 = vmatpush.msra.mxu0 %v3078
    %3279 = vmatpush.msra.mxu0 %v3074
    %3280 = vmatpush.msra.mxu0 %v3070
    %3281 = vmatpush.msra.mxu0 %v3066
    %3282 = vmatpush.msra.mxu0 %v3062
    %3283 = vmatpush.msra.mxu0 %v3058
    %3284 = vmatpush.msra.mxu0 %v3054
    %3285 = vmatpush.msra.mxu0 %v3050
    %3286 = vmatpush.msra.mxu0 %v3046
    %3287 = vmatpush.msra.mxu0 %v3042
    %3288 = vmatmul.f32.gmra.mxu0 %v3250
    %v3289 = vpop.f32.mrf.mxu0
    %v3290 = vadd.f32 %v3207, %v3289
    %3291 = vdwg.mxu0
    %3292 = vmatpush.msra.mxu0 %v3103
    %3293 = vmatpush.msra.mxu0 %v3099
    %3294 = vmatpush.msra.mxu0 %v3095
    %3295 = vmatpush.msra.mxu0 %v3091
    %3296 = vmatpush.msra.mxu0 %v3087
    %3297 = vmatpush.msra.mxu0 %v3083
    %3298 = vmatpush.msra.mxu0 %v3079
    %3299 = vmatpush.msra.mxu0 %v3075
    %3300 = vmatpush.msra.mxu0 %v3071
    %3301 = vmatpush.msra.mxu0 %v3067
    %3302 = vmatpush.msra.mxu0 %v3063
    %3303 = vmatpush.msra.mxu0 %v3059
    %3304 = vmatpush.msra.mxu0 %v3055
    %3305 = vmatpush.msra.mxu0 %v3051
    %3306 = vmatpush.msra.mxu0 %v3047
    %3307 = vmatpush.msra.mxu0 %v3043
    %3308 = vmatmul.f32.gmra.mxu0 %v3250
    %v3309 = vpop.f32.mrf.mxu0
    %v3310 = vadd.f32 %v3227, %v3309
    %3311 = vdwg.mxu0
    %3312 = vmatpush.msra.mxu0 %v3104
    %3313 = vmatpush.msra.mxu0 %v3100
    %3314 = vmatpush.msra.mxu0 %v3096
    %3315 = vmatpush.msra.mxu0 %v3092
    %3316 = vmatpush.msra.mxu0 %v3088
    %3317 = vmatpush.msra.mxu0 %v3084
    %3318 = vmatpush.msra.mxu0 %v3080
    %3319 = vmatpush.msra.mxu0 %v3076
    %3320 = vmatpush.msra.mxu0 %v3072
    %3321 = vmatpush.msra.mxu0 %v3068
    %3322 = vmatpush.msra.mxu0 %v3064
    %3323 = vmatpush.msra.mxu0 %v3060
    %3324 = vmatpush.msra.mxu0 %v3056
    %3325 = vmatpush.msra.mxu0 %v3052
    %3326 = vmatpush.msra.mxu0 %v3048
    %3327 = vmatpush.msra.mxu0 %v3044
    %3328 = vmatmul.f32.gmra.mxu0 %v3250
    %v3329 = vpop.f32.mrf.mxu0
    %v3330 = vadd.f32 %v3247, %v3329
    %3331 = vdwg.mxu0
    %v3332 = vadd.f32 %v3270, %v649
    %v3333 = vadd.f32 %v3290, %v650
    %v3334 = vadd.f32 %v3310, %v651
    %v3335 = vadd.f32 %v3330, %v652
    %v3336 = vxor.u32 %v3332, 2147483648
    %v3337 = vmul.f32 %v3336, 1.442695
    %v3338 = vpow.pop %v3337
    %v3339 = vadd.f32 %v3338, 1.0
    %v3340 = vrcp.pop %v3339
    %v3341 = vmul.f32 %v3339, %v3340
    %v3342 = vsub.f32 1.0, %v3341
    %v3343 = vmul.f32 %v3340, %v3342
    %v3344 = vadd.f32 %v3340, %v3343
    %vm3345 = vweird.f32 %v3339
    %vm3346 = vweird.f32 %v3340
    %vm3347 = vmor %vm3345, %vm3346
    %v3348 = vsel %vm3347, %v3340, %v3344
    %v3349 = vand.u32 2147483647, %v3339
    %vm3350 = vcmp.eq.f32.partialorder %v3349, 8.507059e+37
    %v3351 = vand.u32 %v3339, 2147483648
    %v3352 = vor.u32 1.1754944e-38, %v3351
    %v3353 = vsel %vm3350, %v3352, %v3348
    %v3354 = vmul.f32 1.0, %v3353
    %v3355 = vxor.u32 %v3333, 2147483648
    %v3356 = vmul.f32 %v3355, 1.442695
    %v3357 = vpow.pop %v3356
    %v3358 = vadd.f32 %v3357, 1.0
    %v3359 = vrcp.pop %v3358
    %v3360 = vmul.f32 %v3358, %v3359
    %v3361 = vsub.f32 1.0, %v3360
    %v3362 = vmul.f32 %v3359, %v3361
    %v3363 = vadd.f32 %v3359, %v3362
    %vm3364 = vweird.f32 %v3358
    %vm3365 = vweird.f32 %v3359
    %vm3366 = vmor %vm3364, %vm3365
    %v3367 = vsel %vm3366, %v3359, %v3363
    %v3368 = vand.u32 2147483647, %v3358
    %vm3369 = vcmp.eq.f32.partialorder %v3368, 8.507059e+37
    %v3370 = vand.u32 %v3358, 2147483648
    %v3371 = vor.u32 1.1754944e-38, %v3370
    %v3372 = vsel %vm3369, %v3371, %v3367
    %v3373 = vmul.f32 1.0, %v3372
    %v3374 = vtanh.pop %v3334
    %v3375 = vxor.u32 %v3335, 2147483648
    %v3376 = vmul.f32 %v3375, 1.442695
    %v3377 = vpow.pop %v3376
    %v3378 = vadd.f32 %v3377, 1.0
    %v3379 = vrcp.pop %v3378
    %v3380 = vmul.f32 %v3378, %v3379
    %v3381 = vsub.f32 1.0, %v3380
    %v3382 = vmul.f32 %v3379, %v3381
    %v3383 = vadd.f32 %v3379, %v3382
    %vm3384 = vweird.f32 %v3378
    %vm3385 = vweird.f32 %v3379
    %vm3386 = vmor %vm3384, %vm3385
    %v3387 = vsel %vm3386, %v3379, %v3383
    %v3388 = vand.u32 2147483647, %v3378
    %vm3389 = vcmp.eq.f32.partialorder %v3388, 8.507059e+37
    %v3390 = vand.u32 %v3378, 2147483648
    %v3391 = vor.u32 1.1754944e-38, %v3390
    %v3392 = vsel %vm3389, %v3391, %v3387
    %v3393 = vmul.f32 1.0, %v3392
    %v3394 = vmul.f32 %v3373, %v2728
    %v3395 = vmul.f32 %v3354, %v3374
    %v3396 = vadd.f32 %v3394, %v3395
    %v3397 = vtanh.pop %v3396
    %v3398 = vmul.f32 %v3393, %v3397
    %v3399 = vld [vmem:[#allocation7] sm:$0xff]
    %v3400 = vld [vmem:[#allocation7 + $0x8] sm:$0xff]
    %v3401 = vld [vmem:[#allocation7 + $0x10] sm:$0xff]
    %v3402 = vld [vmem:[#allocation7 + $0x18] sm:$0xff]
    %v3403 = vld [vmem:[#allocation7 + $0x20] sm:$0xff]
    %v3404 = vld [vmem:[#allocation7 + $0x28] sm:$0xff]
    %v3405 = vld [vmem:[#allocation7 + $0x30] sm:$0xff]
    %v3406 = vld [vmem:[#allocation7 + $0x38] sm:$0xff]
    %v3407 = vld [vmem:[#allocation7 + $0x40] sm:$0xff]
    %v3408 = vld [vmem:[#allocation7 + $0x48] sm:$0xff]
    %v3409 = vld [vmem:[#allocation7 + $0x50] sm:$0xff]
    %v3410 = vld [vmem:[#allocation7 + $0x58] sm:$0xff]
    %v3411 = vld [vmem:[#allocation7 + $0x60] sm:$0xff]
    %v3412 = vld [vmem:[#allocation7 + $0x68] sm:$0xff]
    %v3413 = vld [vmem:[#allocation7 + $0x70] sm:$0xff]
    %v3414 = vld [vmem:[#allocation7 + $0x78] sm:$0xff]
    %3415 = vset.pattern.permute.xlu0 3
    %3416 = vperm.xlu0 %3415, %v2809
    %v3417 = vpop.permute.xlu0 %3416
    %v3419 = vmul.f32 %v3417, %v147
    %3420 = vmatpush.msra.mxu0 %v3414
    %3421 = vmatpush.msra.mxu0 %v3413
    %3422 = vmatpush.msra.mxu0 %v3412
    %3423 = vmatpush.msra.mxu0 %v3411
    %3424 = vmatpush.msra.mxu0 %v3410
    %3425 = vmatpush.msra.mxu0 %v3409
    %3426 = vmatpush.msra.mxu0 %v3408
    %3427 = vmatpush.msra.mxu0 %v3407
    %3428 = vmatpush.msra.mxu0 %v3406
    %3429 = vmatpush.msra.mxu0 %v3405
    %3430 = vmatpush.msra.mxu0 %v3404
    %3431 = vmatpush.msra.mxu0 %v3403
    %3432 = vmatpush.msra.mxu0 %v3402
    %3433 = vmatpush.msra.mxu0 %v3401
    %3434 = vmatpush.msra.mxu0 %v3400
    %3435 = vmatpush.msra.mxu0 %v3399
    %3436 = vmatmul.f32.gmra.mxu0 %v3398
    %v3437 = vpop.f32.mrf.mxu0
    %v3438 = vadd.f32 %v3419, %v3437
    %3439 = vdwg.mxu0
    %v3440 = vadd.f32 %v3438, %v148
    %v3441 = vxor.u32 %v3440, 2147483648
    %v3442 = vmul.f32 %v3441, 1.442695
    %v3443 = vpow.pop %v3442
    %v3444 = vadd.f32 %v3443, 1.0
    %v3445 = vrcp.pop %v3444
    %v3446 = vmul.f32 %v3444, %v3445
    %v3447 = vsub.f32 1.0, %v3446
    %v3448 = vmul.f32 %v3445, %v3447
    %v3449 = vadd.f32 %v3445, %v3448
    %vm3450 = vweird.f32 %v3444
    %vm3451 = vweird.f32 %v3445
    %vm3452 = vmor %vm3450, %vm3451
    %v3453 = vsel %vm3452, %v3445, %v3449
    %v3454 = vand.u32 2147483647, %v3444
    %vm3455 = vcmp.eq.f32.partialorder %v3454, 8.507059e+37
    %v3456 = vand.u32 %v3444, 2147483648
    %v3457 = vor.u32 1.1754944e-38, %v3456
    %v3458 = vsel %vm3455, %v3457, %v3453
    %v3459 = vmul.f32 1.0, %v3458
    %v3460 = vtanh.pop %v3440
    %v3461 = vmul.f32 %v3459, %v2803
    %3463 = vrot.lane.b32.xlu0 %v3460, 126
    %v3464 = vpop.permute.xlu0 %3463
    %v3466 = vmul.f32 %v3459, %v3464
    %3468 = vrot.lane.b32.xlu0 %v3466, 1
    %v3469 = vpop.permute.xlu0 %3468
    %v3471 = vadd.f32 %v3461, %v3469
    %v3472 = vtanh.pop %v3471
    %3474 = vrot.lane.b32.xlu0 %v3472, 2
    %v3475 = vpop.permute.xlu0 %3474
    %v3477 = vmul.f32 %v3459, %v3475
    %3479 = vrot.lane.b32.xlu0 %v3477, 125
    %v3480 = vpop.permute.xlu0 %3479
    %3482 = vst.msk [vmem:[%s13 + $0x4] sm:$0x1] %vm809, %v3480
    %v3483 = vld [vmem:[#allocation2] sm:$0xff]
    %v3484 = vld [vmem:[#allocation2 + $0x8] sm:$0xff]
    %v3485 = vld [vmem:[#allocation2 + $0x10] sm:$0xff]
    %v3486 = vld [vmem:[#allocation2 + $0x18] sm:$0xff]
    %v3487 = vld [vmem:[#allocation2 + $0x20] sm:$0xff]
    %v3488 = vld [vmem:[#allocation2 + $0x28] sm:$0xff]
    %v3489 = vld [vmem:[#allocation2 + $0x30] sm:$0xff]
    %v3490 = vld [vmem:[#allocation2 + $0x38] sm:$0xff]
    %v3491 = vld [vmem:[#allocation2 + $0x40] sm:$0xff]
    %v3492 = vld [vmem:[#allocation2 + $0x48] sm:$0xff]
    %v3493 = vld [vmem:[#allocation2 + $0x50] sm:$0xff]
    %v3494 = vld [vmem:[#allocation2 + $0x58] sm:$0xff]
    %v3495 = vld [vmem:[#allocation2 + $0x60] sm:$0xff]
    %v3496 = vld [vmem:[#allocation2 + $0x68] sm:$0xff]
    %v3497 = vld [vmem:[#allocation2 + $0x70] sm:$0xff]
    %v3498 = vld [vmem:[#allocation2 + $0x78] sm:$0xff]
    %v3499 = vld [vmem:[#allocation2 + $0x80] sm:$0xff]
    %v3500 = vld [vmem:[#allocation2 + $0x88] sm:$0xff]
    %v3501 = vld [vmem:[#allocation2 + $0x90] sm:$0xff]
    %v3502 = vld [vmem:[#allocation2 + $0x98] sm:$0xff]
    %v3503 = vld [vmem:[#allocation2 + $0xa0] sm:$0xff]
    %v3504 = vld [vmem:[#allocation2 + $0xa8] sm:$0xff]
    %v3505 = vld [vmem:[#allocation2 + $0xb0] sm:$0xff]
    %v3506 = vld [vmem:[#allocation2 + $0xb8] sm:$0xff]
    %v3507 = vld [vmem:[#allocation2 + $0xc0] sm:$0xff]
    %v3508 = vld [vmem:[#allocation2 + $0xc8] sm:$0xff]
    %v3509 = vld [vmem:[#allocation2 + $0xd0] sm:$0xff]
    %v3510 = vld [vmem:[#allocation2 + $0xd8] sm:$0xff]
    %v3511 = vld [vmem:[#allocation2 + $0xe0] sm:$0xff]
    %v3512 = vld [vmem:[#allocation2 + $0xe8] sm:$0xff]
    %v3513 = vld [vmem:[#allocation2 + $0xf0] sm:$0xff]
    %v3514 = vld [vmem:[#allocation2 + $0xf8] sm:$0xff]
    %v3515 = vld [vmem:[#allocation2 + $0x100] sm:$0xff]
    %v3516 = vld [vmem:[#allocation2 + $0x108] sm:$0xff]
    %v3517 = vld [vmem:[#allocation2 + $0x110] sm:$0xff]
    %v3518 = vld [vmem:[#allocation2 + $0x118] sm:$0xff]
    %v3519 = vld [vmem:[#allocation2 + $0x120] sm:$0xff]
    %v3520 = vld [vmem:[#allocation2 + $0x128] sm:$0xff]
    %v3521 = vld [vmem:[#allocation2 + $0x130] sm:$0xff]
    %v3522 = vld [vmem:[#allocation2 + $0x138] sm:$0xff]
    %v3523 = vld [vmem:[#allocation2 + $0x140] sm:$0xff]
    %v3524 = vld [vmem:[#allocation2 + $0x148] sm:$0xff]
    %v3525 = vld [vmem:[#allocation2 + $0x150] sm:$0xff]
    %v3526 = vld [vmem:[#allocation2 + $0x158] sm:$0xff]
    %v3527 = vld [vmem:[#allocation2 + $0x160] sm:$0xff]
    %v3528 = vld [vmem:[#allocation2 + $0x168] sm:$0xff]
    %v3529 = vld [vmem:[#allocation2 + $0x170] sm:$0xff]
    %v3530 = vld [vmem:[#allocation2 + $0x178] sm:$0xff]
    %v3531 = vld [vmem:[#allocation2 + $0x180] sm:$0xff]
    %v3532 = vld [vmem:[#allocation2 + $0x188] sm:$0xff]
    %v3533 = vld [vmem:[#allocation2 + $0x190] sm:$0xff]
    %v3534 = vld [vmem:[#allocation2 + $0x198] sm:$0xff]
    %v3535 = vld [vmem:[#allocation2 + $0x1a0] sm:$0xff]
    %v3536 = vld [vmem:[#allocation2 + $0x1a8] sm:$0xff]
    %v3537 = vld [vmem:[#allocation2 + $0x1b0] sm:$0xff]
    %v3538 = vld [vmem:[#allocation2 + $0x1b8] sm:$0xff]
    %v3539 = vld [vmem:[#allocation2 + $0x1c0] sm:$0xff]
    %v3540 = vld [vmem:[#allocation2 + $0x1c8] sm:$0xff]
    %v3541 = vld [vmem:[#allocation2 + $0x1d0] sm:$0xff]
    %v3542 = vld [vmem:[#allocation2 + $0x1d8] sm:$0xff]
    %v3543 = vld [vmem:[#allocation2 + $0x1e0] sm:$0xff]
    %v3544 = vld [vmem:[#allocation2 + $0x1e8] sm:$0xff]
    %v3545 = vld [vmem:[#allocation2 + $0x1f0] sm:$0xff]
    %v3546 = vld [vmem:[#allocation2 + $0x1f8] sm:$0xff]
    %3547 = vmatpush.msra.mxu0 %v3543
    %3548 = vmatpush.msra.mxu0 %v3539
    %3549 = vmatpush.msra.mxu0 %v3535
    %3550 = vmatpush.msra.mxu0 %v3531
    %3551 = vmatpush.msra.mxu0 %v3527
    %3552 = vmatpush.msra.mxu0 %v3523
    %3553 = vmatpush.msra.mxu0 %v3519
    %3554 = vmatpush.msra.mxu0 %v3515
    %3555 = vmatpush.msra.mxu0 %v3511
    %3556 = vmatpush.msra.mxu0 %v3507
    %3557 = vmatpush.msra.mxu0 %v3503
    %3558 = vmatpush.msra.mxu0 %v3499
    %3559 = vmatpush.msra.mxu0 %v3495
    %3560 = vmatpush.msra.mxu0 %v3491
    %3561 = vmatpush.msra.mxu0 %v3487
    %3562 = vmatpush.msra.mxu0 %v3483
    %3563 = vmatmul.f32.gmra.mxu0 %v3250
    %v3564 = vpop.f32.mrf.mxu0
    %v3565 = vadd.f32 0.0, %v3564
    %3566 = vdwg.mxu0
    %3567 = vmatpush.msra.mxu0 %v3544
    %3568 = vmatpush.msra.mxu0 %v3540
    %3569 = vmatpush.msra.mxu0 %v3536
    %3570 = vmatpush.msra.mxu0 %v3532
    %3571 = vmatpush.msra.mxu0 %v3528
    %3572 = vmatpush.msra.mxu0 %v3524
    %3573 = vmatpush.msra.mxu0 %v3520
    %3574 = vmatpush.msra.mxu0 %v3516
    %3575 = vmatpush.msra.mxu0 %v3512
    %3576 = vmatpush.msra.mxu0 %v3508
    %3577 = vmatpush.msra.mxu0 %v3504
    %3578 = vmatpush.msra.mxu0 %v3500
    %3579 = vmatpush.msra.mxu0 %v3496
    %3580 = vmatpush.msra.mxu0 %v3492
    %3581 = vmatpush.msra.mxu0 %v3488
    %3582 = vmatpush.msra.mxu0 %v3484
    %3583 = vmatmul.f32.gmra.mxu0 %v3250
    %v3584 = vpop.f32.mrf.mxu0
    %v3585 = vadd.f32 0.0, %v3584
    %3586 = vdwg.mxu0
    %3587 = vmatpush.msra.mxu0 %v3545
    %3588 = vmatpush.msra.mxu0 %v3541
    %3589 = vmatpush.msra.mxu0 %v3537
    %3590 = vmatpush.msra.mxu0 %v3533
    %3591 = vmatpush.msra.mxu0 %v3529
    %3592 = vmatpush.msra.mxu0 %v3525
    %3593 = vmatpush.msra.mxu0 %v3521
    %3594 = vmatpush.msra.mxu0 %v3517
    %3595 = vmatpush.msra.mxu0 %v3513
    %3596 = vmatpush.msra.mxu0 %v3509
    %3597 = vmatpush.msra.mxu0 %v3505
    %3598 = vmatpush.msra.mxu0 %v3501
    %3599 = vmatpush.msra.mxu0 %v3497
    %3600 = vmatpush.msra.mxu0 %v3493
    %3601 = vmatpush.msra.mxu0 %v3489
    %3602 = vmatpush.msra.mxu0 %v3485
    %3603 = vmatmul.f32.gmra.mxu0 %v3250
    %v3604 = vpop.f32.mrf.mxu0
    %v3605 = vadd.f32 0.0, %v3604
    %3606 = vdwg.mxu0
    %3607 = vmatpush.msra.mxu0 %v3546
    %3608 = vmatpush.msra.mxu0 %v3542
    %3609 = vmatpush.msra.mxu0 %v3538
    %3610 = vmatpush.msra.mxu0 %v3534
    %3611 = vmatpush.msra.mxu0 %v3530
    %3612 = vmatpush.msra.mxu0 %v3526
    %3613 = vmatpush.msra.mxu0 %v3522
    %3614 = vmatpush.msra.mxu0 %v3518
    %3615 = vmatpush.msra.mxu0 %v3514
    %3616 = vmatpush.msra.mxu0 %v3510
    %3617 = vmatpush.msra.mxu0 %v3506
    %3618 = vmatpush.msra.mxu0 %v3502
    %3619 = vmatpush.msra.mxu0 %v3498
    %3620 = vmatpush.msra.mxu0 %v3494
    %3621 = vmatpush.msra.mxu0 %v3490
    %3622 = vmatpush.msra.mxu0 %v3486
    %3623 = vmatmul.f32.gmra.mxu0 %v3250
    %v3624 = vpop.f32.mrf.mxu0
    %v3625 = vadd.f32 0.0, %v3624
    %3626 = vdwg.mxu0
    %v3631 = vrot.slane %v3565, 3
    %v3632 = vrot.slane %v3585, 3
    %v3633 = vrot.slane %v3605, 3
    %v3634 = vrot.slane %v3625, 3
    %v3639 = vadd.f32 %v137, %v3631
    %v3640 = vadd.f32 %v138, %v3632
    %v3641 = vadd.f32 %v139, %v3633
    %v3642 = vadd.f32 %v140, %v3634
    %v3643 = vxor.u32 %v3639, 2147483648
    %v3644 = vmul.f32 %v3643, 1.442695
    %v3645 = vpow.pop %v3644
    %v3646 = vadd.f32 %v3645, 1.0
    %v3647 = vrcp.pop %v3646
    %v3648 = vmul.f32 %v3646, %v3647
    %v3649 = vsub.f32 1.0, %v3648
    %v3650 = vmul.f32 %v3647, %v3649
    %v3651 = vadd.f32 %v3647, %v3650
    %vm3652 = vweird.f32 %v3646
    %vm3653 = vweird.f32 %v3647
    %vm3654 = vmor %vm3652, %vm3653
    %v3655 = vsel %vm3654, %v3647, %v3651
    %v3656 = vand.u32 2147483647, %v3646
    %vm3657 = vcmp.eq.f32.partialorder %v3656, 8.507059e+37
    %v3658 = vand.u32 %v3646, 2147483648
    %v3659 = vor.u32 1.1754944e-38, %v3658
    %v3660 = vsel %vm3657, %v3659, %v3655
    %v3661 = vmul.f32 1.0, %v3660
    %v3662 = vxor.u32 %v3640, 2147483648
    %v3663 = vmul.f32 %v3662, 1.442695
    %v3664 = vpow.pop %v3663
    %v3665 = vadd.f32 %v3664, 1.0
    %v3666 = vrcp.pop %v3665
    %v3667 = vmul.f32 %v3665, %v3666
    %v3668 = vsub.f32 1.0, %v3667
    %v3669 = vmul.f32 %v3666, %v3668
    %v3670 = vadd.f32 %v3666, %v3669
    %vm3671 = vweird.f32 %v3665
    %vm3672 = vweird.f32 %v3666
    %vm3673 = vmor %vm3671, %vm3672
    %v3674 = vsel %vm3673, %v3666, %v3670
    %v3675 = vand.u32 2147483647, %v3665
    %vm3676 = vcmp.eq.f32.partialorder %v3675, 8.507059e+37
    %v3677 = vand.u32 %v3665, 2147483648
    %v3678 = vor.u32 1.1754944e-38, %v3677
    %v3679 = vsel %vm3676, %v3678, %v3674
    %v3680 = vmul.f32 1.0, %v3679
    %v3681 = vtanh.pop %v3641
    %v3682 = vxor.u32 %v3642, 2147483648
    %v3683 = vmul.f32 %v3682, 1.442695
    %v3684 = vpow.pop %v3683
    %v3685 = vadd.f32 %v3684, 1.0
    %v3686 = vrcp.pop %v3685
    %v3687 = vmul.f32 %v3685, %v3686
    %v3688 = vsub.f32 1.0, %v3687
    %v3689 = vmul.f32 %v3686, %v3688
    %v3690 = vadd.f32 %v3686, %v3689
    %vm3691 = vweird.f32 %v3685
    %vm3692 = vweird.f32 %v3686
    %vm3693 = vmor %vm3691, %vm3692
    %v3694 = vsel %vm3693, %v3686, %v3690
    %v3695 = vand.u32 2147483647, %v3685
    %vm3696 = vcmp.eq.f32.partialorder %v3695, 8.507059e+37
    %v3697 = vand.u32 %v3685, 2147483648
    %v3698 = vor.u32 1.1754944e-38, %v3697
    %v3699 = vsel %vm3696, %v3698, %v3694
    %v3700 = vmul.f32 1.0, %v3699
    %v3702 = vrot.slane %v3038, 7
    %v3704 = vmul.f32 %v3680, %v3702
    %v3705 = vmul.f32 %v3661, %v3681
    %v3706 = vadd.f32 %v3704, %v3705
    %v3707 = vtanh.pop %v3706
    %v3708 = vmul.f32 %v3700, %v3707
    %v3709 = vld [vmem:[#allocation4] sm:$0xff]
    %v3710 = vld [vmem:[#allocation4 + $0x8] sm:$0xff]
    %v3711 = vld [vmem:[#allocation4 + $0x10] sm:$0xff]
    %v3712 = vld [vmem:[#allocation4 + $0x18] sm:$0xff]
    %v3713 = vld [vmem:[#allocation4 + $0x20] sm:$0xff]
    %v3714 = vld [vmem:[#allocation4 + $0x28] sm:$0xff]
    %v3715 = vld [vmem:[#allocation4 + $0x30] sm:$0xff]
    %v3716 = vld [vmem:[#allocation4 + $0x38] sm:$0xff]
    %v3717 = vld [vmem:[#allocation4 + $0x40] sm:$0xff]
    %v3718 = vld [vmem:[#allocation4 + $0x48] sm:$0xff]
    %v3719 = vld [vmem:[#allocation4 + $0x50] sm:$0xff]
    %v3720 = vld [vmem:[#allocation4 + $0x58] sm:$0xff]
    %v3721 = vld [vmem:[#allocation4 + $0x60] sm:$0xff]
    %v3722 = vld [vmem:[#allocation4 + $0x68] sm:$0xff]
    %v3723 = vld [vmem:[#allocation4 + $0x70] sm:$0xff]
    %v3724 = vld [vmem:[#allocation4 + $0x78] sm:$0xff]
    %v3725 = vld [vmem:[#allocation4 + $0x80] sm:$0xff]
    %v3726 = vld [vmem:[#allocation4 + $0x88] sm:$0xff]
    %v3727 = vld [vmem:[#allocation4 + $0x90] sm:$0xff]
    %v3728 = vld [vmem:[#allocation4 + $0x98] sm:$0xff]
    %v3729 = vld [vmem:[#allocation4 + $0xa0] sm:$0xff]
    %v3730 = vld [vmem:[#allocation4 + $0xa8] sm:$0xff]
    %v3731 = vld [vmem:[#allocation4 + $0xb0] sm:$0xff]
    %v3732 = vld [vmem:[#allocation4 + $0xb8] sm:$0xff]
    %v3733 = vld [vmem:[#allocation4 + $0xc0] sm:$0xff]
    %v3734 = vld [vmem:[#allocation4 + $0xc8] sm:$0xff]
    %v3735 = vld [vmem:[#allocation4 + $0xd0] sm:$0xff]
    %v3736 = vld [vmem:[#allocation4 + $0xd8] sm:$0xff]
    %v3737 = vld [vmem:[#allocation4 + $0xe0] sm:$0xff]
    %v3738 = vld [vmem:[#allocation4 + $0xe8] sm:$0xff]
    %v3739 = vld [vmem:[#allocation4 + $0xf0] sm:$0xff]
    %v3740 = vld [vmem:[#allocation4 + $0xf8] sm:$0xff]
    %v3741 = vld [vmem:[#allocation4 + $0x100] sm:$0xff]
    %v3742 = vld [vmem:[#allocation4 + $0x108] sm:$0xff]
    %v3743 = vld [vmem:[#allocation4 + $0x110] sm:$0xff]
    %v3744 = vld [vmem:[#allocation4 + $0x118] sm:$0xff]
    %v3745 = vld [vmem:[#allocation4 + $0x120] sm:$0xff]
    %v3746 = vld [vmem:[#allocation4 + $0x128] sm:$0xff]
    %v3747 = vld [vmem:[#allocation4 + $0x130] sm:$0xff]
    %v3748 = vld [vmem:[#allocation4 + $0x138] sm:$0xff]
    %v3749 = vld [vmem:[#allocation4 + $0x140] sm:$0xff]
    %v3750 = vld [vmem:[#allocation4 + $0x148] sm:$0xff]
    %v3751 = vld [vmem:[#allocation4 + $0x150] sm:$0xff]
    %v3752 = vld [vmem:[#allocation4 + $0x158] sm:$0xff]
    %v3753 = vld [vmem:[#allocation4 + $0x160] sm:$0xff]
    %v3754 = vld [vmem:[#allocation4 + $0x168] sm:$0xff]
    %v3755 = vld [vmem:[#allocation4 + $0x170] sm:$0xff]
    %v3756 = vld [vmem:[#allocation4 + $0x178] sm:$0xff]
    %v3757 = vld [vmem:[#allocation4 + $0x180] sm:$0xff]
    %v3758 = vld [vmem:[#allocation4 + $0x188] sm:$0xff]
    %v3759 = vld [vmem:[#allocation4 + $0x190] sm:$0xff]
    %v3760 = vld [vmem:[#allocation4 + $0x198] sm:$0xff]
    %v3761 = vld [vmem:[#allocation4 + $0x1a0] sm:$0xff]
    %v3762 = vld [vmem:[#allocation4 + $0x1a8] sm:$0xff]
    %v3763 = vld [vmem:[#allocation4 + $0x1b0] sm:$0xff]
    %v3764 = vld [vmem:[#allocation4 + $0x1b8] sm:$0xff]
    %v3765 = vld [vmem:[#allocation4 + $0x1c0] sm:$0xff]
    %v3766 = vld [vmem:[#allocation4 + $0x1c8] sm:$0xff]
    %v3767 = vld [vmem:[#allocation4 + $0x1d0] sm:$0xff]
    %v3768 = vld [vmem:[#allocation4 + $0x1d8] sm:$0xff]
    %v3769 = vld [vmem:[#allocation4 + $0x1e0] sm:$0xff]
    %v3770 = vld [vmem:[#allocation4 + $0x1e8] sm:$0xff]
    %v3771 = vld [vmem:[#allocation4 + $0x1f0] sm:$0xff]
    %v3772 = vld [vmem:[#allocation4 + $0x1f8] sm:$0xff]
    %v3773 = vld [vmem:[#allocation6] sm:$0xff]
    %v3774 = vld [vmem:[#allocation6 + $0x8] sm:$0xff]
    %v3775 = vld [vmem:[#allocation6 + $0x10] sm:$0xff]
    %v3776 = vld [vmem:[#allocation6 + $0x18] sm:$0xff]
    %v3777 = vld [vmem:[#allocation6 + $0x20] sm:$0xff]
    %v3778 = vld [vmem:[#allocation6 + $0x28] sm:$0xff]
    %v3779 = vld [vmem:[#allocation6 + $0x30] sm:$0xff]
    %v3780 = vld [vmem:[#allocation6 + $0x38] sm:$0xff]
    %v3781 = vld [vmem:[#allocation6 + $0x40] sm:$0xff]
    %v3782 = vld [vmem:[#allocation6 + $0x48] sm:$0xff]
    %v3783 = vld [vmem:[#allocation6 + $0x50] sm:$0xff]
    %v3784 = vld [vmem:[#allocation6 + $0x58] sm:$0xff]
    %v3785 = vld [vmem:[#allocation6 + $0x60] sm:$0xff]
    %v3786 = vld [vmem:[#allocation6 + $0x68] sm:$0xff]
    %v3787 = vld [vmem:[#allocation6 + $0x70] sm:$0xff]
    %v3788 = vld [vmem:[#allocation6 + $0x78] sm:$0xff]
    %v3789 = vld [vmem:[#allocation6 + $0x80] sm:$0xff]
    %v3790 = vld [vmem:[#allocation6 + $0x88] sm:$0xff]
    %v3791 = vld [vmem:[#allocation6 + $0x90] sm:$0xff]
    %v3792 = vld [vmem:[#allocation6 + $0x98] sm:$0xff]
    %v3793 = vld [vmem:[#allocation6 + $0xa0] sm:$0xff]
    %v3794 = vld [vmem:[#allocation6 + $0xa8] sm:$0xff]
    %v3795 = vld [vmem:[#allocation6 + $0xb0] sm:$0xff]
    %v3796 = vld [vmem:[#allocation6 + $0xb8] sm:$0xff]
    %v3797 = vld [vmem:[#allocation6 + $0xc0] sm:$0xff]
    %v3798 = vld [vmem:[#allocation6 + $0xc8] sm:$0xff]
    %v3799 = vld [vmem:[#allocation6 + $0xd0] sm:$0xff]
    %v3800 = vld [vmem:[#allocation6 + $0xd8] sm:$0xff]
    %v3801 = vld [vmem:[#allocation6 + $0xe0] sm:$0xff]
    %v3802 = vld [vmem:[#allocation6 + $0xe8] sm:$0xff]
    %v3803 = vld [vmem:[#allocation6 + $0xf0] sm:$0xff]
    %v3804 = vld [vmem:[#allocation6 + $0xf8] sm:$0xff]
    %v3805 = vld [vmem:[#allocation6 + $0x100] sm:$0xff]
    %v3806 = vld [vmem:[#allocation6 + $0x108] sm:$0xff]
    %v3807 = vld [vmem:[#allocation6 + $0x110] sm:$0xff]
    %v3808 = vld [vmem:[#allocation6 + $0x118] sm:$0xff]
    %v3809 = vld [vmem:[#allocation6 + $0x120] sm:$0xff]
    %v3810 = vld [vmem:[#allocation6 + $0x128] sm:$0xff]
    %v3811 = vld [vmem:[#allocation6 + $0x130] sm:$0xff]
    %v3812 = vld [vmem:[#allocation6 + $0x138] sm:$0xff]
    %v3813 = vld [vmem:[#allocation6 + $0x140] sm:$0xff]
    %v3814 = vld [vmem:[#allocation6 + $0x148] sm:$0xff]
    %v3815 = vld [vmem:[#allocation6 + $0x150] sm:$0xff]
    %v3816 = vld [vmem:[#allocation6 + $0x158] sm:$0xff]
    %v3817 = vld [vmem:[#allocation6 + $0x160] sm:$0xff]
    %v3818 = vld [vmem:[#allocation6 + $0x168] sm:$0xff]
    %v3819 = vld [vmem:[#allocation6 + $0x170] sm:$0xff]
    %v3820 = vld [vmem:[#allocation6 + $0x178] sm:$0xff]
    %v3821 = vld [vmem:[#allocation6 + $0x180] sm:$0xff]
    %v3822 = vld [vmem:[#allocation6 + $0x188] sm:$0xff]
    %v3823 = vld [vmem:[#allocation6 + $0x190] sm:$0xff]
    %v3824 = vld [vmem:[#allocation6 + $0x198] sm:$0xff]
    %v3825 = vld [vmem:[#allocation6 + $0x1a0] sm:$0xff]
    %v3826 = vld [vmem:[#allocation6 + $0x1a8] sm:$0xff]
    %v3827 = vld [vmem:[#allocation6 + $0x1b0] sm:$0xff]
    %v3828 = vld [vmem:[#allocation6 + $0x1b8] sm:$0xff]
    %v3829 = vld [vmem:[#allocation6 + $0x1c0] sm:$0xff]
    %v3830 = vld [vmem:[#allocation6 + $0x1c8] sm:$0xff]
    %v3831 = vld [vmem:[#allocation6 + $0x1d0] sm:$0xff]
    %v3832 = vld [vmem:[#allocation6 + $0x1d8] sm:$0xff]
    %v3833 = vld [vmem:[#allocation6 + $0x1e0] sm:$0xff]
    %v3834 = vld [vmem:[#allocation6 + $0x1e8] sm:$0xff]
    %v3835 = vld [vmem:[#allocation6 + $0x1f0] sm:$0xff]
    %v3836 = vld [vmem:[#allocation6 + $0x1f8] sm:$0xff]
    %3837 = vmatpush.msra.mxu0 %v3833
    %3838 = vmatpush.msra.mxu0 %v3829
    %3839 = vmatpush.msra.mxu0 %v3825
    %3840 = vmatpush.msra.mxu0 %v3821
    %3841 = vmatpush.msra.mxu0 %v3817
    %3842 = vmatpush.msra.mxu0 %v3813
    %3843 = vmatpush.msra.mxu0 %v3809
    %3844 = vmatpush.msra.mxu0 %v3805
    %3845 = vmatpush.msra.mxu0 %v3801
    %3846 = vmatpush.msra.mxu0 %v3797
    %3847 = vmatpush.msra.mxu0 %v3793
    %3848 = vmatpush.msra.mxu0 %v3789
    %3849 = vmatpush.msra.mxu0 %v3785
    %3850 = vmatpush.msra.mxu0 %v3781
    %3851 = vmatpush.msra.mxu0 %v3777
    %3852 = vmatpush.msra.mxu0 %v3773
    %3853 = vmatmul.f32.gmra.mxu0 %v3398
    %v3854 = vpop.f32.mrf.mxu0
    %v3855 = vadd.f32 0.0, %v3854
    %3856 = vdwg.mxu0
    %3857 = vmatpush.msra.mxu0 %v3834
    %3858 = vmatpush.msra.mxu0 %v3830
    %3859 = vmatpush.msra.mxu0 %v3826
    %3860 = vmatpush.msra.mxu0 %v3822
    %3861 = vmatpush.msra.mxu0 %v3818
    %3862 = vmatpush.msra.mxu0 %v3814
    %3863 = vmatpush.msra.mxu0 %v3810
    %3864 = vmatpush.msra.mxu0 %v3806
    %3865 = vmatpush.msra.mxu0 %v3802
    %3866 = vmatpush.msra.mxu0 %v3798
    %3867 = vmatpush.msra.mxu0 %v3794
    %3868 = vmatpush.msra.mxu0 %v3790
    %3869 = vmatpush.msra.mxu0 %v3786
    %3870 = vmatpush.msra.mxu0 %v3782
    %3871 = vmatpush.msra.mxu0 %v3778
    %3872 = vmatpush.msra.mxu0 %v3774
    %3873 = vmatmul.f32.gmra.mxu0 %v3398
    %v3874 = vpop.f32.mrf.mxu0
    %v3875 = vadd.f32 0.0, %v3874
    %3876 = vdwg.mxu0
    %3877 = vmatpush.msra.mxu0 %v3835
    %3878 = vmatpush.msra.mxu0 %v3831
    %3879 = vmatpush.msra.mxu0 %v3827
    %3880 = vmatpush.msra.mxu0 %v3823
    %3881 = vmatpush.msra.mxu0 %v3819
    %3882 = vmatpush.msra.mxu0 %v3815
    %3883 = vmatpush.msra.mxu0 %v3811
    %3884 = vmatpush.msra.mxu0 %v3807
    %3885 = vmatpush.msra.mxu0 %v3803
    %3886 = vmatpush.msra.mxu0 %v3799
    %3887 = vmatpush.msra.mxu0 %v3795
    %3888 = vmatpush.msra.mxu0 %v3791
    %3889 = vmatpush.msra.mxu0 %v3787
    %3890 = vmatpush.msra.mxu0 %v3783
    %3891 = vmatpush.msra.mxu0 %v3779
    %3892 = vmatpush.msra.mxu0 %v3775
    %3893 = vmatmul.f32.gmra.mxu0 %v3398
    %v3894 = vpop.f32.mrf.mxu0
    %v3895 = vadd.f32 0.0, %v3894
    %3896 = vdwg.mxu0
    %3897 = vmatpush.msra.mxu0 %v3836
    %3898 = vmatpush.msra.mxu0 %v3832
    %3899 = vmatpush.msra.mxu0 %v3828
    %3900 = vmatpush.msra.mxu0 %v3824
    %3901 = vmatpush.msra.mxu0 %v3820
    %3902 = vmatpush.msra.mxu0 %v3816
    %3903 = vmatpush.msra.mxu0 %v3812
    %3904 = vmatpush.msra.mxu0 %v3808
    %3905 = vmatpush.msra.mxu0 %v3804
    %3906 = vmatpush.msra.mxu0 %v3800
    %3907 = vmatpush.msra.mxu0 %v3796
    %3908 = vmatpush.msra.mxu0 %v3792
    %3909 = vmatpush.msra.mxu0 %v3788
    %3910 = vmatpush.msra.mxu0 %v3784
    %3911 = vmatpush.msra.mxu0 %v3780
    %3912 = vmatpush.msra.mxu0 %v3776
    %3913 = vmatmul.f32.gmra.mxu0 %v3398
    %v3914 = vpop.f32.mrf.mxu0
    %v3915 = vadd.f32 0.0, %v3914
    %3916 = vdwg.mxu0
    %v3918 = vrot.slane %v3708, 5
    %3920 = vmatpush.msra.mxu0 %v3769
    %3921 = vmatpush.msra.mxu0 %v3765
    %3922 = vmatpush.msra.mxu0 %v3761
    %3923 = vmatpush.msra.mxu0 %v3757
    %3924 = vmatpush.msra.mxu0 %v3753
    %3925 = vmatpush.msra.mxu0 %v3749
    %3926 = vmatpush.msra.mxu0 %v3745
    %3927 = vmatpush.msra.mxu0 %v3741
    %3928 = vmatpush.msra.mxu0 %v3737
    %3929 = vmatpush.msra.mxu0 %v3733
    %3930 = vmatpush.msra.mxu0 %v3729
    %3931 = vmatpush.msra.mxu0 %v3725
    %3932 = vmatpush.msra.mxu0 %v3721
    %3933 = vmatpush.msra.mxu0 %v3717
    %3934 = vmatpush.msra.mxu0 %v3713
    %3935 = vmatpush.msra.mxu0 %v3709
    %3936 = vmatmul.f32.gmra.mxu0 %v3918
    %v3937 = vpop.f32.mrf.mxu0
    %v3938 = vadd.f32 %v3855, %v3937
    %3939 = vdwg.mxu0
    %3940 = vmatpush.msra.mxu0 %v3770
    %3941 = vmatpush.msra.mxu0 %v3766
    %3942 = vmatpush.msra.mxu0 %v3762
    %3943 = vmatpush.msra.mxu0 %v3758
    %3944 = vmatpush.msra.mxu0 %v3754
    %3945 = vmatpush.msra.mxu0 %v3750
    %3946 = vmatpush.msra.mxu0 %v3746
    %3947 = vmatpush.msra.mxu0 %v3742
    %3948 = vmatpush.msra.mxu0 %v3738
    %3949 = vmatpush.msra.mxu0 %v3734
    %3950 = vmatpush.msra.mxu0 %v3730
    %3951 = vmatpush.msra.mxu0 %v3726
    %3952 = vmatpush.msra.mxu0 %v3722
    %3953 = vmatpush.msra.mxu0 %v3718
    %3954 = vmatpush.msra.mxu0 %v3714
    %3955 = vmatpush.msra.mxu0 %v3710
    %3956 = vmatmul.f32.gmra.mxu0 %v3918
    %v3957 = vpop.f32.mrf.mxu0
    %v3958 = vadd.f32 %v3875, %v3957
    %3959 = vdwg.mxu0
    %3960 = vmatpush.msra.mxu0 %v3771
    %3961 = vmatpush.msra.mxu0 %v3767
    %3962 = vmatpush.msra.mxu0 %v3763
    %3963 = vmatpush.msra.mxu0 %v3759
    %3964 = vmatpush.msra.mxu0 %v3755
    %3965 = vmatpush.msra.mxu0 %v3751
    %3966 = vmatpush.msra.mxu0 %v3747
    %3967 = vmatpush.msra.mxu0 %v3743
    %3968 = vmatpush.msra.mxu0 %v3739
    %3969 = vmatpush.msra.mxu0 %v3735
    %3970 = vmatpush.msra.mxu0 %v3731
    %3971 = vmatpush.msra.mxu0 %v3727
    %3972 = vmatpush.msra.mxu0 %v3723
    %3973 = vmatpush.msra.mxu0 %v3719
    %3974 = vmatpush.msra.mxu0 %v3715
    %3975 = vmatpush.msra.mxu0 %v3711
    %3976 = vmatmul.f32.gmra.mxu0 %v3918
    %v3977 = vpop.f32.mrf.mxu0
    %v3978 = vadd.f32 %v3895, %v3977
    %3979 = vdwg.mxu0
    %3980 = vmatpush.msra.mxu0 %v3772
    %3981 = vmatpush.msra.mxu0 %v3768
    %3982 = vmatpush.msra.mxu0 %v3764
    %3983 = vmatpush.msra.mxu0 %v3760
    %3984 = vmatpush.msra.mxu0 %v3756
    %3985 = vmatpush.msra.mxu0 %v3752
    %3986 = vmatpush.msra.mxu0 %v3748
    %3987 = vmatpush.msra.mxu0 %v3744
    %3988 = vmatpush.msra.mxu0 %v3740
    %3989 = vmatpush.msra.mxu0 %v3736
    %3990 = vmatpush.msra.mxu0 %v3732
    %3991 = vmatpush.msra.mxu0 %v3728
    %3992 = vmatpush.msra.mxu0 %v3724
    %3993 = vmatpush.msra.mxu0 %v3720
    %3994 = vmatpush.msra.mxu0 %v3716
    %3995 = vmatpush.msra.mxu0 %v3712
    %3996 = vmatmul.f32.gmra.mxu0 %v3918
    %v3997 = vpop.f32.mrf.mxu0
    %v3998 = vadd.f32 %v3915, %v3997
    %3999 = vdwg.mxu0
    %v4000 = vadd.f32 %v3938, %v649
    %v4001 = vadd.f32 %v3958, %v650
    %v4002 = vadd.f32 %v3978, %v651
    %v4003 = vadd.f32 %v3998, %v652
    %v4004 = vxor.u32 %v4000, 2147483648
    %v4005 = vmul.f32 %v4004, 1.442695
    %v4006 = vpow.pop %v4005
    %v4007 = vadd.f32 %v4006, 1.0
    %v4008 = vrcp.pop %v4007
    %v4009 = vmul.f32 %v4007, %v4008
    %v4010 = vsub.f32 1.0, %v4009
    %v4011 = vmul.f32 %v4008, %v4010
    %v4012 = vadd.f32 %v4008, %v4011
    %vm4013 = vweird.f32 %v4007
    %vm4014 = vweird.f32 %v4008
    %vm4015 = vmor %vm4013, %vm4014
    %v4016 = vsel %vm4015, %v4008, %v4012
    %v4017 = vand.u32 2147483647, %v4007
    %vm4018 = vcmp.eq.f32.partialorder %v4017, 8.507059e+37
    %v4019 = vand.u32 %v4007, 2147483648
    %v4020 = vor.u32 1.1754944e-38, %v4019
    %v4021 = vsel %vm4018, %v4020, %v4016
    %v4022 = vmul.f32 1.0, %v4021
    %v4023 = vxor.u32 %v4001, 2147483648
    %v4024 = vmul.f32 %v4023, 1.442695
    %v4025 = vpow.pop %v4024
    %v4026 = vadd.f32 %v4025, 1.0
    %v4027 = vrcp.pop %v4026
    %v4028 = vmul.f32 %v4026, %v4027
    %v4029 = vsub.f32 1.0, %v4028
    %v4030 = vmul.f32 %v4027, %v4029
    %v4031 = vadd.f32 %v4027, %v4030
    %vm4032 = vweird.f32 %v4026
    %vm4033 = vweird.f32 %v4027
    %vm4034 = vmor %vm4032, %vm4033
    %v4035 = vsel %vm4034, %v4027, %v4031
    %v4036 = vand.u32 2147483647, %v4026
    %vm4037 = vcmp.eq.f32.partialorder %v4036, 8.507059e+37
    %v4038 = vand.u32 %v4026, 2147483648
    %v4039 = vor.u32 1.1754944e-38, %v4038
    %v4040 = vsel %vm4037, %v4039, %v4035
    %v4041 = vmul.f32 1.0, %v4040
    %v4042 = vtanh.pop %v4002
    %v4043 = vxor.u32 %v4003, 2147483648
    %v4044 = vmul.f32 %v4043, 1.442695
    %v4045 = vpow.pop %v4044
    %v4046 = vadd.f32 %v4045, 1.0
    %v4047 = vrcp.pop %v4046
    %v4048 = vmul.f32 %v4046, %v4047
    %v4049 = vsub.f32 1.0, %v4048
    %v4050 = vmul.f32 %v4047, %v4049
    %v4051 = vadd.f32 %v4047, %v4050
    %vm4052 = vweird.f32 %v4046
    %vm4053 = vweird.f32 %v4047
    %vm4054 = vmor %vm4052, %vm4053
    %v4055 = vsel %vm4054, %v4047, %v4051
    %v4056 = vand.u32 2147483647, %v4046
    %vm4057 = vcmp.eq.f32.partialorder %v4056, 8.507059e+37
    %v4058 = vand.u32 %v4046, 2147483648
    %v4059 = vor.u32 1.1754944e-38, %v4058
    %v4060 = vsel %vm4057, %v4059, %v4055
    %v4061 = vmul.f32 1.0, %v4060
    %v4062 = vmul.f32 %v4041, %v3396
    %v4063 = vmul.f32 %v4022, %v4042
    %v4064 = vadd.f32 %v4062, %v4063
    %v4065 = vtanh.pop %v4064
    %v4066 = vmul.f32 %v4061, %v4065
    %v4067 = vld [vmem:[#allocation7] sm:$0xff]
    %v4068 = vld [vmem:[#allocation7 + $0x8] sm:$0xff]
    %v4069 = vld [vmem:[#allocation7 + $0x10] sm:$0xff]
    %v4070 = vld [vmem:[#allocation7 + $0x18] sm:$0xff]
    %v4071 = vld [vmem:[#allocation7 + $0x20] sm:$0xff]
    %v4072 = vld [vmem:[#allocation7 + $0x28] sm:$0xff]
    %v4073 = vld [vmem:[#allocation7 + $0x30] sm:$0xff]
    %v4074 = vld [vmem:[#allocation7 + $0x38] sm:$0xff]
    %v4075 = vld [vmem:[#allocation7 + $0x40] sm:$0xff]
    %v4076 = vld [vmem:[#allocation7 + $0x48] sm:$0xff]
    %v4077 = vld [vmem:[#allocation7 + $0x50] sm:$0xff]
    %v4078 = vld [vmem:[#allocation7 + $0x58] sm:$0xff]
    %v4079 = vld [vmem:[#allocation7 + $0x60] sm:$0xff]
    %v4080 = vld [vmem:[#allocation7 + $0x68] sm:$0xff]
    %v4081 = vld [vmem:[#allocation7 + $0x70] sm:$0xff]
    %v4082 = vld [vmem:[#allocation7 + $0x78] sm:$0xff]
    %4083 = vset.pattern.permute.xlu0 3
    %4084 = vperm.xlu0 %4083, %v3477
    %v4085 = vpop.permute.xlu0 %4084
    %v4087 = vmul.f32 %v4085, %v147
    %4088 = vmatpush.msra.mxu0 %v4082
    %4089 = vmatpush.msra.mxu0 %v4081
    %4090 = vmatpush.msra.mxu0 %v4080
    %4091 = vmatpush.msra.mxu0 %v4079
    %4092 = vmatpush.msra.mxu0 %v4078
    %4093 = vmatpush.msra.mxu0 %v4077
    %4094 = vmatpush.msra.mxu0 %v4076
    %4095 = vmatpush.msra.mxu0 %v4075
    %4096 = vmatpush.msra.mxu0 %v4074
    %4097 = vmatpush.msra.mxu0 %v4073
    %4098 = vmatpush.msra.mxu0 %v4072
    %4099 = vmatpush.msra.mxu0 %v4071
    %4100 = vmatpush.msra.mxu0 %v4070
    %4101 = vmatpush.msra.mxu0 %v4069
    %4102 = vmatpush.msra.mxu0 %v4068
    %4103 = vmatpush.msra.mxu0 %v4067
    %4104 = vmatmul.f32.gmra.mxu0 %v4066
    %v4105 = vpop.f32.mrf.mxu0
    %v4106 = vadd.f32 %v4087, %v4105
    %4107 = vdwg.mxu0
    %v4108 = vadd.f32 %v4106, %v148
    %v4109 = vxor.u32 %v4108, 2147483648
    %v4110 = vmul.f32 %v4109, 1.442695
    %v4111 = vpow.pop %v4110
    %v4112 = vadd.f32 %v4111, 1.0
    %v4113 = vrcp.pop %v4112
    %v4114 = vmul.f32 %v4112, %v4113
    %v4115 = vsub.f32 1.0, %v4114
    %v4116 = vmul.f32 %v4113, %v4115
    %v4117 = vadd.f32 %v4113, %v4116
    %vm4118 = vweird.f32 %v4112
    %vm4119 = vweird.f32 %v4113
    %vm4120 = vmor %vm4118, %vm4119
    %v4121 = vsel %vm4120, %v4113, %v4117
    %v4122 = vand.u32 2147483647, %v4112
    %vm4123 = vcmp.eq.f32.partialorder %v4122, 8.507059e+37
    %v4124 = vand.u32 %v4112, 2147483648
    %v4125 = vor.u32 1.1754944e-38, %v4124
    %v4126 = vsel %vm4123, %v4125, %v4121
    %v4127 = vmul.f32 1.0, %v4126
    %v4128 = vtanh.pop %v4108
    %v4129 = vmul.f32 %v4127, %v3471
    %4131 = vrot.lane.b32.xlu0 %v4128, 126
    %v4132 = vpop.permute.xlu0 %4131
    %v4134 = vmul.f32 %v4127, %v4132
    %4136 = vrot.lane.b32.xlu0 %v4134, 1
    %v4137 = vpop.permute.xlu0 %4136
    %v4139 = vadd.f32 %v4129, %v4137
    %v4140 = vtanh.pop %v4139
    %4142 = vrot.lane.b32.xlu0 %v4140, 2
    %v4143 = vpop.permute.xlu0 %4142
    %v4145 = vmul.f32 %v4127, %v4143
    %4147 = vrot.lane.b32.xlu0 %v4145, 125
    %v4148 = vpop.permute.xlu0 %4147
    %4150 = vst.msk [vmem:[%s13 + $0x5] sm:$0x1] %vm809, %v4148
    %v4151 = vld [vmem:[#allocation2] sm:$0xff]
    %v4152 = vld [vmem:[#allocation2 + $0x8] sm:$0xff]
    %v4153 = vld [vmem:[#allocation2 + $0x10] sm:$0xff]
    %v4154 = vld [vmem:[#allocation2 + $0x18] sm:$0xff]
    %v4155 = vld [vmem:[#allocation2 + $0x20] sm:$0xff]
    %v4156 = vld [vmem:[#allocation2 + $0x28] sm:$0xff]
    %v4157 = vld [vmem:[#allocation2 + $0x30] sm:$0xff]
    %v4158 = vld [vmem:[#allocation2 + $0x38] sm:$0xff]
    %v4159 = vld [vmem:[#allocation2 + $0x40] sm:$0xff]
    %v4160 = vld [vmem:[#allocation2 + $0x48] sm:$0xff]
    %v4161 = vld [vmem:[#allocation2 + $0x50] sm:$0xff]
    %v4162 = vld [vmem:[#allocation2 + $0x58] sm:$0xff]
    %v4163 = vld [vmem:[#allocation2 + $0x60] sm:$0xff]
    %v4164 = vld [vmem:[#allocation2 + $0x68] sm:$0xff]
    %v4165 = vld [vmem:[#allocation2 + $0x70] sm:$0xff]
    %v4166 = vld [vmem:[#allocation2 + $0x78] sm:$0xff]
    %v4167 = vld [vmem:[#allocation2 + $0x80] sm:$0xff]
    %v4168 = vld [vmem:[#allocation2 + $0x88] sm:$0xff]
    %v4169 = vld [vmem:[#allocation2 + $0x90] sm:$0xff]
    %v4170 = vld [vmem:[#allocation2 + $0x98] sm:$0xff]
    %v4171 = vld [vmem:[#allocation2 + $0xa0] sm:$0xff]
    %v4172 = vld [vmem:[#allocation2 + $0xa8] sm:$0xff]
    %v4173 = vld [vmem:[#allocation2 + $0xb0] sm:$0xff]
    %v4174 = vld [vmem:[#allocation2 + $0xb8] sm:$0xff]
    %v4175 = vld [vmem:[#allocation2 + $0xc0] sm:$0xff]
    %v4176 = vld [vmem:[#allocation2 + $0xc8] sm:$0xff]
    %v4177 = vld [vmem:[#allocation2 + $0xd0] sm:$0xff]
    %v4178 = vld [vmem:[#allocation2 + $0xd8] sm:$0xff]
    %v4179 = vld [vmem:[#allocation2 + $0xe0] sm:$0xff]
    %v4180 = vld [vmem:[#allocation2 + $0xe8] sm:$0xff]
    %v4181 = vld [vmem:[#allocation2 + $0xf0] sm:$0xff]
    %v4182 = vld [vmem:[#allocation2 + $0xf8] sm:$0xff]
    %v4183 = vld [vmem:[#allocation2 + $0x100] sm:$0xff]
    %v4184 = vld [vmem:[#allocation2 + $0x108] sm:$0xff]
    %v4185 = vld [vmem:[#allocation2 + $0x110] sm:$0xff]
    %v4186 = vld [vmem:[#allocation2 + $0x118] sm:$0xff]
    %v4187 = vld [vmem:[#allocation2 + $0x120] sm:$0xff]
    %v4188 = vld [vmem:[#allocation2 + $0x128] sm:$0xff]
    %v4189 = vld [vmem:[#allocation2 + $0x130] sm:$0xff]
    %v4190 = vld [vmem:[#allocation2 + $0x138] sm:$0xff]
    %v4191 = vld [vmem:[#allocation2 + $0x140] sm:$0xff]
    %v4192 = vld [vmem:[#allocation2 + $0x148] sm:$0xff]
    %v4193 = vld [vmem:[#allocation2 + $0x150] sm:$0xff]
    %v4194 = vld [vmem:[#allocation2 + $0x158] sm:$0xff]
    %v4195 = vld [vmem:[#allocation2 + $0x160] sm:$0xff]
    %v4196 = vld [vmem:[#allocation2 + $0x168] sm:$0xff]
    %v4197 = vld [vmem:[#allocation2 + $0x170] sm:$0xff]
    %v4198 = vld [vmem:[#allocation2 + $0x178] sm:$0xff]
    %v4199 = vld [vmem:[#allocation2 + $0x180] sm:$0xff]
    %v4200 = vld [vmem:[#allocation2 + $0x188] sm:$0xff]
    %v4201 = vld [vmem:[#allocation2 + $0x190] sm:$0xff]
    %v4202 = vld [vmem:[#allocation2 + $0x198] sm:$0xff]
    %v4203 = vld [vmem:[#allocation2 + $0x1a0] sm:$0xff]
    %v4204 = vld [vmem:[#allocation2 + $0x1a8] sm:$0xff]
    %v4205 = vld [vmem:[#allocation2 + $0x1b0] sm:$0xff]
    %v4206 = vld [vmem:[#allocation2 + $0x1b8] sm:$0xff]
    %v4207 = vld [vmem:[#allocation2 + $0x1c0] sm:$0xff]
    %v4208 = vld [vmem:[#allocation2 + $0x1c8] sm:$0xff]
    %v4209 = vld [vmem:[#allocation2 + $0x1d0] sm:$0xff]
    %v4210 = vld [vmem:[#allocation2 + $0x1d8] sm:$0xff]
    %v4211 = vld [vmem:[#allocation2 + $0x1e0] sm:$0xff]
    %v4212 = vld [vmem:[#allocation2 + $0x1e8] sm:$0xff]
    %v4213 = vld [vmem:[#allocation2 + $0x1f0] sm:$0xff]
    %v4214 = vld [vmem:[#allocation2 + $0x1f8] sm:$0xff]
    %4215 = vmatpush.msra.mxu0 %v4211
    %4216 = vmatpush.msra.mxu0 %v4207
    %4217 = vmatpush.msra.mxu0 %v4203
    %4218 = vmatpush.msra.mxu0 %v4199
    %4219 = vmatpush.msra.mxu0 %v4195
    %4220 = vmatpush.msra.mxu0 %v4191
    %4221 = vmatpush.msra.mxu0 %v4187
    %4222 = vmatpush.msra.mxu0 %v4183
    %4223 = vmatpush.msra.mxu0 %v4179
    %4224 = vmatpush.msra.mxu0 %v4175
    %4225 = vmatpush.msra.mxu0 %v4171
    %4226 = vmatpush.msra.mxu0 %v4167
    %4227 = vmatpush.msra.mxu0 %v4163
    %4228 = vmatpush.msra.mxu0 %v4159
    %4229 = vmatpush.msra.mxu0 %v4155
    %4230 = vmatpush.msra.mxu0 %v4151
    %4231 = vmatmul.f32.gmra.mxu0 %v3918
    %v4232 = vpop.f32.mrf.mxu0
    %v4233 = vadd.f32 0.0, %v4232
    %4234 = vdwg.mxu0
    %4235 = vmatpush.msra.mxu0 %v4212
    %4236 = vmatpush.msra.mxu0 %v4208
    %4237 = vmatpush.msra.mxu0 %v4204
    %4238 = vmatpush.msra.mxu0 %v4200
    %4239 = vmatpush.msra.mxu0 %v4196
    %4240 = vmatpush.msra.mxu0 %v4192
    %4241 = vmatpush.msra.mxu0 %v4188
    %4242 = vmatpush.msra.mxu0 %v4184
    %4243 = vmatpush.msra.mxu0 %v4180
    %4244 = vmatpush.msra.mxu0 %v4176
    %4245 = vmatpush.msra.mxu0 %v4172
    %4246 = vmatpush.msra.mxu0 %v4168
    %4247 = vmatpush.msra.mxu0 %v4164
    %4248 = vmatpush.msra.mxu0 %v4160
    %4249 = vmatpush.msra.mxu0 %v4156
    %4250 = vmatpush.msra.mxu0 %v4152
    %4251 = vmatmul.f32.gmra.mxu0 %v3918
    %v4252 = vpop.f32.mrf.mxu0
    %v4253 = vadd.f32 0.0, %v4252
    %4254 = vdwg.mxu0
    %4255 = vmatpush.msra.mxu0 %v4213
    %4256 = vmatpush.msra.mxu0 %v4209
    %4257 = vmatpush.msra.mxu0 %v4205
    %4258 = vmatpush.msra.mxu0 %v4201
    %4259 = vmatpush.msra.mxu0 %v4197
    %4260 = vmatpush.msra.mxu0 %v4193
    %4261 = vmatpush.msra.mxu0 %v4189
    %4262 = vmatpush.msra.mxu0 %v4185
    %4263 = vmatpush.msra.mxu0 %v4181
    %4264 = vmatpush.msra.mxu0 %v4177
    %4265 = vmatpush.msra.mxu0 %v4173
    %4266 = vmatpush.msra.mxu0 %v4169
    %4267 = vmatpush.msra.mxu0 %v4165
    %4268 = vmatpush.msra.mxu0 %v4161
    %4269 = vmatpush.msra.mxu0 %v4157
    %4270 = vmatpush.msra.mxu0 %v4153
    %4271 = vmatmul.f32.gmra.mxu0 %v3918
    %v4272 = vpop.f32.mrf.mxu0
    %v4273 = vadd.f32 0.0, %v4272
    %4274 = vdwg.mxu0
    %4275 = vmatpush.msra.mxu0 %v4214
    %4276 = vmatpush.msra.mxu0 %v4210
    %4277 = vmatpush.msra.mxu0 %v4206
    %4278 = vmatpush.msra.mxu0 %v4202
    %4279 = vmatpush.msra.mxu0 %v4198
    %4280 = vmatpush.msra.mxu0 %v4194
    %4281 = vmatpush.msra.mxu0 %v4190
    %4282 = vmatpush.msra.mxu0 %v4186
    %4283 = vmatpush.msra.mxu0 %v4182
    %4284 = vmatpush.msra.mxu0 %v4178
    %4285 = vmatpush.msra.mxu0 %v4174
    %4286 = vmatpush.msra.mxu0 %v4170
    %4287 = vmatpush.msra.mxu0 %v4166
    %4288 = vmatpush.msra.mxu0 %v4162
    %4289 = vmatpush.msra.mxu0 %v4158
    %4290 = vmatpush.msra.mxu0 %v4154
    %4291 = vmatmul.f32.gmra.mxu0 %v3918
    %v4292 = vpop.f32.mrf.mxu0
    %v4293 = vadd.f32 0.0, %v4292
    %4294 = vdwg.mxu0
    %v4299 = vrot.slane %v4233, 2
    %v4300 = vrot.slane %v4253, 2
    %v4301 = vrot.slane %v4273, 2
    %v4302 = vrot.slane %v4293, 2
    %v4307 = vadd.f32 %v137, %v4299
    %v4308 = vadd.f32 %v138, %v4300
    %v4309 = vadd.f32 %v139, %v4301
    %v4310 = vadd.f32 %v140, %v4302
    %v4311 = vxor.u32 %v4307, 2147483648
    %v4312 = vmul.f32 %v4311, 1.442695
    %v4313 = vpow.pop %v4312
    %v4314 = vadd.f32 %v4313, 1.0
    %v4315 = vrcp.pop %v4314
    %v4316 = vmul.f32 %v4314, %v4315
    %v4317 = vsub.f32 1.0, %v4316
    %v4318 = vmul.f32 %v4315, %v4317
    %v4319 = vadd.f32 %v4315, %v4318
    %vm4320 = vweird.f32 %v4314
    %vm4321 = vweird.f32 %v4315
    %vm4322 = vmor %vm4320, %vm4321
    %v4323 = vsel %vm4322, %v4315, %v4319
    %v4324 = vand.u32 2147483647, %v4314
    %vm4325 = vcmp.eq.f32.partialorder %v4324, 8.507059e+37
    %v4326 = vand.u32 %v4314, 2147483648
    %v4327 = vor.u32 1.1754944e-38, %v4326
    %v4328 = vsel %vm4325, %v4327, %v4323
    %v4329 = vmul.f32 1.0, %v4328
    %v4330 = vxor.u32 %v4308, 2147483648
    %v4331 = vmul.f32 %v4330, 1.442695
    %v4332 = vpow.pop %v4331
    %v4333 = vadd.f32 %v4332, 1.0
    %v4334 = vrcp.pop %v4333
    %v4335 = vmul.f32 %v4333, %v4334
    %v4336 = vsub.f32 1.0, %v4335
    %v4337 = vmul.f32 %v4334, %v4336
    %v4338 = vadd.f32 %v4334, %v4337
    %vm4339 = vweird.f32 %v4333
    %vm4340 = vweird.f32 %v4334
    %vm4341 = vmor %vm4339, %vm4340
    %v4342 = vsel %vm4341, %v4334, %v4338
    %v4343 = vand.u32 2147483647, %v4333
    %vm4344 = vcmp.eq.f32.partialorder %v4343, 8.507059e+37
    %v4345 = vand.u32 %v4333, 2147483648
    %v4346 = vor.u32 1.1754944e-38, %v4345
    %v4347 = vsel %vm4344, %v4346, %v4342
    %v4348 = vmul.f32 1.0, %v4347
    %v4349 = vtanh.pop %v4309
    %v4350 = vxor.u32 %v4310, 2147483648
    %v4351 = vmul.f32 %v4350, 1.442695
    %v4352 = vpow.pop %v4351
    %v4353 = vadd.f32 %v4352, 1.0
    %v4354 = vrcp.pop %v4353
    %v4355 = vmul.f32 %v4353, %v4354
    %v4356 = vsub.f32 1.0, %v4355
    %v4357 = vmul.f32 %v4354, %v4356
    %v4358 = vadd.f32 %v4354, %v4357
    %vm4359 = vweird.f32 %v4353
    %vm4360 = vweird.f32 %v4354
    %vm4361 = vmor %vm4359, %vm4360
    %v4362 = vsel %vm4361, %v4354, %v4358
    %v4363 = vand.u32 2147483647, %v4353
    %vm4364 = vcmp.eq.f32.partialorder %v4363, 8.507059e+37
    %v4365 = vand.u32 %v4353, 2147483648
    %v4366 = vor.u32 1.1754944e-38, %v4365
    %v4367 = vsel %vm4364, %v4366, %v4362
    %v4368 = vmul.f32 1.0, %v4367
    %v4370 = vrot.slane %v3706, 7
    %v4372 = vmul.f32 %v4348, %v4370
    %v4373 = vmul.f32 %v4329, %v4349
    %v4374 = vadd.f32 %v4372, %v4373
    %v4375 = vtanh.pop %v4374
    %v4376 = vmul.f32 %v4368, %v4375
    %v4377 = vld [vmem:[#allocation4] sm:$0xff]
    %v4378 = vld [vmem:[#allocation4 + $0x8] sm:$0xff]
    %v4379 = vld [vmem:[#allocation4 + $0x10] sm:$0xff]
    %v4380 = vld [vmem:[#allocation4 + $0x18] sm:$0xff]
    %v4381 = vld [vmem:[#allocation4 + $0x20] sm:$0xff]
    %v4382 = vld [vmem:[#allocation4 + $0x28] sm:$0xff]
    %v4383 = vld [vmem:[#allocation4 + $0x30] sm:$0xff]
    %v4384 = vld [vmem:[#allocation4 + $0x38] sm:$0xff]
    %v4385 = vld [vmem:[#allocation4 + $0x40] sm:$0xff]
    %v4386 = vld [vmem:[#allocation4 + $0x48] sm:$0xff]
    %v4387 = vld [vmem:[#allocation4 + $0x50] sm:$0xff]
    %v4388 = vld [vmem:[#allocation4 + $0x58] sm:$0xff]
    %v4389 = vld [vmem:[#allocation4 + $0x60] sm:$0xff]
    %v4390 = vld [vmem:[#allocation4 + $0x68] sm:$0xff]
    %v4391 = vld [vmem:[#allocation4 + $0x70] sm:$0xff]
    %v4392 = vld [vmem:[#allocation4 + $0x78] sm:$0xff]
    %v4393 = vld [vmem:[#allocation4 + $0x80] sm:$0xff]
    %v4394 = vld [vmem:[#allocation4 + $0x88] sm:$0xff]
    %v4395 = vld [vmem:[#allocation4 + $0x90] sm:$0xff]
    %v4396 = vld [vmem:[#allocation4 + $0x98] sm:$0xff]
    %v4397 = vld [vmem:[#allocation4 + $0xa0] sm:$0xff]
    %v4398 = vld [vmem:[#allocation4 + $0xa8] sm:$0xff]
    %v4399 = vld [vmem:[#allocation4 + $0xb0] sm:$0xff]
    %v4400 = vld [vmem:[#allocation4 + $0xb8] sm:$0xff]
    %v4401 = vld [vmem:[#allocation4 + $0xc0] sm:$0xff]
    %v4402 = vld [vmem:[#allocation4 + $0xc8] sm:$0xff]
    %v4403 = vld [vmem:[#allocation4 + $0xd0] sm:$0xff]
    %v4404 = vld [vmem:[#allocation4 + $0xd8] sm:$0xff]
    %v4405 = vld [vmem:[#allocation4 + $0xe0] sm:$0xff]
    %v4406 = vld [vmem:[#allocation4 + $0xe8] sm:$0xff]
    %v4407 = vld [vmem:[#allocation4 + $0xf0] sm:$0xff]
    %v4408 = vld [vmem:[#allocation4 + $0xf8] sm:$0xff]
    %v4409 = vld [vmem:[#allocation4 + $0x100] sm:$0xff]
    %v4410 = vld [vmem:[#allocation4 + $0x108] sm:$0xff]
    %v4411 = vld [vmem:[#allocation4 + $0x110] sm:$0xff]
    %v4412 = vld [vmem:[#allocation4 + $0x118] sm:$0xff]
    %v4413 = vld [vmem:[#allocation4 + $0x120] sm:$0xff]
    %v4414 = vld [vmem:[#allocation4 + $0x128] sm:$0xff]
    %v4415 = vld [vmem:[#allocation4 + $0x130] sm:$0xff]
    %v4416 = vld [vmem:[#allocation4 + $0x138] sm:$0xff]
    %v4417 = vld [vmem:[#allocation4 + $0x140] sm:$0xff]
    %v4418 = vld [vmem:[#allocation4 + $0x148] sm:$0xff]
    %v4419 = vld [vmem:[#allocation4 + $0x150] sm:$0xff]
    %v4420 = vld [vmem:[#allocation4 + $0x158] sm:$0xff]
    %v4421 = vld [vmem:[#allocation4 + $0x160] sm:$0xff]
    %v4422 = vld [vmem:[#allocation4 + $0x168] sm:$0xff]
    %v4423 = vld [vmem:[#allocation4 + $0x170] sm:$0xff]
    %v4424 = vld [vmem:[#allocation4 + $0x178] sm:$0xff]
    %v4425 = vld [vmem:[#allocation4 + $0x180] sm:$0xff]
    %v4426 = vld [vmem:[#allocation4 + $0x188] sm:$0xff]
    %v4427 = vld [vmem:[#allocation4 + $0x190] sm:$0xff]
    %v4428 = vld [vmem:[#allocation4 + $0x198] sm:$0xff]
    %v4429 = vld [vmem:[#allocation4 + $0x1a0] sm:$0xff]
    %v4430 = vld [vmem:[#allocation4 + $0x1a8] sm:$0xff]
    %v4431 = vld [vmem:[#allocation4 + $0x1b0] sm:$0xff]
    %v4432 = vld [vmem:[#allocation4 + $0x1b8] sm:$0xff]
    %v4433 = vld [vmem:[#allocation4 + $0x1c0] sm:$0xff]
    %v4434 = vld [vmem:[#allocation4 + $0x1c8] sm:$0xff]
    %v4435 = vld [vmem:[#allocation4 + $0x1d0] sm:$0xff]
    %v4436 = vld [vmem:[#allocation4 + $0x1d8] sm:$0xff]
    %v4437 = vld [vmem:[#allocation4 + $0x1e0] sm:$0xff]
    %v4438 = vld [vmem:[#allocation4 + $0x1e8] sm:$0xff]
    %v4439 = vld [vmem:[#allocation4 + $0x1f0] sm:$0xff]
    %v4440 = vld [vmem:[#allocation4 + $0x1f8] sm:$0xff]
    %v4441 = vld [vmem:[#allocation6] sm:$0xff]
    %v4442 = vld [vmem:[#allocation6 + $0x8] sm:$0xff]
    %v4443 = vld [vmem:[#allocation6 + $0x10] sm:$0xff]
    %v4444 = vld [vmem:[#allocation6 + $0x18] sm:$0xff]
    %v4445 = vld [vmem:[#allocation6 + $0x20] sm:$0xff]
    %v4446 = vld [vmem:[#allocation6 + $0x28] sm:$0xff]
    %v4447 = vld [vmem:[#allocation6 + $0x30] sm:$0xff]
    %v4448 = vld [vmem:[#allocation6 + $0x38] sm:$0xff]
    %v4449 = vld [vmem:[#allocation6 + $0x40] sm:$0xff]
    %v4450 = vld [vmem:[#allocation6 + $0x48] sm:$0xff]
    %v4451 = vld [vmem:[#allocation6 + $0x50] sm:$0xff]
    %v4452 = vld [vmem:[#allocation6 + $0x58] sm:$0xff]
    %v4453 = vld [vmem:[#allocation6 + $0x60] sm:$0xff]
    %v4454 = vld [vmem:[#allocation6 + $0x68] sm:$0xff]
    %v4455 = vld [vmem:[#allocation6 + $0x70] sm:$0xff]
    %v4456 = vld [vmem:[#allocation6 + $0x78] sm:$0xff]
    %v4457 = vld [vmem:[#allocation6 + $0x80] sm:$0xff]
    %v4458 = vld [vmem:[#allocation6 + $0x88] sm:$0xff]
    %v4459 = vld [vmem:[#allocation6 + $0x90] sm:$0xff]
    %v4460 = vld [vmem:[#allocation6 + $0x98] sm:$0xff]
    %v4461 = vld [vmem:[#allocation6 + $0xa0] sm:$0xff]
    %v4462 = vld [vmem:[#allocation6 + $0xa8] sm:$0xff]
    %v4463 = vld [vmem:[#allocation6 + $0xb0] sm:$0xff]
    %v4464 = vld [vmem:[#allocation6 + $0xb8] sm:$0xff]
    %v4465 = vld [vmem:[#allocation6 + $0xc0] sm:$0xff]
    %v4466 = vld [vmem:[#allocation6 + $0xc8] sm:$0xff]
    %v4467 = vld [vmem:[#allocation6 + $0xd0] sm:$0xff]
    %v4468 = vld [vmem:[#allocation6 + $0xd8] sm:$0xff]
    %v4469 = vld [vmem:[#allocation6 + $0xe0] sm:$0xff]
    %v4470 = vld [vmem:[#allocation6 + $0xe8] sm:$0xff]
    %v4471 = vld [vmem:[#allocation6 + $0xf0] sm:$0xff]
    %v4472 = vld [vmem:[#allocation6 + $0xf8] sm:$0xff]
    %v4473 = vld [vmem:[#allocation6 + $0x100] sm:$0xff]
    %v4474 = vld [vmem:[#allocation6 + $0x108] sm:$0xff]
    %v4475 = vld [vmem:[#allocation6 + $0x110] sm:$0xff]
    %v4476 = vld [vmem:[#allocation6 + $0x118] sm:$0xff]
    %v4477 = vld [vmem:[#allocation6 + $0x120] sm:$0xff]
    %v4478 = vld [vmem:[#allocation6 + $0x128] sm:$0xff]
    %v4479 = vld [vmem:[#allocation6 + $0x130] sm:$0xff]
    %v4480 = vld [vmem:[#allocation6 + $0x138] sm:$0xff]
    %v4481 = vld [vmem:[#allocation6 + $0x140] sm:$0xff]
    %v4482 = vld [vmem:[#allocation6 + $0x148] sm:$0xff]
    %v4483 = vld [vmem:[#allocation6 + $0x150] sm:$0xff]
    %v4484 = vld [vmem:[#allocation6 + $0x158] sm:$0xff]
    %v4485 = vld [vmem:[#allocation6 + $0x160] sm:$0xff]
    %v4486 = vld [vmem:[#allocation6 + $0x168] sm:$0xff]
    %v4487 = vld [vmem:[#allocation6 + $0x170] sm:$0xff]
    %v4488 = vld [vmem:[#allocation6 + $0x178] sm:$0xff]
    %v4489 = vld [vmem:[#allocation6 + $0x180] sm:$0xff]
    %v4490 = vld [vmem:[#allocation6 + $0x188] sm:$0xff]
    %v4491 = vld [vmem:[#allocation6 + $0x190] sm:$0xff]
    %v4492 = vld [vmem:[#allocation6 + $0x198] sm:$0xff]
    %v4493 = vld [vmem:[#allocation6 + $0x1a0] sm:$0xff]
    %v4494 = vld [vmem:[#allocation6 + $0x1a8] sm:$0xff]
    %v4495 = vld [vmem:[#allocation6 + $0x1b0] sm:$0xff]
    %v4496 = vld [vmem:[#allocation6 + $0x1b8] sm:$0xff]
    %v4497 = vld [vmem:[#allocation6 + $0x1c0] sm:$0xff]
    %v4498 = vld [vmem:[#allocation6 + $0x1c8] sm:$0xff]
    %v4499 = vld [vmem:[#allocation6 + $0x1d0] sm:$0xff]
    %v4500 = vld [vmem:[#allocation6 + $0x1d8] sm:$0xff]
    %v4501 = vld [vmem:[#allocation6 + $0x1e0] sm:$0xff]
    %v4502 = vld [vmem:[#allocation6 + $0x1e8] sm:$0xff]
    %v4503 = vld [vmem:[#allocation6 + $0x1f0] sm:$0xff]
    %v4504 = vld [vmem:[#allocation6 + $0x1f8] sm:$0xff]
    %4505 = vmatpush.msra.mxu0 %v4501
    %4506 = vmatpush.msra.mxu0 %v4497
    %4507 = vmatpush.msra.mxu0 %v4493
    %4508 = vmatpush.msra.mxu0 %v4489
    %4509 = vmatpush.msra.mxu0 %v4485
    %4510 = vmatpush.msra.mxu0 %v4481
    %4511 = vmatpush.msra.mxu0 %v4477
    %4512 = vmatpush.msra.mxu0 %v4473
    %4513 = vmatpush.msra.mxu0 %v4469
    %4514 = vmatpush.msra.mxu0 %v4465
    %4515 = vmatpush.msra.mxu0 %v4461
    %4516 = vmatpush.msra.mxu0 %v4457
    %4517 = vmatpush.msra.mxu0 %v4453
    %4518 = vmatpush.msra.mxu0 %v4449
    %4519 = vmatpush.msra.mxu0 %v4445
    %4520 = vmatpush.msra.mxu0 %v4441
    %4521 = vmatmul.f32.gmra.mxu0 %v4066
    %v4522 = vpop.f32.mrf.mxu0
    %v4523 = vadd.f32 0.0, %v4522
    %4524 = vdwg.mxu0
    %4525 = vmatpush.msra.mxu0 %v4502
    %4526 = vmatpush.msra.mxu0 %v4498
    %4527 = vmatpush.msra.mxu0 %v4494
    %4528 = vmatpush.msra.mxu0 %v4490
    %4529 = vmatpush.msra.mxu0 %v4486
    %4530 = vmatpush.msra.mxu0 %v4482
    %4531 = vmatpush.msra.mxu0 %v4478
    %4532 = vmatpush.msra.mxu0 %v4474
    %4533 = vmatpush.msra.mxu0 %v4470
    %4534 = vmatpush.msra.mxu0 %v4466
    %4535 = vmatpush.msra.mxu0 %v4462
    %4536 = vmatpush.msra.mxu0 %v4458
    %4537 = vmatpush.msra.mxu0 %v4454
    %4538 = vmatpush.msra.mxu0 %v4450
    %4539 = vmatpush.msra.mxu0 %v4446
    %4540 = vmatpush.msra.mxu0 %v4442
    %4541 = vmatmul.f32.gmra.mxu0 %v4066
    %v4542 = vpop.f32.mrf.mxu0
    %v4543 = vadd.f32 0.0, %v4542
    %4544 = vdwg.mxu0
    %4545 = vmatpush.msra.mxu0 %v4503
    %4546 = vmatpush.msra.mxu0 %v4499
    %4547 = vmatpush.msra.mxu0 %v4495
    %4548 = vmatpush.msra.mxu0 %v4491
    %4549 = vmatpush.msra.mxu0 %v4487
    %4550 = vmatpush.msra.mxu0 %v4483
    %4551 = vmatpush.msra.mxu0 %v4479
    %4552 = vmatpush.msra.mxu0 %v4475
    %4553 = vmatpush.msra.mxu0 %v4471
    %4554 = vmatpush.msra.mxu0 %v4467
    %4555 = vmatpush.msra.mxu0 %v4463
    %4556 = vmatpush.msra.mxu0 %v4459
    %4557 = vmatpush.msra.mxu0 %v4455
    %4558 = vmatpush.msra.mxu0 %v4451
    %4559 = vmatpush.msra.mxu0 %v4447
    %4560 = vmatpush.msra.mxu0 %v4443
    %4561 = vmatmul.f32.gmra.mxu0 %v4066
    %v4562 = vpop.f32.mrf.mxu0
    %v4563 = vadd.f32 0.0, %v4562
    %4564 = vdwg.mxu0
    %4565 = vmatpush.msra.mxu0 %v4504
    %4566 = vmatpush.msra.mxu0 %v4500
    %4567 = vmatpush.msra.mxu0 %v4496
    %4568 = vmatpush.msra.mxu0 %v4492
    %4569 = vmatpush.msra.mxu0 %v4488
    %4570 = vmatpush.msra.mxu0 %v4484
    %4571 = vmatpush.msra.mxu0 %v4480
    %4572 = vmatpush.msra.mxu0 %v4476
    %4573 = vmatpush.msra.mxu0 %v4472
    %4574 = vmatpush.msra.mxu0 %v4468
    %4575 = vmatpush.msra.mxu0 %v4464
    %4576 = vmatpush.msra.mxu0 %v4460
    %4577 = vmatpush.msra.mxu0 %v4456
    %4578 = vmatpush.msra.mxu0 %v4452
    %4579 = vmatpush.msra.mxu0 %v4448
    %4580 = vmatpush.msra.mxu0 %v4444
    %4581 = vmatmul.f32.gmra.mxu0 %v4066
    %v4582 = vpop.f32.mrf.mxu0
    %v4583 = vadd.f32 0.0, %v4582
    %4584 = vdwg.mxu0
    %v4586 = vrot.slane %v4376, 6
    %4588 = vmatpush.msra.mxu0 %v4437
    %4589 = vmatpush.msra.mxu0 %v4433
    %4590 = vmatpush.msra.mxu0 %v4429
    %4591 = vmatpush.msra.mxu0 %v4425
    %4592 = vmatpush.msra.mxu0 %v4421
    %4593 = vmatpush.msra.mxu0 %v4417
    %4594 = vmatpush.msra.mxu0 %v4413
    %4595 = vmatpush.msra.mxu0 %v4409
    %4596 = vmatpush.msra.mxu0 %v4405
    %4597 = vmatpush.msra.mxu0 %v4401
    %4598 = vmatpush.msra.mxu0 %v4397
    %4599 = vmatpush.msra.mxu0 %v4393
    %4600 = vmatpush.msra.mxu0 %v4389
    %4601 = vmatpush.msra.mxu0 %v4385
    %4602 = vmatpush.msra.mxu0 %v4381
    %4603 = vmatpush.msra.mxu0 %v4377
    %4604 = vmatmul.f32.gmra.mxu0 %v4586
    %v4605 = vpop.f32.mrf.mxu0
    %v4606 = vadd.f32 %v4523, %v4605
    %4607 = vdwg.mxu0
    %4608 = vmatpush.msra.mxu0 %v4438
    %4609 = vmatpush.msra.mxu0 %v4434
    %4610 = vmatpush.msra.mxu0 %v4430
    %4611 = vmatpush.msra.mxu0 %v4426
    %4612 = vmatpush.msra.mxu0 %v4422
    %4613 = vmatpush.msra.mxu0 %v4418
    %4614 = vmatpush.msra.mxu0 %v4414
    %4615 = vmatpush.msra.mxu0 %v4410
    %4616 = vmatpush.msra.mxu0 %v4406
    %4617 = vmatpush.msra.mxu0 %v4402
    %4618 = vmatpush.msra.mxu0 %v4398
    %4619 = vmatpush.msra.mxu0 %v4394
    %4620 = vmatpush.msra.mxu0 %v4390
    %4621 = vmatpush.msra.mxu0 %v4386
    %4622 = vmatpush.msra.mxu0 %v4382
    %4623 = vmatpush.msra.mxu0 %v4378
    %4624 = vmatmul.f32.gmra.mxu0 %v4586
    %v4625 = vpop.f32.mrf.mxu0
    %v4626 = vadd.f32 %v4543, %v4625
    %4627 = vdwg.mxu0
    %4628 = vmatpush.msra.mxu0 %v4439
    %4629 = vmatpush.msra.mxu0 %v4435
    %4630 = vmatpush.msra.mxu0 %v4431
    %4631 = vmatpush.msra.mxu0 %v4427
    %4632 = vmatpush.msra.mxu0 %v4423
    %4633 = vmatpush.msra.mxu0 %v4419
    %4634 = vmatpush.msra.mxu0 %v4415
    %4635 = vmatpush.msra.mxu0 %v4411
    %4636 = vmatpush.msra.mxu0 %v4407
    %4637 = vmatpush.msra.mxu0 %v4403
    %4638 = vmatpush.msra.mxu0 %v4399
    %4639 = vmatpush.msra.mxu0 %v4395
    %4640 = vmatpush.msra.mxu0 %v4391
    %4641 = vmatpush.msra.mxu0 %v4387
    %4642 = vmatpush.msra.mxu0 %v4383
    %4643 = vmatpush.msra.mxu0 %v4379
    %4644 = vmatmul.f32.gmra.mxu0 %v4586
    %v4645 = vpop.f32.mrf.mxu0
    %v4646 = vadd.f32 %v4563, %v4645
    %4647 = vdwg.mxu0
    %4648 = vmatpush.msra.mxu0 %v4440
    %4649 = vmatpush.msra.mxu0 %v4436
    %4650 = vmatpush.msra.mxu0 %v4432
    %4651 = vmatpush.msra.mxu0 %v4428
    %4652 = vmatpush.msra.mxu0 %v4424
    %4653 = vmatpush.msra.mxu0 %v4420
    %4654 = vmatpush.msra.mxu0 %v4416
    %4655 = vmatpush.msra.mxu0 %v4412
    %4656 = vmatpush.msra.mxu0 %v4408
    %4657 = vmatpush.msra.mxu0 %v4404
    %4658 = vmatpush.msra.mxu0 %v4400
    %4659 = vmatpush.msra.mxu0 %v4396
    %4660 = vmatpush.msra.mxu0 %v4392
    %4661 = vmatpush.msra.mxu0 %v4388
    %4662 = vmatpush.msra.mxu0 %v4384
    %4663 = vmatpush.msra.mxu0 %v4380
    %4664 = vmatmul.f32.gmra.mxu0 %v4586
    %v4665 = vpop.f32.mrf.mxu0
    %v4666 = vadd.f32 %v4583, %v4665
    %4667 = vdwg.mxu0
    %v4668 = vadd.f32 %v4606, %v649
    %v4669 = vadd.f32 %v4626, %v650
    %v4670 = vadd.f32 %v4646, %v651
    %v4671 = vadd.f32 %v4666, %v652
    %v4672 = vxor.u32 %v4668, 2147483648
    %v4673 = vmul.f32 %v4672, 1.442695
    %v4674 = vpow.pop %v4673
    %v4675 = vadd.f32 %v4674, 1.0
    %v4676 = vrcp.pop %v4675
    %v4677 = vmul.f32 %v4675, %v4676
    %v4678 = vsub.f32 1.0, %v4677
    %v4679 = vmul.f32 %v4676, %v4678
    %v4680 = vadd.f32 %v4676, %v4679
    %vm4681 = vweird.f32 %v4675
    %vm4682 = vweird.f32 %v4676
    %vm4683 = vmor %vm4681, %vm4682
    %v4684 = vsel %vm4683, %v4676, %v4680
    %v4685 = vand.u32 2147483647, %v4675
    %vm4686 = vcmp.eq.f32.partialorder %v4685, 8.507059e+37
    %v4687 = vand.u32 %v4675, 2147483648
    %v4688 = vor.u32 1.1754944e-38, %v4687
    %v4689 = vsel %vm4686, %v4688, %v4684
    %v4690 = vmul.f32 1.0, %v4689
    %v4691 = vxor.u32 %v4669, 2147483648
    %v4692 = vmul.f32 %v4691, 1.442695
    %v4693 = vpow.pop %v4692
    %v4694 = vadd.f32 %v4693, 1.0
    %v4695 = vrcp.pop %v4694
    %v4696 = vmul.f32 %v4694, %v4695
    %v4697 = vsub.f32 1.0, %v4696
    %v4698 = vmul.f32 %v4695, %v4697
    %v4699 = vadd.f32 %v4695, %v4698
    %vm4700 = vweird.f32 %v4694
    %vm4701 = vweird.f32 %v4695
    %vm4702 = vmor %vm4700, %vm4701
    %v4703 = vsel %vm4702, %v4695, %v4699
    %v4704 = vand.u32 2147483647, %v4694
    %vm4705 = vcmp.eq.f32.partialorder %v4704, 8.507059e+37
    %v4706 = vand.u32 %v4694, 2147483648
    %v4707 = vor.u32 1.1754944e-38, %v4706
    %v4708 = vsel %vm4705, %v4707, %v4703
    %v4709 = vmul.f32 1.0, %v4708
    %v4710 = vtanh.pop %v4670
    %v4711 = vxor.u32 %v4671, 2147483648
    %v4712 = vmul.f32 %v4711, 1.442695
    %v4713 = vpow.pop %v4712
    %v4714 = vadd.f32 %v4713, 1.0
    %v4715 = vrcp.pop %v4714
    %v4716 = vmul.f32 %v4714, %v4715
    %v4717 = vsub.f32 1.0, %v4716
    %v4718 = vmul.f32 %v4715, %v4717
    %v4719 = vadd.f32 %v4715, %v4718
    %vm4720 = vweird.f32 %v4714
    %vm4721 = vweird.f32 %v4715
    %vm4722 = vmor %vm4720, %vm4721
    %v4723 = vsel %vm4722, %v4715, %v4719
    %v4724 = vand.u32 2147483647, %v4714
    %vm4725 = vcmp.eq.f32.partialorder %v4724, 8.507059e+37
    %v4726 = vand.u32 %v4714, 2147483648
    %v4727 = vor.u32 1.1754944e-38, %v4726
    %v4728 = vsel %vm4725, %v4727, %v4723
    %v4729 = vmul.f32 1.0, %v4728
    %v4730 = vmul.f32 %v4709, %v4064
    %v4731 = vmul.f32 %v4690, %v4710
    %v4732 = vadd.f32 %v4730, %v4731
    %v4733 = vtanh.pop %v4732
    %v4734 = vmul.f32 %v4729, %v4733
    %v4735 = vld [vmem:[#allocation7] sm:$0xff]
    %v4736 = vld [vmem:[#allocation7 + $0x8] sm:$0xff]
    %v4737 = vld [vmem:[#allocation7 + $0x10] sm:$0xff]
    %v4738 = vld [vmem:[#allocation7 + $0x18] sm:$0xff]
    %v4739 = vld [vmem:[#allocation7 + $0x20] sm:$0xff]
    %v4740 = vld [vmem:[#allocation7 + $0x28] sm:$0xff]
    %v4741 = vld [vmem:[#allocation7 + $0x30] sm:$0xff]
    %v4742 = vld [vmem:[#allocation7 + $0x38] sm:$0xff]
    %v4743 = vld [vmem:[#allocation7 + $0x40] sm:$0xff]
    %v4744 = vld [vmem:[#allocation7 + $0x48] sm:$0xff]
    %v4745 = vld [vmem:[#allocation7 + $0x50] sm:$0xff]
    %v4746 = vld [vmem:[#allocation7 + $0x58] sm:$0xff]
    %v4747 = vld [vmem:[#allocation7 + $0x60] sm:$0xff]
    %v4748 = vld [vmem:[#allocation7 + $0x68] sm:$0xff]
    %v4749 = vld [vmem:[#allocation7 + $0x70] sm:$0xff]
    %v4750 = vld [vmem:[#allocation7 + $0x78] sm:$0xff]
    %4751 = vset.pattern.permute.xlu0 3
    %4752 = vperm.xlu0 %4751, %v4145
    %v4753 = vpop.permute.xlu0 %4752
    %v4755 = vmul.f32 %v4753, %v147
    %4756 = vmatpush.msra.mxu0 %v4750
    %4757 = vmatpush.msra.mxu0 %v4749
    %4758 = vmatpush.msra.mxu0 %v4748
    %4759 = vmatpush.msra.mxu0 %v4747
    %4760 = vmatpush.msra.mxu0 %v4746
    %4761 = vmatpush.msra.mxu0 %v4745
    %4762 = vmatpush.msra.mxu0 %v4744
    %4763 = vmatpush.msra.mxu0 %v4743
    %4764 = vmatpush.msra.mxu0 %v4742
    %4765 = vmatpush.msra.mxu0 %v4741
    %4766 = vmatpush.msra.mxu0 %v4740
    %4767 = vmatpush.msra.mxu0 %v4739
    %4768 = vmatpush.msra.mxu0 %v4738
    %4769 = vmatpush.msra.mxu0 %v4737
    %4770 = vmatpush.msra.mxu0 %v4736
    %4771 = vmatpush.msra.mxu0 %v4735
    %4772 = vmatmul.f32.gmra.mxu0 %v4734
    %v4773 = vpop.f32.mrf.mxu0
    %v4774 = vadd.f32 %v4755, %v4773
    %4775 = vdwg.mxu0
    %v4776 = vadd.f32 %v4774, %v148
    %v4777 = vxor.u32 %v4776, 2147483648
    %v4778 = vmul.f32 %v4777, 1.442695
    %v4779 = vpow.pop %v4778
    %v4780 = vadd.f32 %v4779, 1.0
    %v4781 = vrcp.pop %v4780
    %v4782 = vmul.f32 %v4780, %v4781
    %v4783 = vsub.f32 1.0, %v4782
    %v4784 = vmul.f32 %v4781, %v4783
    %v4785 = vadd.f32 %v4781, %v4784
    %vm4786 = vweird.f32 %v4780
    %vm4787 = vweird.f32 %v4781
    %vm4788 = vmor %vm4786, %vm4787
    %v4789 = vsel %vm4788, %v4781, %v4785
    %v4790 = vand.u32 2147483647, %v4780
    %vm4791 = vcmp.eq.f32.partialorder %v4790, 8.507059e+37
    %v4792 = vand.u32 %v4780, 2147483648
    %v4793 = vor.u32 1.1754944e-38, %v4792
    %v4794 = vsel %vm4791, %v4793, %v4789
    %v4795 = vmul.f32 1.0, %v4794
    %v4796 = vtanh.pop %v4776
    %v4797 = vmul.f32 %v4795, %v4139
    %4799 = vrot.lane.b32.xlu0 %v4796, 126
    %v4800 = vpop.permute.xlu0 %4799
    %v4802 = vmul.f32 %v4795, %v4800
    %4804 = vrot.lane.b32.xlu0 %v4802, 1
    %v4805 = vpop.permute.xlu0 %4804
    %v4807 = vadd.f32 %v4797, %v4805
    %v4808 = vtanh.pop %v4807
    %4810 = vrot.lane.b32.xlu0 %v4808, 2
    %v4811 = vpop.permute.xlu0 %4810
    %v4813 = vmul.f32 %v4795, %v4811
    %4815 = vrot.lane.b32.xlu0 %v4813, 125
    %v4816 = vpop.permute.xlu0 %4815
    %4818 = vst.msk [vmem:[%s13 + $0x6] sm:$0x1] %vm809, %v4816
    %v4819 = vld [vmem:[#allocation2] sm:$0xff]
    %v4820 = vld [vmem:[#allocation2 + $0x8] sm:$0xff]
    %v4821 = vld [vmem:[#allocation2 + $0x10] sm:$0xff]
    %v4822 = vld [vmem:[#allocation2 + $0x18] sm:$0xff]
    %v4823 = vld [vmem:[#allocation2 + $0x20] sm:$0xff]
    %v4824 = vld [vmem:[#allocation2 + $0x28] sm:$0xff]
    %v4825 = vld [vmem:[#allocation2 + $0x30] sm:$0xff]
    %v4826 = vld [vmem:[#allocation2 + $0x38] sm:$0xff]
    %v4827 = vld [vmem:[#allocation2 + $0x40] sm:$0xff]
    %v4828 = vld [vmem:[#allocation2 + $0x48] sm:$0xff]
    %v4829 = vld [vmem:[#allocation2 + $0x50] sm:$0xff]
    %v4830 = vld [vmem:[#allocation2 + $0x58] sm:$0xff]
    %v4831 = vld [vmem:[#allocation2 + $0x60] sm:$0xff]
    %v4832 = vld [vmem:[#allocation2 + $0x68] sm:$0xff]
    %v4833 = vld [vmem:[#allocation2 + $0x70] sm:$0xff]
    %v4834 = vld [vmem:[#allocation2 + $0x78] sm:$0xff]
    %v4835 = vld [vmem:[#allocation2 + $0x80] sm:$0xff]
    %v4836 = vld [vmem:[#allocation2 + $0x88] sm:$0xff]
    %v4837 = vld [vmem:[#allocation2 + $0x90] sm:$0xff]
    %v4838 = vld [vmem:[#allocation2 + $0x98] sm:$0xff]
    %v4839 = vld [vmem:[#allocation2 + $0xa0] sm:$0xff]
    %v4840 = vld [vmem:[#allocation2 + $0xa8] sm:$0xff]
    %v4841 = vld [vmem:[#allocation2 + $0xb0] sm:$0xff]
    %v4842 = vld [vmem:[#allocation2 + $0xb8] sm:$0xff]
    %v4843 = vld [vmem:[#allocation2 + $0xc0] sm:$0xff]
    %v4844 = vld [vmem:[#allocation2 + $0xc8] sm:$0xff]
    %v4845 = vld [vmem:[#allocation2 + $0xd0] sm:$0xff]
    %v4846 = vld [vmem:[#allocation2 + $0xd8] sm:$0xff]
    %v4847 = vld [vmem:[#allocation2 + $0xe0] sm:$0xff]
    %v4848 = vld [vmem:[#allocation2 + $0xe8] sm:$0xff]
    %v4849 = vld [vmem:[#allocation2 + $0xf0] sm:$0xff]
    %v4850 = vld [vmem:[#allocation2 + $0xf8] sm:$0xff]
    %v4851 = vld [vmem:[#allocation2 + $0x100] sm:$0xff]
    %v4852 = vld [vmem:[#allocation2 + $0x108] sm:$0xff]
    %v4853 = vld [vmem:[#allocation2 + $0x110] sm:$0xff]
    %v4854 = vld [vmem:[#allocation2 + $0x118] sm:$0xff]
    %v4855 = vld [vmem:[#allocation2 + $0x120] sm:$0xff]
    %v4856 = vld [vmem:[#allocation2 + $0x128] sm:$0xff]
    %v4857 = vld [vmem:[#allocation2 + $0x130] sm:$0xff]
    %v4858 = vld [vmem:[#allocation2 + $0x138] sm:$0xff]
    %v4859 = vld [vmem:[#allocation2 + $0x140] sm:$0xff]
    %v4860 = vld [vmem:[#allocation2 + $0x148] sm:$0xff]
    %v4861 = vld [vmem:[#allocation2 + $0x150] sm:$0xff]
    %v4862 = vld [vmem:[#allocation2 + $0x158] sm:$0xff]
    %v4863 = vld [vmem:[#allocation2 + $0x160] sm:$0xff]
    %v4864 = vld [vmem:[#allocation2 + $0x168] sm:$0xff]
    %v4865 = vld [vmem:[#allocation2 + $0x170] sm:$0xff]
    %v4866 = vld [vmem:[#allocation2 + $0x178] sm:$0xff]
    %v4867 = vld [vmem:[#allocation2 + $0x180] sm:$0xff]
    %v4868 = vld [vmem:[#allocation2 + $0x188] sm:$0xff]
    %v4869 = vld [vmem:[#allocation2 + $0x190] sm:$0xff]
    %v4870 = vld [vmem:[#allocation2 + $0x198] sm:$0xff]
    %v4871 = vld [vmem:[#allocation2 + $0x1a0] sm:$0xff]
    %v4872 = vld [vmem:[#allocation2 + $0x1a8] sm:$0xff]
    %v4873 = vld [vmem:[#allocation2 + $0x1b0] sm:$0xff]
    %v4874 = vld [vmem:[#allocation2 + $0x1b8] sm:$0xff]
    %v4875 = vld [vmem:[#allocation2 + $0x1c0] sm:$0xff]
    %v4876 = vld [vmem:[#allocation2 + $0x1c8] sm:$0xff]
    %v4877 = vld [vmem:[#allocation2 + $0x1d0] sm:$0xff]
    %v4878 = vld [vmem:[#allocation2 + $0x1d8] sm:$0xff]
    %v4879 = vld [vmem:[#allocation2 + $0x1e0] sm:$0xff]
    %v4880 = vld [vmem:[#allocation2 + $0x1e8] sm:$0xff]
    %v4881 = vld [vmem:[#allocation2 + $0x1f0] sm:$0xff]
    %v4882 = vld [vmem:[#allocation2 + $0x1f8] sm:$0xff]
    %4883 = vmatpush.msra.mxu0 %v4879
    %4884 = vmatpush.msra.mxu0 %v4875
    %4885 = vmatpush.msra.mxu0 %v4871
    %4886 = vmatpush.msra.mxu0 %v4867
    %4887 = vmatpush.msra.mxu0 %v4863
    %4888 = vmatpush.msra.mxu0 %v4859
    %4889 = vmatpush.msra.mxu0 %v4855
    %4890 = vmatpush.msra.mxu0 %v4851
    %4891 = vmatpush.msra.mxu0 %v4847
    %4892 = vmatpush.msra.mxu0 %v4843
    %4893 = vmatpush.msra.mxu0 %v4839
    %4894 = vmatpush.msra.mxu0 %v4835
    %4895 = vmatpush.msra.mxu0 %v4831
    %4896 = vmatpush.msra.mxu0 %v4827
    %4897 = vmatpush.msra.mxu0 %v4823
    %4898 = vmatpush.msra.mxu0 %v4819
    %4899 = vmatmul.f32.gmra.mxu0 %v4586
    %v4900 = vpop.f32.mrf.mxu0
    %v4901 = vadd.f32 0.0, %v4900
    %4902 = vdwg.mxu0
    %4903 = vmatpush.msra.mxu0 %v4880
    %4904 = vmatpush.msra.mxu0 %v4876
    %4905 = vmatpush.msra.mxu0 %v4872
    %4906 = vmatpush.msra.mxu0 %v4868
    %4907 = vmatpush.msra.mxu0 %v4864
    %4908 = vmatpush.msra.mxu0 %v4860
    %4909 = vmatpush.msra.mxu0 %v4856
    %4910 = vmatpush.msra.mxu0 %v4852
    %4911 = vmatpush.msra.mxu0 %v4848
    %4912 = vmatpush.msra.mxu0 %v4844
    %4913 = vmatpush.msra.mxu0 %v4840
    %4914 = vmatpush.msra.mxu0 %v4836
    %4915 = vmatpush.msra.mxu0 %v4832
    %4916 = vmatpush.msra.mxu0 %v4828
    %4917 = vmatpush.msra.mxu0 %v4824
    %4918 = vmatpush.msra.mxu0 %v4820
    %4919 = vmatmul.f32.gmra.mxu0 %v4586
    %v4920 = vpop.f32.mrf.mxu0
    %v4921 = vadd.f32 0.0, %v4920
    %4922 = vdwg.mxu0
    %4923 = vmatpush.msra.mxu0 %v4881
    %4924 = vmatpush.msra.mxu0 %v4877
    %4925 = vmatpush.msra.mxu0 %v4873
    %4926 = vmatpush.msra.mxu0 %v4869
    %4927 = vmatpush.msra.mxu0 %v4865
    %4928 = vmatpush.msra.mxu0 %v4861
    %4929 = vmatpush.msra.mxu0 %v4857
    %4930 = vmatpush.msra.mxu0 %v4853
    %4931 = vmatpush.msra.mxu0 %v4849
    %4932 = vmatpush.msra.mxu0 %v4845
    %4933 = vmatpush.msra.mxu0 %v4841
    %4934 = vmatpush.msra.mxu0 %v4837
    %4935 = vmatpush.msra.mxu0 %v4833
    %4936 = vmatpush.msra.mxu0 %v4829
    %4937 = vmatpush.msra.mxu0 %v4825
    %4938 = vmatpush.msra.mxu0 %v4821
    %4939 = vmatmul.f32.gmra.mxu0 %v4586
    %v4940 = vpop.f32.mrf.mxu0
    %v4941 = vadd.f32 0.0, %v4940
    %4942 = vdwg.mxu0
    %4943 = vmatpush.msra.mxu0 %v4882
    %4944 = vmatpush.msra.mxu0 %v4878
    %4945 = vmatpush.msra.mxu0 %v4874
    %4946 = vmatpush.msra.mxu0 %v4870
    %4947 = vmatpush.msra.mxu0 %v4866
    %4948 = vmatpush.msra.mxu0 %v4862
    %4949 = vmatpush.msra.mxu0 %v4858
    %4950 = vmatpush.msra.mxu0 %v4854
    %4951 = vmatpush.msra.mxu0 %v4850
    %4952 = vmatpush.msra.mxu0 %v4846
    %4953 = vmatpush.msra.mxu0 %v4842
    %4954 = vmatpush.msra.mxu0 %v4838
    %4955 = vmatpush.msra.mxu0 %v4834
    %4956 = vmatpush.msra.mxu0 %v4830
    %4957 = vmatpush.msra.mxu0 %v4826
    %4958 = vmatpush.msra.mxu0 %v4822
    %4959 = vmatmul.f32.gmra.mxu0 %v4586
    %v4960 = vpop.f32.mrf.mxu0
    %v4961 = vadd.f32 0.0, %v4960
    %4962 = vdwg.mxu0
    %v4967 = vrot.slane %v4901, 1
    %v4968 = vrot.slane %v4921, 1
    %v4969 = vrot.slane %v4941, 1
    %v4970 = vrot.slane %v4961, 1
    %v4975 = vadd.f32 %v137, %v4967
    %v4976 = vadd.f32 %v138, %v4968
    %v4977 = vadd.f32 %v139, %v4969
    %v4978 = vadd.f32 %v140, %v4970
    %v4979 = vxor.u32 %v4975, 2147483648
    %v4980 = vmul.f32 %v4979, 1.442695
    %v4981 = vpow.pop %v4980
    %v4982 = vadd.f32 %v4981, 1.0
    %v4983 = vrcp.pop %v4982
    %v4984 = vmul.f32 %v4982, %v4983
    %v4985 = vsub.f32 1.0, %v4984
    %v4986 = vmul.f32 %v4983, %v4985
    %v4987 = vadd.f32 %v4983, %v4986
    %vm4988 = vweird.f32 %v4982
    %vm4989 = vweird.f32 %v4983
    %vm4990 = vmor %vm4988, %vm4989
    %v4991 = vsel %vm4990, %v4983, %v4987
    %v4992 = vand.u32 2147483647, %v4982
    %vm4993 = vcmp.eq.f32.partialorder %v4992, 8.507059e+37
    %v4994 = vand.u32 %v4982, 2147483648
    %v4995 = vor.u32 1.1754944e-38, %v4994
    %v4996 = vsel %vm4993, %v4995, %v4991
    %v4997 = vmul.f32 1.0, %v4996
    %v4998 = vxor.u32 %v4976, 2147483648
    %v4999 = vmul.f32 %v4998, 1.442695
    %v5000 = vpow.pop %v4999
    %v5001 = vadd.f32 %v5000, 1.0
    %v5002 = vrcp.pop %v5001
    %v5003 = vmul.f32 %v5001, %v5002
    %v5004 = vsub.f32 1.0, %v5003
    %v5005 = vmul.f32 %v5002, %v5004
    %v5006 = vadd.f32 %v5002, %v5005
    %vm5007 = vweird.f32 %v5001
    %vm5008 = vweird.f32 %v5002
    %vm5009 = vmor %vm5007, %vm5008
    %v5010 = vsel %vm5009, %v5002, %v5006
    %v5011 = vand.u32 2147483647, %v5001
    %vm5012 = vcmp.eq.f32.partialorder %v5011, 8.507059e+37
    %v5013 = vand.u32 %v5001, 2147483648
    %v5014 = vor.u32 1.1754944e-38, %v5013
    %v5015 = vsel %vm5012, %v5014, %v5010
    %v5016 = vmul.f32 1.0, %v5015
    %v5017 = vtanh.pop %v4977
    %v5018 = vxor.u32 %v4978, 2147483648
    %v5019 = vmul.f32 %v5018, 1.442695
    %v5020 = vpow.pop %v5019
    %v5021 = vadd.f32 %v5020, 1.0
    %v5022 = vrcp.pop %v5021
    %v5023 = vmul.f32 %v5021, %v5022
    %v5024 = vsub.f32 1.0, %v5023
    %v5025 = vmul.f32 %v5022, %v5024
    %v5026 = vadd.f32 %v5022, %v5025
    %vm5027 = vweird.f32 %v5021
    %vm5028 = vweird.f32 %v5022
    %vm5029 = vmor %vm5027, %vm5028
    %v5030 = vsel %vm5029, %v5022, %v5026
    %v5031 = vand.u32 2147483647, %v5021
    %vm5032 = vcmp.eq.f32.partialorder %v5031, 8.507059e+37
    %v5033 = vand.u32 %v5021, 2147483648
    %v5034 = vor.u32 1.1754944e-38, %v5033
    %v5035 = vsel %vm5032, %v5034, %v5030
    %v5036 = vmul.f32 1.0, %v5035
    %v5038 = vrot.slane %v4374, 7
    %v5040 = vmul.f32 %v5016, %v5038
    %v5041 = vmul.f32 %v4997, %v5017
    %v5042 = vadd.f32 %v5040, %v5041
    %v5043 = vtanh.pop %v5042
    %v5044 = vmul.f32 %v5036, %v5043
    %v5045 = vld [vmem:[#allocation4] sm:$0xff]
    %v5046 = vld [vmem:[#allocation4 + $0x8] sm:$0xff]
    %v5047 = vld [vmem:[#allocation4 + $0x10] sm:$0xff]
    %v5048 = vld [vmem:[#allocation4 + $0x18] sm:$0xff]
    %v5049 = vld [vmem:[#allocation4 + $0x20] sm:$0xff]
    %v5050 = vld [vmem:[#allocation4 + $0x28] sm:$0xff]
    %v5051 = vld [vmem:[#allocation4 + $0x30] sm:$0xff]
    %v5052 = vld [vmem:[#allocation4 + $0x38] sm:$0xff]
    %v5053 = vld [vmem:[#allocation4 + $0x40] sm:$0xff]
    %v5054 = vld [vmem:[#allocation4 + $0x48] sm:$0xff]
    %v5055 = vld [vmem:[#allocation4 + $0x50] sm:$0xff]
    %v5056 = vld [vmem:[#allocation4 + $0x58] sm:$0xff]
    %v5057 = vld [vmem:[#allocation4 + $0x60] sm:$0xff]
    %v5058 = vld [vmem:[#allocation4 + $0x68] sm:$0xff]
    %v5059 = vld [vmem:[#allocation4 + $0x70] sm:$0xff]
    %v5060 = vld [vmem:[#allocation4 + $0x78] sm:$0xff]
    %v5061 = vld [vmem:[#allocation4 + $0x80] sm:$0xff]
    %v5062 = vld [vmem:[#allocation4 + $0x88] sm:$0xff]
    %v5063 = vld [vmem:[#allocation4 + $0x90] sm:$0xff]
    %v5064 = vld [vmem:[#allocation4 + $0x98] sm:$0xff]
    %v5065 = vld [vmem:[#allocation4 + $0xa0] sm:$0xff]
    %v5066 = vld [vmem:[#allocation4 + $0xa8] sm:$0xff]
    %v5067 = vld [vmem:[#allocation4 + $0xb0] sm:$0xff]
    %v5068 = vld [vmem:[#allocation4 + $0xb8] sm:$0xff]
    %v5069 = vld [vmem:[#allocation4 + $0xc0] sm:$0xff]
    %v5070 = vld [vmem:[#allocation4 + $0xc8] sm:$0xff]
    %v5071 = vld [vmem:[#allocation4 + $0xd0] sm:$0xff]
    %v5072 = vld [vmem:[#allocation4 + $0xd8] sm:$0xff]
    %v5073 = vld [vmem:[#allocation4 + $0xe0] sm:$0xff]
    %v5074 = vld [vmem:[#allocation4 + $0xe8] sm:$0xff]
    %v5075 = vld [vmem:[#allocation4 + $0xf0] sm:$0xff]
    %v5076 = vld [vmem:[#allocation4 + $0xf8] sm:$0xff]
    %v5077 = vld [vmem:[#allocation4 + $0x100] sm:$0xff]
    %v5078 = vld [vmem:[#allocation4 + $0x108] sm:$0xff]
    %v5079 = vld [vmem:[#allocation4 + $0x110] sm:$0xff]
    %v5080 = vld [vmem:[#allocation4 + $0x118] sm:$0xff]
    %v5081 = vld [vmem:[#allocation4 + $0x120] sm:$0xff]
    %v5082 = vld [vmem:[#allocation4 + $0x128] sm:$0xff]
    %v5083 = vld [vmem:[#allocation4 + $0x130] sm:$0xff]
    %v5084 = vld [vmem:[#allocation4 + $0x138] sm:$0xff]
    %v5085 = vld [vmem:[#allocation4 + $0x140] sm:$0xff]
    %v5086 = vld [vmem:[#allocation4 + $0x148] sm:$0xff]
    %v5087 = vld [vmem:[#allocation4 + $0x150] sm:$0xff]
    %v5088 = vld [vmem:[#allocation4 + $0x158] sm:$0xff]
    %v5089 = vld [vmem:[#allocation4 + $0x160] sm:$0xff]
    %v5090 = vld [vmem:[#allocation4 + $0x168] sm:$0xff]
    %v5091 = vld [vmem:[#allocation4 + $0x170] sm:$0xff]
    %v5092 = vld [vmem:[#allocation4 + $0x178] sm:$0xff]
    %v5093 = vld [vmem:[#allocation4 + $0x180] sm:$0xff]
    %v5094 = vld [vmem:[#allocation4 + $0x188] sm:$0xff]
    %v5095 = vld [vmem:[#allocation4 + $0x190] sm:$0xff]
    %v5096 = vld [vmem:[#allocation4 + $0x198] sm:$0xff]
    %v5097 = vld [vmem:[#allocation4 + $0x1a0] sm:$0xff]
    %v5098 = vld [vmem:[#allocation4 + $0x1a8] sm:$0xff]
    %v5099 = vld [vmem:[#allocation4 + $0x1b0] sm:$0xff]
    %v5100 = vld [vmem:[#allocation4 + $0x1b8] sm:$0xff]
    %v5101 = vld [vmem:[#allocation4 + $0x1c0] sm:$0xff]
    %v5102 = vld [vmem:[#allocation4 + $0x1c8] sm:$0xff]
    %v5103 = vld [vmem:[#allocation4 + $0x1d0] sm:$0xff]
    %v5104 = vld [vmem:[#allocation4 + $0x1d8] sm:$0xff]
    %v5105 = vld [vmem:[#allocation4 + $0x1e0] sm:$0xff]
    %v5106 = vld [vmem:[#allocation4 + $0x1e8] sm:$0xff]
    %v5107 = vld [vmem:[#allocation4 + $0x1f0] sm:$0xff]
    %v5108 = vld [vmem:[#allocation4 + $0x1f8] sm:$0xff]
    %v5109 = vld [vmem:[#allocation6] sm:$0xff]
    %v5110 = vld [vmem:[#allocation6 + $0x8] sm:$0xff]
    %v5111 = vld [vmem:[#allocation6 + $0x10] sm:$0xff]
    %v5112 = vld [vmem:[#allocation6 + $0x18] sm:$0xff]
    %v5113 = vld [vmem:[#allocation6 + $0x20] sm:$0xff]
    %v5114 = vld [vmem:[#allocation6 + $0x28] sm:$0xff]
    %v5115 = vld [vmem:[#allocation6 + $0x30] sm:$0xff]
    %v5116 = vld [vmem:[#allocation6 + $0x38] sm:$0xff]
    %v5117 = vld [vmem:[#allocation6 + $0x40] sm:$0xff]
    %v5118 = vld [vmem:[#allocation6 + $0x48] sm:$0xff]
    %v5119 = vld [vmem:[#allocation6 + $0x50] sm:$0xff]
    %v5120 = vld [vmem:[#allocation6 + $0x58] sm:$0xff]
    %v5121 = vld [vmem:[#allocation6 + $0x60] sm:$0xff]
    %v5122 = vld [vmem:[#allocation6 + $0x68] sm:$0xff]
    %v5123 = vld [vmem:[#allocation6 + $0x70] sm:$0xff]
    %v5124 = vld [vmem:[#allocation6 + $0x78] sm:$0xff]
    %v5125 = vld [vmem:[#allocation6 + $0x80] sm:$0xff]
    %v5126 = vld [vmem:[#allocation6 + $0x88] sm:$0xff]
    %v5127 = vld [vmem:[#allocation6 + $0x90] sm:$0xff]
    %v5128 = vld [vmem:[#allocation6 + $0x98] sm:$0xff]
    %v5129 = vld [vmem:[#allocation6 + $0xa0] sm:$0xff]
    %v5130 = vld [vmem:[#allocation6 + $0xa8] sm:$0xff]
    %v5131 = vld [vmem:[#allocation6 + $0xb0] sm:$0xff]
    %v5132 = vld [vmem:[#allocation6 + $0xb8] sm:$0xff]
    %v5133 = vld [vmem:[#allocation6 + $0xc0] sm:$0xff]
    %v5134 = vld [vmem:[#allocation6 + $0xc8] sm:$0xff]
    %v5135 = vld [vmem:[#allocation6 + $0xd0] sm:$0xff]
    %v5136 = vld [vmem:[#allocation6 + $0xd8] sm:$0xff]
    %v5137 = vld [vmem:[#allocation6 + $0xe0] sm:$0xff]
    %v5138 = vld [vmem:[#allocation6 + $0xe8] sm:$0xff]
    %v5139 = vld [vmem:[#allocation6 + $0xf0] sm:$0xff]
    %v5140 = vld [vmem:[#allocation6 + $0xf8] sm:$0xff]
    %v5141 = vld [vmem:[#allocation6 + $0x100] sm:$0xff]
    %v5142 = vld [vmem:[#allocation6 + $0x108] sm:$0xff]
    %v5143 = vld [vmem:[#allocation6 + $0x110] sm:$0xff]
    %v5144 = vld [vmem:[#allocation6 + $0x118] sm:$0xff]
    %v5145 = vld [vmem:[#allocation6 + $0x120] sm:$0xff]
    %v5146 = vld [vmem:[#allocation6 + $0x128] sm:$0xff]
    %v5147 = vld [vmem:[#allocation6 + $0x130] sm:$0xff]
    %v5148 = vld [vmem:[#allocation6 + $0x138] sm:$0xff]
    %v5149 = vld [vmem:[#allocation6 + $0x140] sm:$0xff]
    %v5150 = vld [vmem:[#allocation6 + $0x148] sm:$0xff]
    %v5151 = vld [vmem:[#allocation6 + $0x150] sm:$0xff]
    %v5152 = vld [vmem:[#allocation6 + $0x158] sm:$0xff]
    %v5153 = vld [vmem:[#allocation6 + $0x160] sm:$0xff]
    %v5154 = vld [vmem:[#allocation6 + $0x168] sm:$0xff]
    %v5155 = vld [vmem:[#allocation6 + $0x170] sm:$0xff]
    %v5156 = vld [vmem:[#allocation6 + $0x178] sm:$0xff]
    %v5157 = vld [vmem:[#allocation6 + $0x180] sm:$0xff]
    %v5158 = vld [vmem:[#allocation6 + $0x188] sm:$0xff]
    %v5159 = vld [vmem:[#allocation6 + $0x190] sm:$0xff]
    %v5160 = vld [vmem:[#allocation6 + $0x198] sm:$0xff]
    %v5161 = vld [vmem:[#allocation6 + $0x1a0] sm:$0xff]
    %v5162 = vld [vmem:[#allocation6 + $0x1a8] sm:$0xff]
    %v5163 = vld [vmem:[#allocation6 + $0x1b0] sm:$0xff]
    %v5164 = vld [vmem:[#allocation6 + $0x1b8] sm:$0xff]
    %v5165 = vld [vmem:[#allocation6 + $0x1c0] sm:$0xff]
    %v5166 = vld [vmem:[#allocation6 + $0x1c8] sm:$0xff]
    %v5167 = vld [vmem:[#allocation6 + $0x1d0] sm:$0xff]
    %v5168 = vld [vmem:[#allocation6 + $0x1d8] sm:$0xff]
    %v5169 = vld [vmem:[#allocation6 + $0x1e0] sm:$0xff]
    %v5170 = vld [vmem:[#allocation6 + $0x1e8] sm:$0xff]
    %v5171 = vld [vmem:[#allocation6 + $0x1f0] sm:$0xff]
    %v5172 = vld [vmem:[#allocation6 + $0x1f8] sm:$0xff]
    %5173 = vmatpush.msra.mxu0 %v5169
    %5174 = vmatpush.msra.mxu0 %v5165
    %5175 = vmatpush.msra.mxu0 %v5161
    %5176 = vmatpush.msra.mxu0 %v5157
    %5177 = vmatpush.msra.mxu0 %v5153
    %5178 = vmatpush.msra.mxu0 %v5149
    %5179 = vmatpush.msra.mxu0 %v5145
    %5180 = vmatpush.msra.mxu0 %v5141
    %5181 = vmatpush.msra.mxu0 %v5137
    %5182 = vmatpush.msra.mxu0 %v5133
    %5183 = vmatpush.msra.mxu0 %v5129
    %5184 = vmatpush.msra.mxu0 %v5125
    %5185 = vmatpush.msra.mxu0 %v5121
    %5186 = vmatpush.msra.mxu0 %v5117
    %5187 = vmatpush.msra.mxu0 %v5113
    %5188 = vmatpush.msra.mxu0 %v5109
    %5189 = vmatmul.f32.gmra.mxu0 %v4734
    %v5190 = vpop.f32.mrf.mxu0
    %v5191 = vadd.f32 0.0, %v5190
    %5192 = vdwg.mxu0
    %5193 = vmatpush.msra.mxu0 %v5170
    %5194 = vmatpush.msra.mxu0 %v5166
    %5195 = vmatpush.msra.mxu0 %v5162
    %5196 = vmatpush.msra.mxu0 %v5158
    %5197 = vmatpush.msra.mxu0 %v5154
    %5198 = vmatpush.msra.mxu0 %v5150
    %5199 = vmatpush.msra.mxu0 %v5146
    %5200 = vmatpush.msra.mxu0 %v5142
    %5201 = vmatpush.msra.mxu0 %v5138
    %5202 = vmatpush.msra.mxu0 %v5134
    %5203 = vmatpush.msra.mxu0 %v5130
    %5204 = vmatpush.msra.mxu0 %v5126
    %5205 = vmatpush.msra.mxu0 %v5122
    %5206 = vmatpush.msra.mxu0 %v5118
    %5207 = vmatpush.msra.mxu0 %v5114
    %5208 = vmatpush.msra.mxu0 %v5110
    %5209 = vmatmul.f32.gmra.mxu0 %v4734
    %v5210 = vpop.f32.mrf.mxu0
    %v5211 = vadd.f32 0.0, %v5210
    %5212 = vdwg.mxu0
    %5213 = vmatpush.msra.mxu0 %v5171
    %5214 = vmatpush.msra.mxu0 %v5167
    %5215 = vmatpush.msra.mxu0 %v5163
    %5216 = vmatpush.msra.mxu0 %v5159
    %5217 = vmatpush.msra.mxu0 %v5155
    %5218 = vmatpush.msra.mxu0 %v5151
    %5219 = vmatpush.msra.mxu0 %v5147
    %5220 = vmatpush.msra.mxu0 %v5143
    %5221 = vmatpush.msra.mxu0 %v5139
    %5222 = vmatpush.msra.mxu0 %v5135
    %5223 = vmatpush.msra.mxu0 %v5131
    %5224 = vmatpush.msra.mxu0 %v5127
    %5225 = vmatpush.msra.mxu0 %v5123
    %5226 = vmatpush.msra.mxu0 %v5119
    %5227 = vmatpush.msra.mxu0 %v5115
    %5228 = vmatpush.msra.mxu0 %v5111
    %5229 = vmatmul.f32.gmra.mxu0 %v4734
    %v5230 = vpop.f32.mrf.mxu0
    %v5231 = vadd.f32 0.0, %v5230
    %5232 = vdwg.mxu0
    %5233 = vmatpush.msra.mxu0 %v5172
    %5234 = vmatpush.msra.mxu0 %v5168
    %5235 = vmatpush.msra.mxu0 %v5164
    %5236 = vmatpush.msra.mxu0 %v5160
    %5237 = vmatpush.msra.mxu0 %v5156
    %5238 = vmatpush.msra.mxu0 %v5152
    %5239 = vmatpush.msra.mxu0 %v5148
    %5240 = vmatpush.msra.mxu0 %v5144
    %5241 = vmatpush.msra.mxu0 %v5140
    %5242 = vmatpush.msra.mxu0 %v5136
    %5243 = vmatpush.msra.mxu0 %v5132
    %5244 = vmatpush.msra.mxu0 %v5128
    %5245 = vmatpush.msra.mxu0 %v5124
    %5246 = vmatpush.msra.mxu0 %v5120
    %5247 = vmatpush.msra.mxu0 %v5116
    %5248 = vmatpush.msra.mxu0 %v5112
    %5249 = vmatmul.f32.gmra.mxu0 %v4734
    %v5250 = vpop.f32.mrf.mxu0
    %v5251 = vadd.f32 0.0, %v5250
    %5252 = vdwg.mxu0
    %v5254 = vrot.slane %v5044, 7
    %5256 = vmatpush.msra.mxu0 %v5105
    %5257 = vmatpush.msra.mxu0 %v5101
    %5258 = vmatpush.msra.mxu0 %v5097
    %5259 = vmatpush.msra.mxu0 %v5093
    %5260 = vmatpush.msra.mxu0 %v5089
    %5261 = vmatpush.msra.mxu0 %v5085
    %5262 = vmatpush.msra.mxu0 %v5081
    %5263 = vmatpush.msra.mxu0 %v5077
    %5264 = vmatpush.msra.mxu0 %v5073
    %5265 = vmatpush.msra.mxu0 %v5069
    %5266 = vmatpush.msra.mxu0 %v5065
    %5267 = vmatpush.msra.mxu0 %v5061
    %5268 = vmatpush.msra.mxu0 %v5057
    %5269 = vmatpush.msra.mxu0 %v5053
    %5270 = vmatpush.msra.mxu0 %v5049
    %5271 = vmatpush.msra.mxu0 %v5045
    %5272 = vmatmul.f32.gmra.mxu0 %v5254
    %v5273 = vpop.f32.mrf.mxu0
    %v5274 = vadd.f32 %v5191, %v5273
    %5275 = vdwg.mxu0
    %5276 = vmatpush.msra.mxu0 %v5106
    %5277 = vmatpush.msra.mxu0 %v5102
    %5278 = vmatpush.msra.mxu0 %v5098
    %5279 = vmatpush.msra.mxu0 %v5094
    %5280 = vmatpush.msra.mxu0 %v5090
    %5281 = vmatpush.msra.mxu0 %v5086
    %5282 = vmatpush.msra.mxu0 %v5082
    %5283 = vmatpush.msra.mxu0 %v5078
    %5284 = vmatpush.msra.mxu0 %v5074
    %5285 = vmatpush.msra.mxu0 %v5070
    %5286 = vmatpush.msra.mxu0 %v5066
    %5287 = vmatpush.msra.mxu0 %v5062
    %5288 = vmatpush.msra.mxu0 %v5058
    %5289 = vmatpush.msra.mxu0 %v5054
    %5290 = vmatpush.msra.mxu0 %v5050
    %5291 = vmatpush.msra.mxu0 %v5046
    %5292 = vmatmul.f32.gmra.mxu0 %v5254
    %v5293 = vpop.f32.mrf.mxu0
    %v5294 = vadd.f32 %v5211, %v5293
    %5295 = vdwg.mxu0
    %5296 = vmatpush.msra.mxu0 %v5107
    %5297 = vmatpush.msra.mxu0 %v5103
    %5298 = vmatpush.msra.mxu0 %v5099
    %5299 = vmatpush.msra.mxu0 %v5095
    %5300 = vmatpush.msra.mxu0 %v5091
    %5301 = vmatpush.msra.mxu0 %v5087
    %5302 = vmatpush.msra.mxu0 %v5083
    %5303 = vmatpush.msra.mxu0 %v5079
    %5304 = vmatpush.msra.mxu0 %v5075
    %5305 = vmatpush.msra.mxu0 %v5071
    %5306 = vmatpush.msra.mxu0 %v5067
    %5307 = vmatpush.msra.mxu0 %v5063
    %5308 = vmatpush.msra.mxu0 %v5059
    %5309 = vmatpush.msra.mxu0 %v5055
    %5310 = vmatpush.msra.mxu0 %v5051
    %5311 = vmatpush.msra.mxu0 %v5047
    %5312 = vmatmul.f32.gmra.mxu0 %v5254
    %v5313 = vpop.f32.mrf.mxu0
    %v5314 = vadd.f32 %v5231, %v5313
    %5315 = vdwg.mxu0
    %5316 = vmatpush.msra.mxu0 %v5108
    %5317 = vmatpush.msra.mxu0 %v5104
    %5318 = vmatpush.msra.mxu0 %v5100
    %5319 = vmatpush.msra.mxu0 %v5096
    %5320 = vmatpush.msra.mxu0 %v5092
    %5321 = vmatpush.msra.mxu0 %v5088
    %5322 = vmatpush.msra.mxu0 %v5084
    %5323 = vmatpush.msra.mxu0 %v5080
    %5324 = vmatpush.msra.mxu0 %v5076
    %5325 = vmatpush.msra.mxu0 %v5072
    %5326 = vmatpush.msra.mxu0 %v5068
    %5327 = vmatpush.msra.mxu0 %v5064
    %5328 = vmatpush.msra.mxu0 %v5060
    %5329 = vmatpush.msra.mxu0 %v5056
    %5330 = vmatpush.msra.mxu0 %v5052
    %5331 = vmatpush.msra.mxu0 %v5048
    %5332 = vmatmul.f32.gmra.mxu0 %v5254
    %v5333 = vpop.f32.mrf.mxu0
    %v5334 = vadd.f32 %v5251, %v5333
    %5335 = vdwg.mxu0
    %v5336 = vadd.f32 %v5274, %v649
    %v5337 = vadd.f32 %v5294, %v650
    %v5338 = vadd.f32 %v5314, %v651
    %v5339 = vadd.f32 %v5334, %v652
    %v5340 = vxor.u32 %v5336, 2147483648
    %v5341 = vmul.f32 %v5340, 1.442695
    %v5342 = vpow.pop %v5341
    %v5343 = vadd.f32 %v5342, 1.0
    %v5344 = vrcp.pop %v5343
    %v5345 = vmul.f32 %v5343, %v5344
    %v5346 = vsub.f32 1.0, %v5345
    %v5347 = vmul.f32 %v5344, %v5346
    %v5348 = vadd.f32 %v5344, %v5347
    %vm5349 = vweird.f32 %v5343
    %vm5350 = vweird.f32 %v5344
    %vm5351 = vmor %vm5349, %vm5350
    %v5352 = vsel %vm5351, %v5344, %v5348
    %v5353 = vand.u32 2147483647, %v5343
    %vm5354 = vcmp.eq.f32.partialorder %v5353, 8.507059e+37
    %v5355 = vand.u32 %v5343, 2147483648
    %v5356 = vor.u32 1.1754944e-38, %v5355
    %v5357 = vsel %vm5354, %v5356, %v5352
    %v5358 = vmul.f32 1.0, %v5357
    %v5359 = vxor.u32 %v5337, 2147483648
    %v5360 = vmul.f32 %v5359, 1.442695
    %v5361 = vpow.pop %v5360
    %v5362 = vadd.f32 %v5361, 1.0
    %v5363 = vrcp.pop %v5362
    %v5364 = vmul.f32 %v5362, %v5363
    %v5365 = vsub.f32 1.0, %v5364
    %v5366 = vmul.f32 %v5363, %v5365
    %v5367 = vadd.f32 %v5363, %v5366
    %vm5368 = vweird.f32 %v5362
    %vm5369 = vweird.f32 %v5363
    %vm5370 = vmor %vm5368, %vm5369
    %v5371 = vsel %vm5370, %v5363, %v5367
    %v5372 = vand.u32 2147483647, %v5362
    %vm5373 = vcmp.eq.f32.partialorder %v5372, 8.507059e+37
    %v5374 = vand.u32 %v5362, 2147483648
    %v5375 = vor.u32 1.1754944e-38, %v5374
    %v5376 = vsel %vm5373, %v5375, %v5371
    %v5377 = vmul.f32 1.0, %v5376
    %v5378 = vtanh.pop %v5338
    %v5379 = vxor.u32 %v5339, 2147483648
    %v5380 = vmul.f32 %v5379, 1.442695
    %v5381 = vpow.pop %v5380
    %v5382 = vadd.f32 %v5381, 1.0
    %v5383 = vrcp.pop %v5382
    %v5384 = vmul.f32 %v5382, %v5383
    %v5385 = vsub.f32 1.0, %v5384
    %v5386 = vmul.f32 %v5383, %v5385
    %v5387 = vadd.f32 %v5383, %v5386
    %vm5388 = vweird.f32 %v5382
    %vm5389 = vweird.f32 %v5383
    %vm5390 = vmor %vm5388, %vm5389
    %v5391 = vsel %vm5390, %v5383, %v5387
    %v5392 = vand.u32 2147483647, %v5382
    %vm5393 = vcmp.eq.f32.partialorder %v5392, 8.507059e+37
    %v5394 = vand.u32 %v5382, 2147483648
    %v5395 = vor.u32 1.1754944e-38, %v5394
    %v5396 = vsel %vm5393, %v5395, %v5391
    %v5397 = vmul.f32 1.0, %v5396
    %v5398 = vmul.f32 %v5377, %v4732
    %v5399 = vmul.f32 %v5358, %v5378
    %v5400 = vadd.f32 %v5398, %v5399
    %v5401 = vtanh.pop %v5400
    %v5402 = vmul.f32 %v5397, %v5401
    %v5403 = vld [vmem:[#allocation7] sm:$0xff]
    %v5404 = vld [vmem:[#allocation7 + $0x8] sm:$0xff]
    %v5405 = vld [vmem:[#allocation7 + $0x10] sm:$0xff]
    %v5406 = vld [vmem:[#allocation7 + $0x18] sm:$0xff]
    %v5407 = vld [vmem:[#allocation7 + $0x20] sm:$0xff]
    %v5408 = vld [vmem:[#allocation7 + $0x28] sm:$0xff]
    %v5409 = vld [vmem:[#allocation7 + $0x30] sm:$0xff]
    %v5410 = vld [vmem:[#allocation7 + $0x38] sm:$0xff]
    %v5411 = vld [vmem:[#allocation7 + $0x40] sm:$0xff]
    %v5412 = vld [vmem:[#allocation7 + $0x48] sm:$0xff]
    %v5413 = vld [vmem:[#allocation7 + $0x50] sm:$0xff]
    %v5414 = vld [vmem:[#allocation7 + $0x58] sm:$0xff]
    %v5415 = vld [vmem:[#allocation7 + $0x60] sm:$0xff]
    %v5416 = vld [vmem:[#allocation7 + $0x68] sm:$0xff]
    %v5417 = vld [vmem:[#allocation7 + $0x70] sm:$0xff]
    %v5418 = vld [vmem:[#allocation7 + $0x78] sm:$0xff]
    %5419 = vset.pattern.permute.xlu0 3
    %5420 = vperm.xlu0 %5419, %v4813
    %v5421 = vpop.permute.xlu0 %5420
    %v5423 = vmul.f32 %v5421, %v147
    %5424 = vmatpush.msra.mxu0 %v5418
    %5425 = vmatpush.msra.mxu0 %v5417
    %5426 = vmatpush.msra.mxu0 %v5416
    %5427 = vmatpush.msra.mxu0 %v5415
    %5428 = vmatpush.msra.mxu0 %v5414
    %5429 = vmatpush.msra.mxu0 %v5413
    %5430 = vmatpush.msra.mxu0 %v5412
    %5431 = vmatpush.msra.mxu0 %v5411
    %5432 = vmatpush.msra.mxu0 %v5410
    %5433 = vmatpush.msra.mxu0 %v5409
    %5434 = vmatpush.msra.mxu0 %v5408
    %5435 = vmatpush.msra.mxu0 %v5407
    %5436 = vmatpush.msra.mxu0 %v5406
    %5437 = vmatpush.msra.mxu0 %v5405
    %5438 = vmatpush.msra.mxu0 %v5404
    %5439 = vmatpush.msra.mxu0 %v5403
    %5440 = vmatmul.f32.gmra.mxu0 %v5402
    %v5441 = vpop.f32.mrf.mxu0
    %v5442 = vadd.f32 %v5423, %v5441
    %5443 = vdwg.mxu0
    %v5444 = vadd.f32 %v5442, %v148
    %v5445 = vxor.u32 %v5444, 2147483648
    %v5446 = vmul.f32 %v5445, 1.442695
    %v5447 = vpow.pop %v5446
    %v5448 = vadd.f32 %v5447, 1.0
    %v5449 = vrcp.pop %v5448
    %v5450 = vmul.f32 %v5448, %v5449
    %v5451 = vsub.f32 1.0, %v5450
    %v5452 = vmul.f32 %v5449, %v5451
    %v5453 = vadd.f32 %v5449, %v5452
    %vm5454 = vweird.f32 %v5448
    %vm5455 = vweird.f32 %v5449
    %vm5456 = vmor %vm5454, %vm5455
    %v5457 = vsel %vm5456, %v5449, %v5453
    %v5458 = vand.u32 2147483647, %v5448
    %vm5459 = vcmp.eq.f32.partialorder %v5458, 8.507059e+37
    %v5460 = vand.u32 %v5448, 2147483648
    %v5461 = vor.u32 1.1754944e-38, %v5460
    %v5462 = vsel %vm5459, %v5461, %v5457
    %v5463 = vmul.f32 1.0, %v5462
    %v5464 = vtanh.pop %v5444
    %v5465 = vmul.f32 %v5463, %v4807
    %5467 = vrot.lane.b32.xlu0 %v5464, 126
    %v5468 = vpop.permute.xlu0 %5467
    %v5470 = vmul.f32 %v5463, %v5468
    %5472 = vrot.lane.b32.xlu0 %v5470, 1
    %v5473 = vpop.permute.xlu0 %5472
    %v5475 = vadd.f32 %v5465, %v5473
    %v5476 = vtanh.pop %v5475
    %5478 = vrot.lane.b32.xlu0 %v5476, 2
    %v5479 = vpop.permute.xlu0 %5478
    %v5481 = vmul.f32 %v5463, %v5479
    %5483 = vrot.lane.b32.xlu0 %v5481, 125
    %v5484 = vpop.permute.xlu0 %5483
    %5486 = vst.msk [vmem:[%s13 + $0x7] sm:$0x1] %vm809, %v5484
    // Predicated region
    $region70: #{net_forward_pallas.1} parent=1 // pred_check
      _
    $region71: #{net_forward_pallas.1} parent=1 // pred_check_branch
      %5488 = sbr.rel (0) target = $region73
    $region72: #{net_forward_pallas.1} parent=1 // pred_region
      _
    $region73: #{net_forward_pallas.1} parent=1 // pred_fallthru
      _
    // Predicated region
    $region74: #{net_forward_pallas.1} parent=1 // pred_check
      _
    $region75: #{net_forward_pallas.1} parent=1 // pred_check_branch
      %5490 = sbr.rel (0) target = $region77
    $region76: #{net_forward_pallas.1} parent=1 // pred_region
      _
    $region77: #{net_forward_pallas.1} parent=1 // pred_fallthru
      _
    %5491 = vsyncpa [#allocation3], 1
    %5492 = vsyncpa [#allocation5], 1
    %5493 = vsyncpa [#allocation8], 1

</llo_original>
